<compile_context>
chip_gen: v6e
topology: v6e:2x2x1
jax: 0.10.0
libtpu: 0.0.40
codegen_flags: <defaults>
</compile_context>

<pallas_src>
import functools

import jax
import jax.numpy as jnp
from jax.experimental import pallas as pl
from jax.experimental.pallas import tpu as pltpu

_VMEM = pl.BlockSpec(memory_space=pltpu.MemorySpace.VMEM)


# ----------------------------------------------------------------------------
# In-kernel helpers
# ----------------------------------------------------------------------------
def _maxpool2x2(x, n, h, w, c):
  """2x2 stride-2 max pool of an (n,h,w,c) value.

  Only lane-preserving reshapes + static slices + 2 whole-tensor VPU maxes
  (no per-window loops, no masked stores).
  """
  t = x.reshape(n * (h // 2), 2, w, c)
  r = jnp.maximum(t[:, 0, :, :], t[:, 1, :, :])            # pool over H
  t = r.reshape(n * (h // 2), w // 2, 2, c)
  r = jnp.maximum(t[:, :, 0, :], t[:, :, 1, :])            # pool over W
  return r.reshape(n, h // 2, w // 2, c)


def _softmax(z):
  z = z - jnp.max(z, axis=-1, keepdims=True)
  e = jnp.exp(z)
  # approx reciprocal runs on the EUP slot; introduces <~1e-3 relative error
  # (drop approx=True for exact parity with torch softmax).
  return e * pl.reciprocal(jnp.sum(e, axis=-1, keepdims=True), approx=True)


# ----------------------------------------------------------------------------
# Fused kernel: whole Siamese forward (both branches + FC heads + combine)
# ----------------------------------------------------------------------------
def _fused_siamese_kernel(
    x_ref,                                   # (2B,14,14,1) rows [0:B]=x[:,0], [B:2B]=x[:,1]
    w1_ref, b1_ref, s1_ref, t1_ref,          # conv1: (n,9,1,32), (n,1,32) x3
    w2_ref, b2_ref, s2_ref, t2_ref,          # conv2: (n,288,64), (n,1,64) x3
    w1f_ref, b1f_ref, w2f_ref, b2f_ref,      # fc:    (n,256,128), (n,1,128), (n,128,10), (n,1,10)
    wca_ref, wcb_ref, bc_ref,                # combine: (10,no), (10,no), (1,no)
    o1_ref, o2_ref, y_ref,                   # outputs: (B,10), (B,10), (B,no)
    *, weight_sharing):
  f32 = jnp.float32
  S = x_ref.shape[0]                         # 2B stacked images
  B = S // 2

  x_all = x_ref[...]                         # (S,14,14,1)

  def branch(row0, nrows, h):
    # ---- conv1 3x3 (1 -> 32) + ReLU + BN(eval): 14x14 -> 12x12 -------------
    # One lane-splat of the single input channel, then 9 whole-plane FMAs.
    x4 = x_all[row0:row0 + nrows]                            # (n,14,14,1)
    xb = jnp.broadcast_to(x4, (nrows, 14, 14, 32))           # (n,14,14,32)
    acc = None
    for k in range(9):
      i, j = k // 3, k % 3
      term = xb[:, i:i + 12, j:j + 12, :] * w1_ref[h, k]     # (n,12,12,32)*(1,32)
      acc = term if acc is None else acc + term
    a1 = jnp.maximum(acc + b1_ref[h], 0.0) * s1_ref[h] + t1_ref[h]   # ReLU -> BN

    # ---- maxpool 2x2: 12x12 -> 6x6 (Dropout = identity, eval) --------------
    p1 = _maxpool2x2(a1, nrows, 12, 12, 32)                  # (n,6,6,32)

    # ---- conv2 3x3 (32 -> 64) + ReLU + BN(eval): one im2col MXU matmul -----
    cols = [p1[:, (k // 3):(k // 3) + 4, (k % 3):(k % 3) + 4, :] for k in range(9)]
    patches = jnp.concatenate(cols, axis=-1)                 # (n,4,4,288) lane concat
    pm = patches.reshape(nrows * 16, 9 * 32)                 # (n*16,288)
    z2 = jnp.dot(pm, w2_ref[h], preferred_element_type=f32)  # (n*16,64)
    a2 = jnp.maximum(z2 + b2_ref[h], 0.0) * s2_ref[h] + t2_ref[h]
    a2 = a2.reshape(nrows, 4, 4, 64)

    # ---- maxpool 2x2: 4x4 -> 2x2 (Dropout = identity, eval) ----------------
    p2 = _maxpool2x2(a2, nrows, 4, 4, 64)                    # (n,2,2,64)

    # ---- FC head: Linear(256,128) -> ReLU -> Linear(128,10) -> Softmax -----
    # The torch NCHW flatten (feature = c*4 + q, q = ph*2+pw) is folded into an
    # offline row permutation of the FC weight, so we feed q-major blocks.
    feat = jnp.concatenate(
        [p2[:, 0, 0, :], p2[:, 0, 1, :], p2[:, 1, 0, :], p2[:, 1, 1, :]],
        axis=-1)                                             # (n,256)
    hid = jnp.maximum(
        jnp.dot(feat, w1f_ref[h], preferred_element_type=f32) + b1f_ref[h], 0.0)
    z = jnp.dot(hid, w2f_ref[h], preferred_element_type=f32) + b2f_ref[h]
    return _softmax(z)                                       # (n,10)

  if weight_sharing:
    o = branch(0, S, 0)                      # one chain over both stacked halves
    o1, o2 = o[:B], o[B:]
  else:
    o1 = branch(0, B, 0)
    o2 = branch(B, B, 1)

  o1_ref[...] = o1
  o2_ref[...] = o2

  # ---- combine: Linear(20, nout) -> Softmax.  cat(o1,o2) @ W computed as
  #      o1 @ W[:10] + o2 @ W[10:] (weight split done offline). ---------------
  z = (jnp.dot(o1, wca_ref[...], preferred_element_type=f32)
       + jnp.dot(o2, wcb_ref[...], preferred_element_type=f32)
       + bc_ref[...])
  y_ref[...] = _softmax(z)


# ----------------------------------------------------------------------------
# Parameter preparation (offline folding / permutation, outside the kernel)
# ----------------------------------------------------------------------------
def _fold_bn(gamma, beta, mean, var, eps=1e-5):
  scale = gamma / jnp.sqrt(var + eps)
  return scale, beta - mean * scale


def _prep_cnn(p):
  # Conv weights are HWIO (kh,kw,cin,cout); tap index k = kh*3 + kw.
  w1 = p["w1"].reshape(9, 1, 32)
  s1, t1 = _fold_bn(p["g1"], p["be1"], p["m1"], p["v1"])
  w2 = p["w2"].reshape(9 * 32, 64)           # im2col row = k*32 + cin
  s2, t2 = _fold_bn(p["g2"], p["be2"], p["m2"], p["v2"])
  return (w1, p["b1"].reshape(1, 32), s1.reshape(1, 32), t1.reshape(1, 32),
          w2, p["b2"].reshape(1, 64), s2.reshape(1, 64), t2.reshape(1, 64))


def _prep_fc(p):
  # Torch flattens NCHW (feature = c*4 + ph*2 + pw).  The kernel feeds features
  # grouped per spatial position q = ph*2 + pw, so permute w1 rows offline.
  w1 = p["w1"]                                               # (256,128) = (in,out)
  w1p = jnp.concatenate([w1[q::4] for q in range(4)], axis=0)  # (256,128)
  return (w1p, p["b1"].reshape(1, 128), p["w2"], p["b2"].reshape(1, 10))


# ----------------------------------------------------------------------------
# Forward wrapper: single fused pallas_call for the whole network
# ----------------------------------------------------------------------------
def siamese_forward(x, params, weight_sharing=True, auxiliary_loss=True):
  """x: [B, 2, 14, 14] float32 -> (o1, o2, y) like the torch module (eval mode)."""
  B = x.shape[0]
  nout = params["comb"]["w"].shape[1]

  sets = [_prep_cnn(params["cnn1"]) + _prep_fc(params["fc1"])]
  if not weight_sharing:
    sets.append(_prep_cnn(params["cnn2"]) + _prep_fc(params["fc2"]))
  stacked = [jnp.stack(parts) for parts in zip(*sets)]        # leading dim 1 or 2

  wc = params["comb"]["w"]
  wca, wcb = wc[:10], wc[10:]
  bc = params["comb"]["b"].reshape(1, nout)

  # Stack the two images of every pair along the batch axis: rows [0:B]=x[:,0],
  # rows [B:2B]=x[:,1]; with weight sharing the chain runs once over 2B rows.
  xs = jnp.concatenate([x[:, 0], x[:, 1]], axis=0)[..., None]  # (2B,14,14,1)

  kernel = functools.partial(_fused_siamese_kernel, weight_sharing=weight_sharing)
  o1, o2, y = pl.pallas_call(
      kernel,
      out_shape=(jax.ShapeDtypeStruct((B, 10), jnp.float32),
                 jax.ShapeDtypeStruct((B, 10), jnp.float32),
                 jax.ShapeDtypeStruct((B, nout), jnp.float32)),
      in_specs=[_VMEM] * 16,
      out_specs=(_VMEM, _VMEM, _VMEM),
  )(xs, *stacked, wca, wcb, bc)

  if auxiliary_loss:
    return o1, o2, y
  return y


# ----------------------------------------------------------------------------
# Pure-JAX reference (same eval-mode math) for correctness checking
# ----------------------------------------------------------------------------
def _pool_ref(y):
  b, h, w, c = y.shape
  return jnp.max(y.reshape(b, h // 2, 2, w // 2, 2, c), axis=(2, 4))


def _reference_forward(x, params, weight_sharing=True):
  def cnn(img, p):                                            # img: (B,14,14,1)
    y = jax.lax.conv_general_dilated(img, p["w1"], (1, 1), "VALID",
                                     dimension_numbers=("NHWC", "HWIO", "NHWC"))
    s, t = _fold_bn(p["g1"], p["be1"], p["m1"], p["v1"])
    y = jnp.maximum(y + p["b1"], 0.0) * s + t
    y = _pool_ref(y)
    y = jax.lax.conv_general_dilated(y, p["w2"], (1, 1), "VALID",
                                     dimension_numbers=("NHWC", "HWIO", "NHWC"))
    s, t = _fold_bn(p["g2"], p["be2"], p["m2"], p["v2"])
    y = jnp.maximum(y + p["b2"], 0.0) * s + t
    y = _pool_ref(y)                                          # (B,2,2,64)
    return jnp.transpose(y, (0, 3, 1, 2)).reshape(y.shape[0], -1)   # NCHW flatten

  def fc(f, p):
    h = jnp.maximum(f @ p["w1"] + p["b1"], 0.0)
    return jax.nn.softmax(h @ p["w2"] + p["b2"], axis=-1)

  f1 = cnn(x[:, 0][..., None], params["cnn1"])
  f2 = cnn(x[:, 1][..., None], params["cnn1"] if weight_sharing else params["cnn2"])
  o1 = fc(f1, params["fc1"])
  o2 = fc(f2, params["fc1"] if weight_sharing else params["fc2"])
  y = jax.nn.softmax(jnp.concatenate([o1, o2], axis=-1) @ params["comb"]["w"]
                     + params["comb"]["b"], axis=-1)
  return o1, o2, y


# ----------------------------------------------------------------------------
# Deterministic synthetic parameters
# ----------------------------------------------------------------------------
def init_params(key, output_channels=2):
  ks = iter(jax.random.split(key, 64))

  def nrm(shape, scale=0.1):
    return scale * jax.random.normal(next(ks), shape, dtype=jnp.float32)

  def cnn_params():
    return dict(
        w1=nrm((3, 3, 1, 32)), b1=nrm((32,)),
        g1=1.0 + nrm((32,)), be1=nrm((32,)),
        m1=nrm((32,)), v1=0.5 + jnp.abs(nrm((32,), 0.5)),
        w2=nrm((3, 3, 32, 64)), b2=nrm((64,)),
        g2=1.0 + nrm((64,)), be2=nrm((64,)),
        m2=nrm((64,)), v2=0.5 + jnp.abs(nrm((64,), 0.5)),
    )

  def fc_params():
    return dict(w1=nrm((256, 128)), b1=nrm((128,)),
                w2=nrm((128, 10)), b2=nrm((10,)))

  return dict(
      cnn1=cnn_params(), cnn2=cnn_params(),
      fc1=fc_params(), fc2=fc_params(),
      comb=dict(w=nrm((20, output_channels)), b=nrm((output_channels,))),
  )


if __name__ == "__main__":
  key = jax.random.PRNGKey(0)
  kx, kp = jax.random.split(key)
  x = jax.random.normal(kx, (2, 2, 14, 14), dtype=jnp.float32)
  params = init_params(kp, output_channels=2)

  for ws in (True, False):
    fwd = jax.jit(functools.partial(siamese_forward, weight_sharing=ws,
                                    auxiliary_loss=True))
    o1, o2, y = fwd(x, params)
    jax.block_until_ready((o1, o2, y))

    assert o1.shape == (2, 10) and o2.shape == (2, 10) and y.shape == (2, 2)
    assert bool(jnp.all(jnp.isfinite(o1))) and bool(jnp.all(jnp.isfinite(o2)))
    assert bool(jnp.all(jnp.isfinite(y)))
    # softmax rows sum to ~1 (approx reciprocal -> loose tolerance)
    assert bool(jnp.allclose(jnp.sum(o1, axis=-1), 1.0, atol=1e-2))
    assert bool(jnp.allclose(jnp.sum(y, axis=-1), 1.0, atol=1e-2))
    # match the pure-JAX reference of the torch module (eval mode)
    r1, r2, ry = _reference_forward(x, params, weight_sharing=ws)
    assert bool(jnp.allclose(o1, r1, atol=2e-2))
    assert bool(jnp.allclose(o2, r2, atol=2e-2))
    assert bool(jnp.allclose(y, ry, atol=2e-2))

  print("KERNEL_OK")
</pallas_src>

<mosaic_0001>
module attributes {stable_mosaic.version = 11 : i64} {
  func.func @_fused_siamese_kernel(%arg0: memref<4x14x14x1xf32, #tpu.memory_space<vmem>>, %arg1: memref<1x9x1x32xf32, #tpu.memory_space<vmem>>, %arg2: memref<1x1x32xf32, #tpu.memory_space<vmem>>, %arg3: memref<1x1x32xf32, #tpu.memory_space<vmem>>, %arg4: memref<1x1x32xf32, #tpu.memory_space<vmem>>, %arg5: memref<1x288x64xf32, #tpu.memory_space<vmem>>, %arg6: memref<1x1x64xf32, #tpu.memory_space<vmem>>, %arg7: memref<1x1x64xf32, #tpu.memory_space<vmem>>, %arg8: memref<1x1x64xf32, #tpu.memory_space<vmem>>, %arg9: memref<1x256x128xf32, #tpu.memory_space<vmem>>, %arg10: memref<1x1x128xf32, #tpu.memory_space<vmem>>, %arg11: memref<1x128x10xf32, #tpu.memory_space<vmem>>, %arg12: memref<1x1x10xf32, #tpu.memory_space<vmem>>, %arg13: memref<10x2xf32, #tpu.memory_space<vmem>>, %arg14: memref<10x2xf32, #tpu.memory_space<vmem>>, %arg15: memref<1x2xf32, #tpu.memory_space<vmem>>, %arg16: memref<2x10xf32, #tpu.memory_space<vmem>>, %arg17: memref<2x10xf32, #tpu.memory_space<vmem>>, %arg18: memref<2x2xf32, #tpu.memory_space<vmem>>) attributes {dimension_semantics = [], scalar_prefetch = 0 : i64, scratch_operands = 0 : i64, tpu.core_type = #tpu.core_type<tc>} {
    %c0 = arith.constant 0 : index
    %c0_0 = arith.constant 0 : index
    %c0_1 = arith.constant 0 : index
    %c0_2 = arith.constant 0 : index
    %0 = vector.load %arg0[%c0, %c0_0, %c0_1, %c0_2] : memref<4x14x14x1xf32, #tpu.memory_space<vmem>>, vector<4x14x14x1xf32>
    %1 = vector.shape_cast %0 : vector<4x14x14x1xf32> to vector<4x14x14x1xf32>
    %2 = vector.broadcast %1 : vector<4x14x14x1xf32> to vector<4x14x14x32xf32>
    %3 = vector.extract_strided_slice %2 {offsets = [0, 0, 0, 0], sizes = [4, 12, 12, 32], strides = [1, 1, 1, 1]} : vector<4x14x14x32xf32> to vector<4x12x12x32xf32>
    %c0_3 = arith.constant 0 : index
    %c0_4 = arith.constant 0 : index
    %c0_5 = arith.constant 0 : index
    %c0_6 = arith.constant 0 : index
    %4 = vector.load %arg1[%c0_3, %c0_4, %c0_5, %c0_6] : memref<1x9x1x32xf32, #tpu.memory_space<vmem>>, vector<1x1x1x32xf32>
    %5 = vector.shape_cast %4 : vector<1x1x1x32xf32> to vector<1x32xf32>
    %6 = vector.shape_cast %5 : vector<1x32xf32> to vector<1x1x1x32xf32>
    %7 = vector.broadcast %6 : vector<1x1x1x32xf32> to vector<4x12x12x32xf32>
    %8 = arith.mulf %3, %7 : vector<4x12x12x32xf32>
    %9 = vector.extract_strided_slice %2 {offsets = [0, 0, 1, 0], sizes = [4, 12, 12, 32], strides = [1, 1, 1, 1]} : vector<4x14x14x32xf32> to vector<4x12x12x32xf32>
    %c0_7 = arith.constant 0 : index
    %c1 = arith.constant 1 : index
    %c0_8 = arith.constant 0 : index
    %c0_9 = arith.constant 0 : index
    %10 = vector.load %arg1[%c0_7, %c1, %c0_8, %c0_9] : memref<1x9x1x32xf32, #tpu.memory_space<vmem>>, vector<1x1x1x32xf32>
    %11 = vector.shape_cast %10 : vector<1x1x1x32xf32> to vector<1x32xf32>
    %12 = vector.shape_cast %11 : vector<1x32xf32> to vector<1x1x1x32xf32>
    %13 = vector.broadcast %12 : vector<1x1x1x32xf32> to vector<4x12x12x32xf32>
    %14 = arith.mulf %9, %13 : vector<4x12x12x32xf32>
    %15 = arith.addf %8, %14 : vector<4x12x12x32xf32>
    %16 = vector.extract_strided_slice %2 {offsets = [0, 0, 2, 0], sizes = [4, 12, 12, 32], strides = [1, 1, 1, 1]} : vector<4x14x14x32xf32> to vector<4x12x12x32xf32>
    %c0_10 = arith.constant 0 : index
    %c2 = arith.constant 2 : index
    %c0_11 = arith.constant 0 : index
    %c0_12 = arith.constant 0 : index
    %17 = vector.load %arg1[%c0_10, %c2, %c0_11, %c0_12] : memref<1x9x1x32xf32, #tpu.memory_space<vmem>>, vector<1x1x1x32xf32>
    %18 = vector.shape_cast %17 : vector<1x1x1x32xf32> to vector<1x32xf32>
    %19 = vector.shape_cast %18 : vector<1x32xf32> to vector<1x1x1x32xf32>
    %20 = vector.broadcast %19 : vector<1x1x1x32xf32> to vector<4x12x12x32xf32>
    %21 = arith.mulf %16, %20 : vector<4x12x12x32xf32>
    %22 = arith.addf %15, %21 : vector<4x12x12x32xf32>
    %23 = vector.extract_strided_slice %2 {offsets = [0, 1, 0, 0], sizes = [4, 12, 12, 32], strides = [1, 1, 1, 1]} : vector<4x14x14x32xf32> to vector<4x12x12x32xf32>
    %c0_13 = arith.constant 0 : index
    %c3 = arith.constant 3 : index
    %c0_14 = arith.constant 0 : index
    %c0_15 = arith.constant 0 : index
    %24 = vector.load %arg1[%c0_13, %c3, %c0_14, %c0_15] : memref<1x9x1x32xf32, #tpu.memory_space<vmem>>, vector<1x1x1x32xf32>
    %25 = vector.shape_cast %24 : vector<1x1x1x32xf32> to vector<1x32xf32>
    %26 = vector.shape_cast %25 : vector<1x32xf32> to vector<1x1x1x32xf32>
    %27 = vector.broadcast %26 : vector<1x1x1x32xf32> to vector<4x12x12x32xf32>
    %28 = arith.mulf %23, %27 : vector<4x12x12x32xf32>
    %29 = arith.addf %22, %28 : vector<4x12x12x32xf32>
    %30 = vector.extract_strided_slice %2 {offsets = [0, 1, 1, 0], sizes = [4, 12, 12, 32], strides = [1, 1, 1, 1]} : vector<4x14x14x32xf32> to vector<4x12x12x32xf32>
    %c0_16 = arith.constant 0 : index
    %c4 = arith.constant 4 : index
    %c0_17 = arith.constant 0 : index
    %c0_18 = arith.constant 0 : index
    %31 = vector.load %arg1[%c0_16, %c4, %c0_17, %c0_18] : memref<1x9x1x32xf32, #tpu.memory_space<vmem>>, vector<1x1x1x32xf32>
    %32 = vector.shape_cast %31 : vector<1x1x1x32xf32> to vector<1x32xf32>
    %33 = vector.shape_cast %32 : vector<1x32xf32> to vector<1x1x1x32xf32>
    %34 = vector.broadcast %33 : vector<1x1x1x32xf32> to vector<4x12x12x32xf32>
    %35 = arith.mulf %30, %34 : vector<4x12x12x32xf32>
    %36 = arith.addf %29, %35 : vector<4x12x12x32xf32>
    %37 = vector.extract_strided_slice %2 {offsets = [0, 1, 2, 0], sizes = [4, 12, 12, 32], strides = [1, 1, 1, 1]} : vector<4x14x14x32xf32> to vector<4x12x12x32xf32>
    %c0_19 = arith.constant 0 : index
    %c5 = arith.constant 5 : index
    %c0_20 = arith.constant 0 : index
    %c0_21 = arith.constant 0 : index
    %38 = vector.load %arg1[%c0_19, %c5, %c0_20, %c0_21] : memref<1x9x1x32xf32, #tpu.memory_space<vmem>>, vector<1x1x1x32xf32>
    %39 = vector.shape_cast %38 : vector<1x1x1x32xf32> to vector<1x32xf32>
    %40 = vector.shape_cast %39 : vector<1x32xf32> to vector<1x1x1x32xf32>
    %41 = vector.broadcast %40 : vector<1x1x1x32xf32> to vector<4x12x12x32xf32>
    %42 = arith.mulf %37, %41 : vector<4x12x12x32xf32>
    %43 = arith.addf %36, %42 : vector<4x12x12x32xf32>
    %44 = vector.extract_strided_slice %2 {offsets = [0, 2, 0, 0], sizes = [4, 12, 12, 32], strides = [1, 1, 1, 1]} : vector<4x14x14x32xf32> to vector<4x12x12x32xf32>
    %c0_22 = arith.constant 0 : index
    %c6 = arith.constant 6 : index
    %c0_23 = arith.constant 0 : index
    %c0_24 = arith.constant 0 : index
    %45 = vector.load %arg1[%c0_22, %c6, %c0_23, %c0_24] : memref<1x9x1x32xf32, #tpu.memory_space<vmem>>, vector<1x1x1x32xf32>
    %46 = vector.shape_cast %45 : vector<1x1x1x32xf32> to vector<1x32xf32>
    %47 = vector.shape_cast %46 : vector<1x32xf32> to vector<1x1x1x32xf32>
    %48 = vector.broadcast %47 : vector<1x1x1x32xf32> to vector<4x12x12x32xf32>
    %49 = arith.mulf %44, %48 : vector<4x12x12x32xf32>
    %50 = arith.addf %43, %49 : vector<4x12x12x32xf32>
    %51 = vector.extract_strided_slice %2 {offsets = [0, 2, 1, 0], sizes = [4, 12, 12, 32], strides = [1, 1, 1, 1]} : vector<4x14x14x32xf32> to vector<4x12x12x32xf32>
    %c0_25 = arith.constant 0 : index
    %c7 = arith.constant 7 : index
    %c0_26 = arith.constant 0 : index
    %c0_27 = arith.constant 0 : index
    %52 = vector.load %arg1[%c0_25, %c7, %c0_26, %c0_27] : memref<1x9x1x32xf32, #tpu.memory_space<vmem>>, vector<1x1x1x32xf32>
    %53 = vector.shape_cast %52 : vector<1x1x1x32xf32> to vector<1x32xf32>
    %54 = vector.shape_cast %53 : vector<1x32xf32> to vector<1x1x1x32xf32>
    %55 = vector.broadcast %54 : vector<1x1x1x32xf32> to vector<4x12x12x32xf32>
    %56 = arith.mulf %51, %55 : vector<4x12x12x32xf32>
    %57 = arith.addf %50, %56 : vector<4x12x12x32xf32>
    %58 = vector.extract_strided_slice %2 {offsets = [0, 2, 2, 0], sizes = [4, 12, 12, 32], strides = [1, 1, 1, 1]} : vector<4x14x14x32xf32> to vector<4x12x12x32xf32>
    %c0_28 = arith.constant 0 : index
    %c8 = arith.constant 8 : index
    %c0_29 = arith.constant 0 : index
    %c0_30 = arith.constant 0 : index
    %59 = vector.load %arg1[%c0_28, %c8, %c0_29, %c0_30] : memref<1x9x1x32xf32, #tpu.memory_space<vmem>>, vector<1x1x1x32xf32>
    %60 = vector.shape_cast %59 : vector<1x1x1x32xf32> to vector<1x32xf32>
    %61 = vector.shape_cast %60 : vector<1x32xf32> to vector<1x1x1x32xf32>
    %62 = vector.broadcast %61 : vector<1x1x1x32xf32> to vector<4x12x12x32xf32>
    %63 = arith.mulf %58, %62 : vector<4x12x12x32xf32>
    %64 = arith.addf %57, %63 : vector<4x12x12x32xf32>
    %c0_31 = arith.constant 0 : index
    %c0_32 = arith.constant 0 : index
    %c0_33 = arith.constant 0 : index
    %65 = vector.load %arg2[%c0_31, %c0_32, %c0_33] : memref<1x1x32xf32, #tpu.memory_space<vmem>>, vector<1x1x32xf32>
    %66 = vector.shape_cast %65 : vector<1x1x32xf32> to vector<1x32xf32>
    %67 = vector.shape_cast %66 : vector<1x32xf32> to vector<1x1x1x32xf32>
    %68 = vector.broadcast %67 : vector<1x1x1x32xf32> to vector<4x12x12x32xf32>
    %69 = arith.addf %64, %68 : vector<4x12x12x32xf32>
    %cst = arith.constant 0.000000e+00 : f32
    %70 = vector.broadcast %cst : f32 to vector<4x12x12x32xf32>
    %71 = arith.maximumf %69, %70 : vector<4x12x12x32xf32>
    %c0_34 = arith.constant 0 : index
    %c0_35 = arith.constant 0 : index
    %c0_36 = arith.constant 0 : index
    %72 = vector.load %arg3[%c0_34, %c0_35, %c0_36] : memref<1x1x32xf32, #tpu.memory_space<vmem>>, vector<1x1x32xf32>
    %73 = vector.shape_cast %72 : vector<1x1x32xf32> to vector<1x32xf32>
    %74 = vector.shape_cast %73 : vector<1x32xf32> to vector<1x1x1x32xf32>
    %75 = vector.broadcast %74 : vector<1x1x1x32xf32> to vector<4x12x12x32xf32>
    %76 = arith.mulf %71, %75 : vector<4x12x12x32xf32>
    %c0_37 = arith.constant 0 : index
    %c0_38 = arith.constant 0 : index
    %c0_39 = arith.constant 0 : index
    %77 = vector.load %arg4[%c0_37, %c0_38, %c0_39] : memref<1x1x32xf32, #tpu.memory_space<vmem>>, vector<1x1x32xf32>
    %78 = vector.shape_cast %77 : vector<1x1x32xf32> to vector<1x32xf32>
    %79 = vector.shape_cast %78 : vector<1x32xf32> to vector<1x1x1x32xf32>
    %80 = vector.broadcast %79 : vector<1x1x1x32xf32> to vector<4x12x12x32xf32>
    %81 = arith.addf %76, %80 : vector<4x12x12x32xf32>
    %82 = vector.shape_cast %81 : vector<4x12x12x32xf32> to vector<24x2x12x32xf32>
    %83 = vector.extract_strided_slice %82 {offsets = [0, 0, 0, 0], sizes = [24, 1, 12, 32], strides = [1, 1, 1, 1]} : vector<24x2x12x32xf32> to vector<24x1x12x32xf32>
    %84 = vector.shape_cast %83 : vector<24x1x12x32xf32> to vector<24x12x32xf32>
    %85 = vector.extract_strided_slice %82 {offsets = [0, 1, 0, 0], sizes = [24, 1, 12, 32], strides = [1, 1, 1, 1]} : vector<24x2x12x32xf32> to vector<24x1x12x32xf32>
    %86 = vector.shape_cast %85 : vector<24x1x12x32xf32> to vector<24x12x32xf32>
    %87 = arith.maximumf %84, %86 : vector<24x12x32xf32>
    %88 = vector.shape_cast %87 : vector<24x12x32xf32> to vector<24x6x2x32xf32>
    %89 = vector.extract_strided_slice %88 {offsets = [0, 0, 0, 0], sizes = [24, 6, 1, 32], strides = [1, 1, 1, 1]} : vector<24x6x2x32xf32> to vector<24x6x1x32xf32>
    %90 = vector.shape_cast %89 : vector<24x6x1x32xf32> to vector<24x6x32xf32>
    %91 = vector.extract_strided_slice %88 {offsets = [0, 0, 1, 0], sizes = [24, 6, 1, 32], strides = [1, 1, 1, 1]} : vector<24x6x2x32xf32> to vector<24x6x1x32xf32>
    %92 = vector.shape_cast %91 : vector<24x6x1x32xf32> to vector<24x6x32xf32>
    %93 = arith.maximumf %90, %92 : vector<24x6x32xf32>
    %94 = vector.shape_cast %93 : vector<24x6x32xf32> to vector<4x6x6x32xf32>
    %95 = vector.extract_strided_slice %94 {offsets = [0, 0, 0, 0], sizes = [4, 4, 4, 32], strides = [1, 1, 1, 1]} : vector<4x6x6x32xf32> to vector<4x4x4x32xf32>
    %96 = vector.extract_strided_slice %94 {offsets = [0, 0, 1, 0], sizes = [4, 4, 4, 32], strides = [1, 1, 1, 1]} : vector<4x6x6x32xf32> to vector<4x4x4x32xf32>
    %97 = vector.extract_strided_slice %94 {offsets = [0, 0, 2, 0], sizes = [4, 4, 4, 32], strides = [1, 1, 1, 1]} : vector<4x6x6x32xf32> to vector<4x4x4x32xf32>
    %98 = vector.extract_strided_slice %94 {offsets = [0, 1, 0, 0], sizes = [4, 4, 4, 32], strides = [1, 1, 1, 1]} : vector<4x6x6x32xf32> to vector<4x4x4x32xf32>
    %99 = vector.extract_strided_slice %94 {offsets = [0, 1, 1, 0], sizes = [4, 4, 4, 32], strides = [1, 1, 1, 1]} : vector<4x6x6x32xf32> to vector<4x4x4x32xf32>
    %100 = vector.extract_strided_slice %94 {offsets = [0, 1, 2, 0], sizes = [4, 4, 4, 32], strides = [1, 1, 1, 1]} : vector<4x6x6x32xf32> to vector<4x4x4x32xf32>
    %101 = vector.extract_strided_slice %94 {offsets = [0, 2, 0, 0], sizes = [4, 4, 4, 32], strides = [1, 1, 1, 1]} : vector<4x6x6x32xf32> to vector<4x4x4x32xf32>
    %102 = vector.extract_strided_slice %94 {offsets = [0, 2, 1, 0], sizes = [4, 4, 4, 32], strides = [1, 1, 1, 1]} : vector<4x6x6x32xf32> to vector<4x4x4x32xf32>
    %103 = vector.extract_strided_slice %94 {offsets = [0, 2, 2, 0], sizes = [4, 4, 4, 32], strides = [1, 1, 1, 1]} : vector<4x6x6x32xf32> to vector<4x4x4x32xf32>
    %104 = tpu.concatenate %95, %96, %97, %98, %99, %100, %101, %102, %103 in 3 : vector<4x4x4x32xf32>, vector<4x4x4x32xf32>, vector<4x4x4x32xf32>, vector<4x4x4x32xf32>, vector<4x4x4x32xf32>, vector<4x4x4x32xf32>, vector<4x4x4x32xf32>, vector<4x4x4x32xf32>, vector<4x4x4x32xf32> -> vector<4x4x4x288xf32>
    %105 = vector.shape_cast %104 : vector<4x4x4x288xf32> to vector<64x288xf32>
    %c0_40 = arith.constant 0 : index
    %c0_41 = arith.constant 0 : index
    %c0_42 = arith.constant 0 : index
    %106 = vector.load %arg5[%c0_40, %c0_41, %c0_42] : memref<1x288x64xf32, #tpu.memory_space<vmem>>, vector<1x288x64xf32>
    %107 = vector.shape_cast %106 : vector<1x288x64xf32> to vector<288x64xf32>
    %cst_43 = arith.constant dense<0.000000e+00> : vector<64x64xf32>
    %108 = tpu.matmul %105, %107, %cst_43 {dimension_numbers = #tpu.dot_dimension_numbers<[1], [0], [0], [1], [0, 0, 1, 1], [], []>} : vector<64x288xf32>, vector<288x64xf32>, vector<64x64xf32> -> vector<64x64xf32>
    %c0_44 = arith.constant 0 : index
    %c0_45 = arith.constant 0 : index
    %c0_46 = arith.constant 0 : index
    %109 = vector.load %arg6[%c0_44, %c0_45, %c0_46] : memref<1x1x64xf32, #tpu.memory_space<vmem>>, vector<1x1x64xf32>
    %110 = vector.shape_cast %109 : vector<1x1x64xf32> to vector<1x64xf32>
    %111 = vector.broadcast %110 : vector<1x64xf32> to vector<64x64xf32>
    %112 = arith.addf %108, %111 : vector<64x64xf32>
    %cst_47 = arith.constant 0.000000e+00 : f32
    %113 = vector.broadcast %cst_47 : f32 to vector<64x64xf32>
    %114 = arith.maximumf %112, %113 : vector<64x64xf32>
    %c0_48 = arith.constant 0 : index
    %c0_49 = arith.constant 0 : index
    %c0_50 = arith.constant 0 : index
    %115 = vector.load %arg7[%c0_48, %c0_49, %c0_50] : memref<1x1x64xf32, #tpu.memory_space<vmem>>, vector<1x1x64xf32>
    %116 = vector.shape_cast %115 : vector<1x1x64xf32> to vector<1x64xf32>
    %117 = vector.broadcast %116 : vector<1x64xf32> to vector<64x64xf32>
    %118 = arith.mulf %114, %117 : vector<64x64xf32>
    %c0_51 = arith.constant 0 : index
    %c0_52 = arith.constant 0 : index
    %c0_53 = arith.constant 0 : index
    %119 = vector.load %arg8[%c0_51, %c0_52, %c0_53] : memref<1x1x64xf32, #tpu.memory_space<vmem>>, vector<1x1x64xf32>
    %120 = vector.shape_cast %119 : vector<1x1x64xf32> to vector<1x64xf32>
    %121 = vector.broadcast %120 : vector<1x64xf32> to vector<64x64xf32>
    %122 = arith.addf %118, %121 : vector<64x64xf32>
    %123 = vector.shape_cast %122 : vector<64x64xf32> to vector<4x4x4x64xf32>
    %124 = vector.shape_cast %123 : vector<4x4x4x64xf32> to vector<8x2x4x64xf32>
    %125 = vector.extract_strided_slice %124 {offsets = [0, 0, 0, 0], sizes = [8, 1, 4, 64], strides = [1, 1, 1, 1]} : vector<8x2x4x64xf32> to vector<8x1x4x64xf32>
    %126 = vector.shape_cast %125 : vector<8x1x4x64xf32> to vector<8x4x64xf32>
    %127 = vector.extract_strided_slice %124 {offsets = [0, 1, 0, 0], sizes = [8, 1, 4, 64], strides = [1, 1, 1, 1]} : vector<8x2x4x64xf32> to vector<8x1x4x64xf32>
    %128 = vector.shape_cast %127 : vector<8x1x4x64xf32> to vector<8x4x64xf32>
    %129 = arith.maximumf %126, %128 : vector<8x4x64xf32>
    %130 = vector.shape_cast %129 : vector<8x4x64xf32> to vector<8x2x2x64xf32>
    %131 = vector.extract_strided_slice %130 {offsets = [0, 0, 0, 0], sizes = [8, 2, 1, 64], strides = [1, 1, 1, 1]} : vector<8x2x2x64xf32> to vector<8x2x1x64xf32>
    %132 = vector.shape_cast %131 : vector<8x2x1x64xf32> to vector<8x2x64xf32>
    %133 = vector.extract_strided_slice %130 {offsets = [0, 0, 1, 0], sizes = [8, 2, 1, 64], strides = [1, 1, 1, 1]} : vector<8x2x2x64xf32> to vector<8x2x1x64xf32>
    %134 = vector.shape_cast %133 : vector<8x2x1x64xf32> to vector<8x2x64xf32>
    %135 = arith.maximumf %132, %134 : vector<8x2x64xf32>
    %136 = vector.shape_cast %135 : vector<8x2x64xf32> to vector<4x2x2x64xf32>
    %137 = vector.extract_strided_slice %136 {offsets = [0, 0, 0, 0], sizes = [4, 1, 1, 64], strides = [1, 1, 1, 1]} : vector<4x2x2x64xf32> to vector<4x1x1x64xf32>
    %138 = vector.shape_cast %137 : vector<4x1x1x64xf32> to vector<4x64xf32>
    %139 = vector.extract_strided_slice %136 {offsets = [0, 0, 1, 0], sizes = [4, 1, 1, 64], strides = [1, 1, 1, 1]} : vector<4x2x2x64xf32> to vector<4x1x1x64xf32>
    %140 = vector.shape_cast %139 : vector<4x1x1x64xf32> to vector<4x64xf32>
    %141 = vector.extract_strided_slice %136 {offsets = [0, 1, 0, 0], sizes = [4, 1, 1, 64], strides = [1, 1, 1, 1]} : vector<4x2x2x64xf32> to vector<4x1x1x64xf32>
    %142 = vector.shape_cast %141 : vector<4x1x1x64xf32> to vector<4x64xf32>
    %143 = vector.extract_strided_slice %136 {offsets = [0, 1, 1, 0], sizes = [4, 1, 1, 64], strides = [1, 1, 1, 1]} : vector<4x2x2x64xf32> to vector<4x1x1x64xf32>
    %144 = vector.shape_cast %143 : vector<4x1x1x64xf32> to vector<4x64xf32>
    %145 = tpu.concatenate %138, %140, %142, %144 in 1 : vector<4x64xf32>, vector<4x64xf32>, vector<4x64xf32>, vector<4x64xf32> -> vector<4x256xf32>
    %c0_54 = arith.constant 0 : index
    %c0_55 = arith.constant 0 : index
    %c0_56 = arith.constant 0 : index
    %146 = vector.load %arg9[%c0_54, %c0_55, %c0_56] : memref<1x256x128xf32, #tpu.memory_space<vmem>>, vector<1x256x128xf32>
    %147 = vector.shape_cast %146 : vector<1x256x128xf32> to vector<256x128xf32>
    %cst_57 = arith.constant dense<0.000000e+00> : vector<4x128xf32>
    %148 = tpu.matmul %145, %147, %cst_57 {dimension_numbers = #tpu.dot_dimension_numbers<[1], [0], [0], [1], [0, 0, 1, 1], [], []>} : vector<4x256xf32>, vector<256x128xf32>, vector<4x128xf32> -> vector<4x128xf32>
    %c0_58 = arith.constant 0 : index
    %c0_59 = arith.constant 0 : index
    %c0_60 = arith.constant 0 : index
    %149 = vector.load %arg10[%c0_58, %c0_59, %c0_60] : memref<1x1x128xf32, #tpu.memory_space<vmem>>, vector<1x1x128xf32>
    %150 = vector.shape_cast %149 : vector<1x1x128xf32> to vector<1x128xf32>
    %151 = vector.broadcast %150 : vector<1x128xf32> to vector<4x128xf32>
    %152 = arith.addf %148, %151 : vector<4x128xf32>
    %cst_61 = arith.constant 0.000000e+00 : f32
    %153 = vector.broadcast %cst_61 : f32 to vector<4x128xf32>
    %154 = arith.maximumf %152, %153 : vector<4x128xf32>
    %c0_62 = arith.constant 0 : index
    %c0_63 = arith.constant 0 : index
    %c0_64 = arith.constant 0 : index
    %155 = vector.load %arg11[%c0_62, %c0_63, %c0_64] : memref<1x128x10xf32, #tpu.memory_space<vmem>>, vector<1x128x10xf32>
    %156 = vector.shape_cast %155 : vector<1x128x10xf32> to vector<128x10xf32>
    %cst_65 = arith.constant dense<0.000000e+00> : vector<4x10xf32>
    %157 = tpu.matmul %154, %156, %cst_65 {dimension_numbers = #tpu.dot_dimension_numbers<[1], [0], [0], [1], [0, 0, 1, 1], [], []>} : vector<4x128xf32>, vector<128x10xf32>, vector<4x10xf32> -> vector<4x10xf32>
    %c0_66 = arith.constant 0 : index
    %c0_67 = arith.constant 0 : index
    %c0_68 = arith.constant 0 : index
    %158 = vector.load %arg12[%c0_66, %c0_67, %c0_68] : memref<1x1x10xf32, #tpu.memory_space<vmem>>, vector<1x1x10xf32>
    %159 = vector.shape_cast %158 : vector<1x1x10xf32> to vector<1x10xf32>
    %160 = vector.broadcast %159 : vector<1x10xf32> to vector<4x10xf32>
    %161 = arith.addf %157, %160 : vector<4x10xf32>
    %cst_69 = arith.constant dense<0xFF800000> : vector<4xf32>
    %162 = vector.multi_reduction <maximumf>, %161, %cst_69 [1] : vector<4x10xf32> to vector<4xf32>
    %163 = vector.shape_cast %162 : vector<4xf32> to vector<4x1xf32>
    %164 = vector.broadcast %163 : vector<4x1xf32> to vector<4x10xf32>
    %165 = arith.subf %161, %164 : vector<4x10xf32>
    %166 = math.exp %165 : vector<4x10xf32>
    %cst_70 = arith.constant dense<0.000000e+00> : vector<4xf32>
    %167 = vector.multi_reduction <add>, %166, %cst_70 [1] : vector<4x10xf32> to vector<4xf32>
    %168 = vector.shape_cast %167 : vector<4xf32> to vector<4x1xf32>
    %169 = tpu.reciprocal %168 {approx = true} : vector<4x1xf32> -> vector<4x1xf32>
    %170 = vector.broadcast %169 : vector<4x1xf32> to vector<4x10xf32>
    %171 = arith.mulf %166, %170 : vector<4x10xf32>
    %172 = vector.extract_strided_slice %171 {offsets = [0, 0], sizes = [2, 10], strides = [1, 1]} : vector<4x10xf32> to vector<2x10xf32>
    %173 = vector.extract_strided_slice %171 {offsets = [2, 0], sizes = [2, 10], strides = [1, 1]} : vector<4x10xf32> to vector<2x10xf32>
    %c0_71 = arith.constant 0 : index
    %c0_72 = arith.constant 0 : index
    %174 = vector.load %arg16[%c0_71, %c0_72] : memref<2x10xf32, #tpu.memory_space<vmem>>, vector<2x10xf32>
    tpu.vector_store %arg16[%c0_71, %c0_72], %172 {strides = array<i32>} : memref<2x10xf32, #tpu.memory_space<vmem>>, vector<2x10xf32>,
    %c0_73 = arith.constant 0 : index
    %c0_74 = arith.constant 0 : index
    %175 = vector.load %arg17[%c0_73, %c0_74] : memref<2x10xf32, #tpu.memory_space<vmem>>, vector<2x10xf32>
    tpu.vector_store %arg17[%c0_73, %c0_74], %173 {strides = array<i32>} : memref<2x10xf32, #tpu.memory_space<vmem>>, vector<2x10xf32>,
    %c0_75 = arith.constant 0 : index
    %c0_76 = arith.constant 0 : index
    %176 = vector.load %arg13[%c0_75, %c0_76] : memref<10x2xf32, #tpu.memory_space<vmem>>, vector<10x2xf32>
    %cst_77 = arith.constant dense<0.000000e+00> : vector<2x2xf32>
    %177 = tpu.matmul %172, %176, %cst_77 {dimension_numbers = #tpu.dot_dimension_numbers<[1], [0], [0], [1], [0, 0, 1, 1], [], []>} : vector<2x10xf32>, vector<10x2xf32>, vector<2x2xf32> -> vector<2x2xf32>
    %c0_78 = arith.constant 0 : index
    %c0_79 = arith.constant 0 : index
    %178 = vector.load %arg14[%c0_78, %c0_79] : memref<10x2xf32, #tpu.memory_space<vmem>>, vector<10x2xf32>
    %cst_80 = arith.constant dense<0.000000e+00> : vector<2x2xf32>
    %179 = tpu.matmul %173, %178, %cst_80 {dimension_numbers = #tpu.dot_dimension_numbers<[1], [0], [0], [1], [0, 0, 1, 1], [], []>} : vector<2x10xf32>, vector<10x2xf32>, vector<2x2xf32> -> vector<2x2xf32>
    %180 = arith.addf %177, %179 : vector<2x2xf32>
    %c0_81 = arith.constant 0 : index
    %c0_82 = arith.constant 0 : index
    %181 = vector.load %arg15[%c0_81, %c0_82] : memref<1x2xf32, #tpu.memory_space<vmem>>, vector<1x2xf32>
    %182 = vector.broadcast %181 : vector<1x2xf32> to vector<2x2xf32>
    %183 = arith.addf %180, %182 : vector<2x2xf32>
    %cst_83 = arith.constant dense<0xFF800000> : vector<2xf32>
    %184 = vector.multi_reduction <maximumf>, %183, %cst_83 [1] : vector<2x2xf32> to vector<2xf32>
    %185 = vector.shape_cast %184 : vector<2xf32> to vector<2x1xf32>
    %186 = vector.broadcast %185 : vector<2x1xf32> to vector<2x2xf32>
    %187 = arith.subf %183, %186 : vector<2x2xf32>
    %188 = math.exp %187 : vector<2x2xf32>
    %cst_84 = arith.constant dense<0.000000e+00> : vector<2xf32>
    %189 = vector.multi_reduction <add>, %188, %cst_84 [1] : vector<2x2xf32> to vector<2xf32>
    %190 = vector.shape_cast %189 : vector<2xf32> to vector<2x1xf32>
    %191 = tpu.reciprocal %190 {approx = true} : vector<2x1xf32> -> vector<2x1xf32>
    %192 = vector.broadcast %191 : vector<2x1xf32> to vector<2x2xf32>
    %193 = arith.mulf %188, %192 : vector<2x2xf32>
    %c0_85 = arith.constant 0 : index
    %c0_86 = arith.constant 0 : index
    %194 = vector.load %arg18[%c0_85, %c0_86] : memref<2x2xf32, #tpu.memory_space<vmem>>, vector<2x2xf32>
    tpu.vector_store %arg18[%c0_85, %c0_86], %193 {strides = array<i32>} : memref<2x2xf32, #tpu.memory_space<vmem>>, vector<2x2xf32>,
    return
  }
}

</mosaic_0001>

<llo_original>
// kernel: siamese_forward.1
$region0: #{siamese_forward.1}
  #allocation0 [shape = 'u32[]', space=smem, size = 0x4, offset = 0x4, fixed_abs, tag = 'smem constant byte address 0x4 - core index']
  #allocation1 [shape = 'u32[144,128]{1,0:T(1,128)}', space=vmem, size = 0x12000, scoped, tag = 'internal scratch']
  %s0 = inlined_call_operand.vmem [shape: f32[4,14,14,1], index: 0, kind: input, shape index: {}]
  %s1 = inlined_call_operand.vmem [shape: f32[1,9,1,32], index: 1, kind: input, shape index: {}]
  %s2 = inlined_call_operand.vmem [shape: f32[1,1,32], index: 2, kind: input, shape index: {}]
  %s3 = inlined_call_operand.vmem [shape: f32[1,1,32], index: 3, kind: input, shape index: {}]
  %s4 = inlined_call_operand.vmem [shape: f32[1,1,32], index: 4, kind: input, shape index: {}]
  %s5 = inlined_call_operand.vmem [shape: f32[1,288,64], index: 5, kind: input, shape index: {}]
  %s6 = inlined_call_operand.vmem [shape: f32[1,1,64], index: 6, kind: input, shape index: {}]
  %s7 = inlined_call_operand.vmem [shape: f32[1,1,64], index: 7, kind: input, shape index: {}]
  %s8 = inlined_call_operand.vmem [shape: f32[1,1,64], index: 8, kind: input, shape index: {}]
  %s9 = inlined_call_operand.vmem [shape: f32[1,256,128], index: 9, kind: input, shape index: {}]
  %s10 = inlined_call_operand.vmem [shape: f32[1,1,128], index: 10, kind: input, shape index: {}]
  %s11 = inlined_call_operand.vmem [shape: f32[1,128,10], index: 11, kind: input, shape index: {}]
  %s12 = inlined_call_operand.vmem [shape: f32[1,1,10], index: 12, kind: input, shape index: {}]
  %s13 = inlined_call_operand.vmem [shape: f32[10,2], index: 13, kind: input, shape index: {}]
  %s14 = inlined_call_operand.vmem [shape: f32[10,2], index: 14, kind: input, shape index: {}]
  %s15 = inlined_call_operand.vmem [shape: f32[1,2], index: 15, kind: input, shape index: {}]
  %s16 = inlined_call_operand.hbm [shape: f32[2,10], index: 16, kind: output, shape index: {0}]
  %s17 = inlined_call_operand.hbm [shape: f32[2,10], index: 17, kind: output, shape index: {1}]
  %s18 = inlined_call_operand.hbm [shape: f32[2,2], index: 18, kind: output, shape index: {2}]
  %19 = xla_tuple %s16, %s17, %s18
  %s20 = sld [smem:[#allocation0]]
  $region90: #{siamese_forward.1} parent=0
    _
  %s22 = ssub.s32 1, %s20
  %s23 = scalar_select 0, %s22, %s20
  $region1: #{siamese_forward.1} parent=0
    #allocation2 [shape = 'u8[1024]{0}', space=vmem, size = 0x400, scoped, tag = 'output window, operand 0, single buffered']
    #allocation3 [shape = 's32[1]{0}', space=sflag, size = 0x4, scoped, tag = 'scoped memory for siamese_forward.1']
    #allocation4 [shape = 'u8[1024]{0}', space=vmem, size = 0x400, scoped, tag = 'output window, operand 1, single buffered']
    #allocation5 [shape = 's32[1]{0}', space=sflag, size = 0x4, scoped, tag = 'scoped memory for siamese_forward.1']
    #allocation6 [shape = 'u8[1024]{0}', space=vmem, size = 0x400, scoped, tag = 'output window, operand 2, single buffered']
    %24 = vsyncpa [#allocation3], 0
    %25 = vsyncpa [#allocation5], 0
    // Predicated region
    $region2: #{siamese_forward.1} parent=1 // pred_check
      _
    $region3: #{siamese_forward.1} parent=1 // pred_check_branch
      %27 = sbr.rel (0) target = $region5
    $region4: #{siamese_forward.1} parent=1 // pred_region
      _
    $region5: #{siamese_forward.1} parent=1 // pred_fallthru
      _
    // Predicated region
    $region6: #{siamese_forward.1} parent=1 // pred_check
      _
    $region7: #{siamese_forward.1} parent=1 // pred_check_branch
      %29 = sbr.rel (0) target = $region9
    $region8: #{siamese_forward.1} parent=1 // pred_region
      _
    $region9: #{siamese_forward.1} parent=1 // pred_fallthru
      _
    // Predicated region
    $region10: #{siamese_forward.1} parent=1 // pred_check
      _
    $region11: #{siamese_forward.1} parent=1 // pred_check_branch
      %31 = sbr.rel (0) target = $region13
    $region12: #{siamese_forward.1} parent=1 // pred_region
      _
    $region13: #{siamese_forward.1} parent=1 // pred_fallthru
      _
    // Predicated region
    $region14: #{siamese_forward.1} parent=1 // pred_check
      _
    $region15: #{siamese_forward.1} parent=1 // pred_check_branch
      %33 = sbr.rel (0) target = $region17
    $region16: #{siamese_forward.1} parent=1 // pred_region
      _
    $region17: #{siamese_forward.1} parent=1 // pred_fallthru
      _
    // Predicated region
    $region18: #{siamese_forward.1} parent=1 // pred_check
      _
    $region19: #{siamese_forward.1} parent=1 // pred_check_branch
      %35 = sbr.rel (0) target = $region21
    $region20: #{siamese_forward.1} parent=1 // pred_region
      _
    $region21: #{siamese_forward.1} parent=1 // pred_fallthru
      _
    // Predicated region
    $region22: #{siamese_forward.1} parent=1 // pred_check
      _
    $region23: #{siamese_forward.1} parent=1 // pred_check_branch
      %37 = sbr.rel (0) target = $region25
    $region24: #{siamese_forward.1} parent=1 // pred_region
      _
    $region25: #{siamese_forward.1} parent=1 // pred_fallthru
      _
    // Predicated region
    $region26: #{siamese_forward.1} parent=1 // pred_check
      _
    $region27: #{siamese_forward.1} parent=1 // pred_check_branch
      %39 = sbr.rel (0) target = $region29
    $region28: #{siamese_forward.1} parent=1 // pred_region
      _
    $region29: #{siamese_forward.1} parent=1 // pred_fallthru
      _
    // Predicated region
    $region30: #{siamese_forward.1} parent=1 // pred_check
      _
    $region31: #{siamese_forward.1} parent=1 // pred_check_branch
      %41 = sbr.rel (0) target = $region33
    $region32: #{siamese_forward.1} parent=1 // pred_region
      _
    $region33: #{siamese_forward.1} parent=1 // pred_fallthru
      _
    // Predicated region
    $region34: #{siamese_forward.1} parent=1 // pred_check
      _
    $region35: #{siamese_forward.1} parent=1 // pred_check_branch
      %43 = sbr.rel (0) target = $region37
    $region36: #{siamese_forward.1} parent=1 // pred_region
      _
    $region37: #{siamese_forward.1} parent=1 // pred_fallthru
      _
    // Predicated region
    $region38: #{siamese_forward.1} parent=1 // pred_check
      _
    $region39: #{siamese_forward.1} parent=1 // pred_check_branch
      %45 = sbr.rel (0) target = $region41
    $region40: #{siamese_forward.1} parent=1 // pred_region
      _
    $region41: #{siamese_forward.1} parent=1 // pred_fallthru
      _
    // Predicated region
    $region42: #{siamese_forward.1} parent=1 // pred_check
      _
    $region43: #{siamese_forward.1} parent=1 // pred_check_branch
      %47 = sbr.rel (0) target = $region45
    $region44: #{siamese_forward.1} parent=1 // pred_region
      _
    $region45: #{siamese_forward.1} parent=1 // pred_fallthru
      _
    // Predicated region
    $region46: #{siamese_forward.1} parent=1 // pred_check
      _
    $region47: #{siamese_forward.1} parent=1 // pred_check_branch
      %49 = sbr.rel (0) target = $region49
    $region48: #{siamese_forward.1} parent=1 // pred_region
      _
    $region49: #{siamese_forward.1} parent=1 // pred_fallthru
      _
    // Predicated region
    $region50: #{siamese_forward.1} parent=1 // pred_check
      _
    $region51: #{siamese_forward.1} parent=1 // pred_check_branch
      %51 = sbr.rel (0) target = $region53
    $region52: #{siamese_forward.1} parent=1 // pred_region
      _
    $region53: #{siamese_forward.1} parent=1 // pred_fallthru
      _
    // Predicated region
    $region54: #{siamese_forward.1} parent=1 // pred_check
      _
    $region55: #{siamese_forward.1} parent=1 // pred_check_branch
      %53 = sbr.rel (0) target = $region57
    $region56: #{siamese_forward.1} parent=1 // pred_region
      _
    $region57: #{siamese_forward.1} parent=1 // pred_fallthru
      _
    // Predicated region
    $region58: #{siamese_forward.1} parent=1 // pred_check
      _
    $region59: #{siamese_forward.1} parent=1 // pred_check_branch
      %55 = sbr.rel (0) target = $region61
    $region60: #{siamese_forward.1} parent=1 // pred_region
      _
    $region61: #{siamese_forward.1} parent=1 // pred_fallthru
      _
    // Predicated region
    $region62: #{siamese_forward.1} parent=1 // pred_check
      _
    $region63: #{siamese_forward.1} parent=1 // pred_check_branch
      %57 = sbr.rel (0) target = $region65
    $region64: #{siamese_forward.1} parent=1 // pred_region
      _
    $region65: #{siamese_forward.1} parent=1 // pred_fallthru
      _
    %v58 = vld [vmem:[%s0] sm:$0xff]
    %v59 = vld [vmem:[%s0 + $0x8] sm:$0x3f]
    %v60 = vld [vmem:[%s0 + $0x10] sm:$0xff]
    %v61 = vld [vmem:[%s0 + $0x18] sm:$0x3f]
    %v62 = vld [vmem:[%s0 + $0x20] sm:$0xff]
    %v63 = vld [vmem:[%s0 + $0x28] sm:$0x3f]
    %v64 = vld [vmem:[%s0 + $0x30] sm:$0xff]
    %v65 = vld [vmem:[%s0 + $0x38] sm:$0x3f]
    %v66 = vld [vmem:[%s0 + $0x40] sm:$0xff]
    %v67 = vld [vmem:[%s0 + $0x48] sm:$0x3f]
    %v68 = vld [vmem:[%s0 + $0x50] sm:$0xff]
    %v69 = vld [vmem:[%s0 + $0x58] sm:$0x3f]
    %v70 = vld [vmem:[%s0 + $0x60] sm:$0xff]
    %v71 = vld [vmem:[%s0 + $0x68] sm:$0x3f]
    %v72 = vld [vmem:[%s0 + $0x70] sm:$0xff]
    %v73 = vld [vmem:[%s0 + $0x78] sm:$0x3f]
    %v74 = vld [vmem:[%s0 + $0x80] sm:$0xff]
    %v75 = vld [vmem:[%s0 + $0x88] sm:$0x3f]
    %v76 = vld [vmem:[%s0 + $0x90] sm:$0xff]
    %v77 = vld [vmem:[%s0 + $0x98] sm:$0x3f]
    %v78 = vld [vmem:[%s0 + $0xa0] sm:$0xff]
    %v79 = vld [vmem:[%s0 + $0xa8] sm:$0x3f]
    %v80 = vld [vmem:[%s0 + $0xb0] sm:$0xff]
    %v81 = vld [vmem:[%s0 + $0xb8] sm:$0x3f]
    %v82 = vld [vmem:[%s0 + $0xc0] sm:$0xff]
    %v83 = vld [vmem:[%s0 + $0xc8] sm:$0x3f]
    %v84 = vld [vmem:[%s0 + $0xd0] sm:$0xff]
    %v85 = vld [vmem:[%s0 + $0xd8] sm:$0x3f]
    %v86 = vld [vmem:[%s0 + $0xe0] sm:$0xff]
    %v87 = vld [vmem:[%s0 + $0xe8] sm:$0x3f]
    %v88 = vld [vmem:[%s0 + $0xf0] sm:$0xff]
    %v89 = vld [vmem:[%s0 + $0xf8] sm:$0x3f]
    %v90 = vld [vmem:[%s0 + $0x100] sm:$0xff]
    %v91 = vld [vmem:[%s0 + $0x108] sm:$0x3f]
    %v92 = vld [vmem:[%s0 + $0x110] sm:$0xff]
    %v93 = vld [vmem:[%s0 + $0x118] sm:$0x3f]
    %v94 = vld [vmem:[%s0 + $0x120] sm:$0xff]
    %v95 = vld [vmem:[%s0 + $0x128] sm:$0x3f]
    %v96 = vld [vmem:[%s0 + $0x130] sm:$0xff]
    %v97 = vld [vmem:[%s0 + $0x138] sm:$0x3f]
    %v98 = vld [vmem:[%s0 + $0x140] sm:$0xff]
    %v99 = vld [vmem:[%s0 + $0x148] sm:$0x3f]
    %v100 = vld [vmem:[%s0 + $0x150] sm:$0xff]
    %v101 = vld [vmem:[%s0 + $0x158] sm:$0x3f]
    %v102 = vld [vmem:[%s0 + $0x160] sm:$0xff]
    %v103 = vld [vmem:[%s0 + $0x168] sm:$0x3f]
    %v104 = vld [vmem:[%s0 + $0x170] sm:$0xff]
    %v105 = vld [vmem:[%s0 + $0x178] sm:$0x3f]
    %v106 = vld [vmem:[%s0 + $0x180] sm:$0xff]
    %v107 = vld [vmem:[%s0 + $0x188] sm:$0x3f]
    %v108 = vld [vmem:[%s0 + $0x190] sm:$0xff]
    %v109 = vld [vmem:[%s0 + $0x198] sm:$0x3f]
    %v110 = vld [vmem:[%s0 + $0x1a0] sm:$0xff]
    %v111 = vld [vmem:[%s0 + $0x1a8] sm:$0x3f]
    %v112 = vld [vmem:[%s0 + $0x1b0] sm:$0xff]
    %v113 = vld [vmem:[%s0 + $0x1b8] sm:$0x3f]
    %v114 = vld [vmem:[%s0 + $0x1c0] sm:$0xff]
    %v115 = vld [vmem:[%s0 + $0x1c8] sm:$0x3f]
    %v116 = vld [vmem:[%s0 + $0x1d0] sm:$0xff]
    %v117 = vld [vmem:[%s0 + $0x1d8] sm:$0x3f]
    %v118 = vld [vmem:[%s0 + $0x1e0] sm:$0xff]
    %v119 = vld [vmem:[%s0 + $0x1e8] sm:$0x3f]
    %v120 = vld [vmem:[%s0 + $0x1f0] sm:$0xff]
    %v121 = vld [vmem:[%s0 + $0x1f8] sm:$0x3f]
    %v122 = vld [vmem:[%s0 + $0x200] sm:$0xff]
    %v123 = vld [vmem:[%s0 + $0x208] sm:$0x3f]
    %v124 = vld [vmem:[%s0 + $0x210] sm:$0xff]
    %v125 = vld [vmem:[%s0 + $0x218] sm:$0x3f]
    %v126 = vld [vmem:[%s0 + $0x220] sm:$0xff]
    %v127 = vld [vmem:[%s0 + $0x228] sm:$0x3f]
    %v128 = vld [vmem:[%s0 + $0x230] sm:$0xff]
    %v129 = vld [vmem:[%s0 + $0x238] sm:$0x3f]
    %v130 = vld [vmem:[%s0 + $0x240] sm:$0xff]
    %v131 = vld [vmem:[%s0 + $0x248] sm:$0x3f]
    %v132 = vld [vmem:[%s0 + $0x250] sm:$0xff]
    %v133 = vld [vmem:[%s0 + $0x258] sm:$0x3f]
    %v134 = vld [vmem:[%s0 + $0x260] sm:$0xff]
    %v135 = vld [vmem:[%s0 + $0x268] sm:$0x3f]
    %v136 = vld [vmem:[%s0 + $0x270] sm:$0xff]
    %v137 = vld [vmem:[%s0 + $0x278] sm:$0x3f]
    %v138 = vld [vmem:[%s0 + $0x280] sm:$0xff]
    %v139 = vld [vmem:[%s0 + $0x288] sm:$0x3f]
    %v140 = vld [vmem:[%s0 + $0x290] sm:$0xff]
    %v141 = vld [vmem:[%s0 + $0x298] sm:$0x3f]
    %v142 = vld [vmem:[%s0 + $0x2a0] sm:$0xff]
    %v143 = vld [vmem:[%s0 + $0x2a8] sm:$0x3f]
    %v144 = vld [vmem:[%s0 + $0x2b0] sm:$0xff]
    %v145 = vld [vmem:[%s0 + $0x2b8] sm:$0x3f]
    %v146 = vld [vmem:[%s0 + $0x2c0] sm:$0xff]
    %v147 = vld [vmem:[%s0 + $0x2c8] sm:$0x3f]
    %v148 = vld [vmem:[%s0 + $0x2d0] sm:$0xff]
    %v149 = vld [vmem:[%s0 + $0x2d8] sm:$0x3f]
    %v150 = vld [vmem:[%s0 + $0x2e0] sm:$0xff]
    %v151 = vld [vmem:[%s0 + $0x2e8] sm:$0x3f]
    %v152 = vld [vmem:[%s0 + $0x2f0] sm:$0xff]
    %v153 = vld [vmem:[%s0 + $0x2f8] sm:$0x3f]
    %v154 = vld [vmem:[%s0 + $0x300] sm:$0xff]
    %v155 = vld [vmem:[%s0 + $0x308] sm:$0x3f]
    %v156 = vld [vmem:[%s0 + $0x310] sm:$0xff]
    %v157 = vld [vmem:[%s0 + $0x318] sm:$0x3f]
    %v158 = vld [vmem:[%s0 + $0x320] sm:$0xff]
    %v159 = vld [vmem:[%s0 + $0x328] sm:$0x3f]
    %v160 = vld [vmem:[%s0 + $0x330] sm:$0xff]
    %v161 = vld [vmem:[%s0 + $0x338] sm:$0x3f]
    %v162 = vld [vmem:[%s0 + $0x340] sm:$0xff]
    %v163 = vld [vmem:[%s0 + $0x348] sm:$0x3f]
    %v164 = vld [vmem:[%s0 + $0x350] sm:$0xff]
    %v165 = vld [vmem:[%s0 + $0x358] sm:$0x3f]
    %v166 = vld [vmem:[%s0 + $0x360] sm:$0xff]
    %v167 = vld [vmem:[%s0 + $0x368] sm:$0x3f]
    %v168 = vld [vmem:[%s0 + $0x370] sm:$0xff]
    %v169 = vld [vmem:[%s0 + $0x378] sm:$0x3f]
    %171 = vset.pattern.permute.xlu0 0
    %172 = vperm.xlu0 %171, %v58
    %v173 = vpop.permute.xlu0 %172
    %176 = vset.pattern.permute.xlu0 0
    %177 = vperm.xlu0 %176, %v59
    %v178 = vpop.permute.xlu0 %177
    %181 = vset.pattern.permute.xlu0 0
    %182 = vperm.xlu0 %181, %v60
    %v183 = vpop.permute.xlu0 %182
    %186 = vset.pattern.permute.xlu0 0
    %187 = vperm.xlu0 %186, %v61
    %v188 = vpop.permute.xlu0 %187
    %191 = vset.pattern.permute.xlu0 0
    %192 = vperm.xlu0 %191, %v62
    %v193 = vpop.permute.xlu0 %192
    %196 = vset.pattern.permute.xlu0 0
    %197 = vperm.xlu0 %196, %v63
    %v198 = vpop.permute.xlu0 %197
    %201 = vset.pattern.permute.xlu0 0
    %202 = vperm.xlu0 %201, %v64
    %v203 = vpop.permute.xlu0 %202
    %206 = vset.pattern.permute.xlu0 0
    %207 = vperm.xlu0 %206, %v65
    %v208 = vpop.permute.xlu0 %207
    %211 = vset.pattern.permute.xlu0 0
    %212 = vperm.xlu0 %211, %v66
    %v213 = vpop.permute.xlu0 %212
    %216 = vset.pattern.permute.xlu0 0
    %217 = vperm.xlu0 %216, %v67
    %v218 = vpop.permute.xlu0 %217
    %221 = vset.pattern.permute.xlu0 0
    %222 = vperm.xlu0 %221, %v68
    %v223 = vpop.permute.xlu0 %222
    %226 = vset.pattern.permute.xlu0 0
    %227 = vperm.xlu0 %226, %v69
    %v228 = vpop.permute.xlu0 %227
    %231 = vset.pattern.permute.xlu0 0
    %232 = vperm.xlu0 %231, %v70
    %v233 = vpop.permute.xlu0 %232
    %236 = vset.pattern.permute.xlu0 0
    %237 = vperm.xlu0 %236, %v71
    %v238 = vpop.permute.xlu0 %237
    %241 = vset.pattern.permute.xlu0 0
    %242 = vperm.xlu0 %241, %v72
    %v243 = vpop.permute.xlu0 %242
    %246 = vset.pattern.permute.xlu0 0
    %247 = vperm.xlu0 %246, %v73
    %v248 = vpop.permute.xlu0 %247
    %251 = vset.pattern.permute.xlu0 0
    %252 = vperm.xlu0 %251, %v74
    %v253 = vpop.permute.xlu0 %252
    %256 = vset.pattern.permute.xlu0 0
    %257 = vperm.xlu0 %256, %v75
    %v258 = vpop.permute.xlu0 %257
    %261 = vset.pattern.permute.xlu0 0
    %262 = vperm.xlu0 %261, %v76
    %v263 = vpop.permute.xlu0 %262
    %266 = vset.pattern.permute.xlu0 0
    %267 = vperm.xlu0 %266, %v77
    %v268 = vpop.permute.xlu0 %267
    %271 = vset.pattern.permute.xlu0 0
    %272 = vperm.xlu0 %271, %v78
    %v273 = vpop.permute.xlu0 %272
    %276 = vset.pattern.permute.xlu0 0
    %277 = vperm.xlu0 %276, %v79
    %v278 = vpop.permute.xlu0 %277
    %281 = vset.pattern.permute.xlu0 0
    %282 = vperm.xlu0 %281, %v80
    %v283 = vpop.permute.xlu0 %282
    %286 = vset.pattern.permute.xlu0 0
    %287 = vperm.xlu0 %286, %v81
    %v288 = vpop.permute.xlu0 %287
    %291 = vset.pattern.permute.xlu0 0
    %292 = vperm.xlu0 %291, %v86
    %v293 = vpop.permute.xlu0 %292
    %296 = vset.pattern.permute.xlu0 0
    %297 = vperm.xlu0 %296, %v87
    %v298 = vpop.permute.xlu0 %297
    %301 = vset.pattern.permute.xlu0 0
    %302 = vperm.xlu0 %301, %v88
    %v303 = vpop.permute.xlu0 %302
    %306 = vset.pattern.permute.xlu0 0
    %307 = vperm.xlu0 %306, %v89
    %v308 = vpop.permute.xlu0 %307
    %311 = vset.pattern.permute.xlu0 0
    %312 = vperm.xlu0 %311, %v90
    %v313 = vpop.permute.xlu0 %312
    %316 = vset.pattern.permute.xlu0 0
    %317 = vperm.xlu0 %316, %v91
    %v318 = vpop.permute.xlu0 %317
    %321 = vset.pattern.permute.xlu0 0
    %322 = vperm.xlu0 %321, %v92
    %v323 = vpop.permute.xlu0 %322
    %326 = vset.pattern.permute.xlu0 0
    %327 = vperm.xlu0 %326, %v93
    %v328 = vpop.permute.xlu0 %327
    %331 = vset.pattern.permute.xlu0 0
    %332 = vperm.xlu0 %331, %v94
    %v333 = vpop.permute.xlu0 %332
    %336 = vset.pattern.permute.xlu0 0
    %337 = vperm.xlu0 %336, %v95
    %v338 = vpop.permute.xlu0 %337
    %341 = vset.pattern.permute.xlu0 0
    %342 = vperm.xlu0 %341, %v96
    %v343 = vpop.permute.xlu0 %342
    %346 = vset.pattern.permute.xlu0 0
    %347 = vperm.xlu0 %346, %v97
    %v348 = vpop.permute.xlu0 %347
    %351 = vset.pattern.permute.xlu0 0
    %352 = vperm.xlu0 %351, %v98
    %v353 = vpop.permute.xlu0 %352
    %356 = vset.pattern.permute.xlu0 0
    %357 = vperm.xlu0 %356, %v99
    %v358 = vpop.permute.xlu0 %357
    %361 = vset.pattern.permute.xlu0 0
    %362 = vperm.xlu0 %361, %v100
    %v363 = vpop.permute.xlu0 %362
    %366 = vset.pattern.permute.xlu0 0
    %367 = vperm.xlu0 %366, %v101
    %v368 = vpop.permute.xlu0 %367
    %371 = vset.pattern.permute.xlu0 0
    %372 = vperm.xlu0 %371, %v102
    %v373 = vpop.permute.xlu0 %372
    %376 = vset.pattern.permute.xlu0 0
    %377 = vperm.xlu0 %376, %v103
    %v378 = vpop.permute.xlu0 %377
    %381 = vset.pattern.permute.xlu0 0
    %382 = vperm.xlu0 %381, %v104
    %v383 = vpop.permute.xlu0 %382
    %386 = vset.pattern.permute.xlu0 0
    %387 = vperm.xlu0 %386, %v105
    %v388 = vpop.permute.xlu0 %387
    %391 = vset.pattern.permute.xlu0 0
    %392 = vperm.xlu0 %391, %v106
    %v393 = vpop.permute.xlu0 %392
    %396 = vset.pattern.permute.xlu0 0
    %397 = vperm.xlu0 %396, %v107
    %v398 = vpop.permute.xlu0 %397
    %401 = vset.pattern.permute.xlu0 0
    %402 = vperm.xlu0 %401, %v108
    %v403 = vpop.permute.xlu0 %402
    %406 = vset.pattern.permute.xlu0 0
    %407 = vperm.xlu0 %406, %v109
    %v408 = vpop.permute.xlu0 %407
    %411 = vset.pattern.permute.xlu0 0
    %412 = vperm.xlu0 %411, %v114
    %v413 = vpop.permute.xlu0 %412
    %416 = vset.pattern.permute.xlu0 0
    %417 = vperm.xlu0 %416, %v115
    %v418 = vpop.permute.xlu0 %417
    %421 = vset.pattern.permute.xlu0 0
    %422 = vperm.xlu0 %421, %v116
    %v423 = vpop.permute.xlu0 %422
    %426 = vset.pattern.permute.xlu0 0
    %427 = vperm.xlu0 %426, %v117
    %v428 = vpop.permute.xlu0 %427
    %431 = vset.pattern.permute.xlu0 0
    %432 = vperm.xlu0 %431, %v118
    %v433 = vpop.permute.xlu0 %432
    %436 = vset.pattern.permute.xlu0 0
    %437 = vperm.xlu0 %436, %v119
    %v438 = vpop.permute.xlu0 %437
    %441 = vset.pattern.permute.xlu0 0
    %442 = vperm.xlu0 %441, %v120
    %v443 = vpop.permute.xlu0 %442
    %446 = vset.pattern.permute.xlu0 0
    %447 = vperm.xlu0 %446, %v121
    %v448 = vpop.permute.xlu0 %447
    %451 = vset.pattern.permute.xlu0 0
    %452 = vperm.xlu0 %451, %v122
    %v453 = vpop.permute.xlu0 %452
    %456 = vset.pattern.permute.xlu0 0
    %457 = vperm.xlu0 %456, %v123
    %v458 = vpop.permute.xlu0 %457
    %461 = vset.pattern.permute.xlu0 0
    %462 = vperm.xlu0 %461, %v124
    %v463 = vpop.permute.xlu0 %462
    %466 = vset.pattern.permute.xlu0 0
    %467 = vperm.xlu0 %466, %v125
    %v468 = vpop.permute.xlu0 %467
    %471 = vset.pattern.permute.xlu0 0
    %472 = vperm.xlu0 %471, %v126
    %v473 = vpop.permute.xlu0 %472
    %476 = vset.pattern.permute.xlu0 0
    %477 = vperm.xlu0 %476, %v127
    %v478 = vpop.permute.xlu0 %477
    %481 = vset.pattern.permute.xlu0 0
    %482 = vperm.xlu0 %481, %v128
    %v483 = vpop.permute.xlu0 %482
    %486 = vset.pattern.permute.xlu0 0
    %487 = vperm.xlu0 %486, %v129
    %v488 = vpop.permute.xlu0 %487
    %491 = vset.pattern.permute.xlu0 0
    %492 = vperm.xlu0 %491, %v130
    %v493 = vpop.permute.xlu0 %492
    %496 = vset.pattern.permute.xlu0 0
    %497 = vperm.xlu0 %496, %v131
    %v498 = vpop.permute.xlu0 %497
    %501 = vset.pattern.permute.xlu0 0
    %502 = vperm.xlu0 %501, %v132
    %v503 = vpop.permute.xlu0 %502
    %506 = vset.pattern.permute.xlu0 0
    %507 = vperm.xlu0 %506, %v133
    %v508 = vpop.permute.xlu0 %507
    %511 = vset.pattern.permute.xlu0 0
    %512 = vperm.xlu0 %511, %v134
    %v513 = vpop.permute.xlu0 %512
    %516 = vset.pattern.permute.xlu0 0
    %517 = vperm.xlu0 %516, %v135
    %v518 = vpop.permute.xlu0 %517
    %521 = vset.pattern.permute.xlu0 0
    %522 = vperm.xlu0 %521, %v136
    %v523 = vpop.permute.xlu0 %522
    %526 = vset.pattern.permute.xlu0 0
    %527 = vperm.xlu0 %526, %v137
    %v528 = vpop.permute.xlu0 %527
    %531 = vset.pattern.permute.xlu0 0
    %532 = vperm.xlu0 %531, %v142
    %v533 = vpop.permute.xlu0 %532
    %536 = vset.pattern.permute.xlu0 0
    %537 = vperm.xlu0 %536, %v143
    %v538 = vpop.permute.xlu0 %537
    %541 = vset.pattern.permute.xlu0 0
    %542 = vperm.xlu0 %541, %v144
    %v543 = vpop.permute.xlu0 %542
    %546 = vset.pattern.permute.xlu0 0
    %547 = vperm.xlu0 %546, %v145
    %v548 = vpop.permute.xlu0 %547
    %551 = vset.pattern.permute.xlu0 0
    %552 = vperm.xlu0 %551, %v146
    %v553 = vpop.permute.xlu0 %552
    %556 = vset.pattern.permute.xlu0 0
    %557 = vperm.xlu0 %556, %v147
    %v558 = vpop.permute.xlu0 %557
    %561 = vset.pattern.permute.xlu0 0
    %562 = vperm.xlu0 %561, %v148
    %v563 = vpop.permute.xlu0 %562
    %566 = vset.pattern.permute.xlu0 0
    %567 = vperm.xlu0 %566, %v149
    %v568 = vpop.permute.xlu0 %567
    %571 = vset.pattern.permute.xlu0 0
    %572 = vperm.xlu0 %571, %v150
    %v573 = vpop.permute.xlu0 %572
    %576 = vset.pattern.permute.xlu0 0
    %577 = vperm.xlu0 %576, %v151
    %v578 = vpop.permute.xlu0 %577
    %581 = vset.pattern.permute.xlu0 0
    %582 = vperm.xlu0 %581, %v152
    %v583 = vpop.permute.xlu0 %582
    %586 = vset.pattern.permute.xlu0 0
    %587 = vperm.xlu0 %586, %v153
    %v588 = vpop.permute.xlu0 %587
    %591 = vset.pattern.permute.xlu0 0
    %592 = vperm.xlu0 %591, %v154
    %v593 = vpop.permute.xlu0 %592
    %596 = vset.pattern.permute.xlu0 0
    %597 = vperm.xlu0 %596, %v155
    %v598 = vpop.permute.xlu0 %597
    %601 = vset.pattern.permute.xlu0 0
    %602 = vperm.xlu0 %601, %v156
    %v603 = vpop.permute.xlu0 %602
    %606 = vset.pattern.permute.xlu0 0
    %607 = vperm.xlu0 %606, %v157
    %v608 = vpop.permute.xlu0 %607
    %611 = vset.pattern.permute.xlu0 0
    %612 = vperm.xlu0 %611, %v158
    %v613 = vpop.permute.xlu0 %612
    %616 = vset.pattern.permute.xlu0 0
    %617 = vperm.xlu0 %616, %v159
    %v618 = vpop.permute.xlu0 %617
    %621 = vset.pattern.permute.xlu0 0
    %622 = vperm.xlu0 %621, %v160
    %v623 = vpop.permute.xlu0 %622
    %626 = vset.pattern.permute.xlu0 0
    %627 = vperm.xlu0 %626, %v161
    %v628 = vpop.permute.xlu0 %627
    %631 = vset.pattern.permute.xlu0 0
    %632 = vperm.xlu0 %631, %v162
    %v633 = vpop.permute.xlu0 %632
    %636 = vset.pattern.permute.xlu0 0
    %637 = vperm.xlu0 %636, %v163
    %v638 = vpop.permute.xlu0 %637
    %641 = vset.pattern.permute.xlu0 0
    %642 = vperm.xlu0 %641, %v164
    %v643 = vpop.permute.xlu0 %642
    %646 = vset.pattern.permute.xlu0 0
    %647 = vperm.xlu0 %646, %v165
    %v648 = vpop.permute.xlu0 %647
    %v650 = vld [vmem:[%s1] sm:$0x1]
    %v652 = vlaneseq
    %v653 = vshrl.u32 %v652, 7
    %v654 = vsub.s32 0, %v653
    %v655 = vrot.slane %v650, %v654
    %v657 = vmul.f32 %v173, %v655
    %v658 = vmul.f32 %v178, %v655
    %v659 = vmul.f32 %v183, %v655
    %v660 = vmul.f32 %v188, %v655
    %v661 = vmul.f32 %v193, %v655
    %v662 = vmul.f32 %v198, %v655
    %v663 = vmul.f32 %v203, %v655
    %v664 = vmul.f32 %v208, %v655
    %v665 = vmul.f32 %v213, %v655
    %v666 = vmul.f32 %v218, %v655
    %v667 = vmul.f32 %v223, %v655
    %v668 = vmul.f32 %v228, %v655
    %v669 = vmul.f32 %v233, %v655
    %v670 = vmul.f32 %v238, %v655
    %v671 = vmul.f32 %v243, %v655
    %v672 = vmul.f32 %v248, %v655
    %v673 = vmul.f32 %v253, %v655
    %v674 = vmul.f32 %v258, %v655
    %v675 = vmul.f32 %v263, %v655
    %v676 = vmul.f32 %v268, %v655
    %v677 = vmul.f32 %v273, %v655
    %v678 = vmul.f32 %v278, %v655
    %v679 = vmul.f32 %v283, %v655
    %v680 = vmul.f32 %v288, %v655
    %v681 = vmul.f32 %v293, %v655
    %v682 = vmul.f32 %v298, %v655
    %v683 = vmul.f32 %v303, %v655
    %v684 = vmul.f32 %v308, %v655
    %v685 = vmul.f32 %v313, %v655
    %v686 = vmul.f32 %v318, %v655
    %v687 = vmul.f32 %v323, %v655
    %v688 = vmul.f32 %v328, %v655
    %v689 = vmul.f32 %v333, %v655
    %v690 = vmul.f32 %v338, %v655
    %v691 = vmul.f32 %v343, %v655
    %v692 = vmul.f32 %v348, %v655
    %v693 = vmul.f32 %v353, %v655
    %v694 = vmul.f32 %v358, %v655
    %v695 = vmul.f32 %v363, %v655
    %v696 = vmul.f32 %v368, %v655
    %v697 = vmul.f32 %v373, %v655
    %v698 = vmul.f32 %v378, %v655
    %v699 = vmul.f32 %v383, %v655
    %v700 = vmul.f32 %v388, %v655
    %v701 = vmul.f32 %v393, %v655
    %v702 = vmul.f32 %v398, %v655
    %v703 = vmul.f32 %v403, %v655
    %v704 = vmul.f32 %v408, %v655
    %v705 = vmul.f32 %v413, %v655
    %v706 = vmul.f32 %v418, %v655
    %v707 = vmul.f32 %v423, %v655
    %v708 = vmul.f32 %v428, %v655
    %v709 = vmul.f32 %v433, %v655
    %v710 = vmul.f32 %v438, %v655
    %v711 = vmul.f32 %v443, %v655
    %v712 = vmul.f32 %v448, %v655
    %v713 = vmul.f32 %v453, %v655
    %v714 = vmul.f32 %v458, %v655
    %v715 = vmul.f32 %v463, %v655
    %v716 = vmul.f32 %v468, %v655
    %v717 = vmul.f32 %v473, %v655
    %v718 = vmul.f32 %v478, %v655
    %v719 = vmul.f32 %v483, %v655
    %v720 = vmul.f32 %v488, %v655
    %v721 = vmul.f32 %v493, %v655
    %v722 = vmul.f32 %v498, %v655
    %v723 = vmul.f32 %v503, %v655
    %v724 = vmul.f32 %v508, %v655
    %v725 = vmul.f32 %v513, %v655
    %v726 = vmul.f32 %v518, %v655
    %v727 = vmul.f32 %v523, %v655
    %v728 = vmul.f32 %v528, %v655
    %v729 = vmul.f32 %v533, %v655
    %v730 = vmul.f32 %v538, %v655
    %v731 = vmul.f32 %v543, %v655
    %v732 = vmul.f32 %v548, %v655
    %v733 = vmul.f32 %v553, %v655
    %v734 = vmul.f32 %v558, %v655
    %v735 = vmul.f32 %v563, %v655
    %v736 = vmul.f32 %v568, %v655
    %v737 = vmul.f32 %v573, %v655
    %v738 = vmul.f32 %v578, %v655
    %v739 = vmul.f32 %v583, %v655
    %v740 = vmul.f32 %v588, %v655
    %v741 = vmul.f32 %v593, %v655
    %v742 = vmul.f32 %v598, %v655
    %v743 = vmul.f32 %v603, %v655
    %v744 = vmul.f32 %v608, %v655
    %v745 = vmul.f32 %v613, %v655
    %v746 = vmul.f32 %v618, %v655
    %v747 = vmul.f32 %v623, %v655
    %v748 = vmul.f32 %v628, %v655
    %v749 = vmul.f32 %v633, %v655
    %v750 = vmul.f32 %v638, %v655
    %v751 = vmul.f32 %v643, %v655
    %v752 = vmul.f32 %v648, %v655
    %s753 = scalar_lea.vmem %s1, 1
    %v754 = vld [vmem:[%s753] sm:$0x1]
    %v756 = vlaneseq
    %v757 = vshrl.u32 %v756, 7
    %v758 = vsub.s32 0, %v757
    %v759 = vrot.slane %v754, %v758
    %v761 = vmul.f32 %v173, %v759
    %v762 = vmul.f32 %v178, %v759
    %v763 = vmul.f32 %v183, %v759
    %v764 = vmul.f32 %v188, %v759
    %v765 = vmul.f32 %v193, %v759
    %v766 = vmul.f32 %v198, %v759
    %v767 = vmul.f32 %v203, %v759
    %v768 = vmul.f32 %v208, %v759
    %v769 = vmul.f32 %v213, %v759
    %v770 = vmul.f32 %v218, %v759
    %v771 = vmul.f32 %v223, %v759
    %v772 = vmul.f32 %v228, %v759
    %v773 = vmul.f32 %v233, %v759
    %v774 = vmul.f32 %v238, %v759
    %v775 = vmul.f32 %v243, %v759
    %v776 = vmul.f32 %v248, %v759
    %v777 = vmul.f32 %v253, %v759
    %v778 = vmul.f32 %v258, %v759
    %v779 = vmul.f32 %v263, %v759
    %v780 = vmul.f32 %v268, %v759
    %v781 = vmul.f32 %v273, %v759
    %v782 = vmul.f32 %v278, %v759
    %v783 = vmul.f32 %v283, %v759
    %v784 = vmul.f32 %v288, %v759
    %v785 = vmul.f32 %v293, %v759
    %v786 = vmul.f32 %v298, %v759
    %v787 = vmul.f32 %v303, %v759
    %v788 = vmul.f32 %v308, %v759
    %v789 = vmul.f32 %v313, %v759
    %v790 = vmul.f32 %v318, %v759
    %v791 = vmul.f32 %v323, %v759
    %v792 = vmul.f32 %v328, %v759
    %v793 = vmul.f32 %v333, %v759
    %v794 = vmul.f32 %v338, %v759
    %v795 = vmul.f32 %v343, %v759
    %v796 = vmul.f32 %v348, %v759
    %v797 = vmul.f32 %v353, %v759
    %v798 = vmul.f32 %v358, %v759
    %v799 = vmul.f32 %v363, %v759
    %v800 = vmul.f32 %v368, %v759
    %v801 = vmul.f32 %v373, %v759
    %v802 = vmul.f32 %v378, %v759
    %v803 = vmul.f32 %v383, %v759
    %v804 = vmul.f32 %v388, %v759
    %v805 = vmul.f32 %v393, %v759
    %v806 = vmul.f32 %v398, %v759
    %v807 = vmul.f32 %v403, %v759
    %v808 = vmul.f32 %v408, %v759
    %v809 = vmul.f32 %v413, %v759
    %v810 = vmul.f32 %v418, %v759
    %v811 = vmul.f32 %v423, %v759
    %v812 = vmul.f32 %v428, %v759
    %v813 = vmul.f32 %v433, %v759
    %v814 = vmul.f32 %v438, %v759
    %v815 = vmul.f32 %v443, %v759
    %v816 = vmul.f32 %v448, %v759
    %v817 = vmul.f32 %v453, %v759
    %v818 = vmul.f32 %v458, %v759
    %v819 = vmul.f32 %v463, %v759
    %v820 = vmul.f32 %v468, %v759
    %v821 = vmul.f32 %v473, %v759
    %v822 = vmul.f32 %v478, %v759
    %v823 = vmul.f32 %v483, %v759
    %v824 = vmul.f32 %v488, %v759
    %v825 = vmul.f32 %v493, %v759
    %v826 = vmul.f32 %v498, %v759
    %v827 = vmul.f32 %v503, %v759
    %v828 = vmul.f32 %v508, %v759
    %v829 = vmul.f32 %v513, %v759
    %v830 = vmul.f32 %v518, %v759
    %v831 = vmul.f32 %v523, %v759
    %v832 = vmul.f32 %v528, %v759
    %v833 = vmul.f32 %v533, %v759
    %v834 = vmul.f32 %v538, %v759
    %v835 = vmul.f32 %v543, %v759
    %v836 = vmul.f32 %v548, %v759
    %v837 = vmul.f32 %v553, %v759
    %v838 = vmul.f32 %v558, %v759
    %v839 = vmul.f32 %v563, %v759
    %v840 = vmul.f32 %v568, %v759
    %v841 = vmul.f32 %v573, %v759
    %v842 = vmul.f32 %v578, %v759
    %v843 = vmul.f32 %v583, %v759
    %v844 = vmul.f32 %v588, %v759
    %v845 = vmul.f32 %v593, %v759
    %v846 = vmul.f32 %v598, %v759
    %v847 = vmul.f32 %v603, %v759
    %v848 = vmul.f32 %v608, %v759
    %v849 = vmul.f32 %v613, %v759
    %v850 = vmul.f32 %v618, %v759
    %v851 = vmul.f32 %v623, %v759
    %v852 = vmul.f32 %v628, %v759
    %v853 = vmul.f32 %v633, %v759
    %v854 = vmul.f32 %v638, %v759
    %v855 = vmul.f32 %v643, %v759
    %v856 = vmul.f32 %v648, %v759
    %vm953 = vcmask 1046528
    %v954 = vrot.slane %v761, 1
    %v955 = vrot.slane %v762, 1
    %v956 = vsel %vm953, %v954, %v955
    %v957 = vrot.slane %v763, 1
    %v958 = vrot.slane %v764, 1
    %v959 = vsel %vm953, %v957, %v958
    %v960 = vrot.slane %v765, 1
    %v961 = vrot.slane %v766, 1
    %v962 = vsel %vm953, %v960, %v961
    %v963 = vrot.slane %v767, 1
    %v964 = vrot.slane %v768, 1
    %v965 = vsel %vm953, %v963, %v964
    %v966 = vrot.slane %v769, 1
    %v967 = vrot.slane %v770, 1
    %v968 = vsel %vm953, %v966, %v967
    %v969 = vrot.slane %v771, 1
    %v970 = vrot.slane %v772, 1
    %v971 = vsel %vm953, %v969, %v970
    %v972 = vrot.slane %v773, 1
    %v973 = vrot.slane %v774, 1
    %v974 = vsel %vm953, %v972, %v973
    %v975 = vrot.slane %v775, 1
    %v976 = vrot.slane %v776, 1
    %v977 = vsel %vm953, %v975, %v976
    %v978 = vrot.slane %v777, 1
    %v979 = vrot.slane %v778, 1
    %v980 = vsel %vm953, %v978, %v979
    %v981 = vrot.slane %v779, 1
    %v982 = vrot.slane %v780, 1
    %v983 = vsel %vm953, %v981, %v982
    %v984 = vrot.slane %v781, 1
    %v985 = vrot.slane %v782, 1
    %v986 = vsel %vm953, %v984, %v985
    %v987 = vrot.slane %v783, 1
    %v988 = vrot.slane %v784, 1
    %v989 = vsel %vm953, %v987, %v988
    %v990 = vrot.slane %v785, 1
    %v991 = vrot.slane %v786, 1
    %v992 = vsel %vm953, %v990, %v991
    %v993 = vrot.slane %v787, 1
    %v994 = vrot.slane %v788, 1
    %v995 = vsel %vm953, %v993, %v994
    %v996 = vrot.slane %v789, 1
    %v997 = vrot.slane %v790, 1
    %v998 = vsel %vm953, %v996, %v997
    %v999 = vrot.slane %v791, 1
    %v1000 = vrot.slane %v792, 1
    %v1001 = vsel %vm953, %v999, %v1000
    %v1002 = vrot.slane %v793, 1
    %v1003 = vrot.slane %v794, 1
    %v1004 = vsel %vm953, %v1002, %v1003
    %v1005 = vrot.slane %v795, 1
    %v1006 = vrot.slane %v796, 1
    %v1007 = vsel %vm953, %v1005, %v1006
    %v1008 = vrot.slane %v797, 1
    %v1009 = vrot.slane %v798, 1
    %v1010 = vsel %vm953, %v1008, %v1009
    %v1011 = vrot.slane %v799, 1
    %v1012 = vrot.slane %v800, 1
    %v1013 = vsel %vm953, %v1011, %v1012
    %v1014 = vrot.slane %v801, 1
    %v1015 = vrot.slane %v802, 1
    %v1016 = vsel %vm953, %v1014, %v1015
    %v1017 = vrot.slane %v803, 1
    %v1018 = vrot.slane %v804, 1
    %v1019 = vsel %vm953, %v1017, %v1018
    %v1020 = vrot.slane %v805, 1
    %v1021 = vrot.slane %v806, 1
    %v1022 = vsel %vm953, %v1020, %v1021
    %v1023 = vrot.slane %v807, 1
    %v1024 = vrot.slane %v808, 1
    %v1025 = vsel %vm953, %v1023, %v1024
    %v1026 = vrot.slane %v809, 1
    %v1027 = vrot.slane %v810, 1
    %v1028 = vsel %vm953, %v1026, %v1027
    %v1029 = vrot.slane %v811, 1
    %v1030 = vrot.slane %v812, 1
    %v1031 = vsel %vm953, %v1029, %v1030
    %v1032 = vrot.slane %v813, 1
    %v1033 = vrot.slane %v814, 1
    %v1034 = vsel %vm953, %v1032, %v1033
    %v1035 = vrot.slane %v815, 1
    %v1036 = vrot.slane %v816, 1
    %v1037 = vsel %vm953, %v1035, %v1036
    %v1038 = vrot.slane %v817, 1
    %v1039 = vrot.slane %v818, 1
    %v1040 = vsel %vm953, %v1038, %v1039
    %v1041 = vrot.slane %v819, 1
    %v1042 = vrot.slane %v820, 1
    %v1043 = vsel %vm953, %v1041, %v1042
    %v1044 = vrot.slane %v821, 1
    %v1045 = vrot.slane %v822, 1
    %v1046 = vsel %vm953, %v1044, %v1045
    %v1047 = vrot.slane %v823, 1
    %v1048 = vrot.slane %v824, 1
    %v1049 = vsel %vm953, %v1047, %v1048
    %v1050 = vrot.slane %v825, 1
    %v1051 = vrot.slane %v826, 1
    %v1052 = vsel %vm953, %v1050, %v1051
    %v1053 = vrot.slane %v827, 1
    %v1054 = vrot.slane %v828, 1
    %v1055 = vsel %vm953, %v1053, %v1054
    %v1056 = vrot.slane %v829, 1
    %v1057 = vrot.slane %v830, 1
    %v1058 = vsel %vm953, %v1056, %v1057
    %v1059 = vrot.slane %v831, 1
    %v1060 = vrot.slane %v832, 1
    %v1061 = vsel %vm953, %v1059, %v1060
    %v1062 = vrot.slane %v833, 1
    %v1063 = vrot.slane %v834, 1
    %v1064 = vsel %vm953, %v1062, %v1063
    %v1065 = vrot.slane %v835, 1
    %v1066 = vrot.slane %v836, 1
    %v1067 = vsel %vm953, %v1065, %v1066
    %v1068 = vrot.slane %v837, 1
    %v1069 = vrot.slane %v838, 1
    %v1070 = vsel %vm953, %v1068, %v1069
    %v1071 = vrot.slane %v839, 1
    %v1072 = vrot.slane %v840, 1
    %v1073 = vsel %vm953, %v1071, %v1072
    %v1074 = vrot.slane %v841, 1
    %v1075 = vrot.slane %v842, 1
    %v1076 = vsel %vm953, %v1074, %v1075
    %v1077 = vrot.slane %v843, 1
    %v1078 = vrot.slane %v844, 1
    %v1079 = vsel %vm953, %v1077, %v1078
    %v1080 = vrot.slane %v845, 1
    %v1081 = vrot.slane %v846, 1
    %v1082 = vsel %vm953, %v1080, %v1081
    %v1083 = vrot.slane %v847, 1
    %v1084 = vrot.slane %v848, 1
    %v1085 = vsel %vm953, %v1083, %v1084
    %v1086 = vrot.slane %v849, 1
    %v1087 = vrot.slane %v850, 1
    %v1088 = vsel %vm953, %v1086, %v1087
    %v1089 = vrot.slane %v851, 1
    %v1090 = vrot.slane %v852, 1
    %v1091 = vsel %vm953, %v1089, %v1090
    %v1092 = vrot.slane %v853, 1
    %v1093 = vrot.slane %v854, 1
    %v1094 = vsel %vm953, %v1092, %v1093
    %v1095 = vrot.slane %v855, 1
    %v1096 = vrot.slane %v856, 1
    %v1097 = vsel %vm953, %v1095, %v1096
    %v1194 = vadd.f32 %v657, %v956
    %v1195 = vadd.f32 %v658, %v955
    %v1196 = vadd.f32 %v659, %v959
    %v1197 = vadd.f32 %v660, %v958
    %v1198 = vadd.f32 %v661, %v962
    %v1199 = vadd.f32 %v662, %v961
    %v1200 = vadd.f32 %v663, %v965
    %v1201 = vadd.f32 %v664, %v964
    %v1202 = vadd.f32 %v665, %v968
    %v1203 = vadd.f32 %v666, %v967
    %v1204 = vadd.f32 %v667, %v971
    %v1205 = vadd.f32 %v668, %v970
    %v1206 = vadd.f32 %v669, %v974
    %v1207 = vadd.f32 %v670, %v973
    %v1208 = vadd.f32 %v671, %v977
    %v1209 = vadd.f32 %v672, %v976
    %v1210 = vadd.f32 %v673, %v980
    %v1211 = vadd.f32 %v674, %v979
    %v1212 = vadd.f32 %v675, %v983
    %v1213 = vadd.f32 %v676, %v982
    %v1214 = vadd.f32 %v677, %v986
    %v1215 = vadd.f32 %v678, %v985
    %v1216 = vadd.f32 %v679, %v989
    %v1217 = vadd.f32 %v680, %v988
    %v1218 = vadd.f32 %v681, %v992
    %v1219 = vadd.f32 %v682, %v991
    %v1220 = vadd.f32 %v683, %v995
    %v1221 = vadd.f32 %v684, %v994
    %v1222 = vadd.f32 %v685, %v998
    %v1223 = vadd.f32 %v686, %v997
    %v1224 = vadd.f32 %v687, %v1001
    %v1225 = vadd.f32 %v688, %v1000
    %v1226 = vadd.f32 %v689, %v1004
    %v1227 = vadd.f32 %v690, %v1003
    %v1228 = vadd.f32 %v691, %v1007
    %v1229 = vadd.f32 %v692, %v1006
    %v1230 = vadd.f32 %v693, %v1010
    %v1231 = vadd.f32 %v694, %v1009
    %v1232 = vadd.f32 %v695, %v1013
    %v1233 = vadd.f32 %v696, %v1012
    %v1234 = vadd.f32 %v697, %v1016
    %v1235 = vadd.f32 %v698, %v1015
    %v1236 = vadd.f32 %v699, %v1019
    %v1237 = vadd.f32 %v700, %v1018
    %v1238 = vadd.f32 %v701, %v1022
    %v1239 = vadd.f32 %v702, %v1021
    %v1240 = vadd.f32 %v703, %v1025
    %v1241 = vadd.f32 %v704, %v1024
    %v1242 = vadd.f32 %v705, %v1028
    %v1243 = vadd.f32 %v706, %v1027
    %v1244 = vadd.f32 %v707, %v1031
    %v1245 = vadd.f32 %v708, %v1030
    %v1246 = vadd.f32 %v709, %v1034
    %v1247 = vadd.f32 %v710, %v1033
    %v1248 = vadd.f32 %v711, %v1037
    %v1249 = vadd.f32 %v712, %v1036
    %v1250 = vadd.f32 %v713, %v1040
    %v1251 = vadd.f32 %v714, %v1039
    %v1252 = vadd.f32 %v715, %v1043
    %v1253 = vadd.f32 %v716, %v1042
    %v1254 = vadd.f32 %v717, %v1046
    %v1255 = vadd.f32 %v718, %v1045
    %v1256 = vadd.f32 %v719, %v1049
    %v1257 = vadd.f32 %v720, %v1048
    %v1258 = vadd.f32 %v721, %v1052
    %v1259 = vadd.f32 %v722, %v1051
    %v1260 = vadd.f32 %v723, %v1055
    %v1261 = vadd.f32 %v724, %v1054
    %v1262 = vadd.f32 %v725, %v1058
    %v1263 = vadd.f32 %v726, %v1057
    %v1264 = vadd.f32 %v727, %v1061
    %v1265 = vadd.f32 %v728, %v1060
    %v1266 = vadd.f32 %v729, %v1064
    %v1267 = vadd.f32 %v730, %v1063
    %v1268 = vadd.f32 %v731, %v1067
    %v1269 = vadd.f32 %v732, %v1066
    %v1270 = vadd.f32 %v733, %v1070
    %v1271 = vadd.f32 %v734, %v1069
    %v1272 = vadd.f32 %v735, %v1073
    %v1273 = vadd.f32 %v736, %v1072
    %v1274 = vadd.f32 %v737, %v1076
    %v1275 = vadd.f32 %v738, %v1075
    %v1276 = vadd.f32 %v739, %v1079
    %v1277 = vadd.f32 %v740, %v1078
    %v1278 = vadd.f32 %v741, %v1082
    %v1279 = vadd.f32 %v742, %v1081
    %v1280 = vadd.f32 %v743, %v1085
    %v1281 = vadd.f32 %v744, %v1084
    %v1282 = vadd.f32 %v745, %v1088
    %v1283 = vadd.f32 %v746, %v1087
    %v1284 = vadd.f32 %v747, %v1091
    %v1285 = vadd.f32 %v748, %v1090
    %v1286 = vadd.f32 %v749, %v1094
    %v1287 = vadd.f32 %v750, %v1093
    %v1288 = vadd.f32 %v751, %v1097
    %v1289 = vadd.f32 %v752, %v1096
    %s1290 = scalar_lea.vmem %s1, 2
    %v1291 = vld [vmem:[%s1290] sm:$0x1]
    %v1293 = vlaneseq
    %v1294 = vshrl.u32 %v1293, 7
    %v1295 = vsub.s32 0, %v1294
    %v1296 = vrot.slane %v1291, %v1295
    %v1298 = vmul.f32 %v173, %v1296
    %v1299 = vmul.f32 %v178, %v1296
    %v1300 = vmul.f32 %v183, %v1296
    %v1301 = vmul.f32 %v188, %v1296
    %v1302 = vmul.f32 %v193, %v1296
    %v1303 = vmul.f32 %v198, %v1296
    %v1304 = vmul.f32 %v203, %v1296
    %v1305 = vmul.f32 %v208, %v1296
    %v1306 = vmul.f32 %v213, %v1296
    %v1307 = vmul.f32 %v218, %v1296
    %v1308 = vmul.f32 %v223, %v1296
    %v1309 = vmul.f32 %v228, %v1296
    %v1310 = vmul.f32 %v233, %v1296
    %v1311 = vmul.f32 %v238, %v1296
    %v1312 = vmul.f32 %v243, %v1296
    %v1313 = vmul.f32 %v248, %v1296
    %v1314 = vmul.f32 %v253, %v1296
    %v1315 = vmul.f32 %v258, %v1296
    %v1316 = vmul.f32 %v263, %v1296
    %v1317 = vmul.f32 %v268, %v1296
    %v1318 = vmul.f32 %v273, %v1296
    %v1319 = vmul.f32 %v278, %v1296
    %v1320 = vmul.f32 %v283, %v1296
    %v1321 = vmul.f32 %v288, %v1296
    %v1322 = vmul.f32 %v293, %v1296
    %v1323 = vmul.f32 %v298, %v1296
    %v1324 = vmul.f32 %v303, %v1296
    %v1325 = vmul.f32 %v308, %v1296
    %v1326 = vmul.f32 %v313, %v1296
    %v1327 = vmul.f32 %v318, %v1296
    %v1328 = vmul.f32 %v323, %v1296
    %v1329 = vmul.f32 %v328, %v1296
    %v1330 = vmul.f32 %v333, %v1296
    %v1331 = vmul.f32 %v338, %v1296
    %v1332 = vmul.f32 %v343, %v1296
    %v1333 = vmul.f32 %v348, %v1296
    %v1334 = vmul.f32 %v353, %v1296
    %v1335 = vmul.f32 %v358, %v1296
    %v1336 = vmul.f32 %v363, %v1296
    %v1337 = vmul.f32 %v368, %v1296
    %v1338 = vmul.f32 %v373, %v1296
    %v1339 = vmul.f32 %v378, %v1296
    %v1340 = vmul.f32 %v383, %v1296
    %v1341 = vmul.f32 %v388, %v1296
    %v1342 = vmul.f32 %v393, %v1296
    %v1343 = vmul.f32 %v398, %v1296
    %v1344 = vmul.f32 %v403, %v1296
    %v1345 = vmul.f32 %v408, %v1296
    %v1346 = vmul.f32 %v413, %v1296
    %v1347 = vmul.f32 %v418, %v1296
    %v1348 = vmul.f32 %v423, %v1296
    %v1349 = vmul.f32 %v428, %v1296
    %v1350 = vmul.f32 %v433, %v1296
    %v1351 = vmul.f32 %v438, %v1296
    %v1352 = vmul.f32 %v443, %v1296
    %v1353 = vmul.f32 %v448, %v1296
    %v1354 = vmul.f32 %v453, %v1296
    %v1355 = vmul.f32 %v458, %v1296
    %v1356 = vmul.f32 %v463, %v1296
    %v1357 = vmul.f32 %v468, %v1296
    %v1358 = vmul.f32 %v473, %v1296
    %v1359 = vmul.f32 %v478, %v1296
    %v1360 = vmul.f32 %v483, %v1296
    %v1361 = vmul.f32 %v488, %v1296
    %v1362 = vmul.f32 %v493, %v1296
    %v1363 = vmul.f32 %v498, %v1296
    %v1364 = vmul.f32 %v503, %v1296
    %v1365 = vmul.f32 %v508, %v1296
    %v1366 = vmul.f32 %v513, %v1296
    %v1367 = vmul.f32 %v518, %v1296
    %v1368 = vmul.f32 %v523, %v1296
    %v1369 = vmul.f32 %v528, %v1296
    %v1370 = vmul.f32 %v533, %v1296
    %v1371 = vmul.f32 %v538, %v1296
    %v1372 = vmul.f32 %v543, %v1296
    %v1373 = vmul.f32 %v548, %v1296
    %v1374 = vmul.f32 %v553, %v1296
    %v1375 = vmul.f32 %v558, %v1296
    %v1376 = vmul.f32 %v563, %v1296
    %v1377 = vmul.f32 %v568, %v1296
    %v1378 = vmul.f32 %v573, %v1296
    %v1379 = vmul.f32 %v578, %v1296
    %v1380 = vmul.f32 %v583, %v1296
    %v1381 = vmul.f32 %v588, %v1296
    %v1382 = vmul.f32 %v593, %v1296
    %v1383 = vmul.f32 %v598, %v1296
    %v1384 = vmul.f32 %v603, %v1296
    %v1385 = vmul.f32 %v608, %v1296
    %v1386 = vmul.f32 %v613, %v1296
    %v1387 = vmul.f32 %v618, %v1296
    %v1388 = vmul.f32 %v623, %v1296
    %v1389 = vmul.f32 %v628, %v1296
    %v1390 = vmul.f32 %v633, %v1296
    %v1391 = vmul.f32 %v638, %v1296
    %v1392 = vmul.f32 %v643, %v1296
    %v1393 = vmul.f32 %v648, %v1296
    %vm1490 = vcmask 1045504
    %v1491 = vrot.slane %v1298, 2
    %v1492 = vrot.slane %v1299, 2
    %v1493 = vsel %vm1490, %v1491, %v1492
    %v1494 = vrot.slane %v1300, 2
    %v1495 = vrot.slane %v1301, 2
    %v1496 = vsel %vm1490, %v1494, %v1495
    %v1497 = vrot.slane %v1302, 2
    %v1498 = vrot.slane %v1303, 2
    %v1499 = vsel %vm1490, %v1497, %v1498
    %v1500 = vrot.slane %v1304, 2
    %v1501 = vrot.slane %v1305, 2
    %v1502 = vsel %vm1490, %v1500, %v1501
    %v1503 = vrot.slane %v1306, 2
    %v1504 = vrot.slane %v1307, 2
    %v1505 = vsel %vm1490, %v1503, %v1504
    %v1506 = vrot.slane %v1308, 2
    %v1507 = vrot.slane %v1309, 2
    %v1508 = vsel %vm1490, %v1506, %v1507
    %v1509 = vrot.slane %v1310, 2
    %v1510 = vrot.slane %v1311, 2
    %v1511 = vsel %vm1490, %v1509, %v1510
    %v1512 = vrot.slane %v1312, 2
    %v1513 = vrot.slane %v1313, 2
    %v1514 = vsel %vm1490, %v1512, %v1513
    %v1515 = vrot.slane %v1314, 2
    %v1516 = vrot.slane %v1315, 2
    %v1517 = vsel %vm1490, %v1515, %v1516
    %v1518 = vrot.slane %v1316, 2
    %v1519 = vrot.slane %v1317, 2
    %v1520 = vsel %vm1490, %v1518, %v1519
    %v1521 = vrot.slane %v1318, 2
    %v1522 = vrot.slane %v1319, 2
    %v1523 = vsel %vm1490, %v1521, %v1522
    %v1524 = vrot.slane %v1320, 2
    %v1525 = vrot.slane %v1321, 2
    %v1526 = vsel %vm1490, %v1524, %v1525
    %v1527 = vrot.slane %v1322, 2
    %v1528 = vrot.slane %v1323, 2
    %v1529 = vsel %vm1490, %v1527, %v1528
    %v1530 = vrot.slane %v1324, 2
    %v1531 = vrot.slane %v1325, 2
    %v1532 = vsel %vm1490, %v1530, %v1531
    %v1533 = vrot.slane %v1326, 2
    %v1534 = vrot.slane %v1327, 2
    %v1535 = vsel %vm1490, %v1533, %v1534
    %v1536 = vrot.slane %v1328, 2
    %v1537 = vrot.slane %v1329, 2
    %v1538 = vsel %vm1490, %v1536, %v1537
    %v1539 = vrot.slane %v1330, 2
    %v1540 = vrot.slane %v1331, 2
    %v1541 = vsel %vm1490, %v1539, %v1540
    %v1542 = vrot.slane %v1332, 2
    %v1543 = vrot.slane %v1333, 2
    %v1544 = vsel %vm1490, %v1542, %v1543
    %v1545 = vrot.slane %v1334, 2
    %v1546 = vrot.slane %v1335, 2
    %v1547 = vsel %vm1490, %v1545, %v1546
    %v1548 = vrot.slane %v1336, 2
    %v1549 = vrot.slane %v1337, 2
    %v1550 = vsel %vm1490, %v1548, %v1549
    %v1551 = vrot.slane %v1338, 2
    %v1552 = vrot.slane %v1339, 2
    %v1553 = vsel %vm1490, %v1551, %v1552
    %v1554 = vrot.slane %v1340, 2
    %v1555 = vrot.slane %v1341, 2
    %v1556 = vsel %vm1490, %v1554, %v1555
    %v1557 = vrot.slane %v1342, 2
    %v1558 = vrot.slane %v1343, 2
    %v1559 = vsel %vm1490, %v1557, %v1558
    %v1560 = vrot.slane %v1344, 2
    %v1561 = vrot.slane %v1345, 2
    %v1562 = vsel %vm1490, %v1560, %v1561
    %v1563 = vrot.slane %v1346, 2
    %v1564 = vrot.slane %v1347, 2
    %v1565 = vsel %vm1490, %v1563, %v1564
    %v1566 = vrot.slane %v1348, 2
    %v1567 = vrot.slane %v1349, 2
    %v1568 = vsel %vm1490, %v1566, %v1567
    %v1569 = vrot.slane %v1350, 2
    %v1570 = vrot.slane %v1351, 2
    %v1571 = vsel %vm1490, %v1569, %v1570
    %v1572 = vrot.slane %v1352, 2
    %v1573 = vrot.slane %v1353, 2
    %v1574 = vsel %vm1490, %v1572, %v1573
    %v1575 = vrot.slane %v1354, 2
    %v1576 = vrot.slane %v1355, 2
    %v1577 = vsel %vm1490, %v1575, %v1576
    %v1578 = vrot.slane %v1356, 2
    %v1579 = vrot.slane %v1357, 2
    %v1580 = vsel %vm1490, %v1578, %v1579
    %v1581 = vrot.slane %v1358, 2
    %v1582 = vrot.slane %v1359, 2
    %v1583 = vsel %vm1490, %v1581, %v1582
    %v1584 = vrot.slane %v1360, 2
    %v1585 = vrot.slane %v1361, 2
    %v1586 = vsel %vm1490, %v1584, %v1585
    %v1587 = vrot.slane %v1362, 2
    %v1588 = vrot.slane %v1363, 2
    %v1589 = vsel %vm1490, %v1587, %v1588
    %v1590 = vrot.slane %v1364, 2
    %v1591 = vrot.slane %v1365, 2
    %v1592 = vsel %vm1490, %v1590, %v1591
    %v1593 = vrot.slane %v1366, 2
    %v1594 = vrot.slane %v1367, 2
    %v1595 = vsel %vm1490, %v1593, %v1594
    %v1596 = vrot.slane %v1368, 2
    %v1597 = vrot.slane %v1369, 2
    %v1598 = vsel %vm1490, %v1596, %v1597
    %v1599 = vrot.slane %v1370, 2
    %v1600 = vrot.slane %v1371, 2
    %v1601 = vsel %vm1490, %v1599, %v1600
    %v1602 = vrot.slane %v1372, 2
    %v1603 = vrot.slane %v1373, 2
    %v1604 = vsel %vm1490, %v1602, %v1603
    %v1605 = vrot.slane %v1374, 2
    %v1606 = vrot.slane %v1375, 2
    %v1607 = vsel %vm1490, %v1605, %v1606
    %v1608 = vrot.slane %v1376, 2
    %v1609 = vrot.slane %v1377, 2
    %v1610 = vsel %vm1490, %v1608, %v1609
    %v1611 = vrot.slane %v1378, 2
    %v1612 = vrot.slane %v1379, 2
    %v1613 = vsel %vm1490, %v1611, %v1612
    %v1614 = vrot.slane %v1380, 2
    %v1615 = vrot.slane %v1381, 2
    %v1616 = vsel %vm1490, %v1614, %v1615
    %v1617 = vrot.slane %v1382, 2
    %v1618 = vrot.slane %v1383, 2
    %v1619 = vsel %vm1490, %v1617, %v1618
    %v1620 = vrot.slane %v1384, 2
    %v1621 = vrot.slane %v1385, 2
    %v1622 = vsel %vm1490, %v1620, %v1621
    %v1623 = vrot.slane %v1386, 2
    %v1624 = vrot.slane %v1387, 2
    %v1625 = vsel %vm1490, %v1623, %v1624
    %v1626 = vrot.slane %v1388, 2
    %v1627 = vrot.slane %v1389, 2
    %v1628 = vsel %vm1490, %v1626, %v1627
    %v1629 = vrot.slane %v1390, 2
    %v1630 = vrot.slane %v1391, 2
    %v1631 = vsel %vm1490, %v1629, %v1630
    %v1632 = vrot.slane %v1392, 2
    %v1633 = vrot.slane %v1393, 2
    %v1634 = vsel %vm1490, %v1632, %v1633
    %v1731 = vadd.f32 %v1194, %v1493
    %v1732 = vadd.f32 %v1195, %v1492
    %v1733 = vadd.f32 %v1196, %v1496
    %v1734 = vadd.f32 %v1197, %v1495
    %v1735 = vadd.f32 %v1198, %v1499
    %v1736 = vadd.f32 %v1199, %v1498
    %v1737 = vadd.f32 %v1200, %v1502
    %v1738 = vadd.f32 %v1201, %v1501
    %v1739 = vadd.f32 %v1202, %v1505
    %v1740 = vadd.f32 %v1203, %v1504
    %v1741 = vadd.f32 %v1204, %v1508
    %v1742 = vadd.f32 %v1205, %v1507
    %v1743 = vadd.f32 %v1206, %v1511
    %v1744 = vadd.f32 %v1207, %v1510
    %v1745 = vadd.f32 %v1208, %v1514
    %v1746 = vadd.f32 %v1209, %v1513
    %v1747 = vadd.f32 %v1210, %v1517
    %v1748 = vadd.f32 %v1211, %v1516
    %v1749 = vadd.f32 %v1212, %v1520
    %v1750 = vadd.f32 %v1213, %v1519
    %v1751 = vadd.f32 %v1214, %v1523
    %v1752 = vadd.f32 %v1215, %v1522
    %v1753 = vadd.f32 %v1216, %v1526
    %v1754 = vadd.f32 %v1217, %v1525
    %v1755 = vadd.f32 %v1218, %v1529
    %v1756 = vadd.f32 %v1219, %v1528
    %v1757 = vadd.f32 %v1220, %v1532
    %v1758 = vadd.f32 %v1221, %v1531
    %v1759 = vadd.f32 %v1222, %v1535
    %v1760 = vadd.f32 %v1223, %v1534
    %v1761 = vadd.f32 %v1224, %v1538
    %v1762 = vadd.f32 %v1225, %v1537
    %v1763 = vadd.f32 %v1226, %v1541
    %v1764 = vadd.f32 %v1227, %v1540
    %v1765 = vadd.f32 %v1228, %v1544
    %v1766 = vadd.f32 %v1229, %v1543
    %v1767 = vadd.f32 %v1230, %v1547
    %v1768 = vadd.f32 %v1231, %v1546
    %v1769 = vadd.f32 %v1232, %v1550
    %v1770 = vadd.f32 %v1233, %v1549
    %v1771 = vadd.f32 %v1234, %v1553
    %v1772 = vadd.f32 %v1235, %v1552
    %v1773 = vadd.f32 %v1236, %v1556
    %v1774 = vadd.f32 %v1237, %v1555
    %v1775 = vadd.f32 %v1238, %v1559
    %v1776 = vadd.f32 %v1239, %v1558
    %v1777 = vadd.f32 %v1240, %v1562
    %v1778 = vadd.f32 %v1241, %v1561
    %v1779 = vadd.f32 %v1242, %v1565
    %v1780 = vadd.f32 %v1243, %v1564
    %v1781 = vadd.f32 %v1244, %v1568
    %v1782 = vadd.f32 %v1245, %v1567
    %v1783 = vadd.f32 %v1246, %v1571
    %v1784 = vadd.f32 %v1247, %v1570
    %v1785 = vadd.f32 %v1248, %v1574
    %v1786 = vadd.f32 %v1249, %v1573
    %v1787 = vadd.f32 %v1250, %v1577
    %v1788 = vadd.f32 %v1251, %v1576
    %v1789 = vadd.f32 %v1252, %v1580
    %v1790 = vadd.f32 %v1253, %v1579
    %v1791 = vadd.f32 %v1254, %v1583
    %v1792 = vadd.f32 %v1255, %v1582
    %v1793 = vadd.f32 %v1256, %v1586
    %v1794 = vadd.f32 %v1257, %v1585
    %v1795 = vadd.f32 %v1258, %v1589
    %v1796 = vadd.f32 %v1259, %v1588
    %v1797 = vadd.f32 %v1260, %v1592
    %v1798 = vadd.f32 %v1261, %v1591
    %v1799 = vadd.f32 %v1262, %v1595
    %v1800 = vadd.f32 %v1263, %v1594
    %v1801 = vadd.f32 %v1264, %v1598
    %v1802 = vadd.f32 %v1265, %v1597
    %v1803 = vadd.f32 %v1266, %v1601
    %v1804 = vadd.f32 %v1267, %v1600
    %v1805 = vadd.f32 %v1268, %v1604
    %v1806 = vadd.f32 %v1269, %v1603
    %v1807 = vadd.f32 %v1270, %v1607
    %v1808 = vadd.f32 %v1271, %v1606
    %v1809 = vadd.f32 %v1272, %v1610
    %v1810 = vadd.f32 %v1273, %v1609
    %v1811 = vadd.f32 %v1274, %v1613
    %v1812 = vadd.f32 %v1275, %v1612
    %v1813 = vadd.f32 %v1276, %v1616
    %v1814 = vadd.f32 %v1277, %v1615
    %v1815 = vadd.f32 %v1278, %v1619
    %v1816 = vadd.f32 %v1279, %v1618
    %v1817 = vadd.f32 %v1280, %v1622
    %v1818 = vadd.f32 %v1281, %v1621
    %v1819 = vadd.f32 %v1282, %v1625
    %v1820 = vadd.f32 %v1283, %v1624
    %v1821 = vadd.f32 %v1284, %v1628
    %v1822 = vadd.f32 %v1285, %v1627
    %v1823 = vadd.f32 %v1286, %v1631
    %v1824 = vadd.f32 %v1287, %v1630
    %v1825 = vadd.f32 %v1288, %v1634
    %v1826 = vadd.f32 %v1289, %v1633
    %1828 = vset.pattern.permute.xlu0 0
    %1829 = vperm.xlu0 %1828, %v82
    %v1830 = vpop.permute.xlu0 %1829
    %1833 = vset.pattern.permute.xlu0 0
    %1834 = vperm.xlu0 %1833, %v83
    %v1835 = vpop.permute.xlu0 %1834
    %1838 = vset.pattern.permute.xlu0 0
    %1839 = vperm.xlu0 %1838, %v110
    %v1840 = vpop.permute.xlu0 %1839
    %1843 = vset.pattern.permute.xlu0 0
    %1844 = vperm.xlu0 %1843, %v111
    %v1845 = vpop.permute.xlu0 %1844
    %1848 = vset.pattern.permute.xlu0 0
    %1849 = vperm.xlu0 %1848, %v138
    %v1850 = vpop.permute.xlu0 %1849
    %1853 = vset.pattern.permute.xlu0 0
    %1854 = vperm.xlu0 %1853, %v139
    %v1855 = vpop.permute.xlu0 %1854
    %1858 = vset.pattern.permute.xlu0 0
    %1859 = vperm.xlu0 %1858, %v166
    %v1860 = vpop.permute.xlu0 %1859
    %1863 = vset.pattern.permute.xlu0 0
    %1864 = vperm.xlu0 %1863, %v167
    %v1865 = vpop.permute.xlu0 %1864
    %s1867 = scalar_lea.vmem %s1, 3
    %v1868 = vld [vmem:[%s1867] sm:$0x1]
    %v1870 = vlaneseq
    %v1871 = vshrl.u32 %v1870, 7
    %v1872 = vsub.s32 0, %v1871
    %v1873 = vrot.slane %v1868, %v1872
    %v1875 = vmul.f32 %v183, %v1873
    %v1876 = vmul.f32 %v188, %v1873
    %v1877 = vmul.f32 %v193, %v1873
    %v1878 = vmul.f32 %v198, %v1873
    %v1879 = vmul.f32 %v203, %v1873
    %v1880 = vmul.f32 %v208, %v1873
    %v1881 = vmul.f32 %v213, %v1873
    %v1882 = vmul.f32 %v218, %v1873
    %v1883 = vmul.f32 %v223, %v1873
    %v1884 = vmul.f32 %v228, %v1873
    %v1885 = vmul.f32 %v233, %v1873
    %v1886 = vmul.f32 %v238, %v1873
    %v1887 = vmul.f32 %v243, %v1873
    %v1888 = vmul.f32 %v248, %v1873
    %v1889 = vmul.f32 %v253, %v1873
    %v1890 = vmul.f32 %v258, %v1873
    %v1891 = vmul.f32 %v263, %v1873
    %v1892 = vmul.f32 %v268, %v1873
    %v1893 = vmul.f32 %v273, %v1873
    %v1894 = vmul.f32 %v278, %v1873
    %v1895 = vmul.f32 %v283, %v1873
    %v1896 = vmul.f32 %v288, %v1873
    %v1897 = vmul.f32 %v1830, %v1873
    %v1898 = vmul.f32 %v1835, %v1873
    %v1899 = vmul.f32 %v303, %v1873
    %v1900 = vmul.f32 %v308, %v1873
    %v1901 = vmul.f32 %v313, %v1873
    %v1902 = vmul.f32 %v318, %v1873
    %v1903 = vmul.f32 %v323, %v1873
    %v1904 = vmul.f32 %v328, %v1873
    %v1905 = vmul.f32 %v333, %v1873
    %v1906 = vmul.f32 %v338, %v1873
    %v1907 = vmul.f32 %v343, %v1873
    %v1908 = vmul.f32 %v348, %v1873
    %v1909 = vmul.f32 %v353, %v1873
    %v1910 = vmul.f32 %v358, %v1873
    %v1911 = vmul.f32 %v363, %v1873
    %v1912 = vmul.f32 %v368, %v1873
    %v1913 = vmul.f32 %v373, %v1873
    %v1914 = vmul.f32 %v378, %v1873
    %v1915 = vmul.f32 %v383, %v1873
    %v1916 = vmul.f32 %v388, %v1873
    %v1917 = vmul.f32 %v393, %v1873
    %v1918 = vmul.f32 %v398, %v1873
    %v1919 = vmul.f32 %v403, %v1873
    %v1920 = vmul.f32 %v408, %v1873
    %v1921 = vmul.f32 %v1840, %v1873
    %v1922 = vmul.f32 %v1845, %v1873
    %v1923 = vmul.f32 %v423, %v1873
    %v1924 = vmul.f32 %v428, %v1873
    %v1925 = vmul.f32 %v433, %v1873
    %v1926 = vmul.f32 %v438, %v1873
    %v1927 = vmul.f32 %v443, %v1873
    %v1928 = vmul.f32 %v448, %v1873
    %v1929 = vmul.f32 %v453, %v1873
    %v1930 = vmul.f32 %v458, %v1873
    %v1931 = vmul.f32 %v463, %v1873
    %v1932 = vmul.f32 %v468, %v1873
    %v1933 = vmul.f32 %v473, %v1873
    %v1934 = vmul.f32 %v478, %v1873
    %v1935 = vmul.f32 %v483, %v1873
    %v1936 = vmul.f32 %v488, %v1873
    %v1937 = vmul.f32 %v493, %v1873
    %v1938 = vmul.f32 %v498, %v1873
    %v1939 = vmul.f32 %v503, %v1873
    %v1940 = vmul.f32 %v508, %v1873
    %v1941 = vmul.f32 %v513, %v1873
    %v1942 = vmul.f32 %v518, %v1873
    %v1943 = vmul.f32 %v523, %v1873
    %v1944 = vmul.f32 %v528, %v1873
    %v1945 = vmul.f32 %v1850, %v1873
    %v1946 = vmul.f32 %v1855, %v1873
    %v1947 = vmul.f32 %v543, %v1873
    %v1948 = vmul.f32 %v548, %v1873
    %v1949 = vmul.f32 %v553, %v1873
    %v1950 = vmul.f32 %v558, %v1873
    %v1951 = vmul.f32 %v563, %v1873
    %v1952 = vmul.f32 %v568, %v1873
    %v1953 = vmul.f32 %v573, %v1873
    %v1954 = vmul.f32 %v578, %v1873
    %v1955 = vmul.f32 %v583, %v1873
    %v1956 = vmul.f32 %v588, %v1873
    %v1957 = vmul.f32 %v593, %v1873
    %v1958 = vmul.f32 %v598, %v1873
    %v1959 = vmul.f32 %v603, %v1873
    %v1960 = vmul.f32 %v608, %v1873
    %v1961 = vmul.f32 %v613, %v1873
    %v1962 = vmul.f32 %v618, %v1873
    %v1963 = vmul.f32 %v623, %v1873
    %v1964 = vmul.f32 %v628, %v1873
    %v1965 = vmul.f32 %v633, %v1873
    %v1966 = vmul.f32 %v638, %v1873
    %v1967 = vmul.f32 %v643, %v1873
    %v1968 = vmul.f32 %v648, %v1873
    %v1969 = vmul.f32 %v1860, %v1873
    %v1970 = vmul.f32 %v1865, %v1873
    %v1971 = vadd.f32 %v1731, %v1875
    %v1972 = vadd.f32 %v1732, %v1876
    %v1973 = vadd.f32 %v1733, %v1877
    %v1974 = vadd.f32 %v1734, %v1878
    %v1975 = vadd.f32 %v1735, %v1879
    %v1976 = vadd.f32 %v1736, %v1880
    %v1977 = vadd.f32 %v1737, %v1881
    %v1978 = vadd.f32 %v1738, %v1882
    %v1979 = vadd.f32 %v1739, %v1883
    %v1980 = vadd.f32 %v1740, %v1884
    %v1981 = vadd.f32 %v1741, %v1885
    %v1982 = vadd.f32 %v1742, %v1886
    %v1983 = vadd.f32 %v1743, %v1887
    %v1984 = vadd.f32 %v1744, %v1888
    %v1985 = vadd.f32 %v1745, %v1889
    %v1986 = vadd.f32 %v1746, %v1890
    %v1987 = vadd.f32 %v1747, %v1891
    %v1988 = vadd.f32 %v1748, %v1892
    %v1989 = vadd.f32 %v1749, %v1893
    %v1990 = vadd.f32 %v1750, %v1894
    %v1991 = vadd.f32 %v1751, %v1895
    %v1992 = vadd.f32 %v1752, %v1896
    %v1993 = vadd.f32 %v1753, %v1897
    %v1994 = vadd.f32 %v1754, %v1898
    %v1995 = vadd.f32 %v1755, %v1899
    %v1996 = vadd.f32 %v1756, %v1900
    %v1997 = vadd.f32 %v1757, %v1901
    %v1998 = vadd.f32 %v1758, %v1902
    %v1999 = vadd.f32 %v1759, %v1903
    %v2000 = vadd.f32 %v1760, %v1904
    %v2001 = vadd.f32 %v1761, %v1905
    %v2002 = vadd.f32 %v1762, %v1906
    %v2003 = vadd.f32 %v1763, %v1907
    %v2004 = vadd.f32 %v1764, %v1908
    %v2005 = vadd.f32 %v1765, %v1909
    %v2006 = vadd.f32 %v1766, %v1910
    %v2007 = vadd.f32 %v1767, %v1911
    %v2008 = vadd.f32 %v1768, %v1912
    %v2009 = vadd.f32 %v1769, %v1913
    %v2010 = vadd.f32 %v1770, %v1914
    %v2011 = vadd.f32 %v1771, %v1915
    %v2012 = vadd.f32 %v1772, %v1916
    %v2013 = vadd.f32 %v1773, %v1917
    %v2014 = vadd.f32 %v1774, %v1918
    %v2015 = vadd.f32 %v1775, %v1919
    %v2016 = vadd.f32 %v1776, %v1920
    %v2017 = vadd.f32 %v1777, %v1921
    %v2018 = vadd.f32 %v1778, %v1922
    %v2019 = vadd.f32 %v1779, %v1923
    %v2020 = vadd.f32 %v1780, %v1924
    %v2021 = vadd.f32 %v1781, %v1925
    %v2022 = vadd.f32 %v1782, %v1926
    %v2023 = vadd.f32 %v1783, %v1927
    %v2024 = vadd.f32 %v1784, %v1928
    %v2025 = vadd.f32 %v1785, %v1929
    %v2026 = vadd.f32 %v1786, %v1930
    %v2027 = vadd.f32 %v1787, %v1931
    %v2028 = vadd.f32 %v1788, %v1932
    %v2029 = vadd.f32 %v1789, %v1933
    %v2030 = vadd.f32 %v1790, %v1934
    %v2031 = vadd.f32 %v1791, %v1935
    %v2032 = vadd.f32 %v1792, %v1936
    %v2033 = vadd.f32 %v1793, %v1937
    %v2034 = vadd.f32 %v1794, %v1938
    %v2035 = vadd.f32 %v1795, %v1939
    %v2036 = vadd.f32 %v1796, %v1940
    %v2037 = vadd.f32 %v1797, %v1941
    %v2038 = vadd.f32 %v1798, %v1942
    %v2039 = vadd.f32 %v1799, %v1943
    %v2040 = vadd.f32 %v1800, %v1944
    %v2041 = vadd.f32 %v1801, %v1945
    %v2042 = vadd.f32 %v1802, %v1946
    %v2043 = vadd.f32 %v1803, %v1947
    %v2044 = vadd.f32 %v1804, %v1948
    %v2045 = vadd.f32 %v1805, %v1949
    %v2046 = vadd.f32 %v1806, %v1950
    %v2047 = vadd.f32 %v1807, %v1951
    %v2048 = vadd.f32 %v1808, %v1952
    %v2049 = vadd.f32 %v1809, %v1953
    %v2050 = vadd.f32 %v1810, %v1954
    %v2051 = vadd.f32 %v1811, %v1955
    %v2052 = vadd.f32 %v1812, %v1956
    %v2053 = vadd.f32 %v1813, %v1957
    %v2054 = vadd.f32 %v1814, %v1958
    %v2055 = vadd.f32 %v1815, %v1959
    %v2056 = vadd.f32 %v1816, %v1960
    %v2057 = vadd.f32 %v1817, %v1961
    %v2058 = vadd.f32 %v1818, %v1962
    %v2059 = vadd.f32 %v1819, %v1963
    %v2060 = vadd.f32 %v1820, %v1964
    %v2061 = vadd.f32 %v1821, %v1965
    %v2062 = vadd.f32 %v1822, %v1966
    %v2063 = vadd.f32 %v1823, %v1967
    %v2064 = vadd.f32 %v1824, %v1968
    %v2065 = vadd.f32 %v1825, %v1969
    %v2066 = vadd.f32 %v1826, %v1970
    %s2067 = scalar_lea.vmem %s1, 4
    %v2068 = vld [vmem:[%s2067] sm:$0x1]
    %v2070 = vlaneseq
    %v2071 = vshrl.u32 %v2070, 7
    %v2072 = vsub.s32 0, %v2071
    %v2073 = vrot.slane %v2068, %v2072
    %v2075 = vmul.f32 %v183, %v2073
    %v2076 = vmul.f32 %v188, %v2073
    %v2077 = vmul.f32 %v193, %v2073
    %v2078 = vmul.f32 %v198, %v2073
    %v2079 = vmul.f32 %v203, %v2073
    %v2080 = vmul.f32 %v208, %v2073
    %v2081 = vmul.f32 %v213, %v2073
    %v2082 = vmul.f32 %v218, %v2073
    %v2083 = vmul.f32 %v223, %v2073
    %v2084 = vmul.f32 %v228, %v2073
    %v2085 = vmul.f32 %v233, %v2073
    %v2086 = vmul.f32 %v238, %v2073
    %v2087 = vmul.f32 %v243, %v2073
    %v2088 = vmul.f32 %v248, %v2073
    %v2089 = vmul.f32 %v253, %v2073
    %v2090 = vmul.f32 %v258, %v2073
    %v2091 = vmul.f32 %v263, %v2073
    %v2092 = vmul.f32 %v268, %v2073
    %v2093 = vmul.f32 %v273, %v2073
    %v2094 = vmul.f32 %v278, %v2073
    %v2095 = vmul.f32 %v283, %v2073
    %v2096 = vmul.f32 %v288, %v2073
    %v2097 = vmul.f32 %v1830, %v2073
    %v2098 = vmul.f32 %v1835, %v2073
    %v2099 = vmul.f32 %v303, %v2073
    %v2100 = vmul.f32 %v308, %v2073
    %v2101 = vmul.f32 %v313, %v2073
    %v2102 = vmul.f32 %v318, %v2073
    %v2103 = vmul.f32 %v323, %v2073
    %v2104 = vmul.f32 %v328, %v2073
    %v2105 = vmul.f32 %v333, %v2073
    %v2106 = vmul.f32 %v338, %v2073
    %v2107 = vmul.f32 %v343, %v2073
    %v2108 = vmul.f32 %v348, %v2073
    %v2109 = vmul.f32 %v353, %v2073
    %v2110 = vmul.f32 %v358, %v2073
    %v2111 = vmul.f32 %v363, %v2073
    %v2112 = vmul.f32 %v368, %v2073
    %v2113 = vmul.f32 %v373, %v2073
    %v2114 = vmul.f32 %v378, %v2073
    %v2115 = vmul.f32 %v383, %v2073
    %v2116 = vmul.f32 %v388, %v2073
    %v2117 = vmul.f32 %v393, %v2073
    %v2118 = vmul.f32 %v398, %v2073
    %v2119 = vmul.f32 %v403, %v2073
    %v2120 = vmul.f32 %v408, %v2073
    %v2121 = vmul.f32 %v1840, %v2073
    %v2122 = vmul.f32 %v1845, %v2073
    %v2123 = vmul.f32 %v423, %v2073
    %v2124 = vmul.f32 %v428, %v2073
    %v2125 = vmul.f32 %v433, %v2073
    %v2126 = vmul.f32 %v438, %v2073
    %v2127 = vmul.f32 %v443, %v2073
    %v2128 = vmul.f32 %v448, %v2073
    %v2129 = vmul.f32 %v453, %v2073
    %v2130 = vmul.f32 %v458, %v2073
    %v2131 = vmul.f32 %v463, %v2073
    %v2132 = vmul.f32 %v468, %v2073
    %v2133 = vmul.f32 %v473, %v2073
    %v2134 = vmul.f32 %v478, %v2073
    %v2135 = vmul.f32 %v483, %v2073
    %v2136 = vmul.f32 %v488, %v2073
    %v2137 = vmul.f32 %v493, %v2073
    %v2138 = vmul.f32 %v498, %v2073
    %v2139 = vmul.f32 %v503, %v2073
    %v2140 = vmul.f32 %v508, %v2073
    %v2141 = vmul.f32 %v513, %v2073
    %v2142 = vmul.f32 %v518, %v2073
    %v2143 = vmul.f32 %v523, %v2073
    %v2144 = vmul.f32 %v528, %v2073
    %v2145 = vmul.f32 %v1850, %v2073
    %v2146 = vmul.f32 %v1855, %v2073
    %v2147 = vmul.f32 %v543, %v2073
    %v2148 = vmul.f32 %v548, %v2073
    %v2149 = vmul.f32 %v553, %v2073
    %v2150 = vmul.f32 %v558, %v2073
    %v2151 = vmul.f32 %v563, %v2073
    %v2152 = vmul.f32 %v568, %v2073
    %v2153 = vmul.f32 %v573, %v2073
    %v2154 = vmul.f32 %v578, %v2073
    %v2155 = vmul.f32 %v583, %v2073
    %v2156 = vmul.f32 %v588, %v2073
    %v2157 = vmul.f32 %v593, %v2073
    %v2158 = vmul.f32 %v598, %v2073
    %v2159 = vmul.f32 %v603, %v2073
    %v2160 = vmul.f32 %v608, %v2073
    %v2161 = vmul.f32 %v613, %v2073
    %v2162 = vmul.f32 %v618, %v2073
    %v2163 = vmul.f32 %v623, %v2073
    %v2164 = vmul.f32 %v628, %v2073
    %v2165 = vmul.f32 %v633, %v2073
    %v2166 = vmul.f32 %v638, %v2073
    %v2167 = vmul.f32 %v643, %v2073
    %v2168 = vmul.f32 %v648, %v2073
    %v2169 = vmul.f32 %v1860, %v2073
    %v2170 = vmul.f32 %v1865, %v2073
    %v2267 = vrot.slane %v2075, 1
    %v2268 = vrot.slane %v2076, 1
    %v2269 = vsel %vm953, %v2267, %v2268
    %v2270 = vrot.slane %v2077, 1
    %v2271 = vrot.slane %v2078, 1
    %v2272 = vsel %vm953, %v2270, %v2271
    %v2273 = vrot.slane %v2079, 1
    %v2274 = vrot.slane %v2080, 1
    %v2275 = vsel %vm953, %v2273, %v2274
    %v2276 = vrot.slane %v2081, 1
    %v2277 = vrot.slane %v2082, 1
    %v2278 = vsel %vm953, %v2276, %v2277
    %v2279 = vrot.slane %v2083, 1
    %v2280 = vrot.slane %v2084, 1
    %v2281 = vsel %vm953, %v2279, %v2280
    %v2282 = vrot.slane %v2085, 1
    %v2283 = vrot.slane %v2086, 1
    %v2284 = vsel %vm953, %v2282, %v2283
    %v2285 = vrot.slane %v2087, 1
    %v2286 = vrot.slane %v2088, 1
    %v2287 = vsel %vm953, %v2285, %v2286
    %v2288 = vrot.slane %v2089, 1
    %v2289 = vrot.slane %v2090, 1
    %v2290 = vsel %vm953, %v2288, %v2289
    %v2291 = vrot.slane %v2091, 1
    %v2292 = vrot.slane %v2092, 1
    %v2293 = vsel %vm953, %v2291, %v2292
    %v2294 = vrot.slane %v2093, 1
    %v2295 = vrot.slane %v2094, 1
    %v2296 = vsel %vm953, %v2294, %v2295
    %v2297 = vrot.slane %v2095, 1
    %v2298 = vrot.slane %v2096, 1
    %v2299 = vsel %vm953, %v2297, %v2298
    %v2300 = vrot.slane %v2097, 1
    %v2301 = vrot.slane %v2098, 1
    %v2302 = vsel %vm953, %v2300, %v2301
    %v2303 = vrot.slane %v2099, 1
    %v2304 = vrot.slane %v2100, 1
    %v2305 = vsel %vm953, %v2303, %v2304
    %v2306 = vrot.slane %v2101, 1
    %v2307 = vrot.slane %v2102, 1
    %v2308 = vsel %vm953, %v2306, %v2307
    %v2309 = vrot.slane %v2103, 1
    %v2310 = vrot.slane %v2104, 1
    %v2311 = vsel %vm953, %v2309, %v2310
    %v2312 = vrot.slane %v2105, 1
    %v2313 = vrot.slane %v2106, 1
    %v2314 = vsel %vm953, %v2312, %v2313
    %v2315 = vrot.slane %v2107, 1
    %v2316 = vrot.slane %v2108, 1
    %v2317 = vsel %vm953, %v2315, %v2316
    %v2318 = vrot.slane %v2109, 1
    %v2319 = vrot.slane %v2110, 1
    %v2320 = vsel %vm953, %v2318, %v2319
    %v2321 = vrot.slane %v2111, 1
    %v2322 = vrot.slane %v2112, 1
    %v2323 = vsel %vm953, %v2321, %v2322
    %v2324 = vrot.slane %v2113, 1
    %v2325 = vrot.slane %v2114, 1
    %v2326 = vsel %vm953, %v2324, %v2325
    %v2327 = vrot.slane %v2115, 1
    %v2328 = vrot.slane %v2116, 1
    %v2329 = vsel %vm953, %v2327, %v2328
    %v2330 = vrot.slane %v2117, 1
    %v2331 = vrot.slane %v2118, 1
    %v2332 = vsel %vm953, %v2330, %v2331
    %v2333 = vrot.slane %v2119, 1
    %v2334 = vrot.slane %v2120, 1
    %v2335 = vsel %vm953, %v2333, %v2334
    %v2336 = vrot.slane %v2121, 1
    %v2337 = vrot.slane %v2122, 1
    %v2338 = vsel %vm953, %v2336, %v2337
    %v2339 = vrot.slane %v2123, 1
    %v2340 = vrot.slane %v2124, 1
    %v2341 = vsel %vm953, %v2339, %v2340
    %v2342 = vrot.slane %v2125, 1
    %v2343 = vrot.slane %v2126, 1
    %v2344 = vsel %vm953, %v2342, %v2343
    %v2345 = vrot.slane %v2127, 1
    %v2346 = vrot.slane %v2128, 1
    %v2347 = vsel %vm953, %v2345, %v2346
    %v2348 = vrot.slane %v2129, 1
    %v2349 = vrot.slane %v2130, 1
    %v2350 = vsel %vm953, %v2348, %v2349
    %v2351 = vrot.slane %v2131, 1
    %v2352 = vrot.slane %v2132, 1
    %v2353 = vsel %vm953, %v2351, %v2352
    %v2354 = vrot.slane %v2133, 1
    %v2355 = vrot.slane %v2134, 1
    %v2356 = vsel %vm953, %v2354, %v2355
    %v2357 = vrot.slane %v2135, 1
    %v2358 = vrot.slane %v2136, 1
    %v2359 = vsel %vm953, %v2357, %v2358
    %v2360 = vrot.slane %v2137, 1
    %v2361 = vrot.slane %v2138, 1
    %v2362 = vsel %vm953, %v2360, %v2361
    %v2363 = vrot.slane %v2139, 1
    %v2364 = vrot.slane %v2140, 1
    %v2365 = vsel %vm953, %v2363, %v2364
    %v2366 = vrot.slane %v2141, 1
    %v2367 = vrot.slane %v2142, 1
    %v2368 = vsel %vm953, %v2366, %v2367
    %v2369 = vrot.slane %v2143, 1
    %v2370 = vrot.slane %v2144, 1
    %v2371 = vsel %vm953, %v2369, %v2370
    %v2372 = vrot.slane %v2145, 1
    %v2373 = vrot.slane %v2146, 1
    %v2374 = vsel %vm953, %v2372, %v2373
    %v2375 = vrot.slane %v2147, 1
    %v2376 = vrot.slane %v2148, 1
    %v2377 = vsel %vm953, %v2375, %v2376
    %v2378 = vrot.slane %v2149, 1
    %v2379 = vrot.slane %v2150, 1
    %v2380 = vsel %vm953, %v2378, %v2379
    %v2381 = vrot.slane %v2151, 1
    %v2382 = vrot.slane %v2152, 1
    %v2383 = vsel %vm953, %v2381, %v2382
    %v2384 = vrot.slane %v2153, 1
    %v2385 = vrot.slane %v2154, 1
    %v2386 = vsel %vm953, %v2384, %v2385
    %v2387 = vrot.slane %v2155, 1
    %v2388 = vrot.slane %v2156, 1
    %v2389 = vsel %vm953, %v2387, %v2388
    %v2390 = vrot.slane %v2157, 1
    %v2391 = vrot.slane %v2158, 1
    %v2392 = vsel %vm953, %v2390, %v2391
    %v2393 = vrot.slane %v2159, 1
    %v2394 = vrot.slane %v2160, 1
    %v2395 = vsel %vm953, %v2393, %v2394
    %v2396 = vrot.slane %v2161, 1
    %v2397 = vrot.slane %v2162, 1
    %v2398 = vsel %vm953, %v2396, %v2397
    %v2399 = vrot.slane %v2163, 1
    %v2400 = vrot.slane %v2164, 1
    %v2401 = vsel %vm953, %v2399, %v2400
    %v2402 = vrot.slane %v2165, 1
    %v2403 = vrot.slane %v2166, 1
    %v2404 = vsel %vm953, %v2402, %v2403
    %v2405 = vrot.slane %v2167, 1
    %v2406 = vrot.slane %v2168, 1
    %v2407 = vsel %vm953, %v2405, %v2406
    %v2408 = vrot.slane %v2169, 1
    %v2409 = vrot.slane %v2170, 1
    %v2410 = vsel %vm953, %v2408, %v2409
    %v2507 = vadd.f32 %v1971, %v2269
    %v2508 = vadd.f32 %v1972, %v2268
    %v2509 = vadd.f32 %v1973, %v2272
    %v2510 = vadd.f32 %v1974, %v2271
    %v2511 = vadd.f32 %v1975, %v2275
    %v2512 = vadd.f32 %v1976, %v2274
    %v2513 = vadd.f32 %v1977, %v2278
    %v2514 = vadd.f32 %v1978, %v2277
    %v2515 = vadd.f32 %v1979, %v2281
    %v2516 = vadd.f32 %v1980, %v2280
    %v2517 = vadd.f32 %v1981, %v2284
    %v2518 = vadd.f32 %v1982, %v2283
    %v2519 = vadd.f32 %v1983, %v2287
    %v2520 = vadd.f32 %v1984, %v2286
    %v2521 = vadd.f32 %v1985, %v2290
    %v2522 = vadd.f32 %v1986, %v2289
    %v2523 = vadd.f32 %v1987, %v2293
    %v2524 = vadd.f32 %v1988, %v2292
    %v2525 = vadd.f32 %v1989, %v2296
    %v2526 = vadd.f32 %v1990, %v2295
    %v2527 = vadd.f32 %v1991, %v2299
    %v2528 = vadd.f32 %v1992, %v2298
    %v2529 = vadd.f32 %v1993, %v2302
    %v2530 = vadd.f32 %v1994, %v2301
    %v2531 = vadd.f32 %v1995, %v2305
    %v2532 = vadd.f32 %v1996, %v2304
    %v2533 = vadd.f32 %v1997, %v2308
    %v2534 = vadd.f32 %v1998, %v2307
    %v2535 = vadd.f32 %v1999, %v2311
    %v2536 = vadd.f32 %v2000, %v2310
    %v2537 = vadd.f32 %v2001, %v2314
    %v2538 = vadd.f32 %v2002, %v2313
    %v2539 = vadd.f32 %v2003, %v2317
    %v2540 = vadd.f32 %v2004, %v2316
    %v2541 = vadd.f32 %v2005, %v2320
    %v2542 = vadd.f32 %v2006, %v2319
    %v2543 = vadd.f32 %v2007, %v2323
    %v2544 = vadd.f32 %v2008, %v2322
    %v2545 = vadd.f32 %v2009, %v2326
    %v2546 = vadd.f32 %v2010, %v2325
    %v2547 = vadd.f32 %v2011, %v2329
    %v2548 = vadd.f32 %v2012, %v2328
    %v2549 = vadd.f32 %v2013, %v2332
    %v2550 = vadd.f32 %v2014, %v2331
    %v2551 = vadd.f32 %v2015, %v2335
    %v2552 = vadd.f32 %v2016, %v2334
    %v2553 = vadd.f32 %v2017, %v2338
    %v2554 = vadd.f32 %v2018, %v2337
    %v2555 = vadd.f32 %v2019, %v2341
    %v2556 = vadd.f32 %v2020, %v2340
    %v2557 = vadd.f32 %v2021, %v2344
    %v2558 = vadd.f32 %v2022, %v2343
    %v2559 = vadd.f32 %v2023, %v2347
    %v2560 = vadd.f32 %v2024, %v2346
    %v2561 = vadd.f32 %v2025, %v2350
    %v2562 = vadd.f32 %v2026, %v2349
    %v2563 = vadd.f32 %v2027, %v2353
    %v2564 = vadd.f32 %v2028, %v2352
    %v2565 = vadd.f32 %v2029, %v2356
    %v2566 = vadd.f32 %v2030, %v2355
    %v2567 = vadd.f32 %v2031, %v2359
    %v2568 = vadd.f32 %v2032, %v2358
    %v2569 = vadd.f32 %v2033, %v2362
    %v2570 = vadd.f32 %v2034, %v2361
    %v2571 = vadd.f32 %v2035, %v2365
    %v2572 = vadd.f32 %v2036, %v2364
    %v2573 = vadd.f32 %v2037, %v2368
    %v2574 = vadd.f32 %v2038, %v2367
    %v2575 = vadd.f32 %v2039, %v2371
    %v2576 = vadd.f32 %v2040, %v2370
    %v2577 = vadd.f32 %v2041, %v2374
    %v2578 = vadd.f32 %v2042, %v2373
    %v2579 = vadd.f32 %v2043, %v2377
    %v2580 = vadd.f32 %v2044, %v2376
    %v2581 = vadd.f32 %v2045, %v2380
    %v2582 = vadd.f32 %v2046, %v2379
    %v2583 = vadd.f32 %v2047, %v2383
    %v2584 = vadd.f32 %v2048, %v2382
    %v2585 = vadd.f32 %v2049, %v2386
    %v2586 = vadd.f32 %v2050, %v2385
    %v2587 = vadd.f32 %v2051, %v2389
    %v2588 = vadd.f32 %v2052, %v2388
    %v2589 = vadd.f32 %v2053, %v2392
    %v2590 = vadd.f32 %v2054, %v2391
    %v2591 = vadd.f32 %v2055, %v2395
    %v2592 = vadd.f32 %v2056, %v2394
    %v2593 = vadd.f32 %v2057, %v2398
    %v2594 = vadd.f32 %v2058, %v2397
    %v2595 = vadd.f32 %v2059, %v2401
    %v2596 = vadd.f32 %v2060, %v2400
    %v2597 = vadd.f32 %v2061, %v2404
    %v2598 = vadd.f32 %v2062, %v2403
    %v2599 = vadd.f32 %v2063, %v2407
    %v2600 = vadd.f32 %v2064, %v2406
    %v2601 = vadd.f32 %v2065, %v2410
    %v2602 = vadd.f32 %v2066, %v2409
    %s2603 = scalar_lea.vmem %s1, 5
    %v2604 = vld [vmem:[%s2603] sm:$0x1]
    %v2606 = vlaneseq
    %v2607 = vshrl.u32 %v2606, 7
    %v2608 = vsub.s32 0, %v2607
    %v2609 = vrot.slane %v2604, %v2608
    %v2611 = vmul.f32 %v183, %v2609
    %v2612 = vmul.f32 %v188, %v2609
    %v2613 = vmul.f32 %v193, %v2609
    %v2614 = vmul.f32 %v198, %v2609
    %v2615 = vmul.f32 %v203, %v2609
    %v2616 = vmul.f32 %v208, %v2609
    %v2617 = vmul.f32 %v213, %v2609
    %v2618 = vmul.f32 %v218, %v2609
    %v2619 = vmul.f32 %v223, %v2609
    %v2620 = vmul.f32 %v228, %v2609
    %v2621 = vmul.f32 %v233, %v2609
    %v2622 = vmul.f32 %v238, %v2609
    %v2623 = vmul.f32 %v243, %v2609
    %v2624 = vmul.f32 %v248, %v2609
    %v2625 = vmul.f32 %v253, %v2609
    %v2626 = vmul.f32 %v258, %v2609
    %v2627 = vmul.f32 %v263, %v2609
    %v2628 = vmul.f32 %v268, %v2609
    %v2629 = vmul.f32 %v273, %v2609
    %v2630 = vmul.f32 %v278, %v2609
    %v2631 = vmul.f32 %v283, %v2609
    %v2632 = vmul.f32 %v288, %v2609
    %v2633 = vmul.f32 %v1830, %v2609
    %v2634 = vmul.f32 %v1835, %v2609
    %v2635 = vmul.f32 %v303, %v2609
    %v2636 = vmul.f32 %v308, %v2609
    %v2637 = vmul.f32 %v313, %v2609
    %v2638 = vmul.f32 %v318, %v2609
    %v2639 = vmul.f32 %v323, %v2609
    %v2640 = vmul.f32 %v328, %v2609
    %v2641 = vmul.f32 %v333, %v2609
    %v2642 = vmul.f32 %v338, %v2609
    %v2643 = vmul.f32 %v343, %v2609
    %v2644 = vmul.f32 %v348, %v2609
    %v2645 = vmul.f32 %v353, %v2609
    %v2646 = vmul.f32 %v358, %v2609
    %v2647 = vmul.f32 %v363, %v2609
    %v2648 = vmul.f32 %v368, %v2609
    %v2649 = vmul.f32 %v373, %v2609
    %v2650 = vmul.f32 %v378, %v2609
    %v2651 = vmul.f32 %v383, %v2609
    %v2652 = vmul.f32 %v388, %v2609
    %v2653 = vmul.f32 %v393, %v2609
    %v2654 = vmul.f32 %v398, %v2609
    %v2655 = vmul.f32 %v403, %v2609
    %v2656 = vmul.f32 %v408, %v2609
    %v2657 = vmul.f32 %v1840, %v2609
    %v2658 = vmul.f32 %v1845, %v2609
    %v2659 = vmul.f32 %v423, %v2609
    %v2660 = vmul.f32 %v428, %v2609
    %v2661 = vmul.f32 %v433, %v2609
    %v2662 = vmul.f32 %v438, %v2609
    %v2663 = vmul.f32 %v443, %v2609
    %v2664 = vmul.f32 %v448, %v2609
    %v2665 = vmul.f32 %v453, %v2609
    %v2666 = vmul.f32 %v458, %v2609
    %v2667 = vmul.f32 %v463, %v2609
    %v2668 = vmul.f32 %v468, %v2609
    %v2669 = vmul.f32 %v473, %v2609
    %v2670 = vmul.f32 %v478, %v2609
    %v2671 = vmul.f32 %v483, %v2609
    %v2672 = vmul.f32 %v488, %v2609
    %v2673 = vmul.f32 %v493, %v2609
    %v2674 = vmul.f32 %v498, %v2609
    %v2675 = vmul.f32 %v503, %v2609
    %v2676 = vmul.f32 %v508, %v2609
    %v2677 = vmul.f32 %v513, %v2609
    %v2678 = vmul.f32 %v518, %v2609
    %v2679 = vmul.f32 %v523, %v2609
    %v2680 = vmul.f32 %v528, %v2609
    %v2681 = vmul.f32 %v1850, %v2609
    %v2682 = vmul.f32 %v1855, %v2609
    %v2683 = vmul.f32 %v543, %v2609
    %v2684 = vmul.f32 %v548, %v2609
    %v2685 = vmul.f32 %v553, %v2609
    %v2686 = vmul.f32 %v558, %v2609
    %v2687 = vmul.f32 %v563, %v2609
    %v2688 = vmul.f32 %v568, %v2609
    %v2689 = vmul.f32 %v573, %v2609
    %v2690 = vmul.f32 %v578, %v2609
    %v2691 = vmul.f32 %v583, %v2609
    %v2692 = vmul.f32 %v588, %v2609
    %v2693 = vmul.f32 %v593, %v2609
    %v2694 = vmul.f32 %v598, %v2609
    %v2695 = vmul.f32 %v603, %v2609
    %v2696 = vmul.f32 %v608, %v2609
    %v2697 = vmul.f32 %v613, %v2609
    %v2698 = vmul.f32 %v618, %v2609
    %v2699 = vmul.f32 %v623, %v2609
    %v2700 = vmul.f32 %v628, %v2609
    %v2701 = vmul.f32 %v633, %v2609
    %v2702 = vmul.f32 %v638, %v2609
    %v2703 = vmul.f32 %v643, %v2609
    %v2704 = vmul.f32 %v648, %v2609
    %v2705 = vmul.f32 %v1860, %v2609
    %v2706 = vmul.f32 %v1865, %v2609
    %v2803 = vrot.slane %v2611, 2
    %v2804 = vrot.slane %v2612, 2
    %v2805 = vsel %vm1490, %v2803, %v2804
    %v2806 = vrot.slane %v2613, 2
    %v2807 = vrot.slane %v2614, 2
    %v2808 = vsel %vm1490, %v2806, %v2807
    %v2809 = vrot.slane %v2615, 2
    %v2810 = vrot.slane %v2616, 2
    %v2811 = vsel %vm1490, %v2809, %v2810
    %v2812 = vrot.slane %v2617, 2
    %v2813 = vrot.slane %v2618, 2
    %v2814 = vsel %vm1490, %v2812, %v2813
    %v2815 = vrot.slane %v2619, 2
    %v2816 = vrot.slane %v2620, 2
    %v2817 = vsel %vm1490, %v2815, %v2816
    %v2818 = vrot.slane %v2621, 2
    %v2819 = vrot.slane %v2622, 2
    %v2820 = vsel %vm1490, %v2818, %v2819
    %v2821 = vrot.slane %v2623, 2
    %v2822 = vrot.slane %v2624, 2
    %v2823 = vsel %vm1490, %v2821, %v2822
    %v2824 = vrot.slane %v2625, 2
    %v2825 = vrot.slane %v2626, 2
    %v2826 = vsel %vm1490, %v2824, %v2825
    %v2827 = vrot.slane %v2627, 2
    %v2828 = vrot.slane %v2628, 2
    %v2829 = vsel %vm1490, %v2827, %v2828
    %v2830 = vrot.slane %v2629, 2
    %v2831 = vrot.slane %v2630, 2
    %v2832 = vsel %vm1490, %v2830, %v2831
    %v2833 = vrot.slane %v2631, 2
    %v2834 = vrot.slane %v2632, 2
    %v2835 = vsel %vm1490, %v2833, %v2834
    %v2836 = vrot.slane %v2633, 2
    %v2837 = vrot.slane %v2634, 2
    %v2838 = vsel %vm1490, %v2836, %v2837
    %v2839 = vrot.slane %v2635, 2
    %v2840 = vrot.slane %v2636, 2
    %v2841 = vsel %vm1490, %v2839, %v2840
    %v2842 = vrot.slane %v2637, 2
    %v2843 = vrot.slane %v2638, 2
    %v2844 = vsel %vm1490, %v2842, %v2843
    %v2845 = vrot.slane %v2639, 2
    %v2846 = vrot.slane %v2640, 2
    %v2847 = vsel %vm1490, %v2845, %v2846
    %v2848 = vrot.slane %v2641, 2
    %v2849 = vrot.slane %v2642, 2
    %v2850 = vsel %vm1490, %v2848, %v2849
    %v2851 = vrot.slane %v2643, 2
    %v2852 = vrot.slane %v2644, 2
    %v2853 = vsel %vm1490, %v2851, %v2852
    %v2854 = vrot.slane %v2645, 2
    %v2855 = vrot.slane %v2646, 2
    %v2856 = vsel %vm1490, %v2854, %v2855
    %v2857 = vrot.slane %v2647, 2
    %v2858 = vrot.slane %v2648, 2
    %v2859 = vsel %vm1490, %v2857, %v2858
    %v2860 = vrot.slane %v2649, 2
    %v2861 = vrot.slane %v2650, 2
    %v2862 = vsel %vm1490, %v2860, %v2861
    %v2863 = vrot.slane %v2651, 2
    %v2864 = vrot.slane %v2652, 2
    %v2865 = vsel %vm1490, %v2863, %v2864
    %v2866 = vrot.slane %v2653, 2
    %v2867 = vrot.slane %v2654, 2
    %v2868 = vsel %vm1490, %v2866, %v2867
    %v2869 = vrot.slane %v2655, 2
    %v2870 = vrot.slane %v2656, 2
    %v2871 = vsel %vm1490, %v2869, %v2870
    %v2872 = vrot.slane %v2657, 2
    %v2873 = vrot.slane %v2658, 2
    %v2874 = vsel %vm1490, %v2872, %v2873
    %v2875 = vrot.slane %v2659, 2
    %v2876 = vrot.slane %v2660, 2
    %v2877 = vsel %vm1490, %v2875, %v2876
    %v2878 = vrot.slane %v2661, 2
    %v2879 = vrot.slane %v2662, 2
    %v2880 = vsel %vm1490, %v2878, %v2879
    %v2881 = vrot.slane %v2663, 2
    %v2882 = vrot.slane %v2664, 2
    %v2883 = vsel %vm1490, %v2881, %v2882
    %v2884 = vrot.slane %v2665, 2
    %v2885 = vrot.slane %v2666, 2
    %v2886 = vsel %vm1490, %v2884, %v2885
    %v2887 = vrot.slane %v2667, 2
    %v2888 = vrot.slane %v2668, 2
    %v2889 = vsel %vm1490, %v2887, %v2888
    %v2890 = vrot.slane %v2669, 2
    %v2891 = vrot.slane %v2670, 2
    %v2892 = vsel %vm1490, %v2890, %v2891
    %v2893 = vrot.slane %v2671, 2
    %v2894 = vrot.slane %v2672, 2
    %v2895 = vsel %vm1490, %v2893, %v2894
    %v2896 = vrot.slane %v2673, 2
    %v2897 = vrot.slane %v2674, 2
    %v2898 = vsel %vm1490, %v2896, %v2897
    %v2899 = vrot.slane %v2675, 2
    %v2900 = vrot.slane %v2676, 2
    %v2901 = vsel %vm1490, %v2899, %v2900
    %v2902 = vrot.slane %v2677, 2
    %v2903 = vrot.slane %v2678, 2
    %v2904 = vsel %vm1490, %v2902, %v2903
    %v2905 = vrot.slane %v2679, 2
    %v2906 = vrot.slane %v2680, 2
    %v2907 = vsel %vm1490, %v2905, %v2906
    %v2908 = vrot.slane %v2681, 2
    %v2909 = vrot.slane %v2682, 2
    %v2910 = vsel %vm1490, %v2908, %v2909
    %v2911 = vrot.slane %v2683, 2
    %v2912 = vrot.slane %v2684, 2
    %v2913 = vsel %vm1490, %v2911, %v2912
    %v2914 = vrot.slane %v2685, 2
    %v2915 = vrot.slane %v2686, 2
    %v2916 = vsel %vm1490, %v2914, %v2915
    %v2917 = vrot.slane %v2687, 2
    %v2918 = vrot.slane %v2688, 2
    %v2919 = vsel %vm1490, %v2917, %v2918
    %v2920 = vrot.slane %v2689, 2
    %v2921 = vrot.slane %v2690, 2
    %v2922 = vsel %vm1490, %v2920, %v2921
    %v2923 = vrot.slane %v2691, 2
    %v2924 = vrot.slane %v2692, 2
    %v2925 = vsel %vm1490, %v2923, %v2924
    %v2926 = vrot.slane %v2693, 2
    %v2927 = vrot.slane %v2694, 2
    %v2928 = vsel %vm1490, %v2926, %v2927
    %v2929 = vrot.slane %v2695, 2
    %v2930 = vrot.slane %v2696, 2
    %v2931 = vsel %vm1490, %v2929, %v2930
    %v2932 = vrot.slane %v2697, 2
    %v2933 = vrot.slane %v2698, 2
    %v2934 = vsel %vm1490, %v2932, %v2933
    %v2935 = vrot.slane %v2699, 2
    %v2936 = vrot.slane %v2700, 2
    %v2937 = vsel %vm1490, %v2935, %v2936
    %v2938 = vrot.slane %v2701, 2
    %v2939 = vrot.slane %v2702, 2
    %v2940 = vsel %vm1490, %v2938, %v2939
    %v2941 = vrot.slane %v2703, 2
    %v2942 = vrot.slane %v2704, 2
    %v2943 = vsel %vm1490, %v2941, %v2942
    %v2944 = vrot.slane %v2705, 2
    %v2945 = vrot.slane %v2706, 2
    %v2946 = vsel %vm1490, %v2944, %v2945
    %v3043 = vadd.f32 %v2507, %v2805
    %v3044 = vadd.f32 %v2508, %v2804
    %v3045 = vadd.f32 %v2509, %v2808
    %v3046 = vadd.f32 %v2510, %v2807
    %v3047 = vadd.f32 %v2511, %v2811
    %v3048 = vadd.f32 %v2512, %v2810
    %v3049 = vadd.f32 %v2513, %v2814
    %v3050 = vadd.f32 %v2514, %v2813
    %v3051 = vadd.f32 %v2515, %v2817
    %v3052 = vadd.f32 %v2516, %v2816
    %v3053 = vadd.f32 %v2517, %v2820
    %v3054 = vadd.f32 %v2518, %v2819
    %v3055 = vadd.f32 %v2519, %v2823
    %v3056 = vadd.f32 %v2520, %v2822
    %v3057 = vadd.f32 %v2521, %v2826
    %v3058 = vadd.f32 %v2522, %v2825
    %v3059 = vadd.f32 %v2523, %v2829
    %v3060 = vadd.f32 %v2524, %v2828
    %v3061 = vadd.f32 %v2525, %v2832
    %v3062 = vadd.f32 %v2526, %v2831
    %v3063 = vadd.f32 %v2527, %v2835
    %v3064 = vadd.f32 %v2528, %v2834
    %v3065 = vadd.f32 %v2529, %v2838
    %v3066 = vadd.f32 %v2530, %v2837
    %v3067 = vadd.f32 %v2531, %v2841
    %v3068 = vadd.f32 %v2532, %v2840
    %v3069 = vadd.f32 %v2533, %v2844
    %v3070 = vadd.f32 %v2534, %v2843
    %v3071 = vadd.f32 %v2535, %v2847
    %v3072 = vadd.f32 %v2536, %v2846
    %v3073 = vadd.f32 %v2537, %v2850
    %v3074 = vadd.f32 %v2538, %v2849
    %v3075 = vadd.f32 %v2539, %v2853
    %v3076 = vadd.f32 %v2540, %v2852
    %v3077 = vadd.f32 %v2541, %v2856
    %v3078 = vadd.f32 %v2542, %v2855
    %v3079 = vadd.f32 %v2543, %v2859
    %v3080 = vadd.f32 %v2544, %v2858
    %v3081 = vadd.f32 %v2545, %v2862
    %v3082 = vadd.f32 %v2546, %v2861
    %v3083 = vadd.f32 %v2547, %v2865
    %v3084 = vadd.f32 %v2548, %v2864
    %v3085 = vadd.f32 %v2549, %v2868
    %v3086 = vadd.f32 %v2550, %v2867
    %v3087 = vadd.f32 %v2551, %v2871
    %v3088 = vadd.f32 %v2552, %v2870
    %v3089 = vadd.f32 %v2553, %v2874
    %v3090 = vadd.f32 %v2554, %v2873
    %v3091 = vadd.f32 %v2555, %v2877
    %v3092 = vadd.f32 %v2556, %v2876
    %v3093 = vadd.f32 %v2557, %v2880
    %v3094 = vadd.f32 %v2558, %v2879
    %v3095 = vadd.f32 %v2559, %v2883
    %v3096 = vadd.f32 %v2560, %v2882
    %v3097 = vadd.f32 %v2561, %v2886
    %v3098 = vadd.f32 %v2562, %v2885
    %v3099 = vadd.f32 %v2563, %v2889
    %v3100 = vadd.f32 %v2564, %v2888
    %v3101 = vadd.f32 %v2565, %v2892
    %v3102 = vadd.f32 %v2566, %v2891
    %v3103 = vadd.f32 %v2567, %v2895
    %v3104 = vadd.f32 %v2568, %v2894
    %v3105 = vadd.f32 %v2569, %v2898
    %v3106 = vadd.f32 %v2570, %v2897
    %v3107 = vadd.f32 %v2571, %v2901
    %v3108 = vadd.f32 %v2572, %v2900
    %v3109 = vadd.f32 %v2573, %v2904
    %v3110 = vadd.f32 %v2574, %v2903
    %v3111 = vadd.f32 %v2575, %v2907
    %v3112 = vadd.f32 %v2576, %v2906
    %v3113 = vadd.f32 %v2577, %v2910
    %v3114 = vadd.f32 %v2578, %v2909
    %v3115 = vadd.f32 %v2579, %v2913
    %v3116 = vadd.f32 %v2580, %v2912
    %v3117 = vadd.f32 %v2581, %v2916
    %v3118 = vadd.f32 %v2582, %v2915
    %v3119 = vadd.f32 %v2583, %v2919
    %v3120 = vadd.f32 %v2584, %v2918
    %v3121 = vadd.f32 %v2585, %v2922
    %v3122 = vadd.f32 %v2586, %v2921
    %v3123 = vadd.f32 %v2587, %v2925
    %v3124 = vadd.f32 %v2588, %v2924
    %v3125 = vadd.f32 %v2589, %v2928
    %v3126 = vadd.f32 %v2590, %v2927
    %v3127 = vadd.f32 %v2591, %v2931
    %v3128 = vadd.f32 %v2592, %v2930
    %v3129 = vadd.f32 %v2593, %v2934
    %v3130 = vadd.f32 %v2594, %v2933
    %v3131 = vadd.f32 %v2595, %v2937
    %v3132 = vadd.f32 %v2596, %v2936
    %v3133 = vadd.f32 %v2597, %v2940
    %v3134 = vadd.f32 %v2598, %v2939
    %v3135 = vadd.f32 %v2599, %v2943
    %v3136 = vadd.f32 %v2600, %v2942
    %v3137 = vadd.f32 %v2601, %v2946
    %v3138 = vadd.f32 %v2602, %v2945
    %3140 = vset.pattern.permute.xlu0 0
    %3141 = vperm.xlu0 %3140, %v84
    %v3142 = vpop.permute.xlu0 %3141
    %3145 = vset.pattern.permute.xlu0 0
    %3146 = vperm.xlu0 %3145, %v85
    %v3147 = vpop.permute.xlu0 %3146
    %3150 = vset.pattern.permute.xlu0 0
    %3151 = vperm.xlu0 %3150, %v112
    %v3152 = vpop.permute.xlu0 %3151
    %3155 = vset.pattern.permute.xlu0 0
    %3156 = vperm.xlu0 %3155, %v113
    %v3157 = vpop.permute.xlu0 %3156
    %3160 = vset.pattern.permute.xlu0 0
    %3161 = vperm.xlu0 %3160, %v140
    %v3162 = vpop.permute.xlu0 %3161
    %3165 = vset.pattern.permute.xlu0 0
    %3166 = vperm.xlu0 %3165, %v141
    %v3167 = vpop.permute.xlu0 %3166
    %3170 = vset.pattern.permute.xlu0 0
    %3171 = vperm.xlu0 %3170, %v168
    %v3172 = vpop.permute.xlu0 %3171
    %3175 = vset.pattern.permute.xlu0 0
    %3176 = vperm.xlu0 %3175, %v169
    %v3177 = vpop.permute.xlu0 %3176
    %s3179 = scalar_lea.vmem %s1, 6
    %v3180 = vld [vmem:[%s3179] sm:$0x1]
    %v3182 = vlaneseq
    %v3183 = vshrl.u32 %v3182, 7
    %v3184 = vsub.s32 0, %v3183
    %v3185 = vrot.slane %v3180, %v3184
    %v3187 = vmul.f32 %v193, %v3185
    %v3188 = vmul.f32 %v198, %v3185
    %v3189 = vmul.f32 %v203, %v3185
    %v3190 = vmul.f32 %v208, %v3185
    %v3191 = vmul.f32 %v213, %v3185
    %v3192 = vmul.f32 %v218, %v3185
    %v3193 = vmul.f32 %v223, %v3185
    %v3194 = vmul.f32 %v228, %v3185
    %v3195 = vmul.f32 %v233, %v3185
    %v3196 = vmul.f32 %v238, %v3185
    %v3197 = vmul.f32 %v243, %v3185
    %v3198 = vmul.f32 %v248, %v3185
    %v3199 = vmul.f32 %v253, %v3185
    %v3200 = vmul.f32 %v258, %v3185
    %v3201 = vmul.f32 %v263, %v3185
    %v3202 = vmul.f32 %v268, %v3185
    %v3203 = vmul.f32 %v273, %v3185
    %v3204 = vmul.f32 %v278, %v3185
    %v3205 = vmul.f32 %v283, %v3185
    %v3206 = vmul.f32 %v288, %v3185
    %v3207 = vmul.f32 %v1830, %v3185
    %v3208 = vmul.f32 %v1835, %v3185
    %v3209 = vmul.f32 %v3142, %v3185
    %v3210 = vmul.f32 %v3147, %v3185
    %v3211 = vmul.f32 %v313, %v3185
    %v3212 = vmul.f32 %v318, %v3185
    %v3213 = vmul.f32 %v323, %v3185
    %v3214 = vmul.f32 %v328, %v3185
    %v3215 = vmul.f32 %v333, %v3185
    %v3216 = vmul.f32 %v338, %v3185
    %v3217 = vmul.f32 %v343, %v3185
    %v3218 = vmul.f32 %v348, %v3185
    %v3219 = vmul.f32 %v353, %v3185
    %v3220 = vmul.f32 %v358, %v3185
    %v3221 = vmul.f32 %v363, %v3185
    %v3222 = vmul.f32 %v368, %v3185
    %v3223 = vmul.f32 %v373, %v3185
    %v3224 = vmul.f32 %v378, %v3185
    %v3225 = vmul.f32 %v383, %v3185
    %v3226 = vmul.f32 %v388, %v3185
    %v3227 = vmul.f32 %v393, %v3185
    %v3228 = vmul.f32 %v398, %v3185
    %v3229 = vmul.f32 %v403, %v3185
    %v3230 = vmul.f32 %v408, %v3185
    %v3231 = vmul.f32 %v1840, %v3185
    %v3232 = vmul.f32 %v1845, %v3185
    %v3233 = vmul.f32 %v3152, %v3185
    %v3234 = vmul.f32 %v3157, %v3185
    %v3235 = vmul.f32 %v433, %v3185
    %v3236 = vmul.f32 %v438, %v3185
    %v3237 = vmul.f32 %v443, %v3185
    %v3238 = vmul.f32 %v448, %v3185
    %v3239 = vmul.f32 %v453, %v3185
    %v3240 = vmul.f32 %v458, %v3185
    %v3241 = vmul.f32 %v463, %v3185
    %v3242 = vmul.f32 %v468, %v3185
    %v3243 = vmul.f32 %v473, %v3185
    %v3244 = vmul.f32 %v478, %v3185
    %v3245 = vmul.f32 %v483, %v3185
    %v3246 = vmul.f32 %v488, %v3185
    %v3247 = vmul.f32 %v493, %v3185
    %v3248 = vmul.f32 %v498, %v3185
    %v3249 = vmul.f32 %v503, %v3185
    %v3250 = vmul.f32 %v508, %v3185
    %v3251 = vmul.f32 %v513, %v3185
    %v3252 = vmul.f32 %v518, %v3185
    %v3253 = vmul.f32 %v523, %v3185
    %v3254 = vmul.f32 %v528, %v3185
    %v3255 = vmul.f32 %v1850, %v3185
    %v3256 = vmul.f32 %v1855, %v3185
    %v3257 = vmul.f32 %v3162, %v3185
    %v3258 = vmul.f32 %v3167, %v3185
    %v3259 = vmul.f32 %v553, %v3185
    %v3260 = vmul.f32 %v558, %v3185
    %v3261 = vmul.f32 %v563, %v3185
    %v3262 = vmul.f32 %v568, %v3185
    %v3263 = vmul.f32 %v573, %v3185
    %v3264 = vmul.f32 %v578, %v3185
    %v3265 = vmul.f32 %v583, %v3185
    %v3266 = vmul.f32 %v588, %v3185
    %v3267 = vmul.f32 %v593, %v3185
    %v3268 = vmul.f32 %v598, %v3185
    %v3269 = vmul.f32 %v603, %v3185
    %v3270 = vmul.f32 %v608, %v3185
    %v3271 = vmul.f32 %v613, %v3185
    %v3272 = vmul.f32 %v618, %v3185
    %v3273 = vmul.f32 %v623, %v3185
    %v3274 = vmul.f32 %v628, %v3185
    %v3275 = vmul.f32 %v633, %v3185
    %v3276 = vmul.f32 %v638, %v3185
    %v3277 = vmul.f32 %v643, %v3185
    %v3278 = vmul.f32 %v648, %v3185
    %v3279 = vmul.f32 %v1860, %v3185
    %v3280 = vmul.f32 %v1865, %v3185
    %v3281 = vmul.f32 %v3172, %v3185
    %v3282 = vmul.f32 %v3177, %v3185
    %v3283 = vadd.f32 %v3043, %v3187
    %v3284 = vadd.f32 %v3044, %v3188
    %v3285 = vadd.f32 %v3045, %v3189
    %v3286 = vadd.f32 %v3046, %v3190
    %v3287 = vadd.f32 %v3047, %v3191
    %v3288 = vadd.f32 %v3048, %v3192
    %v3289 = vadd.f32 %v3049, %v3193
    %v3290 = vadd.f32 %v3050, %v3194
    %v3291 = vadd.f32 %v3051, %v3195
    %v3292 = vadd.f32 %v3052, %v3196
    %v3293 = vadd.f32 %v3053, %v3197
    %v3294 = vadd.f32 %v3054, %v3198
    %v3295 = vadd.f32 %v3055, %v3199
    %v3296 = vadd.f32 %v3056, %v3200
    %v3297 = vadd.f32 %v3057, %v3201
    %v3298 = vadd.f32 %v3058, %v3202
    %v3299 = vadd.f32 %v3059, %v3203
    %v3300 = vadd.f32 %v3060, %v3204
    %v3301 = vadd.f32 %v3061, %v3205
    %v3302 = vadd.f32 %v3062, %v3206
    %v3303 = vadd.f32 %v3063, %v3207
    %v3304 = vadd.f32 %v3064, %v3208
    %v3305 = vadd.f32 %v3065, %v3209
    %v3306 = vadd.f32 %v3066, %v3210
    %v3307 = vadd.f32 %v3067, %v3211
    %v3308 = vadd.f32 %v3068, %v3212
    %v3309 = vadd.f32 %v3069, %v3213
    %v3310 = vadd.f32 %v3070, %v3214
    %v3311 = vadd.f32 %v3071, %v3215
    %v3312 = vadd.f32 %v3072, %v3216
    %v3313 = vadd.f32 %v3073, %v3217
    %v3314 = vadd.f32 %v3074, %v3218
    %v3315 = vadd.f32 %v3075, %v3219
    %v3316 = vadd.f32 %v3076, %v3220
    %v3317 = vadd.f32 %v3077, %v3221
    %v3318 = vadd.f32 %v3078, %v3222
    %v3319 = vadd.f32 %v3079, %v3223
    %v3320 = vadd.f32 %v3080, %v3224
    %v3321 = vadd.f32 %v3081, %v3225
    %v3322 = vadd.f32 %v3082, %v3226
    %v3323 = vadd.f32 %v3083, %v3227
    %v3324 = vadd.f32 %v3084, %v3228
    %v3325 = vadd.f32 %v3085, %v3229
    %v3326 = vadd.f32 %v3086, %v3230
    %v3327 = vadd.f32 %v3087, %v3231
    %v3328 = vadd.f32 %v3088, %v3232
    %v3329 = vadd.f32 %v3089, %v3233
    %v3330 = vadd.f32 %v3090, %v3234
    %v3331 = vadd.f32 %v3091, %v3235
    %v3332 = vadd.f32 %v3092, %v3236
    %v3333 = vadd.f32 %v3093, %v3237
    %v3334 = vadd.f32 %v3094, %v3238
    %v3335 = vadd.f32 %v3095, %v3239
    %v3336 = vadd.f32 %v3096, %v3240
    %v3337 = vadd.f32 %v3097, %v3241
    %v3338 = vadd.f32 %v3098, %v3242
    %v3339 = vadd.f32 %v3099, %v3243
    %v3340 = vadd.f32 %v3100, %v3244
    %v3341 = vadd.f32 %v3101, %v3245
    %v3342 = vadd.f32 %v3102, %v3246
    %v3343 = vadd.f32 %v3103, %v3247
    %v3344 = vadd.f32 %v3104, %v3248
    %v3345 = vadd.f32 %v3105, %v3249
    %v3346 = vadd.f32 %v3106, %v3250
    %v3347 = vadd.f32 %v3107, %v3251
    %v3348 = vadd.f32 %v3108, %v3252
    %v3349 = vadd.f32 %v3109, %v3253
    %v3350 = vadd.f32 %v3110, %v3254
    %v3351 = vadd.f32 %v3111, %v3255
    %v3352 = vadd.f32 %v3112, %v3256
    %v3353 = vadd.f32 %v3113, %v3257
    %v3354 = vadd.f32 %v3114, %v3258
    %v3355 = vadd.f32 %v3115, %v3259
    %v3356 = vadd.f32 %v3116, %v3260
    %v3357 = vadd.f32 %v3117, %v3261
    %v3358 = vadd.f32 %v3118, %v3262
    %v3359 = vadd.f32 %v3119, %v3263
    %v3360 = vadd.f32 %v3120, %v3264
    %v3361 = vadd.f32 %v3121, %v3265
    %v3362 = vadd.f32 %v3122, %v3266
    %v3363 = vadd.f32 %v3123, %v3267
    %v3364 = vadd.f32 %v3124, %v3268
    %v3365 = vadd.f32 %v3125, %v3269
    %v3366 = vadd.f32 %v3126, %v3270
    %v3367 = vadd.f32 %v3127, %v3271
    %v3368 = vadd.f32 %v3128, %v3272
    %v3369 = vadd.f32 %v3129, %v3273
    %v3370 = vadd.f32 %v3130, %v3274
    %v3371 = vadd.f32 %v3131, %v3275
    %v3372 = vadd.f32 %v3132, %v3276
    %v3373 = vadd.f32 %v3133, %v3277
    %v3374 = vadd.f32 %v3134, %v3278
    %v3375 = vadd.f32 %v3135, %v3279
    %v3376 = vadd.f32 %v3136, %v3280
    %v3377 = vadd.f32 %v3137, %v3281
    %v3378 = vadd.f32 %v3138, %v3282
    %s3379 = scalar_lea.vmem %s1, 7
    %v3380 = vld [vmem:[%s3379] sm:$0x1]
    %v3382 = vlaneseq
    %v3383 = vshrl.u32 %v3382, 7
    %v3384 = vsub.s32 0, %v3383
    %v3385 = vrot.slane %v3380, %v3384
    %v3387 = vmul.f32 %v193, %v3385
    %v3388 = vmul.f32 %v198, %v3385
    %v3389 = vmul.f32 %v203, %v3385
    %v3390 = vmul.f32 %v208, %v3385
    %v3391 = vmul.f32 %v213, %v3385
    %v3392 = vmul.f32 %v218, %v3385
    %v3393 = vmul.f32 %v223, %v3385
    %v3394 = vmul.f32 %v228, %v3385
    %v3395 = vmul.f32 %v233, %v3385
    %v3396 = vmul.f32 %v238, %v3385
    %v3397 = vmul.f32 %v243, %v3385
    %v3398 = vmul.f32 %v248, %v3385
    %v3399 = vmul.f32 %v253, %v3385
    %v3400 = vmul.f32 %v258, %v3385
    %v3401 = vmul.f32 %v263, %v3385
    %v3402 = vmul.f32 %v268, %v3385
    %v3403 = vmul.f32 %v273, %v3385
    %v3404 = vmul.f32 %v278, %v3385
    %v3405 = vmul.f32 %v283, %v3385
    %v3406 = vmul.f32 %v288, %v3385
    %v3407 = vmul.f32 %v1830, %v3385
    %v3408 = vmul.f32 %v1835, %v3385
    %v3409 = vmul.f32 %v3142, %v3385
    %v3410 = vmul.f32 %v3147, %v3385
    %v3411 = vmul.f32 %v313, %v3385
    %v3412 = vmul.f32 %v318, %v3385
    %v3413 = vmul.f32 %v323, %v3385
    %v3414 = vmul.f32 %v328, %v3385
    %v3415 = vmul.f32 %v333, %v3385
    %v3416 = vmul.f32 %v338, %v3385
    %v3417 = vmul.f32 %v343, %v3385
    %v3418 = vmul.f32 %v348, %v3385
    %v3419 = vmul.f32 %v353, %v3385
    %v3420 = vmul.f32 %v358, %v3385
    %v3421 = vmul.f32 %v363, %v3385
    %v3422 = vmul.f32 %v368, %v3385
    %v3423 = vmul.f32 %v373, %v3385
    %v3424 = vmul.f32 %v378, %v3385
    %v3425 = vmul.f32 %v383, %v3385
    %v3426 = vmul.f32 %v388, %v3385
    %v3427 = vmul.f32 %v393, %v3385
    %v3428 = vmul.f32 %v398, %v3385
    %v3429 = vmul.f32 %v403, %v3385
    %v3430 = vmul.f32 %v408, %v3385
    %v3431 = vmul.f32 %v1840, %v3385
    %v3432 = vmul.f32 %v1845, %v3385
    %v3433 = vmul.f32 %v3152, %v3385
    %v3434 = vmul.f32 %v3157, %v3385
    %v3435 = vmul.f32 %v433, %v3385
    %v3436 = vmul.f32 %v438, %v3385
    %v3437 = vmul.f32 %v443, %v3385
    %v3438 = vmul.f32 %v448, %v3385
    %v3439 = vmul.f32 %v453, %v3385
    %v3440 = vmul.f32 %v458, %v3385
    %v3441 = vmul.f32 %v463, %v3385
    %v3442 = vmul.f32 %v468, %v3385
    %v3443 = vmul.f32 %v473, %v3385
    %v3444 = vmul.f32 %v478, %v3385
    %v3445 = vmul.f32 %v483, %v3385
    %v3446 = vmul.f32 %v488, %v3385
    %v3447 = vmul.f32 %v493, %v3385
    %v3448 = vmul.f32 %v498, %v3385
    %v3449 = vmul.f32 %v503, %v3385
    %v3450 = vmul.f32 %v508, %v3385
    %v3451 = vmul.f32 %v513, %v3385
    %v3452 = vmul.f32 %v518, %v3385
    %v3453 = vmul.f32 %v523, %v3385
    %v3454 = vmul.f32 %v528, %v3385
    %v3455 = vmul.f32 %v1850, %v3385
    %v3456 = vmul.f32 %v1855, %v3385
    %v3457 = vmul.f32 %v3162, %v3385
    %v3458 = vmul.f32 %v3167, %v3385
    %v3459 = vmul.f32 %v553, %v3385
    %v3460 = vmul.f32 %v558, %v3385
    %v3461 = vmul.f32 %v563, %v3385
    %v3462 = vmul.f32 %v568, %v3385
    %v3463 = vmul.f32 %v573, %v3385
    %v3464 = vmul.f32 %v578, %v3385
    %v3465 = vmul.f32 %v583, %v3385
    %v3466 = vmul.f32 %v588, %v3385
    %v3467 = vmul.f32 %v593, %v3385
    %v3468 = vmul.f32 %v598, %v3385
    %v3469 = vmul.f32 %v603, %v3385
    %v3470 = vmul.f32 %v608, %v3385
    %v3471 = vmul.f32 %v613, %v3385
    %v3472 = vmul.f32 %v618, %v3385
    %v3473 = vmul.f32 %v623, %v3385
    %v3474 = vmul.f32 %v628, %v3385
    %v3475 = vmul.f32 %v633, %v3385
    %v3476 = vmul.f32 %v638, %v3385
    %v3477 = vmul.f32 %v643, %v3385
    %v3478 = vmul.f32 %v648, %v3385
    %v3479 = vmul.f32 %v1860, %v3385
    %v3480 = vmul.f32 %v1865, %v3385
    %v3481 = vmul.f32 %v3172, %v3385
    %v3482 = vmul.f32 %v3177, %v3385
    %v3579 = vrot.slane %v3387, 1
    %v3580 = vrot.slane %v3388, 1
    %v3581 = vsel %vm953, %v3579, %v3580
    %v3582 = vrot.slane %v3389, 1
    %v3583 = vrot.slane %v3390, 1
    %v3584 = vsel %vm953, %v3582, %v3583
    %v3585 = vrot.slane %v3391, 1
    %v3586 = vrot.slane %v3392, 1
    %v3587 = vsel %vm953, %v3585, %v3586
    %v3588 = vrot.slane %v3393, 1
    %v3589 = vrot.slane %v3394, 1
    %v3590 = vsel %vm953, %v3588, %v3589
    %v3591 = vrot.slane %v3395, 1
    %v3592 = vrot.slane %v3396, 1
    %v3593 = vsel %vm953, %v3591, %v3592
    %v3594 = vrot.slane %v3397, 1
    %v3595 = vrot.slane %v3398, 1
    %v3596 = vsel %vm953, %v3594, %v3595
    %v3597 = vrot.slane %v3399, 1
    %v3598 = vrot.slane %v3400, 1
    %v3599 = vsel %vm953, %v3597, %v3598
    %v3600 = vrot.slane %v3401, 1
    %v3601 = vrot.slane %v3402, 1
    %v3602 = vsel %vm953, %v3600, %v3601
    %v3603 = vrot.slane %v3403, 1
    %v3604 = vrot.slane %v3404, 1
    %v3605 = vsel %vm953, %v3603, %v3604
    %v3606 = vrot.slane %v3405, 1
    %v3607 = vrot.slane %v3406, 1
    %v3608 = vsel %vm953, %v3606, %v3607
    %v3609 = vrot.slane %v3407, 1
    %v3610 = vrot.slane %v3408, 1
    %v3611 = vsel %vm953, %v3609, %v3610
    %v3612 = vrot.slane %v3409, 1
    %v3613 = vrot.slane %v3410, 1
    %v3614 = vsel %vm953, %v3612, %v3613
    %v3615 = vrot.slane %v3411, 1
    %v3616 = vrot.slane %v3412, 1
    %v3617 = vsel %vm953, %v3615, %v3616
    %v3618 = vrot.slane %v3413, 1
    %v3619 = vrot.slane %v3414, 1
    %v3620 = vsel %vm953, %v3618, %v3619
    %v3621 = vrot.slane %v3415, 1
    %v3622 = vrot.slane %v3416, 1
    %v3623 = vsel %vm953, %v3621, %v3622
    %v3624 = vrot.slane %v3417, 1
    %v3625 = vrot.slane %v3418, 1
    %v3626 = vsel %vm953, %v3624, %v3625
    %v3627 = vrot.slane %v3419, 1
    %v3628 = vrot.slane %v3420, 1
    %v3629 = vsel %vm953, %v3627, %v3628
    %v3630 = vrot.slane %v3421, 1
    %v3631 = vrot.slane %v3422, 1
    %v3632 = vsel %vm953, %v3630, %v3631
    %v3633 = vrot.slane %v3423, 1
    %v3634 = vrot.slane %v3424, 1
    %v3635 = vsel %vm953, %v3633, %v3634
    %v3636 = vrot.slane %v3425, 1
    %v3637 = vrot.slane %v3426, 1
    %v3638 = vsel %vm953, %v3636, %v3637
    %v3639 = vrot.slane %v3427, 1
    %v3640 = vrot.slane %v3428, 1
    %v3641 = vsel %vm953, %v3639, %v3640
    %v3642 = vrot.slane %v3429, 1
    %v3643 = vrot.slane %v3430, 1
    %v3644 = vsel %vm953, %v3642, %v3643
    %v3645 = vrot.slane %v3431, 1
    %v3646 = vrot.slane %v3432, 1
    %v3647 = vsel %vm953, %v3645, %v3646
    %v3648 = vrot.slane %v3433, 1
    %v3649 = vrot.slane %v3434, 1
    %v3650 = vsel %vm953, %v3648, %v3649
    %v3651 = vrot.slane %v3435, 1
    %v3652 = vrot.slane %v3436, 1
    %v3653 = vsel %vm953, %v3651, %v3652
    %v3654 = vrot.slane %v3437, 1
    %v3655 = vrot.slane %v3438, 1
    %v3656 = vsel %vm953, %v3654, %v3655
    %v3657 = vrot.slane %v3439, 1
    %v3658 = vrot.slane %v3440, 1
    %v3659 = vsel %vm953, %v3657, %v3658
    %v3660 = vrot.slane %v3441, 1
    %v3661 = vrot.slane %v3442, 1
    %v3662 = vsel %vm953, %v3660, %v3661
    %v3663 = vrot.slane %v3443, 1
    %v3664 = vrot.slane %v3444, 1
    %v3665 = vsel %vm953, %v3663, %v3664
    %v3666 = vrot.slane %v3445, 1
    %v3667 = vrot.slane %v3446, 1
    %v3668 = vsel %vm953, %v3666, %v3667
    %v3669 = vrot.slane %v3447, 1
    %v3670 = vrot.slane %v3448, 1
    %v3671 = vsel %vm953, %v3669, %v3670
    %v3672 = vrot.slane %v3449, 1
    %v3673 = vrot.slane %v3450, 1
    %v3674 = vsel %vm953, %v3672, %v3673
    %v3675 = vrot.slane %v3451, 1
    %v3676 = vrot.slane %v3452, 1
    %v3677 = vsel %vm953, %v3675, %v3676
    %v3678 = vrot.slane %v3453, 1
    %v3679 = vrot.slane %v3454, 1
    %v3680 = vsel %vm953, %v3678, %v3679
    %v3681 = vrot.slane %v3455, 1
    %v3682 = vrot.slane %v3456, 1
    %v3683 = vsel %vm953, %v3681, %v3682
    %v3684 = vrot.slane %v3457, 1
    %v3685 = vrot.slane %v3458, 1
    %v3686 = vsel %vm953, %v3684, %v3685
    %v3687 = vrot.slane %v3459, 1
    %v3688 = vrot.slane %v3460, 1
    %v3689 = vsel %vm953, %v3687, %v3688
    %v3690 = vrot.slane %v3461, 1
    %v3691 = vrot.slane %v3462, 1
    %v3692 = vsel %vm953, %v3690, %v3691
    %v3693 = vrot.slane %v3463, 1
    %v3694 = vrot.slane %v3464, 1
    %v3695 = vsel %vm953, %v3693, %v3694
    %v3696 = vrot.slane %v3465, 1
    %v3697 = vrot.slane %v3466, 1
    %v3698 = vsel %vm953, %v3696, %v3697
    %v3699 = vrot.slane %v3467, 1
    %v3700 = vrot.slane %v3468, 1
    %v3701 = vsel %vm953, %v3699, %v3700
    %v3702 = vrot.slane %v3469, 1
    %v3703 = vrot.slane %v3470, 1
    %v3704 = vsel %vm953, %v3702, %v3703
    %v3705 = vrot.slane %v3471, 1
    %v3706 = vrot.slane %v3472, 1
    %v3707 = vsel %vm953, %v3705, %v3706
    %v3708 = vrot.slane %v3473, 1
    %v3709 = vrot.slane %v3474, 1
    %v3710 = vsel %vm953, %v3708, %v3709
    %v3711 = vrot.slane %v3475, 1
    %v3712 = vrot.slane %v3476, 1
    %v3713 = vsel %vm953, %v3711, %v3712
    %v3714 = vrot.slane %v3477, 1
    %v3715 = vrot.slane %v3478, 1
    %v3716 = vsel %vm953, %v3714, %v3715
    %v3717 = vrot.slane %v3479, 1
    %v3718 = vrot.slane %v3480, 1
    %v3719 = vsel %vm953, %v3717, %v3718
    %v3720 = vrot.slane %v3481, 1
    %v3721 = vrot.slane %v3482, 1
    %v3722 = vsel %vm953, %v3720, %v3721
    %v3819 = vadd.f32 %v3283, %v3581
    %v3820 = vadd.f32 %v3284, %v3580
    %v3821 = vadd.f32 %v3285, %v3584
    %v3822 = vadd.f32 %v3286, %v3583
    %v3823 = vadd.f32 %v3287, %v3587
    %v3824 = vadd.f32 %v3288, %v3586
    %v3825 = vadd.f32 %v3289, %v3590
    %v3826 = vadd.f32 %v3290, %v3589
    %v3827 = vadd.f32 %v3291, %v3593
    %v3828 = vadd.f32 %v3292, %v3592
    %v3829 = vadd.f32 %v3293, %v3596
    %v3830 = vadd.f32 %v3294, %v3595
    %v3831 = vadd.f32 %v3295, %v3599
    %v3832 = vadd.f32 %v3296, %v3598
    %v3833 = vadd.f32 %v3297, %v3602
    %v3834 = vadd.f32 %v3298, %v3601
    %v3835 = vadd.f32 %v3299, %v3605
    %v3836 = vadd.f32 %v3300, %v3604
    %v3837 = vadd.f32 %v3301, %v3608
    %v3838 = vadd.f32 %v3302, %v3607
    %v3839 = vadd.f32 %v3303, %v3611
    %v3840 = vadd.f32 %v3304, %v3610
    %v3841 = vadd.f32 %v3305, %v3614
    %v3842 = vadd.f32 %v3306, %v3613
    %v3843 = vadd.f32 %v3307, %v3617
    %v3844 = vadd.f32 %v3308, %v3616
    %v3845 = vadd.f32 %v3309, %v3620
    %v3846 = vadd.f32 %v3310, %v3619
    %v3847 = vadd.f32 %v3311, %v3623
    %v3848 = vadd.f32 %v3312, %v3622
    %v3849 = vadd.f32 %v3313, %v3626
    %v3850 = vadd.f32 %v3314, %v3625
    %v3851 = vadd.f32 %v3315, %v3629
    %v3852 = vadd.f32 %v3316, %v3628
    %v3853 = vadd.f32 %v3317, %v3632
    %v3854 = vadd.f32 %v3318, %v3631
    %v3855 = vadd.f32 %v3319, %v3635
    %v3856 = vadd.f32 %v3320, %v3634
    %v3857 = vadd.f32 %v3321, %v3638
    %v3858 = vadd.f32 %v3322, %v3637
    %v3859 = vadd.f32 %v3323, %v3641
    %v3860 = vadd.f32 %v3324, %v3640
    %v3861 = vadd.f32 %v3325, %v3644
    %v3862 = vadd.f32 %v3326, %v3643
    %v3863 = vadd.f32 %v3327, %v3647
    %v3864 = vadd.f32 %v3328, %v3646
    %v3865 = vadd.f32 %v3329, %v3650
    %v3866 = vadd.f32 %v3330, %v3649
    %v3867 = vadd.f32 %v3331, %v3653
    %v3868 = vadd.f32 %v3332, %v3652
    %v3869 = vadd.f32 %v3333, %v3656
    %v3870 = vadd.f32 %v3334, %v3655
    %v3871 = vadd.f32 %v3335, %v3659
    %v3872 = vadd.f32 %v3336, %v3658
    %v3873 = vadd.f32 %v3337, %v3662
    %v3874 = vadd.f32 %v3338, %v3661
    %v3875 = vadd.f32 %v3339, %v3665
    %v3876 = vadd.f32 %v3340, %v3664
    %v3877 = vadd.f32 %v3341, %v3668
    %v3878 = vadd.f32 %v3342, %v3667
    %v3879 = vadd.f32 %v3343, %v3671
    %v3880 = vadd.f32 %v3344, %v3670
    %v3881 = vadd.f32 %v3345, %v3674
    %v3882 = vadd.f32 %v3346, %v3673
    %v3883 = vadd.f32 %v3347, %v3677
    %v3884 = vadd.f32 %v3348, %v3676
    %v3885 = vadd.f32 %v3349, %v3680
    %v3886 = vadd.f32 %v3350, %v3679
    %v3887 = vadd.f32 %v3351, %v3683
    %v3888 = vadd.f32 %v3352, %v3682
    %v3889 = vadd.f32 %v3353, %v3686
    %v3890 = vadd.f32 %v3354, %v3685
    %v3891 = vadd.f32 %v3355, %v3689
    %v3892 = vadd.f32 %v3356, %v3688
    %v3893 = vadd.f32 %v3357, %v3692
    %v3894 = vadd.f32 %v3358, %v3691
    %v3895 = vadd.f32 %v3359, %v3695
    %v3896 = vadd.f32 %v3360, %v3694
    %v3897 = vadd.f32 %v3361, %v3698
    %v3898 = vadd.f32 %v3362, %v3697
    %v3899 = vadd.f32 %v3363, %v3701
    %v3900 = vadd.f32 %v3364, %v3700
    %v3901 = vadd.f32 %v3365, %v3704
    %v3902 = vadd.f32 %v3366, %v3703
    %v3903 = vadd.f32 %v3367, %v3707
    %v3904 = vadd.f32 %v3368, %v3706
    %v3905 = vadd.f32 %v3369, %v3710
    %v3906 = vadd.f32 %v3370, %v3709
    %v3907 = vadd.f32 %v3371, %v3713
    %v3908 = vadd.f32 %v3372, %v3712
    %v3909 = vadd.f32 %v3373, %v3716
    %v3910 = vadd.f32 %v3374, %v3715
    %v3911 = vadd.f32 %v3375, %v3719
    %v3912 = vadd.f32 %v3376, %v3718
    %v3913 = vadd.f32 %v3377, %v3722
    %v3914 = vadd.f32 %v3378, %v3721
    %s3915 = scalar_lea.vmem %s1, 8
    %v3916 = vld [vmem:[%s3915] sm:$0x1]
    %v3918 = vlaneseq
    %v3919 = vshrl.u32 %v3918, 7
    %v3920 = vsub.s32 0, %v3919
    %v3921 = vrot.slane %v3916, %v3920
    %v3923 = vmul.f32 %v193, %v3921
    %v3924 = vmul.f32 %v198, %v3921
    %v3925 = vmul.f32 %v203, %v3921
    %v3926 = vmul.f32 %v208, %v3921
    %v3927 = vmul.f32 %v213, %v3921
    %v3928 = vmul.f32 %v218, %v3921
    %v3929 = vmul.f32 %v223, %v3921
    %v3930 = vmul.f32 %v228, %v3921
    %v3931 = vmul.f32 %v233, %v3921
    %v3932 = vmul.f32 %v238, %v3921
    %v3933 = vmul.f32 %v243, %v3921
    %v3934 = vmul.f32 %v248, %v3921
    %v3935 = vmul.f32 %v253, %v3921
    %v3936 = vmul.f32 %v258, %v3921
    %v3937 = vmul.f32 %v263, %v3921
    %v3938 = vmul.f32 %v268, %v3921
    %v3939 = vmul.f32 %v273, %v3921
    %v3940 = vmul.f32 %v278, %v3921
    %v3941 = vmul.f32 %v283, %v3921
    %v3942 = vmul.f32 %v288, %v3921
    %v3943 = vmul.f32 %v1830, %v3921
    %v3944 = vmul.f32 %v1835, %v3921
    %v3945 = vmul.f32 %v3142, %v3921
    %v3946 = vmul.f32 %v3147, %v3921
    %v3947 = vmul.f32 %v313, %v3921
    %v3948 = vmul.f32 %v318, %v3921
    %v3949 = vmul.f32 %v323, %v3921
    %v3950 = vmul.f32 %v328, %v3921
    %v3951 = vmul.f32 %v333, %v3921
    %v3952 = vmul.f32 %v338, %v3921
    %v3953 = vmul.f32 %v343, %v3921
    %v3954 = vmul.f32 %v348, %v3921
    %v3955 = vmul.f32 %v353, %v3921
    %v3956 = vmul.f32 %v358, %v3921
    %v3957 = vmul.f32 %v363, %v3921
    %v3958 = vmul.f32 %v368, %v3921
    %v3959 = vmul.f32 %v373, %v3921
    %v3960 = vmul.f32 %v378, %v3921
    %v3961 = vmul.f32 %v383, %v3921
    %v3962 = vmul.f32 %v388, %v3921
    %v3963 = vmul.f32 %v393, %v3921
    %v3964 = vmul.f32 %v398, %v3921
    %v3965 = vmul.f32 %v403, %v3921
    %v3966 = vmul.f32 %v408, %v3921
    %v3967 = vmul.f32 %v1840, %v3921
    %v3968 = vmul.f32 %v1845, %v3921
    %v3969 = vmul.f32 %v3152, %v3921
    %v3970 = vmul.f32 %v3157, %v3921
    %v3971 = vmul.f32 %v433, %v3921
    %v3972 = vmul.f32 %v438, %v3921
    %v3973 = vmul.f32 %v443, %v3921
    %v3974 = vmul.f32 %v448, %v3921
    %v3975 = vmul.f32 %v453, %v3921
    %v3976 = vmul.f32 %v458, %v3921
    %v3977 = vmul.f32 %v463, %v3921
    %v3978 = vmul.f32 %v468, %v3921
    %v3979 = vmul.f32 %v473, %v3921
    %v3980 = vmul.f32 %v478, %v3921
    %v3981 = vmul.f32 %v483, %v3921
    %v3982 = vmul.f32 %v488, %v3921
    %v3983 = vmul.f32 %v493, %v3921
    %v3984 = vmul.f32 %v498, %v3921
    %v3985 = vmul.f32 %v503, %v3921
    %v3986 = vmul.f32 %v508, %v3921
    %v3987 = vmul.f32 %v513, %v3921
    %v3988 = vmul.f32 %v518, %v3921
    %v3989 = vmul.f32 %v523, %v3921
    %v3990 = vmul.f32 %v528, %v3921
    %v3991 = vmul.f32 %v1850, %v3921
    %v3992 = vmul.f32 %v1855, %v3921
    %v3993 = vmul.f32 %v3162, %v3921
    %v3994 = vmul.f32 %v3167, %v3921
    %v3995 = vmul.f32 %v553, %v3921
    %v3996 = vmul.f32 %v558, %v3921
    %v3997 = vmul.f32 %v563, %v3921
    %v3998 = vmul.f32 %v568, %v3921
    %v3999 = vmul.f32 %v573, %v3921
    %v4000 = vmul.f32 %v578, %v3921
    %v4001 = vmul.f32 %v583, %v3921
    %v4002 = vmul.f32 %v588, %v3921
    %v4003 = vmul.f32 %v593, %v3921
    %v4004 = vmul.f32 %v598, %v3921
    %v4005 = vmul.f32 %v603, %v3921
    %v4006 = vmul.f32 %v608, %v3921
    %v4007 = vmul.f32 %v613, %v3921
    %v4008 = vmul.f32 %v618, %v3921
    %v4009 = vmul.f32 %v623, %v3921
    %v4010 = vmul.f32 %v628, %v3921
    %v4011 = vmul.f32 %v633, %v3921
    %v4012 = vmul.f32 %v638, %v3921
    %v4013 = vmul.f32 %v643, %v3921
    %v4014 = vmul.f32 %v648, %v3921
    %v4015 = vmul.f32 %v1860, %v3921
    %v4016 = vmul.f32 %v1865, %v3921
    %v4017 = vmul.f32 %v3172, %v3921
    %v4018 = vmul.f32 %v3177, %v3921
    %v4115 = vrot.slane %v3923, 2
    %v4116 = vrot.slane %v3924, 2
    %v4117 = vsel %vm1490, %v4115, %v4116
    %v4118 = vrot.slane %v3925, 2
    %v4119 = vrot.slane %v3926, 2
    %v4120 = vsel %vm1490, %v4118, %v4119
    %v4121 = vrot.slane %v3927, 2
    %v4122 = vrot.slane %v3928, 2
    %v4123 = vsel %vm1490, %v4121, %v4122
    %v4124 = vrot.slane %v3929, 2
    %v4125 = vrot.slane %v3930, 2
    %v4126 = vsel %vm1490, %v4124, %v4125
    %v4127 = vrot.slane %v3931, 2
    %v4128 = vrot.slane %v3932, 2
    %v4129 = vsel %vm1490, %v4127, %v4128
    %v4130 = vrot.slane %v3933, 2
    %v4131 = vrot.slane %v3934, 2
    %v4132 = vsel %vm1490, %v4130, %v4131
    %v4133 = vrot.slane %v3935, 2
    %v4134 = vrot.slane %v3936, 2
    %v4135 = vsel %vm1490, %v4133, %v4134
    %v4136 = vrot.slane %v3937, 2
    %v4137 = vrot.slane %v3938, 2
    %v4138 = vsel %vm1490, %v4136, %v4137
    %v4139 = vrot.slane %v3939, 2
    %v4140 = vrot.slane %v3940, 2
    %v4141 = vsel %vm1490, %v4139, %v4140
    %v4142 = vrot.slane %v3941, 2
    %v4143 = vrot.slane %v3942, 2
    %v4144 = vsel %vm1490, %v4142, %v4143
    %v4145 = vrot.slane %v3943, 2
    %v4146 = vrot.slane %v3944, 2
    %v4147 = vsel %vm1490, %v4145, %v4146
    %v4148 = vrot.slane %v3945, 2
    %v4149 = vrot.slane %v3946, 2
    %v4150 = vsel %vm1490, %v4148, %v4149
    %v4151 = vrot.slane %v3947, 2
    %v4152 = vrot.slane %v3948, 2
    %v4153 = vsel %vm1490, %v4151, %v4152
    %v4154 = vrot.slane %v3949, 2
    %v4155 = vrot.slane %v3950, 2
    %v4156 = vsel %vm1490, %v4154, %v4155
    %v4157 = vrot.slane %v3951, 2
    %v4158 = vrot.slane %v3952, 2
    %v4159 = vsel %vm1490, %v4157, %v4158
    %v4160 = vrot.slane %v3953, 2
    %v4161 = vrot.slane %v3954, 2
    %v4162 = vsel %vm1490, %v4160, %v4161
    %v4163 = vrot.slane %v3955, 2
    %v4164 = vrot.slane %v3956, 2
    %v4165 = vsel %vm1490, %v4163, %v4164
    %v4166 = vrot.slane %v3957, 2
    %v4167 = vrot.slane %v3958, 2
    %v4168 = vsel %vm1490, %v4166, %v4167
    %v4169 = vrot.slane %v3959, 2
    %v4170 = vrot.slane %v3960, 2
    %v4171 = vsel %vm1490, %v4169, %v4170
    %v4172 = vrot.slane %v3961, 2
    %v4173 = vrot.slane %v3962, 2
    %v4174 = vsel %vm1490, %v4172, %v4173
    %v4175 = vrot.slane %v3963, 2
    %v4176 = vrot.slane %v3964, 2
    %v4177 = vsel %vm1490, %v4175, %v4176
    %v4178 = vrot.slane %v3965, 2
    %v4179 = vrot.slane %v3966, 2
    %v4180 = vsel %vm1490, %v4178, %v4179
    %v4181 = vrot.slane %v3967, 2
    %v4182 = vrot.slane %v3968, 2
    %v4183 = vsel %vm1490, %v4181, %v4182
    %v4184 = vrot.slane %v3969, 2
    %v4185 = vrot.slane %v3970, 2
    %v4186 = vsel %vm1490, %v4184, %v4185
    %v4187 = vrot.slane %v3971, 2
    %v4188 = vrot.slane %v3972, 2
    %v4189 = vsel %vm1490, %v4187, %v4188
    %v4190 = vrot.slane %v3973, 2
    %v4191 = vrot.slane %v3974, 2
    %v4192 = vsel %vm1490, %v4190, %v4191
    %v4193 = vrot.slane %v3975, 2
    %v4194 = vrot.slane %v3976, 2
    %v4195 = vsel %vm1490, %v4193, %v4194
    %v4196 = vrot.slane %v3977, 2
    %v4197 = vrot.slane %v3978, 2
    %v4198 = vsel %vm1490, %v4196, %v4197
    %v4199 = vrot.slane %v3979, 2
    %v4200 = vrot.slane %v3980, 2
    %v4201 = vsel %vm1490, %v4199, %v4200
    %v4202 = vrot.slane %v3981, 2
    %v4203 = vrot.slane %v3982, 2
    %v4204 = vsel %vm1490, %v4202, %v4203
    %v4205 = vrot.slane %v3983, 2
    %v4206 = vrot.slane %v3984, 2
    %v4207 = vsel %vm1490, %v4205, %v4206
    %v4208 = vrot.slane %v3985, 2
    %v4209 = vrot.slane %v3986, 2
    %v4210 = vsel %vm1490, %v4208, %v4209
    %v4211 = vrot.slane %v3987, 2
    %v4212 = vrot.slane %v3988, 2
    %v4213 = vsel %vm1490, %v4211, %v4212
    %v4214 = vrot.slane %v3989, 2
    %v4215 = vrot.slane %v3990, 2
    %v4216 = vsel %vm1490, %v4214, %v4215
    %v4217 = vrot.slane %v3991, 2
    %v4218 = vrot.slane %v3992, 2
    %v4219 = vsel %vm1490, %v4217, %v4218
    %v4220 = vrot.slane %v3993, 2
    %v4221 = vrot.slane %v3994, 2
    %v4222 = vsel %vm1490, %v4220, %v4221
    %v4223 = vrot.slane %v3995, 2
    %v4224 = vrot.slane %v3996, 2
    %v4225 = vsel %vm1490, %v4223, %v4224
    %v4226 = vrot.slane %v3997, 2
    %v4227 = vrot.slane %v3998, 2
    %v4228 = vsel %vm1490, %v4226, %v4227
    %v4229 = vrot.slane %v3999, 2
    %v4230 = vrot.slane %v4000, 2
    %v4231 = vsel %vm1490, %v4229, %v4230
    %v4232 = vrot.slane %v4001, 2
    %v4233 = vrot.slane %v4002, 2
    %v4234 = vsel %vm1490, %v4232, %v4233
    %v4235 = vrot.slane %v4003, 2
    %v4236 = vrot.slane %v4004, 2
    %v4237 = vsel %vm1490, %v4235, %v4236
    %v4238 = vrot.slane %v4005, 2
    %v4239 = vrot.slane %v4006, 2
    %v4240 = vsel %vm1490, %v4238, %v4239
    %v4241 = vrot.slane %v4007, 2
    %v4242 = vrot.slane %v4008, 2
    %v4243 = vsel %vm1490, %v4241, %v4242
    %v4244 = vrot.slane %v4009, 2
    %v4245 = vrot.slane %v4010, 2
    %v4246 = vsel %vm1490, %v4244, %v4245
    %v4247 = vrot.slane %v4011, 2
    %v4248 = vrot.slane %v4012, 2
    %v4249 = vsel %vm1490, %v4247, %v4248
    %v4250 = vrot.slane %v4013, 2
    %v4251 = vrot.slane %v4014, 2
    %v4252 = vsel %vm1490, %v4250, %v4251
    %v4253 = vrot.slane %v4015, 2
    %v4254 = vrot.slane %v4016, 2
    %v4255 = vsel %vm1490, %v4253, %v4254
    %v4256 = vrot.slane %v4017, 2
    %v4257 = vrot.slane %v4018, 2
    %v4258 = vsel %vm1490, %v4256, %v4257
    %v4355 = vadd.f32 %v3819, %v4117
    %v4356 = vadd.f32 %v3820, %v4116
    %v4357 = vadd.f32 %v3821, %v4120
    %v4358 = vadd.f32 %v3822, %v4119
    %v4359 = vadd.f32 %v3823, %v4123
    %v4360 = vadd.f32 %v3824, %v4122
    %v4361 = vadd.f32 %v3825, %v4126
    %v4362 = vadd.f32 %v3826, %v4125
    %v4363 = vadd.f32 %v3827, %v4129
    %v4364 = vadd.f32 %v3828, %v4128
    %v4365 = vadd.f32 %v3829, %v4132
    %v4366 = vadd.f32 %v3830, %v4131
    %v4367 = vadd.f32 %v3831, %v4135
    %v4368 = vadd.f32 %v3832, %v4134
    %v4369 = vadd.f32 %v3833, %v4138
    %v4370 = vadd.f32 %v3834, %v4137
    %v4371 = vadd.f32 %v3835, %v4141
    %v4372 = vadd.f32 %v3836, %v4140
    %v4373 = vadd.f32 %v3837, %v4144
    %v4374 = vadd.f32 %v3838, %v4143
    %v4375 = vadd.f32 %v3839, %v4147
    %v4376 = vadd.f32 %v3840, %v4146
    %v4377 = vadd.f32 %v3841, %v4150
    %v4378 = vadd.f32 %v3842, %v4149
    %v4379 = vadd.f32 %v3843, %v4153
    %v4380 = vadd.f32 %v3844, %v4152
    %v4381 = vadd.f32 %v3845, %v4156
    %v4382 = vadd.f32 %v3846, %v4155
    %v4383 = vadd.f32 %v3847, %v4159
    %v4384 = vadd.f32 %v3848, %v4158
    %v4385 = vadd.f32 %v3849, %v4162
    %v4386 = vadd.f32 %v3850, %v4161
    %v4387 = vadd.f32 %v3851, %v4165
    %v4388 = vadd.f32 %v3852, %v4164
    %v4389 = vadd.f32 %v3853, %v4168
    %v4390 = vadd.f32 %v3854, %v4167
    %v4391 = vadd.f32 %v3855, %v4171
    %v4392 = vadd.f32 %v3856, %v4170
    %v4393 = vadd.f32 %v3857, %v4174
    %v4394 = vadd.f32 %v3858, %v4173
    %v4395 = vadd.f32 %v3859, %v4177
    %v4396 = vadd.f32 %v3860, %v4176
    %v4397 = vadd.f32 %v3861, %v4180
    %v4398 = vadd.f32 %v3862, %v4179
    %v4399 = vadd.f32 %v3863, %v4183
    %v4400 = vadd.f32 %v3864, %v4182
    %v4401 = vadd.f32 %v3865, %v4186
    %v4402 = vadd.f32 %v3866, %v4185
    %v4403 = vadd.f32 %v3867, %v4189
    %v4404 = vadd.f32 %v3868, %v4188
    %v4405 = vadd.f32 %v3869, %v4192
    %v4406 = vadd.f32 %v3870, %v4191
    %v4407 = vadd.f32 %v3871, %v4195
    %v4408 = vadd.f32 %v3872, %v4194
    %v4409 = vadd.f32 %v3873, %v4198
    %v4410 = vadd.f32 %v3874, %v4197
    %v4411 = vadd.f32 %v3875, %v4201
    %v4412 = vadd.f32 %v3876, %v4200
    %v4413 = vadd.f32 %v3877, %v4204
    %v4414 = vadd.f32 %v3878, %v4203
    %v4415 = vadd.f32 %v3879, %v4207
    %v4416 = vadd.f32 %v3880, %v4206
    %v4417 = vadd.f32 %v3881, %v4210
    %v4418 = vadd.f32 %v3882, %v4209
    %v4419 = vadd.f32 %v3883, %v4213
    %v4420 = vadd.f32 %v3884, %v4212
    %v4421 = vadd.f32 %v3885, %v4216
    %v4422 = vadd.f32 %v3886, %v4215
    %v4423 = vadd.f32 %v3887, %v4219
    %v4424 = vadd.f32 %v3888, %v4218
    %v4425 = vadd.f32 %v3889, %v4222
    %v4426 = vadd.f32 %v3890, %v4221
    %v4427 = vadd.f32 %v3891, %v4225
    %v4428 = vadd.f32 %v3892, %v4224
    %v4429 = vadd.f32 %v3893, %v4228
    %v4430 = vadd.f32 %v3894, %v4227
    %v4431 = vadd.f32 %v3895, %v4231
    %v4432 = vadd.f32 %v3896, %v4230
    %v4433 = vadd.f32 %v3897, %v4234
    %v4434 = vadd.f32 %v3898, %v4233
    %v4435 = vadd.f32 %v3899, %v4237
    %v4436 = vadd.f32 %v3900, %v4236
    %v4437 = vadd.f32 %v3901, %v4240
    %v4438 = vadd.f32 %v3902, %v4239
    %v4439 = vadd.f32 %v3903, %v4243
    %v4440 = vadd.f32 %v3904, %v4242
    %v4441 = vadd.f32 %v3905, %v4246
    %v4442 = vadd.f32 %v3906, %v4245
    %v4443 = vadd.f32 %v3907, %v4249
    %v4444 = vadd.f32 %v3908, %v4248
    %v4445 = vadd.f32 %v3909, %v4252
    %v4446 = vadd.f32 %v3910, %v4251
    %v4447 = vadd.f32 %v3911, %v4255
    %v4448 = vadd.f32 %v3912, %v4254
    %v4449 = vadd.f32 %v3913, %v4258
    %v4450 = vadd.f32 %v3914, %v4257
    %v4451 = vld [vmem:[%s2] sm:$0x1]
    %v4453 = vlaneseq
    %v4454 = vshrl.u32 %v4453, 7
    %v4455 = vsub.s32 0, %v4454
    %v4456 = vrot.slane %v4451, %v4455
    %v4458 = vadd.f32 %v4355, %v4456
    %v4459 = vadd.f32 %v4356, %v4456
    %v4460 = vadd.f32 %v4357, %v4456
    %v4461 = vadd.f32 %v4358, %v4456
    %v4462 = vadd.f32 %v4359, %v4456
    %v4463 = vadd.f32 %v4360, %v4456
    %v4464 = vadd.f32 %v4361, %v4456
    %v4465 = vadd.f32 %v4362, %v4456
    %v4466 = vadd.f32 %v4363, %v4456
    %v4467 = vadd.f32 %v4364, %v4456
    %v4468 = vadd.f32 %v4365, %v4456
    %v4469 = vadd.f32 %v4366, %v4456
    %v4470 = vadd.f32 %v4367, %v4456
    %v4471 = vadd.f32 %v4368, %v4456
    %v4472 = vadd.f32 %v4369, %v4456
    %v4473 = vadd.f32 %v4370, %v4456
    %v4474 = vadd.f32 %v4371, %v4456
    %v4475 = vadd.f32 %v4372, %v4456
    %v4476 = vadd.f32 %v4373, %v4456
    %v4477 = vadd.f32 %v4374, %v4456
    %v4478 = vadd.f32 %v4375, %v4456
    %v4479 = vadd.f32 %v4376, %v4456
    %v4480 = vadd.f32 %v4377, %v4456
    %v4481 = vadd.f32 %v4378, %v4456
    %v4482 = vadd.f32 %v4379, %v4456
    %v4483 = vadd.f32 %v4380, %v4456
    %v4484 = vadd.f32 %v4381, %v4456
    %v4485 = vadd.f32 %v4382, %v4456
    %v4486 = vadd.f32 %v4383, %v4456
    %v4487 = vadd.f32 %v4384, %v4456
    %v4488 = vadd.f32 %v4385, %v4456
    %v4489 = vadd.f32 %v4386, %v4456
    %v4490 = vadd.f32 %v4387, %v4456
    %v4491 = vadd.f32 %v4388, %v4456
    %v4492 = vadd.f32 %v4389, %v4456
    %v4493 = vadd.f32 %v4390, %v4456
    %v4494 = vadd.f32 %v4391, %v4456
    %v4495 = vadd.f32 %v4392, %v4456
    %v4496 = vadd.f32 %v4393, %v4456
    %v4497 = vadd.f32 %v4394, %v4456
    %v4498 = vadd.f32 %v4395, %v4456
    %v4499 = vadd.f32 %v4396, %v4456
    %v4500 = vadd.f32 %v4397, %v4456
    %v4501 = vadd.f32 %v4398, %v4456
    %v4502 = vadd.f32 %v4399, %v4456
    %v4503 = vadd.f32 %v4400, %v4456
    %v4504 = vadd.f32 %v4401, %v4456
    %v4505 = vadd.f32 %v4402, %v4456
    %v4506 = vadd.f32 %v4403, %v4456
    %v4507 = vadd.f32 %v4404, %v4456
    %v4508 = vadd.f32 %v4405, %v4456
    %v4509 = vadd.f32 %v4406, %v4456
    %v4510 = vadd.f32 %v4407, %v4456
    %v4511 = vadd.f32 %v4408, %v4456
    %v4512 = vadd.f32 %v4409, %v4456
    %v4513 = vadd.f32 %v4410, %v4456
    %v4514 = vadd.f32 %v4411, %v4456
    %v4515 = vadd.f32 %v4412, %v4456
    %v4516 = vadd.f32 %v4413, %v4456
    %v4517 = vadd.f32 %v4414, %v4456
    %v4518 = vadd.f32 %v4415, %v4456
    %v4519 = vadd.f32 %v4416, %v4456
    %v4520 = vadd.f32 %v4417, %v4456
    %v4521 = vadd.f32 %v4418, %v4456
    %v4522 = vadd.f32 %v4419, %v4456
    %v4523 = vadd.f32 %v4420, %v4456
    %v4524 = vadd.f32 %v4421, %v4456
    %v4525 = vadd.f32 %v4422, %v4456
    %v4526 = vadd.f32 %v4423, %v4456
    %v4527 = vadd.f32 %v4424, %v4456
    %v4528 = vadd.f32 %v4425, %v4456
    %v4529 = vadd.f32 %v4426, %v4456
    %v4530 = vadd.f32 %v4427, %v4456
    %v4531 = vadd.f32 %v4428, %v4456
    %v4532 = vadd.f32 %v4429, %v4456
    %v4533 = vadd.f32 %v4430, %v4456
    %v4534 = vadd.f32 %v4431, %v4456
    %v4535 = vadd.f32 %v4432, %v4456
    %v4536 = vadd.f32 %v4433, %v4456
    %v4537 = vadd.f32 %v4434, %v4456
    %v4538 = vadd.f32 %v4435, %v4456
    %v4539 = vadd.f32 %v4436, %v4456
    %v4540 = vadd.f32 %v4437, %v4456
    %v4541 = vadd.f32 %v4438, %v4456
    %v4542 = vadd.f32 %v4439, %v4456
    %v4543 = vadd.f32 %v4440, %v4456
    %v4544 = vadd.f32 %v4441, %v4456
    %v4545 = vadd.f32 %v4442, %v4456
    %v4546 = vadd.f32 %v4443, %v4456
    %v4547 = vadd.f32 %v4444, %v4456
    %v4548 = vadd.f32 %v4445, %v4456
    %v4549 = vadd.f32 %v4446, %v4456
    %v4550 = vadd.f32 %v4447, %v4456
    %v4551 = vadd.f32 %v4448, %v4456
    %v4552 = vadd.f32 %v4449, %v4456
    %v4553 = vadd.f32 %v4450, %v4456
    %v4554 = vmax.f32 %v4458, 0.0
    %v4555 = vmax.f32 %v4459, 0.0
    %v4556 = vmax.f32 %v4460, 0.0
    %v4557 = vmax.f32 %v4461, 0.0
    %v4558 = vmax.f32 %v4462, 0.0
    %v4559 = vmax.f32 %v4463, 0.0
    %v4560 = vmax.f32 %v4464, 0.0
    %v4561 = vmax.f32 %v4465, 0.0
    %v4562 = vmax.f32 %v4466, 0.0
    %v4563 = vmax.f32 %v4467, 0.0
    %v4564 = vmax.f32 %v4468, 0.0
    %v4565 = vmax.f32 %v4469, 0.0
    %v4566 = vmax.f32 %v4470, 0.0
    %v4567 = vmax.f32 %v4471, 0.0
    %v4568 = vmax.f32 %v4472, 0.0
    %v4569 = vmax.f32 %v4473, 0.0
    %v4570 = vmax.f32 %v4474, 0.0
    %v4571 = vmax.f32 %v4475, 0.0
    %v4572 = vmax.f32 %v4476, 0.0
    %v4573 = vmax.f32 %v4477, 0.0
    %v4574 = vmax.f32 %v4478, 0.0
    %v4575 = vmax.f32 %v4479, 0.0
    %v4576 = vmax.f32 %v4480, 0.0
    %v4577 = vmax.f32 %v4481, 0.0
    %v4578 = vmax.f32 %v4482, 0.0
    %v4579 = vmax.f32 %v4483, 0.0
    %v4580 = vmax.f32 %v4484, 0.0
    %v4581 = vmax.f32 %v4485, 0.0
    %v4582 = vmax.f32 %v4486, 0.0
    %v4583 = vmax.f32 %v4487, 0.0
    %v4584 = vmax.f32 %v4488, 0.0
    %v4585 = vmax.f32 %v4489, 0.0
    %v4586 = vmax.f32 %v4490, 0.0
    %v4587 = vmax.f32 %v4491, 0.0
    %v4588 = vmax.f32 %v4492, 0.0
    %v4589 = vmax.f32 %v4493, 0.0
    %v4590 = vmax.f32 %v4494, 0.0
    %v4591 = vmax.f32 %v4495, 0.0
    %v4592 = vmax.f32 %v4496, 0.0
    %v4593 = vmax.f32 %v4497, 0.0
    %v4594 = vmax.f32 %v4498, 0.0
    %v4595 = vmax.f32 %v4499, 0.0
    %v4596 = vmax.f32 %v4500, 0.0
    %v4597 = vmax.f32 %v4501, 0.0
    %v4598 = vmax.f32 %v4502, 0.0
    %v4599 = vmax.f32 %v4503, 0.0
    %v4600 = vmax.f32 %v4504, 0.0
    %v4601 = vmax.f32 %v4505, 0.0
    %v4602 = vmax.f32 %v4506, 0.0
    %v4603 = vmax.f32 %v4507, 0.0
    %v4604 = vmax.f32 %v4508, 0.0
    %v4605 = vmax.f32 %v4509, 0.0
    %v4606 = vmax.f32 %v4510, 0.0
    %v4607 = vmax.f32 %v4511, 0.0
    %v4608 = vmax.f32 %v4512, 0.0
    %v4609 = vmax.f32 %v4513, 0.0
    %v4610 = vmax.f32 %v4514, 0.0
    %v4611 = vmax.f32 %v4515, 0.0
    %v4612 = vmax.f32 %v4516, 0.0
    %v4613 = vmax.f32 %v4517, 0.0
    %v4614 = vmax.f32 %v4518, 0.0
    %v4615 = vmax.f32 %v4519, 0.0
    %v4616 = vmax.f32 %v4520, 0.0
    %v4617 = vmax.f32 %v4521, 0.0
    %v4618 = vmax.f32 %v4522, 0.0
    %v4619 = vmax.f32 %v4523, 0.0
    %v4620 = vmax.f32 %v4524, 0.0
    %v4621 = vmax.f32 %v4525, 0.0
    %v4622 = vmax.f32 %v4526, 0.0
    %v4623 = vmax.f32 %v4527, 0.0
    %v4624 = vmax.f32 %v4528, 0.0
    %v4625 = vmax.f32 %v4529, 0.0
    %v4626 = vmax.f32 %v4530, 0.0
    %v4627 = vmax.f32 %v4531, 0.0
    %v4628 = vmax.f32 %v4532, 0.0
    %v4629 = vmax.f32 %v4533, 0.0
    %v4630 = vmax.f32 %v4534, 0.0
    %v4631 = vmax.f32 %v4535, 0.0
    %v4632 = vmax.f32 %v4536, 0.0
    %v4633 = vmax.f32 %v4537, 0.0
    %v4634 = vmax.f32 %v4538, 0.0
    %v4635 = vmax.f32 %v4539, 0.0
    %v4636 = vmax.f32 %v4540, 0.0
    %v4637 = vmax.f32 %v4541, 0.0
    %v4638 = vmax.f32 %v4542, 0.0
    %v4639 = vmax.f32 %v4543, 0.0
    %v4640 = vmax.f32 %v4544, 0.0
    %v4641 = vmax.f32 %v4545, 0.0
    %v4642 = vmax.f32 %v4546, 0.0
    %v4643 = vmax.f32 %v4547, 0.0
    %v4644 = vmax.f32 %v4548, 0.0
    %v4645 = vmax.f32 %v4549, 0.0
    %v4646 = vmax.f32 %v4550, 0.0
    %v4647 = vmax.f32 %v4551, 0.0
    %v4648 = vmax.f32 %v4552, 0.0
    %v4649 = vmax.f32 %v4553, 0.0
    %v4650 = vld [vmem:[%s3] sm:$0x1]
    %v4652 = vlaneseq
    %v4653 = vshrl.u32 %v4652, 7
    %v4654 = vsub.s32 0, %v4653
    %v4655 = vrot.slane %v4650, %v4654
    %v4657 = vmul.f32 %v4554, %v4655
    %v4658 = vmul.f32 %v4555, %v4655
    %v4659 = vmul.f32 %v4556, %v4655
    %v4660 = vmul.f32 %v4557, %v4655
    %v4661 = vmul.f32 %v4558, %v4655
    %v4662 = vmul.f32 %v4559, %v4655
    %v4663 = vmul.f32 %v4560, %v4655
    %v4664 = vmul.f32 %v4561, %v4655
    %v4665 = vmul.f32 %v4562, %v4655
    %v4666 = vmul.f32 %v4563, %v4655
    %v4667 = vmul.f32 %v4564, %v4655
    %v4668 = vmul.f32 %v4565, %v4655
    %v4669 = vmul.f32 %v4566, %v4655
    %v4670 = vmul.f32 %v4567, %v4655
    %v4671 = vmul.f32 %v4568, %v4655
    %v4672 = vmul.f32 %v4569, %v4655
    %v4673 = vmul.f32 %v4570, %v4655
    %v4674 = vmul.f32 %v4571, %v4655
    %v4675 = vmul.f32 %v4572, %v4655
    %v4676 = vmul.f32 %v4573, %v4655
    %v4677 = vmul.f32 %v4574, %v4655
    %v4678 = vmul.f32 %v4575, %v4655
    %v4679 = vmul.f32 %v4576, %v4655
    %v4680 = vmul.f32 %v4577, %v4655
    %v4681 = vmul.f32 %v4578, %v4655
    %v4682 = vmul.f32 %v4579, %v4655
    %v4683 = vmul.f32 %v4580, %v4655
    %v4684 = vmul.f32 %v4581, %v4655
    %v4685 = vmul.f32 %v4582, %v4655
    %v4686 = vmul.f32 %v4583, %v4655
    %v4687 = vmul.f32 %v4584, %v4655
    %v4688 = vmul.f32 %v4585, %v4655
    %v4689 = vmul.f32 %v4586, %v4655
    %v4690 = vmul.f32 %v4587, %v4655
    %v4691 = vmul.f32 %v4588, %v4655
    %v4692 = vmul.f32 %v4589, %v4655
    %v4693 = vmul.f32 %v4590, %v4655
    %v4694 = vmul.f32 %v4591, %v4655
    %v4695 = vmul.f32 %v4592, %v4655
    %v4696 = vmul.f32 %v4593, %v4655
    %v4697 = vmul.f32 %v4594, %v4655
    %v4698 = vmul.f32 %v4595, %v4655
    %v4699 = vmul.f32 %v4596, %v4655
    %v4700 = vmul.f32 %v4597, %v4655
    %v4701 = vmul.f32 %v4598, %v4655
    %v4702 = vmul.f32 %v4599, %v4655
    %v4703 = vmul.f32 %v4600, %v4655
    %v4704 = vmul.f32 %v4601, %v4655
    %v4705 = vmul.f32 %v4602, %v4655
    %v4706 = vmul.f32 %v4603, %v4655
    %v4707 = vmul.f32 %v4604, %v4655
    %v4708 = vmul.f32 %v4605, %v4655
    %v4709 = vmul.f32 %v4606, %v4655
    %v4710 = vmul.f32 %v4607, %v4655
    %v4711 = vmul.f32 %v4608, %v4655
    %v4712 = vmul.f32 %v4609, %v4655
    %v4713 = vmul.f32 %v4610, %v4655
    %v4714 = vmul.f32 %v4611, %v4655
    %v4715 = vmul.f32 %v4612, %v4655
    %v4716 = vmul.f32 %v4613, %v4655
    %v4717 = vmul.f32 %v4614, %v4655
    %v4718 = vmul.f32 %v4615, %v4655
    %v4719 = vmul.f32 %v4616, %v4655
    %v4720 = vmul.f32 %v4617, %v4655
    %v4721 = vmul.f32 %v4618, %v4655
    %v4722 = vmul.f32 %v4619, %v4655
    %v4723 = vmul.f32 %v4620, %v4655
    %v4724 = vmul.f32 %v4621, %v4655
    %v4725 = vmul.f32 %v4622, %v4655
    %v4726 = vmul.f32 %v4623, %v4655
    %v4727 = vmul.f32 %v4624, %v4655
    %v4728 = vmul.f32 %v4625, %v4655
    %v4729 = vmul.f32 %v4626, %v4655
    %v4730 = vmul.f32 %v4627, %v4655
    %v4731 = vmul.f32 %v4628, %v4655
    %v4732 = vmul.f32 %v4629, %v4655
    %v4733 = vmul.f32 %v4630, %v4655
    %v4734 = vmul.f32 %v4631, %v4655
    %v4735 = vmul.f32 %v4632, %v4655
    %v4736 = vmul.f32 %v4633, %v4655
    %v4737 = vmul.f32 %v4634, %v4655
    %v4738 = vmul.f32 %v4635, %v4655
    %v4739 = vmul.f32 %v4636, %v4655
    %v4740 = vmul.f32 %v4637, %v4655
    %v4741 = vmul.f32 %v4638, %v4655
    %v4742 = vmul.f32 %v4639, %v4655
    %v4743 = vmul.f32 %v4640, %v4655
    %v4744 = vmul.f32 %v4641, %v4655
    %v4745 = vmul.f32 %v4642, %v4655
    %v4746 = vmul.f32 %v4643, %v4655
    %v4747 = vmul.f32 %v4644, %v4655
    %v4748 = vmul.f32 %v4645, %v4655
    %v4749 = vmul.f32 %v4646, %v4655
    %v4750 = vmul.f32 %v4647, %v4655
    %v4751 = vmul.f32 %v4648, %v4655
    %v4752 = vmul.f32 %v4649, %v4655
    %v4753 = vld [vmem:[%s4] sm:$0x1]
    %v4755 = vlaneseq
    %v4756 = vshrl.u32 %v4755, 7
    %v4757 = vsub.s32 0, %v4756
    %v4758 = vrot.slane %v4753, %v4757
    %v4760 = vadd.f32 %v4657, %v4758
    %v4761 = vadd.f32 %v4658, %v4758
    %v4762 = vadd.f32 %v4659, %v4758
    %v4763 = vadd.f32 %v4660, %v4758
    %v4764 = vadd.f32 %v4661, %v4758
    %v4765 = vadd.f32 %v4662, %v4758
    %v4766 = vadd.f32 %v4663, %v4758
    %v4767 = vadd.f32 %v4664, %v4758
    %v4768 = vadd.f32 %v4665, %v4758
    %v4769 = vadd.f32 %v4666, %v4758
    %v4770 = vadd.f32 %v4667, %v4758
    %v4771 = vadd.f32 %v4668, %v4758
    %v4772 = vadd.f32 %v4669, %v4758
    %v4773 = vadd.f32 %v4670, %v4758
    %v4774 = vadd.f32 %v4671, %v4758
    %v4775 = vadd.f32 %v4672, %v4758
    %v4776 = vadd.f32 %v4673, %v4758
    %v4777 = vadd.f32 %v4674, %v4758
    %v4778 = vadd.f32 %v4675, %v4758
    %v4779 = vadd.f32 %v4676, %v4758
    %v4780 = vadd.f32 %v4677, %v4758
    %v4781 = vadd.f32 %v4678, %v4758
    %v4782 = vadd.f32 %v4679, %v4758
    %v4783 = vadd.f32 %v4680, %v4758
    %v4784 = vadd.f32 %v4681, %v4758
    %v4785 = vadd.f32 %v4682, %v4758
    %v4786 = vadd.f32 %v4683, %v4758
    %v4787 = vadd.f32 %v4684, %v4758
    %v4788 = vadd.f32 %v4685, %v4758
    %v4789 = vadd.f32 %v4686, %v4758
    %v4790 = vadd.f32 %v4687, %v4758
    %v4791 = vadd.f32 %v4688, %v4758
    %v4792 = vadd.f32 %v4689, %v4758
    %v4793 = vadd.f32 %v4690, %v4758
    %v4794 = vadd.f32 %v4691, %v4758
    %v4795 = vadd.f32 %v4692, %v4758
    %v4796 = vadd.f32 %v4693, %v4758
    %v4797 = vadd.f32 %v4694, %v4758
    %v4798 = vadd.f32 %v4695, %v4758
    %v4799 = vadd.f32 %v4696, %v4758
    %v4800 = vadd.f32 %v4697, %v4758
    %v4801 = vadd.f32 %v4698, %v4758
    %v4802 = vadd.f32 %v4699, %v4758
    %v4803 = vadd.f32 %v4700, %v4758
    %v4804 = vadd.f32 %v4701, %v4758
    %v4805 = vadd.f32 %v4702, %v4758
    %v4806 = vadd.f32 %v4703, %v4758
    %v4807 = vadd.f32 %v4704, %v4758
    %v4808 = vadd.f32 %v4705, %v4758
    %v4809 = vadd.f32 %v4706, %v4758
    %v4810 = vadd.f32 %v4707, %v4758
    %v4811 = vadd.f32 %v4708, %v4758
    %v4812 = vadd.f32 %v4709, %v4758
    %v4813 = vadd.f32 %v4710, %v4758
    %v4814 = vadd.f32 %v4711, %v4758
    %v4815 = vadd.f32 %v4712, %v4758
    %v4816 = vadd.f32 %v4713, %v4758
    %v4817 = vadd.f32 %v4714, %v4758
    %v4818 = vadd.f32 %v4715, %v4758
    %v4819 = vadd.f32 %v4716, %v4758
    %v4820 = vadd.f32 %v4717, %v4758
    %v4821 = vadd.f32 %v4718, %v4758
    %v4822 = vadd.f32 %v4719, %v4758
    %v4823 = vadd.f32 %v4720, %v4758
    %v4824 = vadd.f32 %v4721, %v4758
    %v4825 = vadd.f32 %v4722, %v4758
    %v4826 = vadd.f32 %v4723, %v4758
    %v4827 = vadd.f32 %v4724, %v4758
    %v4828 = vadd.f32 %v4725, %v4758
    %v4829 = vadd.f32 %v4726, %v4758
    %v4830 = vadd.f32 %v4727, %v4758
    %v4831 = vadd.f32 %v4728, %v4758
    %v4832 = vadd.f32 %v4729, %v4758
    %v4833 = vadd.f32 %v4730, %v4758
    %v4834 = vadd.f32 %v4731, %v4758
    %v4835 = vadd.f32 %v4732, %v4758
    %v4836 = vadd.f32 %v4733, %v4758
    %v4837 = vadd.f32 %v4734, %v4758
    %v4838 = vadd.f32 %v4735, %v4758
    %v4839 = vadd.f32 %v4736, %v4758
    %v4840 = vadd.f32 %v4737, %v4758
    %v4841 = vadd.f32 %v4738, %v4758
    %v4842 = vadd.f32 %v4739, %v4758
    %v4843 = vadd.f32 %v4740, %v4758
    %v4844 = vadd.f32 %v4741, %v4758
    %v4845 = vadd.f32 %v4742, %v4758
    %v4846 = vadd.f32 %v4743, %v4758
    %v4847 = vadd.f32 %v4744, %v4758
    %v4848 = vadd.f32 %v4745, %v4758
    %v4849 = vadd.f32 %v4746, %v4758
    %v4850 = vadd.f32 %v4747, %v4758
    %v4851 = vadd.f32 %v4748, %v4758
    %v4852 = vadd.f32 %v4749, %v4758
    %v4853 = vadd.f32 %v4750, %v4758
    %v4854 = vadd.f32 %v4751, %v4758
    %v4855 = vadd.f32 %v4752, %v4758
    %v4856 = vmax.f32 %v4760, %v4762
    %v4857 = vmax.f32 %v4761, %v4763
    %v4858 = vmax.f32 %v4764, %v4766
    %v4859 = vmax.f32 %v4765, %v4767
    %v4860 = vmax.f32 %v4768, %v4770
    %v4861 = vmax.f32 %v4769, %v4771
    %v4862 = vmax.f32 %v4772, %v4774
    %v4863 = vmax.f32 %v4773, %v4775
    %v4864 = vmax.f32 %v4776, %v4778
    %v4865 = vmax.f32 %v4777, %v4779
    %v4866 = vmax.f32 %v4780, %v4782
    %v4867 = vmax.f32 %v4781, %v4783
    %v4868 = vmax.f32 %v4784, %v4786
    %v4869 = vmax.f32 %v4785, %v4787
    %v4870 = vmax.f32 %v4788, %v4790
    %v4871 = vmax.f32 %v4789, %v4791
    %v4872 = vmax.f32 %v4792, %v4794
    %v4873 = vmax.f32 %v4793, %v4795
    %v4874 = vmax.f32 %v4796, %v4798
    %v4875 = vmax.f32 %v4797, %v4799
    %v4876 = vmax.f32 %v4800, %v4802
    %v4877 = vmax.f32 %v4801, %v4803
    %v4878 = vmax.f32 %v4804, %v4806
    %v4879 = vmax.f32 %v4805, %v4807
    %v4880 = vmax.f32 %v4808, %v4810
    %v4881 = vmax.f32 %v4809, %v4811
    %v4882 = vmax.f32 %v4812, %v4814
    %v4883 = vmax.f32 %v4813, %v4815
    %v4884 = vmax.f32 %v4816, %v4818
    %v4885 = vmax.f32 %v4817, %v4819
    %v4886 = vmax.f32 %v4820, %v4822
    %v4887 = vmax.f32 %v4821, %v4823
    %v4888 = vmax.f32 %v4824, %v4826
    %v4889 = vmax.f32 %v4825, %v4827
    %v4890 = vmax.f32 %v4828, %v4830
    %v4891 = vmax.f32 %v4829, %v4831
    %v4892 = vmax.f32 %v4832, %v4834
    %v4893 = vmax.f32 %v4833, %v4835
    %v4894 = vmax.f32 %v4836, %v4838
    %v4895 = vmax.f32 %v4837, %v4839
    %v4896 = vmax.f32 %v4840, %v4842
    %v4897 = vmax.f32 %v4841, %v4843
    %v4898 = vmax.f32 %v4844, %v4846
    %v4899 = vmax.f32 %v4845, %v4847
    %v4900 = vmax.f32 %v4848, %v4850
    %v4901 = vmax.f32 %v4849, %v4851
    %v4902 = vmax.f32 %v4852, %v4854
    %v4903 = vmax.f32 %v4853, %v4855
    %v4952 = vcombine.high %v4856, %v4856
    %v4954 = vunpack.c.l.s4 1983009808
    %v4955 = vunpack.c.0.s8 %v4954
    %v4956 = vlaneseq
    %v4957 = vshrl.u32 %v4956, 7
    %v4958 = vsub.s32 %v4955, %v4957
    %v4959 = vrot.slane %v4856, %v4958
    %v4961 = vunpack.c.l.s4 1983009808
    %v4962 = vunpack.c.0.s8 %v4961
    %v4963 = vlaneseq
    %v4964 = vshrl.u32 %v4963, 7
    %v4965 = vsub.s32 %v4962, %v4964
    %v4966 = vrot.slane %v4952, %v4965
    %v4967 = vcombine.high %v4959, %v4959
    %v4968 = vcombine.high %v4966, %v4966
    %v4970 = vunpack.c.l.s4 1983009808
    %v4971 = vunpack.c.0.s8 %v4970
    %v4972 = vlaneseq
    %v4973 = vshrl.u32 %v4972, 7
    %v4974 = vsub.s32 %v4971, %v4973
    %v4975 = vrot.slane %v4857, %v4974
    %v4976 = vcombine.high %v4975, %v4975
    %v4977 = vcombine.high %v4858, %v4858
    %v4979 = vunpack.c.l.s4 1983009808
    %v4980 = vunpack.c.0.s8 %v4979
    %v4981 = vlaneseq
    %v4982 = vshrl.u32 %v4981, 7
    %v4983 = vsub.s32 %v4980, %v4982
    %v4984 = vrot.slane %v4858, %v4983
    %v4986 = vunpack.c.l.s4 1983009808
    %v4987 = vunpack.c.0.s8 %v4986
    %v4988 = vlaneseq
    %v4989 = vshrl.u32 %v4988, 7
    %v4990 = vsub.s32 %v4987, %v4989
    %v4991 = vrot.slane %v4977, %v4990
    %v4992 = vcombine.high %v4984, %v4984
    %v4993 = vcombine.high %v4991, %v4991
    %v4995 = vunpack.c.l.s4 1983009808
    %v4996 = vunpack.c.0.s8 %v4995
    %v4997 = vlaneseq
    %v4998 = vshrl.u32 %v4997, 7
    %v4999 = vsub.s32 %v4996, %v4998
    %v5000 = vrot.slane %v4859, %v4999
    %v5001 = vcombine.high %v5000, %v5000
    %v5002 = vcombine.high %v4860, %v4860
    %v5004 = vunpack.c.l.s4 1983009808
    %v5005 = vunpack.c.0.s8 %v5004
    %v5006 = vlaneseq
    %v5007 = vshrl.u32 %v5006, 7
    %v5008 = vsub.s32 %v5005, %v5007
    %v5009 = vrot.slane %v4860, %v5008
    %v5011 = vunpack.c.l.s4 1983009808
    %v5012 = vunpack.c.0.s8 %v5011
    %v5013 = vlaneseq
    %v5014 = vshrl.u32 %v5013, 7
    %v5015 = vsub.s32 %v5012, %v5014
    %v5016 = vrot.slane %v5002, %v5015
    %v5017 = vcombine.high %v5009, %v5009
    %v5018 = vcombine.high %v5016, %v5016
    %v5020 = vunpack.c.l.s4 1983009808
    %v5021 = vunpack.c.0.s8 %v5020
    %v5022 = vlaneseq
    %v5023 = vshrl.u32 %v5022, 7
    %v5024 = vsub.s32 %v5021, %v5023
    %v5025 = vrot.slane %v4861, %v5024
    %v5026 = vcombine.high %v5025, %v5025
    %v5027 = vcombine.high %v4862, %v4862
    %v5029 = vunpack.c.l.s4 1983009808
    %v5030 = vunpack.c.0.s8 %v5029
    %v5031 = vlaneseq
    %v5032 = vshrl.u32 %v5031, 7
    %v5033 = vsub.s32 %v5030, %v5032
    %v5034 = vrot.slane %v4862, %v5033
    %v5036 = vunpack.c.l.s4 1983009808
    %v5037 = vunpack.c.0.s8 %v5036
    %v5038 = vlaneseq
    %v5039 = vshrl.u32 %v5038, 7
    %v5040 = vsub.s32 %v5037, %v5039
    %v5041 = vrot.slane %v5027, %v5040
    %v5042 = vcombine.high %v5034, %v5034
    %v5043 = vcombine.high %v5041, %v5041
    %v5045 = vunpack.c.l.s4 1983009808
    %v5046 = vunpack.c.0.s8 %v5045
    %v5047 = vlaneseq
    %v5048 = vshrl.u32 %v5047, 7
    %v5049 = vsub.s32 %v5046, %v5048
    %v5050 = vrot.slane %v4863, %v5049
    %v5051 = vcombine.high %v5050, %v5050
    %v5052 = vcombine.high %v4864, %v4864
    %v5054 = vunpack.c.l.s4 1983009808
    %v5055 = vunpack.c.0.s8 %v5054
    %v5056 = vlaneseq
    %v5057 = vshrl.u32 %v5056, 7
    %v5058 = vsub.s32 %v5055, %v5057
    %v5059 = vrot.slane %v4864, %v5058
    %v5061 = vunpack.c.l.s4 1983009808
    %v5062 = vunpack.c.0.s8 %v5061
    %v5063 = vlaneseq
    %v5064 = vshrl.u32 %v5063, 7
    %v5065 = vsub.s32 %v5062, %v5064
    %v5066 = vrot.slane %v5052, %v5065
    %v5067 = vcombine.high %v5059, %v5059
    %v5068 = vcombine.high %v5066, %v5066
    %v5070 = vunpack.c.l.s4 1983009808
    %v5071 = vunpack.c.0.s8 %v5070
    %v5072 = vlaneseq
    %v5073 = vshrl.u32 %v5072, 7
    %v5074 = vsub.s32 %v5071, %v5073
    %v5075 = vrot.slane %v4865, %v5074
    %v5076 = vcombine.high %v5075, %v5075
    %v5077 = vcombine.high %v4866, %v4866
    %v5079 = vunpack.c.l.s4 1983009808
    %v5080 = vunpack.c.0.s8 %v5079
    %v5081 = vlaneseq
    %v5082 = vshrl.u32 %v5081, 7
    %v5083 = vsub.s32 %v5080, %v5082
    %v5084 = vrot.slane %v4866, %v5083
    %v5086 = vunpack.c.l.s4 1983009808
    %v5087 = vunpack.c.0.s8 %v5086
    %v5088 = vlaneseq
    %v5089 = vshrl.u32 %v5088, 7
    %v5090 = vsub.s32 %v5087, %v5089
    %v5091 = vrot.slane %v5077, %v5090
    %v5092 = vcombine.high %v5084, %v5084
    %v5093 = vcombine.high %v5091, %v5091
    %v5095 = vunpack.c.l.s4 1983009808
    %v5096 = vunpack.c.0.s8 %v5095
    %v5097 = vlaneseq
    %v5098 = vshrl.u32 %v5097, 7
    %v5099 = vsub.s32 %v5096, %v5098
    %v5100 = vrot.slane %v4867, %v5099
    %v5101 = vcombine.high %v5100, %v5100
    %v5102 = vcombine.high %v4868, %v4868
    %v5104 = vunpack.c.l.s4 1983009808
    %v5105 = vunpack.c.0.s8 %v5104
    %v5106 = vlaneseq
    %v5107 = vshrl.u32 %v5106, 7
    %v5108 = vsub.s32 %v5105, %v5107
    %v5109 = vrot.slane %v4868, %v5108
    %v5111 = vunpack.c.l.s4 1983009808
    %v5112 = vunpack.c.0.s8 %v5111
    %v5113 = vlaneseq
    %v5114 = vshrl.u32 %v5113, 7
    %v5115 = vsub.s32 %v5112, %v5114
    %v5116 = vrot.slane %v5102, %v5115
    %v5117 = vcombine.high %v5109, %v5109
    %v5118 = vcombine.high %v5116, %v5116
    %v5120 = vunpack.c.l.s4 1983009808
    %v5121 = vunpack.c.0.s8 %v5120
    %v5122 = vlaneseq
    %v5123 = vshrl.u32 %v5122, 7
    %v5124 = vsub.s32 %v5121, %v5123
    %v5125 = vrot.slane %v4869, %v5124
    %v5126 = vcombine.high %v5125, %v5125
    %v5127 = vcombine.high %v4870, %v4870
    %v5129 = vunpack.c.l.s4 1983009808
    %v5130 = vunpack.c.0.s8 %v5129
    %v5131 = vlaneseq
    %v5132 = vshrl.u32 %v5131, 7
    %v5133 = vsub.s32 %v5130, %v5132
    %v5134 = vrot.slane %v4870, %v5133
    %v5136 = vunpack.c.l.s4 1983009808
    %v5137 = vunpack.c.0.s8 %v5136
    %v5138 = vlaneseq
    %v5139 = vshrl.u32 %v5138, 7
    %v5140 = vsub.s32 %v5137, %v5139
    %v5141 = vrot.slane %v5127, %v5140
    %v5142 = vcombine.high %v5134, %v5134
    %v5143 = vcombine.high %v5141, %v5141
    %v5145 = vunpack.c.l.s4 1983009808
    %v5146 = vunpack.c.0.s8 %v5145
    %v5147 = vlaneseq
    %v5148 = vshrl.u32 %v5147, 7
    %v5149 = vsub.s32 %v5146, %v5148
    %v5150 = vrot.slane %v4871, %v5149
    %v5151 = vcombine.high %v5150, %v5150
    %v5152 = vcombine.high %v4872, %v4872
    %v5154 = vunpack.c.l.s4 1983009808
    %v5155 = vunpack.c.0.s8 %v5154
    %v5156 = vlaneseq
    %v5157 = vshrl.u32 %v5156, 7
    %v5158 = vsub.s32 %v5155, %v5157
    %v5159 = vrot.slane %v4872, %v5158
    %v5161 = vunpack.c.l.s4 1983009808
    %v5162 = vunpack.c.0.s8 %v5161
    %v5163 = vlaneseq
    %v5164 = vshrl.u32 %v5163, 7
    %v5165 = vsub.s32 %v5162, %v5164
    %v5166 = vrot.slane %v5152, %v5165
    %v5167 = vcombine.high %v5159, %v5159
    %v5168 = vcombine.high %v5166, %v5166
    %v5170 = vunpack.c.l.s4 1983009808
    %v5171 = vunpack.c.0.s8 %v5170
    %v5172 = vlaneseq
    %v5173 = vshrl.u32 %v5172, 7
    %v5174 = vsub.s32 %v5171, %v5173
    %v5175 = vrot.slane %v4873, %v5174
    %v5176 = vcombine.high %v5175, %v5175
    %v5177 = vcombine.high %v4874, %v4874
    %v5179 = vunpack.c.l.s4 1983009808
    %v5180 = vunpack.c.0.s8 %v5179
    %v5181 = vlaneseq
    %v5182 = vshrl.u32 %v5181, 7
    %v5183 = vsub.s32 %v5180, %v5182
    %v5184 = vrot.slane %v4874, %v5183
    %v5186 = vunpack.c.l.s4 1983009808
    %v5187 = vunpack.c.0.s8 %v5186
    %v5188 = vlaneseq
    %v5189 = vshrl.u32 %v5188, 7
    %v5190 = vsub.s32 %v5187, %v5189
    %v5191 = vrot.slane %v5177, %v5190
    %v5192 = vcombine.high %v5184, %v5184
    %v5193 = vcombine.high %v5191, %v5191
    %v5195 = vunpack.c.l.s4 1983009808
    %v5196 = vunpack.c.0.s8 %v5195
    %v5197 = vlaneseq
    %v5198 = vshrl.u32 %v5197, 7
    %v5199 = vsub.s32 %v5196, %v5198
    %v5200 = vrot.slane %v4875, %v5199
    %v5201 = vcombine.high %v5200, %v5200
    %v5202 = vcombine.high %v4876, %v4876
    %v5204 = vunpack.c.l.s4 1983009808
    %v5205 = vunpack.c.0.s8 %v5204
    %v5206 = vlaneseq
    %v5207 = vshrl.u32 %v5206, 7
    %v5208 = vsub.s32 %v5205, %v5207
    %v5209 = vrot.slane %v4876, %v5208
    %v5211 = vunpack.c.l.s4 1983009808
    %v5212 = vunpack.c.0.s8 %v5211
    %v5213 = vlaneseq
    %v5214 = vshrl.u32 %v5213, 7
    %v5215 = vsub.s32 %v5212, %v5214
    %v5216 = vrot.slane %v5202, %v5215
    %v5217 = vcombine.high %v5209, %v5209
    %v5218 = vcombine.high %v5216, %v5216
    %v5220 = vunpack.c.l.s4 1983009808
    %v5221 = vunpack.c.0.s8 %v5220
    %v5222 = vlaneseq
    %v5223 = vshrl.u32 %v5222, 7
    %v5224 = vsub.s32 %v5221, %v5223
    %v5225 = vrot.slane %v4877, %v5224
    %v5226 = vcombine.high %v5225, %v5225
    %v5227 = vcombine.high %v4878, %v4878
    %v5229 = vunpack.c.l.s4 1983009808
    %v5230 = vunpack.c.0.s8 %v5229
    %v5231 = vlaneseq
    %v5232 = vshrl.u32 %v5231, 7
    %v5233 = vsub.s32 %v5230, %v5232
    %v5234 = vrot.slane %v4878, %v5233
    %v5236 = vunpack.c.l.s4 1983009808
    %v5237 = vunpack.c.0.s8 %v5236
    %v5238 = vlaneseq
    %v5239 = vshrl.u32 %v5238, 7
    %v5240 = vsub.s32 %v5237, %v5239
    %v5241 = vrot.slane %v5227, %v5240
    %v5242 = vcombine.high %v5234, %v5234
    %v5243 = vcombine.high %v5241, %v5241
    %v5245 = vunpack.c.l.s4 1983009808
    %v5246 = vunpack.c.0.s8 %v5245
    %v5247 = vlaneseq
    %v5248 = vshrl.u32 %v5247, 7
    %v5249 = vsub.s32 %v5246, %v5248
    %v5250 = vrot.slane %v4879, %v5249
    %v5251 = vcombine.high %v5250, %v5250
    %v5252 = vcombine.high %v4880, %v4880
    %v5254 = vunpack.c.l.s4 1983009808
    %v5255 = vunpack.c.0.s8 %v5254
    %v5256 = vlaneseq
    %v5257 = vshrl.u32 %v5256, 7
    %v5258 = vsub.s32 %v5255, %v5257
    %v5259 = vrot.slane %v4880, %v5258
    %v5261 = vunpack.c.l.s4 1983009808
    %v5262 = vunpack.c.0.s8 %v5261
    %v5263 = vlaneseq
    %v5264 = vshrl.u32 %v5263, 7
    %v5265 = vsub.s32 %v5262, %v5264
    %v5266 = vrot.slane %v5252, %v5265
    %v5267 = vcombine.high %v5259, %v5259
    %v5268 = vcombine.high %v5266, %v5266
    %v5270 = vunpack.c.l.s4 1983009808
    %v5271 = vunpack.c.0.s8 %v5270
    %v5272 = vlaneseq
    %v5273 = vshrl.u32 %v5272, 7
    %v5274 = vsub.s32 %v5271, %v5273
    %v5275 = vrot.slane %v4881, %v5274
    %v5276 = vcombine.high %v5275, %v5275
    %v5277 = vcombine.high %v4882, %v4882
    %v5279 = vunpack.c.l.s4 1983009808
    %v5280 = vunpack.c.0.s8 %v5279
    %v5281 = vlaneseq
    %v5282 = vshrl.u32 %v5281, 7
    %v5283 = vsub.s32 %v5280, %v5282
    %v5284 = vrot.slane %v4882, %v5283
    %v5286 = vunpack.c.l.s4 1983009808
    %v5287 = vunpack.c.0.s8 %v5286
    %v5288 = vlaneseq
    %v5289 = vshrl.u32 %v5288, 7
    %v5290 = vsub.s32 %v5287, %v5289
    %v5291 = vrot.slane %v5277, %v5290
    %v5292 = vcombine.high %v5284, %v5284
    %v5293 = vcombine.high %v5291, %v5291
    %v5295 = vunpack.c.l.s4 1983009808
    %v5296 = vunpack.c.0.s8 %v5295
    %v5297 = vlaneseq
    %v5298 = vshrl.u32 %v5297, 7
    %v5299 = vsub.s32 %v5296, %v5298
    %v5300 = vrot.slane %v4883, %v5299
    %v5301 = vcombine.high %v5300, %v5300
    %v5302 = vcombine.high %v4884, %v4884
    %v5304 = vunpack.c.l.s4 1983009808
    %v5305 = vunpack.c.0.s8 %v5304
    %v5306 = vlaneseq
    %v5307 = vshrl.u32 %v5306, 7
    %v5308 = vsub.s32 %v5305, %v5307
    %v5309 = vrot.slane %v4884, %v5308
    %v5311 = vunpack.c.l.s4 1983009808
    %v5312 = vunpack.c.0.s8 %v5311
    %v5313 = vlaneseq
    %v5314 = vshrl.u32 %v5313, 7
    %v5315 = vsub.s32 %v5312, %v5314
    %v5316 = vrot.slane %v5302, %v5315
    %v5317 = vcombine.high %v5309, %v5309
    %v5318 = vcombine.high %v5316, %v5316
    %v5320 = vunpack.c.l.s4 1983009808
    %v5321 = vunpack.c.0.s8 %v5320
    %v5322 = vlaneseq
    %v5323 = vshrl.u32 %v5322, 7
    %v5324 = vsub.s32 %v5321, %v5323
    %v5325 = vrot.slane %v4885, %v5324
    %v5326 = vcombine.high %v5325, %v5325
    %v5327 = vcombine.high %v4886, %v4886
    %v5329 = vunpack.c.l.s4 1983009808
    %v5330 = vunpack.c.0.s8 %v5329
    %v5331 = vlaneseq
    %v5332 = vshrl.u32 %v5331, 7
    %v5333 = vsub.s32 %v5330, %v5332
    %v5334 = vrot.slane %v4886, %v5333
    %v5336 = vunpack.c.l.s4 1983009808
    %v5337 = vunpack.c.0.s8 %v5336
    %v5338 = vlaneseq
    %v5339 = vshrl.u32 %v5338, 7
    %v5340 = vsub.s32 %v5337, %v5339
    %v5341 = vrot.slane %v5327, %v5340
    %v5342 = vcombine.high %v5334, %v5334
    %v5343 = vcombine.high %v5341, %v5341
    %v5345 = vunpack.c.l.s4 1983009808
    %v5346 = vunpack.c.0.s8 %v5345
    %v5347 = vlaneseq
    %v5348 = vshrl.u32 %v5347, 7
    %v5349 = vsub.s32 %v5346, %v5348
    %v5350 = vrot.slane %v4887, %v5349
    %v5351 = vcombine.high %v5350, %v5350
    %v5352 = vcombine.high %v4888, %v4888
    %v5354 = vunpack.c.l.s4 1983009808
    %v5355 = vunpack.c.0.s8 %v5354
    %v5356 = vlaneseq
    %v5357 = vshrl.u32 %v5356, 7
    %v5358 = vsub.s32 %v5355, %v5357
    %v5359 = vrot.slane %v4888, %v5358
    %v5361 = vunpack.c.l.s4 1983009808
    %v5362 = vunpack.c.0.s8 %v5361
    %v5363 = vlaneseq
    %v5364 = vshrl.u32 %v5363, 7
    %v5365 = vsub.s32 %v5362, %v5364
    %v5366 = vrot.slane %v5352, %v5365
    %v5367 = vcombine.high %v5359, %v5359
    %v5368 = vcombine.high %v5366, %v5366
    %v5370 = vunpack.c.l.s4 1983009808
    %v5371 = vunpack.c.0.s8 %v5370
    %v5372 = vlaneseq
    %v5373 = vshrl.u32 %v5372, 7
    %v5374 = vsub.s32 %v5371, %v5373
    %v5375 = vrot.slane %v4889, %v5374
    %v5376 = vcombine.high %v5375, %v5375
    %v5377 = vcombine.high %v4890, %v4890
    %v5379 = vunpack.c.l.s4 1983009808
    %v5380 = vunpack.c.0.s8 %v5379
    %v5381 = vlaneseq
    %v5382 = vshrl.u32 %v5381, 7
    %v5383 = vsub.s32 %v5380, %v5382
    %v5384 = vrot.slane %v4890, %v5383
    %v5386 = vunpack.c.l.s4 1983009808
    %v5387 = vunpack.c.0.s8 %v5386
    %v5388 = vlaneseq
    %v5389 = vshrl.u32 %v5388, 7
    %v5390 = vsub.s32 %v5387, %v5389
    %v5391 = vrot.slane %v5377, %v5390
    %v5392 = vcombine.high %v5384, %v5384
    %v5393 = vcombine.high %v5391, %v5391
    %v5395 = vunpack.c.l.s4 1983009808
    %v5396 = vunpack.c.0.s8 %v5395
    %v5397 = vlaneseq
    %v5398 = vshrl.u32 %v5397, 7
    %v5399 = vsub.s32 %v5396, %v5398
    %v5400 = vrot.slane %v4891, %v5399
    %v5401 = vcombine.high %v5400, %v5400
    %v5402 = vcombine.high %v4892, %v4892
    %v5404 = vunpack.c.l.s4 1983009808
    %v5405 = vunpack.c.0.s8 %v5404
    %v5406 = vlaneseq
    %v5407 = vshrl.u32 %v5406, 7
    %v5408 = vsub.s32 %v5405, %v5407
    %v5409 = vrot.slane %v4892, %v5408
    %v5411 = vunpack.c.l.s4 1983009808
    %v5412 = vunpack.c.0.s8 %v5411
    %v5413 = vlaneseq
    %v5414 = vshrl.u32 %v5413, 7
    %v5415 = vsub.s32 %v5412, %v5414
    %v5416 = vrot.slane %v5402, %v5415
    %v5417 = vcombine.high %v5409, %v5409
    %v5418 = vcombine.high %v5416, %v5416
    %v5420 = vunpack.c.l.s4 1983009808
    %v5421 = vunpack.c.0.s8 %v5420
    %v5422 = vlaneseq
    %v5423 = vshrl.u32 %v5422, 7
    %v5424 = vsub.s32 %v5421, %v5423
    %v5425 = vrot.slane %v4893, %v5424
    %v5426 = vcombine.high %v5425, %v5425
    %v5427 = vcombine.high %v4894, %v4894
    %v5429 = vunpack.c.l.s4 1983009808
    %v5430 = vunpack.c.0.s8 %v5429
    %v5431 = vlaneseq
    %v5432 = vshrl.u32 %v5431, 7
    %v5433 = vsub.s32 %v5430, %v5432
    %v5434 = vrot.slane %v4894, %v5433
    %v5436 = vunpack.c.l.s4 1983009808
    %v5437 = vunpack.c.0.s8 %v5436
    %v5438 = vlaneseq
    %v5439 = vshrl.u32 %v5438, 7
    %v5440 = vsub.s32 %v5437, %v5439
    %v5441 = vrot.slane %v5427, %v5440
    %v5442 = vcombine.high %v5434, %v5434
    %v5443 = vcombine.high %v5441, %v5441
    %v5445 = vunpack.c.l.s4 1983009808
    %v5446 = vunpack.c.0.s8 %v5445
    %v5447 = vlaneseq
    %v5448 = vshrl.u32 %v5447, 7
    %v5449 = vsub.s32 %v5446, %v5448
    %v5450 = vrot.slane %v4895, %v5449
    %v5451 = vcombine.high %v5450, %v5450
    %v5452 = vcombine.high %v4896, %v4896
    %v5454 = vunpack.c.l.s4 1983009808
    %v5455 = vunpack.c.0.s8 %v5454
    %v5456 = vlaneseq
    %v5457 = vshrl.u32 %v5456, 7
    %v5458 = vsub.s32 %v5455, %v5457
    %v5459 = vrot.slane %v4896, %v5458
    %v5461 = vunpack.c.l.s4 1983009808
    %v5462 = vunpack.c.0.s8 %v5461
    %v5463 = vlaneseq
    %v5464 = vshrl.u32 %v5463, 7
    %v5465 = vsub.s32 %v5462, %v5464
    %v5466 = vrot.slane %v5452, %v5465
    %v5467 = vcombine.high %v5459, %v5459
    %v5468 = vcombine.high %v5466, %v5466
    %v5470 = vunpack.c.l.s4 1983009808
    %v5471 = vunpack.c.0.s8 %v5470
    %v5472 = vlaneseq
    %v5473 = vshrl.u32 %v5472, 7
    %v5474 = vsub.s32 %v5471, %v5473
    %v5475 = vrot.slane %v4897, %v5474
    %v5476 = vcombine.high %v5475, %v5475
    %v5477 = vcombine.high %v4898, %v4898
    %v5479 = vunpack.c.l.s4 1983009808
    %v5480 = vunpack.c.0.s8 %v5479
    %v5481 = vlaneseq
    %v5482 = vshrl.u32 %v5481, 7
    %v5483 = vsub.s32 %v5480, %v5482
    %v5484 = vrot.slane %v4898, %v5483
    %v5486 = vunpack.c.l.s4 1983009808
    %v5487 = vunpack.c.0.s8 %v5486
    %v5488 = vlaneseq
    %v5489 = vshrl.u32 %v5488, 7
    %v5490 = vsub.s32 %v5487, %v5489
    %v5491 = vrot.slane %v5477, %v5490
    %v5492 = vcombine.high %v5484, %v5484
    %v5493 = vcombine.high %v5491, %v5491
    %v5495 = vunpack.c.l.s4 1983009808
    %v5496 = vunpack.c.0.s8 %v5495
    %v5497 = vlaneseq
    %v5498 = vshrl.u32 %v5497, 7
    %v5499 = vsub.s32 %v5496, %v5498
    %v5500 = vrot.slane %v4899, %v5499
    %v5501 = vcombine.high %v5500, %v5500
    %v5502 = vcombine.high %v4900, %v4900
    %v5504 = vunpack.c.l.s4 1983009808
    %v5505 = vunpack.c.0.s8 %v5504
    %v5506 = vlaneseq
    %v5507 = vshrl.u32 %v5506, 7
    %v5508 = vsub.s32 %v5505, %v5507
    %v5509 = vrot.slane %v4900, %v5508
    %v5511 = vunpack.c.l.s4 1983009808
    %v5512 = vunpack.c.0.s8 %v5511
    %v5513 = vlaneseq
    %v5514 = vshrl.u32 %v5513, 7
    %v5515 = vsub.s32 %v5512, %v5514
    %v5516 = vrot.slane %v5502, %v5515
    %v5517 = vcombine.high %v5509, %v5509
    %v5518 = vcombine.high %v5516, %v5516
    %v5520 = vunpack.c.l.s4 1983009808
    %v5521 = vunpack.c.0.s8 %v5520
    %v5522 = vlaneseq
    %v5523 = vshrl.u32 %v5522, 7
    %v5524 = vsub.s32 %v5521, %v5523
    %v5525 = vrot.slane %v4901, %v5524
    %v5526 = vcombine.high %v5525, %v5525
    %v5527 = vcombine.high %v4902, %v4902
    %v5529 = vunpack.c.l.s4 1983009808
    %v5530 = vunpack.c.0.s8 %v5529
    %v5531 = vlaneseq
    %v5532 = vshrl.u32 %v5531, 7
    %v5533 = vsub.s32 %v5530, %v5532
    %v5534 = vrot.slane %v4902, %v5533
    %v5536 = vunpack.c.l.s4 1983009808
    %v5537 = vunpack.c.0.s8 %v5536
    %v5538 = vlaneseq
    %v5539 = vshrl.u32 %v5538, 7
    %v5540 = vsub.s32 %v5537, %v5539
    %v5541 = vrot.slane %v5527, %v5540
    %v5542 = vcombine.high %v5534, %v5534
    %v5543 = vcombine.high %v5541, %v5541
    %v5545 = vunpack.c.l.s4 1983009808
    %v5546 = vunpack.c.0.s8 %v5545
    %v5547 = vlaneseq
    %v5548 = vshrl.u32 %v5547, 7
    %v5549 = vsub.s32 %v5546, %v5548
    %v5550 = vrot.slane %v4903, %v5549
    %v5551 = vcombine.high %v5550, %v5550
    %v5696 = vrot.slane %v4959, 7
    %v5697 = vrot.slane %v5696, 2
    %v5698 = vrot.slane %v4967, 7
    %v5699 = vrot.slane %v5698, 2
    %v5700 = vrot.slane %v4966, 7
    %v5701 = vrot.slane %v5700, 2
    %v5702 = vrot.slane %v4968, 7
    %v5703 = vrot.slane %v5702, 2
    %v5704 = vrot.slane %v4975, 7
    %v5705 = vrot.slane %v5704, 2
    %v5706 = vrot.slane %v4976, 7
    %v5707 = vrot.slane %v5706, 2
    %v5708 = vrot.slane %v4984, 7
    %v5709 = vrot.slane %v5708, 2
    %v5710 = vrot.slane %v4992, 7
    %v5711 = vrot.slane %v5710, 2
    %v5712 = vrot.slane %v4991, 7
    %v5713 = vrot.slane %v5712, 2
    %v5714 = vrot.slane %v4993, 7
    %v5715 = vrot.slane %v5714, 2
    %v5716 = vrot.slane %v5000, 7
    %v5717 = vrot.slane %v5716, 2
    %v5718 = vrot.slane %v5001, 7
    %v5719 = vrot.slane %v5718, 2
    %v5720 = vrot.slane %v5009, 7
    %v5721 = vrot.slane %v5720, 2
    %v5722 = vrot.slane %v5017, 7
    %v5723 = vrot.slane %v5722, 2
    %v5724 = vrot.slane %v5016, 7
    %v5725 = vrot.slane %v5724, 2
    %v5726 = vrot.slane %v5018, 7
    %v5727 = vrot.slane %v5726, 2
    %v5728 = vrot.slane %v5025, 7
    %v5729 = vrot.slane %v5728, 2
    %v5730 = vrot.slane %v5026, 7
    %v5731 = vrot.slane %v5730, 2
    %v5732 = vrot.slane %v5034, 7
    %v5733 = vrot.slane %v5732, 2
    %v5734 = vrot.slane %v5042, 7
    %v5735 = vrot.slane %v5734, 2
    %v5736 = vrot.slane %v5041, 7
    %v5737 = vrot.slane %v5736, 2
    %v5738 = vrot.slane %v5043, 7
    %v5739 = vrot.slane %v5738, 2
    %v5740 = vrot.slane %v5050, 7
    %v5741 = vrot.slane %v5740, 2
    %v5742 = vrot.slane %v5051, 7
    %v5743 = vrot.slane %v5742, 2
    %v5744 = vrot.slane %v5059, 7
    %v5745 = vrot.slane %v5744, 2
    %v5746 = vrot.slane %v5067, 7
    %v5747 = vrot.slane %v5746, 2
    %v5748 = vrot.slane %v5066, 7
    %v5749 = vrot.slane %v5748, 2
    %v5750 = vrot.slane %v5068, 7
    %v5751 = vrot.slane %v5750, 2
    %v5752 = vrot.slane %v5075, 7
    %v5753 = vrot.slane %v5752, 2
    %v5754 = vrot.slane %v5076, 7
    %v5755 = vrot.slane %v5754, 2
    %v5756 = vrot.slane %v5084, 7
    %v5757 = vrot.slane %v5756, 2
    %v5758 = vrot.slane %v5092, 7
    %v5759 = vrot.slane %v5758, 2
    %v5760 = vrot.slane %v5091, 7
    %v5761 = vrot.slane %v5760, 2
    %v5762 = vrot.slane %v5093, 7
    %v5763 = vrot.slane %v5762, 2
    %v5764 = vrot.slane %v5100, 7
    %v5765 = vrot.slane %v5764, 2
    %v5766 = vrot.slane %v5101, 7
    %v5767 = vrot.slane %v5766, 2
    %v5768 = vrot.slane %v5109, 7
    %v5769 = vrot.slane %v5768, 2
    %v5770 = vrot.slane %v5117, 7
    %v5771 = vrot.slane %v5770, 2
    %v5772 = vrot.slane %v5116, 7
    %v5773 = vrot.slane %v5772, 2
    %v5774 = vrot.slane %v5118, 7
    %v5775 = vrot.slane %v5774, 2
    %v5776 = vrot.slane %v5125, 7
    %v5777 = vrot.slane %v5776, 2
    %v5778 = vrot.slane %v5126, 7
    %v5779 = vrot.slane %v5778, 2
    %v5780 = vrot.slane %v5134, 7
    %v5781 = vrot.slane %v5780, 2
    %v5782 = vrot.slane %v5142, 7
    %v5783 = vrot.slane %v5782, 2
    %v5784 = vrot.slane %v5141, 7
    %v5785 = vrot.slane %v5784, 2
    %v5786 = vrot.slane %v5143, 7
    %v5787 = vrot.slane %v5786, 2
    %v5788 = vrot.slane %v5150, 7
    %v5789 = vrot.slane %v5788, 2
    %v5790 = vrot.slane %v5151, 7
    %v5791 = vrot.slane %v5790, 2
    %v5792 = vrot.slane %v5159, 7
    %v5793 = vrot.slane %v5792, 2
    %v5794 = vrot.slane %v5167, 7
    %v5795 = vrot.slane %v5794, 2
    %v5796 = vrot.slane %v5166, 7
    %v5797 = vrot.slane %v5796, 2
    %v5798 = vrot.slane %v5168, 7
    %v5799 = vrot.slane %v5798, 2
    %v5800 = vrot.slane %v5175, 7
    %v5801 = vrot.slane %v5800, 2
    %v5802 = vrot.slane %v5176, 7
    %v5803 = vrot.slane %v5802, 2
    %v5804 = vrot.slane %v5184, 7
    %v5805 = vrot.slane %v5804, 2
    %v5806 = vrot.slane %v5192, 7
    %v5807 = vrot.slane %v5806, 2
    %v5808 = vrot.slane %v5191, 7
    %v5809 = vrot.slane %v5808, 2
    %v5810 = vrot.slane %v5193, 7
    %v5811 = vrot.slane %v5810, 2
    %v5812 = vrot.slane %v5200, 7
    %v5813 = vrot.slane %v5812, 2
    %v5814 = vrot.slane %v5201, 7
    %v5815 = vrot.slane %v5814, 2
    %v5816 = vrot.slane %v5209, 7
    %v5817 = vrot.slane %v5816, 2
    %v5818 = vrot.slane %v5217, 7
    %v5819 = vrot.slane %v5818, 2
    %v5820 = vrot.slane %v5216, 7
    %v5821 = vrot.slane %v5820, 2
    %v5822 = vrot.slane %v5218, 7
    %v5823 = vrot.slane %v5822, 2
    %v5824 = vrot.slane %v5225, 7
    %v5825 = vrot.slane %v5824, 2
    %v5826 = vrot.slane %v5226, 7
    %v5827 = vrot.slane %v5826, 2
    %v5828 = vrot.slane %v5234, 7
    %v5829 = vrot.slane %v5828, 2
    %v5830 = vrot.slane %v5242, 7
    %v5831 = vrot.slane %v5830, 2
    %v5832 = vrot.slane %v5241, 7
    %v5833 = vrot.slane %v5832, 2
    %v5834 = vrot.slane %v5243, 7
    %v5835 = vrot.slane %v5834, 2
    %v5836 = vrot.slane %v5250, 7
    %v5837 = vrot.slane %v5836, 2
    %v5838 = vrot.slane %v5251, 7
    %v5839 = vrot.slane %v5838, 2
    %v5840 = vrot.slane %v5259, 7
    %v5841 = vrot.slane %v5840, 2
    %v5842 = vrot.slane %v5267, 7
    %v5843 = vrot.slane %v5842, 2
    %v5844 = vrot.slane %v5266, 7
    %v5845 = vrot.slane %v5844, 2
    %v5846 = vrot.slane %v5268, 7
    %v5847 = vrot.slane %v5846, 2
    %v5848 = vrot.slane %v5275, 7
    %v5849 = vrot.slane %v5848, 2
    %v5850 = vrot.slane %v5276, 7
    %v5851 = vrot.slane %v5850, 2
    %v5852 = vrot.slane %v5284, 7
    %v5853 = vrot.slane %v5852, 2
    %v5854 = vrot.slane %v5292, 7
    %v5855 = vrot.slane %v5854, 2
    %v5856 = vrot.slane %v5291, 7
    %v5857 = vrot.slane %v5856, 2
    %v5858 = vrot.slane %v5293, 7
    %v5859 = vrot.slane %v5858, 2
    %v5860 = vrot.slane %v5300, 7
    %v5861 = vrot.slane %v5860, 2
    %v5862 = vrot.slane %v5301, 7
    %v5863 = vrot.slane %v5862, 2
    %v5864 = vrot.slane %v5309, 7
    %v5865 = vrot.slane %v5864, 2
    %v5866 = vrot.slane %v5317, 7
    %v5867 = vrot.slane %v5866, 2
    %v5868 = vrot.slane %v5316, 7
    %v5869 = vrot.slane %v5868, 2
    %v5870 = vrot.slane %v5318, 7
    %v5871 = vrot.slane %v5870, 2
    %v5872 = vrot.slane %v5325, 7
    %v5873 = vrot.slane %v5872, 2
    %v5874 = vrot.slane %v5326, 7
    %v5875 = vrot.slane %v5874, 2
    %v5876 = vrot.slane %v5334, 7
    %v5877 = vrot.slane %v5876, 2
    %v5878 = vrot.slane %v5342, 7
    %v5879 = vrot.slane %v5878, 2
    %v5880 = vrot.slane %v5341, 7
    %v5881 = vrot.slane %v5880, 2
    %v5882 = vrot.slane %v5343, 7
    %v5883 = vrot.slane %v5882, 2
    %v5884 = vrot.slane %v5350, 7
    %v5885 = vrot.slane %v5884, 2
    %v5886 = vrot.slane %v5351, 7
    %v5887 = vrot.slane %v5886, 2
    %v5888 = vrot.slane %v5359, 7
    %v5889 = vrot.slane %v5888, 2
    %v5890 = vrot.slane %v5367, 7
    %v5891 = vrot.slane %v5890, 2
    %v5892 = vrot.slane %v5366, 7
    %v5893 = vrot.slane %v5892, 2
    %v5894 = vrot.slane %v5368, 7
    %v5895 = vrot.slane %v5894, 2
    %v5896 = vrot.slane %v5375, 7
    %v5897 = vrot.slane %v5896, 2
    %v5898 = vrot.slane %v5376, 7
    %v5899 = vrot.slane %v5898, 2
    %v5900 = vrot.slane %v5384, 7
    %v5901 = vrot.slane %v5900, 2
    %v5902 = vrot.slane %v5392, 7
    %v5903 = vrot.slane %v5902, 2
    %v5904 = vrot.slane %v5391, 7
    %v5905 = vrot.slane %v5904, 2
    %v5906 = vrot.slane %v5393, 7
    %v5907 = vrot.slane %v5906, 2
    %v5908 = vrot.slane %v5400, 7
    %v5909 = vrot.slane %v5908, 2
    %v5910 = vrot.slane %v5401, 7
    %v5911 = vrot.slane %v5910, 2
    %v5912 = vrot.slane %v5409, 7
    %v5913 = vrot.slane %v5912, 2
    %v5914 = vrot.slane %v5417, 7
    %v5915 = vrot.slane %v5914, 2
    %v5916 = vrot.slane %v5416, 7
    %v5917 = vrot.slane %v5916, 2
    %v5918 = vrot.slane %v5418, 7
    %v5919 = vrot.slane %v5918, 2
    %v5920 = vrot.slane %v5425, 7
    %v5921 = vrot.slane %v5920, 2
    %v5922 = vrot.slane %v5426, 7
    %v5923 = vrot.slane %v5922, 2
    %v5924 = vrot.slane %v5434, 7
    %v5925 = vrot.slane %v5924, 2
    %v5926 = vrot.slane %v5442, 7
    %v5927 = vrot.slane %v5926, 2
    %v5928 = vrot.slane %v5441, 7
    %v5929 = vrot.slane %v5928, 2
    %v5930 = vrot.slane %v5443, 7
    %v5931 = vrot.slane %v5930, 2
    %v5932 = vrot.slane %v5450, 7
    %v5933 = vrot.slane %v5932, 2
    %v5934 = vrot.slane %v5451, 7
    %v5935 = vrot.slane %v5934, 2
    %v5936 = vrot.slane %v5459, 7
    %v5937 = vrot.slane %v5936, 2
    %v5938 = vrot.slane %v5467, 7
    %v5939 = vrot.slane %v5938, 2
    %v5940 = vrot.slane %v5466, 7
    %v5941 = vrot.slane %v5940, 2
    %v5942 = vrot.slane %v5468, 7
    %v5943 = vrot.slane %v5942, 2
    %v5944 = vrot.slane %v5475, 7
    %v5945 = vrot.slane %v5944, 2
    %v5946 = vrot.slane %v5476, 7
    %v5947 = vrot.slane %v5946, 2
    %v5948 = vrot.slane %v5484, 7
    %v5949 = vrot.slane %v5948, 2
    %v5950 = vrot.slane %v5492, 7
    %v5951 = vrot.slane %v5950, 2
    %v5952 = vrot.slane %v5491, 7
    %v5953 = vrot.slane %v5952, 2
    %v5954 = vrot.slane %v5493, 7
    %v5955 = vrot.slane %v5954, 2
    %v5956 = vrot.slane %v5500, 7
    %v5957 = vrot.slane %v5956, 2
    %v5958 = vrot.slane %v5501, 7
    %v5959 = vrot.slane %v5958, 2
    %v5960 = vrot.slane %v5509, 7
    %v5961 = vrot.slane %v5960, 2
    %v5962 = vrot.slane %v5517, 7
    %v5963 = vrot.slane %v5962, 2
    %v5964 = vrot.slane %v5516, 7
    %v5965 = vrot.slane %v5964, 2
    %v5966 = vrot.slane %v5518, 7
    %v5967 = vrot.slane %v5966, 2
    %v5968 = vrot.slane %v5525, 7
    %v5969 = vrot.slane %v5968, 2
    %v5970 = vrot.slane %v5526, 7
    %v5971 = vrot.slane %v5970, 2
    %v5972 = vrot.slane %v5534, 7
    %v5973 = vrot.slane %v5972, 2
    %v5974 = vrot.slane %v5542, 7
    %v5975 = vrot.slane %v5974, 2
    %v5976 = vrot.slane %v5541, 7
    %v5977 = vrot.slane %v5976, 2
    %v5978 = vrot.slane %v5543, 7
    %v5979 = vrot.slane %v5978, 2
    %v5980 = vrot.slane %v5550, 7
    %v5981 = vrot.slane %v5980, 2
    %v5982 = vrot.slane %v5551, 7
    %v5983 = vrot.slane %v5982, 2
    %v6128 = vmax.f32 %v4959, %v5697
    %v6129 = vmax.f32 %v4967, %v5699
    %v6130 = vmax.f32 %v4966, %v5701
    %v6131 = vmax.f32 %v4968, %v5703
    %v6132 = vmax.f32 %v4975, %v5705
    %v6133 = vmax.f32 %v4976, %v5707
    %v6134 = vmax.f32 %v4984, %v5709
    %v6135 = vmax.f32 %v4992, %v5711
    %v6136 = vmax.f32 %v4991, %v5713
    %v6137 = vmax.f32 %v4993, %v5715
    %v6138 = vmax.f32 %v5000, %v5717
    %v6139 = vmax.f32 %v5001, %v5719
    %v6140 = vmax.f32 %v5009, %v5721
    %v6141 = vmax.f32 %v5017, %v5723
    %v6142 = vmax.f32 %v5016, %v5725
    %v6143 = vmax.f32 %v5018, %v5727
    %v6144 = vmax.f32 %v5025, %v5729
    %v6145 = vmax.f32 %v5026, %v5731
    %v6146 = vmax.f32 %v5034, %v5733
    %v6147 = vmax.f32 %v5042, %v5735
    %v6148 = vmax.f32 %v5041, %v5737
    %v6149 = vmax.f32 %v5043, %v5739
    %v6150 = vmax.f32 %v5050, %v5741
    %v6151 = vmax.f32 %v5051, %v5743
    %v6152 = vmax.f32 %v5059, %v5745
    %v6153 = vmax.f32 %v5067, %v5747
    %v6154 = vmax.f32 %v5066, %v5749
    %v6155 = vmax.f32 %v5068, %v5751
    %v6156 = vmax.f32 %v5075, %v5753
    %v6157 = vmax.f32 %v5076, %v5755
    %v6158 = vmax.f32 %v5084, %v5757
    %v6159 = vmax.f32 %v5092, %v5759
    %v6160 = vmax.f32 %v5091, %v5761
    %v6161 = vmax.f32 %v5093, %v5763
    %v6162 = vmax.f32 %v5100, %v5765
    %v6163 = vmax.f32 %v5101, %v5767
    %v6164 = vmax.f32 %v5109, %v5769
    %v6165 = vmax.f32 %v5117, %v5771
    %v6166 = vmax.f32 %v5116, %v5773
    %v6167 = vmax.f32 %v5118, %v5775
    %v6168 = vmax.f32 %v5125, %v5777
    %v6169 = vmax.f32 %v5126, %v5779
    %v6170 = vmax.f32 %v5134, %v5781
    %v6171 = vmax.f32 %v5142, %v5783
    %v6172 = vmax.f32 %v5141, %v5785
    %v6173 = vmax.f32 %v5143, %v5787
    %v6174 = vmax.f32 %v5150, %v5789
    %v6175 = vmax.f32 %v5151, %v5791
    %v6176 = vmax.f32 %v5159, %v5793
    %v6177 = vmax.f32 %v5167, %v5795
    %v6178 = vmax.f32 %v5166, %v5797
    %v6179 = vmax.f32 %v5168, %v5799
    %v6180 = vmax.f32 %v5175, %v5801
    %v6181 = vmax.f32 %v5176, %v5803
    %v6182 = vmax.f32 %v5184, %v5805
    %v6183 = vmax.f32 %v5192, %v5807
    %v6184 = vmax.f32 %v5191, %v5809
    %v6185 = vmax.f32 %v5193, %v5811
    %v6186 = vmax.f32 %v5200, %v5813
    %v6187 = vmax.f32 %v5201, %v5815
    %v6188 = vmax.f32 %v5209, %v5817
    %v6189 = vmax.f32 %v5217, %v5819
    %v6190 = vmax.f32 %v5216, %v5821
    %v6191 = vmax.f32 %v5218, %v5823
    %v6192 = vmax.f32 %v5225, %v5825
    %v6193 = vmax.f32 %v5226, %v5827
    %v6194 = vmax.f32 %v5234, %v5829
    %v6195 = vmax.f32 %v5242, %v5831
    %v6196 = vmax.f32 %v5241, %v5833
    %v6197 = vmax.f32 %v5243, %v5835
    %v6198 = vmax.f32 %v5250, %v5837
    %v6199 = vmax.f32 %v5251, %v5839
    %v6200 = vmax.f32 %v5259, %v5841
    %v6201 = vmax.f32 %v5267, %v5843
    %v6202 = vmax.f32 %v5266, %v5845
    %v6203 = vmax.f32 %v5268, %v5847
    %v6204 = vmax.f32 %v5275, %v5849
    %v6205 = vmax.f32 %v5276, %v5851
    %v6206 = vmax.f32 %v5284, %v5853
    %v6207 = vmax.f32 %v5292, %v5855
    %v6208 = vmax.f32 %v5291, %v5857
    %v6209 = vmax.f32 %v5293, %v5859
    %v6210 = vmax.f32 %v5300, %v5861
    %v6211 = vmax.f32 %v5301, %v5863
    %v6212 = vmax.f32 %v5309, %v5865
    %v6213 = vmax.f32 %v5317, %v5867
    %v6214 = vmax.f32 %v5316, %v5869
    %v6215 = vmax.f32 %v5318, %v5871
    %v6216 = vmax.f32 %v5325, %v5873
    %v6217 = vmax.f32 %v5326, %v5875
    %v6218 = vmax.f32 %v5334, %v5877
    %v6219 = vmax.f32 %v5342, %v5879
    %v6220 = vmax.f32 %v5341, %v5881
    %v6221 = vmax.f32 %v5343, %v5883
    %v6222 = vmax.f32 %v5350, %v5885
    %v6223 = vmax.f32 %v5351, %v5887
    %v6224 = vmax.f32 %v5359, %v5889
    %v6225 = vmax.f32 %v5367, %v5891
    %v6226 = vmax.f32 %v5366, %v5893
    %v6227 = vmax.f32 %v5368, %v5895
    %v6228 = vmax.f32 %v5375, %v5897
    %v6229 = vmax.f32 %v5376, %v5899
    %v6230 = vmax.f32 %v5384, %v5901
    %v6231 = vmax.f32 %v5392, %v5903
    %v6232 = vmax.f32 %v5391, %v5905
    %v6233 = vmax.f32 %v5393, %v5907
    %v6234 = vmax.f32 %v5400, %v5909
    %v6235 = vmax.f32 %v5401, %v5911
    %v6236 = vmax.f32 %v5409, %v5913
    %v6237 = vmax.f32 %v5417, %v5915
    %v6238 = vmax.f32 %v5416, %v5917
    %v6239 = vmax.f32 %v5418, %v5919
    %v6240 = vmax.f32 %v5425, %v5921
    %v6241 = vmax.f32 %v5426, %v5923
    %v6242 = vmax.f32 %v5434, %v5925
    %v6243 = vmax.f32 %v5442, %v5927
    %v6244 = vmax.f32 %v5441, %v5929
    %v6245 = vmax.f32 %v5443, %v5931
    %v6246 = vmax.f32 %v5450, %v5933
    %v6247 = vmax.f32 %v5451, %v5935
    %v6248 = vmax.f32 %v5459, %v5937
    %v6249 = vmax.f32 %v5467, %v5939
    %v6250 = vmax.f32 %v5466, %v5941
    %v6251 = vmax.f32 %v5468, %v5943
    %v6252 = vmax.f32 %v5475, %v5945
    %v6253 = vmax.f32 %v5476, %v5947
    %v6254 = vmax.f32 %v5484, %v5949
    %v6255 = vmax.f32 %v5492, %v5951
    %v6256 = vmax.f32 %v5491, %v5953
    %v6257 = vmax.f32 %v5493, %v5955
    %v6258 = vmax.f32 %v5500, %v5957
    %v6259 = vmax.f32 %v5501, %v5959
    %v6260 = vmax.f32 %v5509, %v5961
    %v6261 = vmax.f32 %v5517, %v5963
    %v6262 = vmax.f32 %v5516, %v5965
    %v6263 = vmax.f32 %v5518, %v5967
    %v6264 = vmax.f32 %v5525, %v5969
    %v6265 = vmax.f32 %v5526, %v5971
    %v6266 = vmax.f32 %v5534, %v5973
    %v6267 = vmax.f32 %v5542, %v5975
    %v6268 = vmax.f32 %v5541, %v5977
    %v6269 = vmax.f32 %v5543, %v5979
    %v6270 = vmax.f32 %v5550, %v5981
    %v6271 = vmax.f32 %v5551, %v5983
    %v6336 = vlaneseq
    %v6337 = vshrl.u32 %v6336, 7
    %v6338 = vsub.s32 0, %v6337
    %v6339 = vrot.slane %v6128, %v6338
    %v6340 = vlaneseq
    %v6341 = vshrl.u32 %v6340, 7
    %v6342 = vsub.s32 0, %v6341
    %v6343 = vrot.slane %v6129, %v6342
    %v6344 = vlaneseq
    %v6345 = vshrl.u32 %v6344, 7
    %v6346 = vsub.s32 0, %v6345
    %v6347 = vrot.slane %v6130, %v6346
    %v6348 = vlaneseq
    %v6349 = vshrl.u32 %v6348, 7
    %v6350 = vsub.s32 0, %v6349
    %v6351 = vrot.slane %v6131, %v6350
    %v6352 = vlaneseq
    %v6353 = vshrl.u32 %v6352, 7
    %v6354 = vsub.s32 0, %v6353
    %v6355 = vrot.slane %v6134, %v6354
    %v6356 = vlaneseq
    %v6357 = vshrl.u32 %v6356, 7
    %v6358 = vsub.s32 0, %v6357
    %v6359 = vrot.slane %v6135, %v6358
    %v6360 = vlaneseq
    %v6361 = vshrl.u32 %v6360, 7
    %v6362 = vsub.s32 0, %v6361
    %v6363 = vrot.slane %v6136, %v6362
    %v6364 = vlaneseq
    %v6365 = vshrl.u32 %v6364, 7
    %v6366 = vsub.s32 0, %v6365
    %v6367 = vrot.slane %v6137, %v6366
    %v6368 = vlaneseq
    %v6369 = vshrl.u32 %v6368, 7
    %v6370 = vsub.s32 0, %v6369
    %v6371 = vrot.slane %v6140, %v6370
    %v6372 = vlaneseq
    %v6373 = vshrl.u32 %v6372, 7
    %v6374 = vsub.s32 0, %v6373
    %v6375 = vrot.slane %v6141, %v6374
    %v6376 = vlaneseq
    %v6377 = vshrl.u32 %v6376, 7
    %v6378 = vsub.s32 0, %v6377
    %v6379 = vrot.slane %v6142, %v6378
    %v6380 = vlaneseq
    %v6381 = vshrl.u32 %v6380, 7
    %v6382 = vsub.s32 0, %v6381
    %v6383 = vrot.slane %v6143, %v6382
    %v6384 = vlaneseq
    %v6385 = vshrl.u32 %v6384, 7
    %v6386 = vsub.s32 0, %v6385
    %v6387 = vrot.slane %v6146, %v6386
    %v6388 = vlaneseq
    %v6389 = vshrl.u32 %v6388, 7
    %v6390 = vsub.s32 0, %v6389
    %v6391 = vrot.slane %v6147, %v6390
    %v6392 = vlaneseq
    %v6393 = vshrl.u32 %v6392, 7
    %v6394 = vsub.s32 0, %v6393
    %v6395 = vrot.slane %v6148, %v6394
    %v6396 = vlaneseq
    %v6397 = vshrl.u32 %v6396, 7
    %v6398 = vsub.s32 0, %v6397
    %v6399 = vrot.slane %v6149, %v6398
    %v6400 = vlaneseq
    %v6401 = vshrl.u32 %v6400, 7
    %v6402 = vsub.s32 0, %v6401
    %v6403 = vrot.slane %v6164, %v6402
    %v6404 = vlaneseq
    %v6405 = vshrl.u32 %v6404, 7
    %v6406 = vsub.s32 0, %v6405
    %v6407 = vrot.slane %v6165, %v6406
    %v6408 = vlaneseq
    %v6409 = vshrl.u32 %v6408, 7
    %v6410 = vsub.s32 0, %v6409
    %v6411 = vrot.slane %v6166, %v6410
    %v6412 = vlaneseq
    %v6413 = vshrl.u32 %v6412, 7
    %v6414 = vsub.s32 0, %v6413
    %v6415 = vrot.slane %v6167, %v6414
    %v6416 = vlaneseq
    %v6417 = vshrl.u32 %v6416, 7
    %v6418 = vsub.s32 0, %v6417
    %v6419 = vrot.slane %v6170, %v6418
    %v6420 = vlaneseq
    %v6421 = vshrl.u32 %v6420, 7
    %v6422 = vsub.s32 0, %v6421
    %v6423 = vrot.slane %v6171, %v6422
    %v6424 = vlaneseq
    %v6425 = vshrl.u32 %v6424, 7
    %v6426 = vsub.s32 0, %v6425
    %v6427 = vrot.slane %v6172, %v6426
    %v6428 = vlaneseq
    %v6429 = vshrl.u32 %v6428, 7
    %v6430 = vsub.s32 0, %v6429
    %v6431 = vrot.slane %v6173, %v6430
    %v6432 = vlaneseq
    %v6433 = vshrl.u32 %v6432, 7
    %v6434 = vsub.s32 0, %v6433
    %v6435 = vrot.slane %v6176, %v6434
    %v6436 = vlaneseq
    %v6437 = vshrl.u32 %v6436, 7
    %v6438 = vsub.s32 0, %v6437
    %v6439 = vrot.slane %v6177, %v6438
    %v6440 = vlaneseq
    %v6441 = vshrl.u32 %v6440, 7
    %v6442 = vsub.s32 0, %v6441
    %v6443 = vrot.slane %v6178, %v6442
    %v6444 = vlaneseq
    %v6445 = vshrl.u32 %v6444, 7
    %v6446 = vsub.s32 0, %v6445
    %v6447 = vrot.slane %v6179, %v6446
    %v6448 = vlaneseq
    %v6449 = vshrl.u32 %v6448, 7
    %v6450 = vsub.s32 0, %v6449
    %v6451 = vrot.slane %v6182, %v6450
    %v6452 = vlaneseq
    %v6453 = vshrl.u32 %v6452, 7
    %v6454 = vsub.s32 0, %v6453
    %v6455 = vrot.slane %v6183, %v6454
    %v6456 = vlaneseq
    %v6457 = vshrl.u32 %v6456, 7
    %v6458 = vsub.s32 0, %v6457
    %v6459 = vrot.slane %v6184, %v6458
    %v6460 = vlaneseq
    %v6461 = vshrl.u32 %v6460, 7
    %v6462 = vsub.s32 0, %v6461
    %v6463 = vrot.slane %v6185, %v6462
    %v6464 = vlaneseq
    %v6465 = vshrl.u32 %v6464, 7
    %v6466 = vsub.s32 0, %v6465
    %v6467 = vrot.slane %v6200, %v6466
    %v6468 = vlaneseq
    %v6469 = vshrl.u32 %v6468, 7
    %v6470 = vsub.s32 0, %v6469
    %v6471 = vrot.slane %v6201, %v6470
    %v6472 = vlaneseq
    %v6473 = vshrl.u32 %v6472, 7
    %v6474 = vsub.s32 0, %v6473
    %v6475 = vrot.slane %v6202, %v6474
    %v6476 = vlaneseq
    %v6477 = vshrl.u32 %v6476, 7
    %v6478 = vsub.s32 0, %v6477
    %v6479 = vrot.slane %v6203, %v6478
    %v6480 = vlaneseq
    %v6481 = vshrl.u32 %v6480, 7
    %v6482 = vsub.s32 0, %v6481
    %v6483 = vrot.slane %v6206, %v6482
    %v6484 = vlaneseq
    %v6485 = vshrl.u32 %v6484, 7
    %v6486 = vsub.s32 0, %v6485
    %v6487 = vrot.slane %v6207, %v6486
    %v6488 = vlaneseq
    %v6489 = vshrl.u32 %v6488, 7
    %v6490 = vsub.s32 0, %v6489
    %v6491 = vrot.slane %v6208, %v6490
    %v6492 = vlaneseq
    %v6493 = vshrl.u32 %v6492, 7
    %v6494 = vsub.s32 0, %v6493
    %v6495 = vrot.slane %v6209, %v6494
    %v6496 = vlaneseq
    %v6497 = vshrl.u32 %v6496, 7
    %v6498 = vsub.s32 0, %v6497
    %v6499 = vrot.slane %v6212, %v6498
    %v6500 = vlaneseq
    %v6501 = vshrl.u32 %v6500, 7
    %v6502 = vsub.s32 0, %v6501
    %v6503 = vrot.slane %v6213, %v6502
    %v6504 = vlaneseq
    %v6505 = vshrl.u32 %v6504, 7
    %v6506 = vsub.s32 0, %v6505
    %v6507 = vrot.slane %v6214, %v6506
    %v6508 = vlaneseq
    %v6509 = vshrl.u32 %v6508, 7
    %v6510 = vsub.s32 0, %v6509
    %v6511 = vrot.slane %v6215, %v6510
    %v6512 = vlaneseq
    %v6513 = vshrl.u32 %v6512, 7
    %v6514 = vsub.s32 0, %v6513
    %v6515 = vrot.slane %v6218, %v6514
    %v6516 = vlaneseq
    %v6517 = vshrl.u32 %v6516, 7
    %v6518 = vsub.s32 0, %v6517
    %v6519 = vrot.slane %v6219, %v6518
    %v6520 = vlaneseq
    %v6521 = vshrl.u32 %v6520, 7
    %v6522 = vsub.s32 0, %v6521
    %v6523 = vrot.slane %v6220, %v6522
    %v6524 = vlaneseq
    %v6525 = vshrl.u32 %v6524, 7
    %v6526 = vsub.s32 0, %v6525
    %v6527 = vrot.slane %v6221, %v6526
    %v6528 = vlaneseq
    %v6529 = vshrl.u32 %v6528, 7
    %v6530 = vsub.s32 0, %v6529
    %v6531 = vrot.slane %v6236, %v6530
    %v6532 = vlaneseq
    %v6533 = vshrl.u32 %v6532, 7
    %v6534 = vsub.s32 0, %v6533
    %v6535 = vrot.slane %v6237, %v6534
    %v6536 = vlaneseq
    %v6537 = vshrl.u32 %v6536, 7
    %v6538 = vsub.s32 0, %v6537
    %v6539 = vrot.slane %v6238, %v6538
    %v6540 = vlaneseq
    %v6541 = vshrl.u32 %v6540, 7
    %v6542 = vsub.s32 0, %v6541
    %v6543 = vrot.slane %v6239, %v6542
    %v6544 = vlaneseq
    %v6545 = vshrl.u32 %v6544, 7
    %v6546 = vsub.s32 0, %v6545
    %v6547 = vrot.slane %v6242, %v6546
    %v6548 = vlaneseq
    %v6549 = vshrl.u32 %v6548, 7
    %v6550 = vsub.s32 0, %v6549
    %v6551 = vrot.slane %v6243, %v6550
    %v6552 = vlaneseq
    %v6553 = vshrl.u32 %v6552, 7
    %v6554 = vsub.s32 0, %v6553
    %v6555 = vrot.slane %v6244, %v6554
    %v6556 = vlaneseq
    %v6557 = vshrl.u32 %v6556, 7
    %v6558 = vsub.s32 0, %v6557
    %v6559 = vrot.slane %v6245, %v6558
    %v6560 = vlaneseq
    %v6561 = vshrl.u32 %v6560, 7
    %v6562 = vsub.s32 0, %v6561
    %v6563 = vrot.slane %v6248, %v6562
    %v6564 = vlaneseq
    %v6565 = vshrl.u32 %v6564, 7
    %v6566 = vsub.s32 0, %v6565
    %v6567 = vrot.slane %v6249, %v6566
    %v6568 = vlaneseq
    %v6569 = vshrl.u32 %v6568, 7
    %v6570 = vsub.s32 0, %v6569
    %v6571 = vrot.slane %v6250, %v6570
    %v6572 = vlaneseq
    %v6573 = vshrl.u32 %v6572, 7
    %v6574 = vsub.s32 0, %v6573
    %v6575 = vrot.slane %v6251, %v6574
    %v6576 = vlaneseq
    %v6577 = vshrl.u32 %v6576, 7
    %v6578 = vsub.s32 0, %v6577
    %v6579 = vrot.slane %v6254, %v6578
    %v6580 = vlaneseq
    %v6581 = vshrl.u32 %v6580, 7
    %v6582 = vsub.s32 0, %v6581
    %v6583 = vrot.slane %v6255, %v6582
    %v6584 = vlaneseq
    %v6585 = vshrl.u32 %v6584, 7
    %v6586 = vsub.s32 0, %v6585
    %v6587 = vrot.slane %v6256, %v6586
    %v6588 = vlaneseq
    %v6589 = vshrl.u32 %v6588, 7
    %v6590 = vsub.s32 0, %v6589
    %v6591 = vrot.slane %v6257, %v6590
    %vm6592 = vcmask 1041409
    %v6593 = vsel %vm6592, %v6343, %v6339
    %vm6594 = vcmask 1042434
    %v6595 = vsel %vm6594, %v6347, %v6593
    %vm6596 = vcmask 1043459
    %v6597 = vsel %vm6596, %v6351, %v6595
    %v6598 = vsel %vm6592, %v6359, %v6355
    %v6599 = vsel %vm6594, %v6363, %v6598
    %v6600 = vsel %vm6596, %v6367, %v6599
    %v6601 = vsel %vm6592, %v6375, %v6371
    %v6602 = vsel %vm6594, %v6379, %v6601
    %v6603 = vsel %vm6596, %v6383, %v6602
    %v6604 = vsel %vm6592, %v6391, %v6387
    %v6605 = vsel %vm6594, %v6395, %v6604
    %v6606 = vsel %vm6596, %v6399, %v6605
    %v6607 = vsel %vm6592, %v6407, %v6403
    %v6608 = vsel %vm6594, %v6411, %v6607
    %v6609 = vsel %vm6596, %v6415, %v6608
    %v6610 = vsel %vm6592, %v6423, %v6419
    %v6611 = vsel %vm6594, %v6427, %v6610
    %v6612 = vsel %vm6596, %v6431, %v6611
    %v6613 = vsel %vm6592, %v6439, %v6435
    %v6614 = vsel %vm6594, %v6443, %v6613
    %v6615 = vsel %vm6596, %v6447, %v6614
    %v6616 = vsel %vm6592, %v6455, %v6451
    %v6617 = vsel %vm6594, %v6459, %v6616
    %v6618 = vsel %vm6596, %v6463, %v6617
    %v6619 = vsel %vm6592, %v6471, %v6467
    %v6620 = vsel %vm6594, %v6475, %v6619
    %v6621 = vsel %vm6596, %v6479, %v6620
    %v6622 = vsel %vm6592, %v6487, %v6483
    %v6623 = vsel %vm6594, %v6491, %v6622
    %v6624 = vsel %vm6596, %v6495, %v6623
    %v6625 = vsel %vm6592, %v6503, %v6499
    %v6626 = vsel %vm6594, %v6507, %v6625
    %v6627 = vsel %vm6596, %v6511, %v6626
    %v6628 = vsel %vm6592, %v6519, %v6515
    %v6629 = vsel %vm6594, %v6523, %v6628
    %v6630 = vsel %vm6596, %v6527, %v6629
    %v6631 = vsel %vm6592, %v6535, %v6531
    %v6632 = vsel %vm6594, %v6539, %v6631
    %v6633 = vsel %vm6596, %v6543, %v6632
    %v6634 = vsel %vm6592, %v6551, %v6547
    %v6635 = vsel %vm6594, %v6555, %v6634
    %v6636 = vsel %vm6596, %v6559, %v6635
    %v6637 = vsel %vm6592, %v6567, %v6563
    %v6638 = vsel %vm6594, %v6571, %v6637
    %v6639 = vsel %vm6596, %v6575, %v6638
    %v6640 = vsel %vm6592, %v6583, %v6579
    %v6641 = vsel %vm6594, %v6587, %v6640
    %v6642 = vsel %vm6596, %v6591, %v6641
    %v6675 = vlaneseq
    %v6676 = vshrl.u32 %v6675, 7
    %v6677 = vsub.s32 0, %v6676
    %v6678 = vrot.slane %v6132, %v6677
    %v6679 = vlaneseq
    %v6680 = vshrl.u32 %v6679, 7
    %v6681 = vsub.s32 0, %v6680
    %v6682 = vrot.slane %v6138, %v6681
    %v6683 = vlaneseq
    %v6684 = vshrl.u32 %v6683, 7
    %v6685 = vsub.s32 0, %v6684
    %v6686 = vrot.slane %v6144, %v6685
    %v6687 = vlaneseq
    %v6688 = vshrl.u32 %v6687, 7
    %v6689 = vsub.s32 0, %v6688
    %v6690 = vrot.slane %v6150, %v6689
    %v6691 = vlaneseq
    %v6692 = vshrl.u32 %v6691, 7
    %v6693 = vsub.s32 0, %v6692
    %v6694 = vrot.slane %v6168, %v6693
    %v6695 = vlaneseq
    %v6696 = vshrl.u32 %v6695, 7
    %v6697 = vsub.s32 0, %v6696
    %v6698 = vrot.slane %v6174, %v6697
    %v6699 = vlaneseq
    %v6700 = vshrl.u32 %v6699, 7
    %v6701 = vsub.s32 0, %v6700
    %v6702 = vrot.slane %v6180, %v6701
    %v6703 = vlaneseq
    %v6704 = vshrl.u32 %v6703, 7
    %v6705 = vsub.s32 0, %v6704
    %v6706 = vrot.slane %v6186, %v6705
    %v6707 = vlaneseq
    %v6708 = vshrl.u32 %v6707, 7
    %v6709 = vsub.s32 0, %v6708
    %v6710 = vrot.slane %v6204, %v6709
    %v6711 = vlaneseq
    %v6712 = vshrl.u32 %v6711, 7
    %v6713 = vsub.s32 0, %v6712
    %v6714 = vrot.slane %v6210, %v6713
    %v6715 = vlaneseq
    %v6716 = vshrl.u32 %v6715, 7
    %v6717 = vsub.s32 0, %v6716
    %v6718 = vrot.slane %v6216, %v6717
    %v6719 = vlaneseq
    %v6720 = vshrl.u32 %v6719, 7
    %v6721 = vsub.s32 0, %v6720
    %v6722 = vrot.slane %v6222, %v6721
    %v6723 = vlaneseq
    %v6724 = vshrl.u32 %v6723, 7
    %v6725 = vsub.s32 0, %v6724
    %v6726 = vrot.slane %v6240, %v6725
    %v6727 = vlaneseq
    %v6728 = vshrl.u32 %v6727, 7
    %v6729 = vsub.s32 0, %v6728
    %v6730 = vrot.slane %v6246, %v6729
    %v6731 = vlaneseq
    %v6732 = vshrl.u32 %v6731, 7
    %v6733 = vsub.s32 0, %v6732
    %v6734 = vrot.slane %v6252, %v6733
    %v6735 = vlaneseq
    %v6736 = vshrl.u32 %v6735, 7
    %v6737 = vsub.s32 0, %v6736
    %v6738 = vrot.slane %v6258, %v6737
    %v6739 = vsel %vm6592, %v6347, %v6343
    %v6740 = vsel %vm6594, %v6351, %v6739
    %v6741 = vsel %vm6596, %v6678, %v6740
    %v6742 = vsel %vm6592, %v6363, %v6359
    %v6743 = vsel %vm6594, %v6367, %v6742
    %v6744 = vsel %vm6596, %v6682, %v6743
    %v6745 = vsel %vm6592, %v6379, %v6375
    %v6746 = vsel %vm6594, %v6383, %v6745
    %v6747 = vsel %vm6596, %v6686, %v6746
    %v6748 = vsel %vm6592, %v6395, %v6391
    %v6749 = vsel %vm6594, %v6399, %v6748
    %v6750 = vsel %vm6596, %v6690, %v6749
    %v6751 = vsel %vm6592, %v6411, %v6407
    %v6752 = vsel %vm6594, %v6415, %v6751
    %v6753 = vsel %vm6596, %v6694, %v6752
    %v6754 = vsel %vm6592, %v6427, %v6423
    %v6755 = vsel %vm6594, %v6431, %v6754
    %v6756 = vsel %vm6596, %v6698, %v6755
    %v6757 = vsel %vm6592, %v6443, %v6439
    %v6758 = vsel %vm6594, %v6447, %v6757
    %v6759 = vsel %vm6596, %v6702, %v6758
    %v6760 = vsel %vm6592, %v6459, %v6455
    %v6761 = vsel %vm6594, %v6463, %v6760
    %v6762 = vsel %vm6596, %v6706, %v6761
    %v6763 = vsel %vm6592, %v6475, %v6471
    %v6764 = vsel %vm6594, %v6479, %v6763
    %v6765 = vsel %vm6596, %v6710, %v6764
    %v6766 = vsel %vm6592, %v6491, %v6487
    %v6767 = vsel %vm6594, %v6495, %v6766
    %v6768 = vsel %vm6596, %v6714, %v6767
    %v6769 = vsel %vm6592, %v6507, %v6503
    %v6770 = vsel %vm6594, %v6511, %v6769
    %v6771 = vsel %vm6596, %v6718, %v6770
    %v6772 = vsel %vm6592, %v6523, %v6519
    %v6773 = vsel %vm6594, %v6527, %v6772
    %v6774 = vsel %vm6596, %v6722, %v6773
    %v6775 = vsel %vm6592, %v6539, %v6535
    %v6776 = vsel %vm6594, %v6543, %v6775
    %v6777 = vsel %vm6596, %v6726, %v6776
    %v6778 = vsel %vm6592, %v6555, %v6551
    %v6779 = vsel %vm6594, %v6559, %v6778
    %v6780 = vsel %vm6596, %v6730, %v6779
    %v6781 = vsel %vm6592, %v6571, %v6567
    %v6782 = vsel %vm6594, %v6575, %v6781
    %v6783 = vsel %vm6596, %v6734, %v6782
    %v6784 = vsel %vm6592, %v6587, %v6583
    %v6785 = vsel %vm6594, %v6591, %v6784
    %v6786 = vsel %vm6596, %v6738, %v6785
    %6787 = vrot.lane.b32.xlu0 %v6741, 32
    %v6788 = vpop.permute.xlu0 %6787
    %6789 = vrot.lane.b32.xlu0 %v6744, 32
    %v6790 = vpop.permute.xlu0 %6789
    %6791 = vrot.lane.b32.xlu0 %v6747, 32
    %v6792 = vpop.permute.xlu0 %6791
    %6793 = vrot.lane.b32.xlu0 %v6750, 32
    %v6794 = vpop.permute.xlu0 %6793
    %6795 = vrot.lane.b32.xlu0 %v6753, 32
    %v6796 = vpop.permute.xlu0 %6795
    %6797 = vrot.lane.b32.xlu0 %v6756, 32
    %v6798 = vpop.permute.xlu0 %6797
    %6799 = vrot.lane.b32.xlu0 %v6759, 32
    %v6800 = vpop.permute.xlu0 %6799
    %6801 = vrot.lane.b32.xlu0 %v6762, 32
    %v6802 = vpop.permute.xlu0 %6801
    %6803 = vrot.lane.b32.xlu0 %v6765, 32
    %v6804 = vpop.permute.xlu0 %6803
    %6805 = vrot.lane.b32.xlu0 %v6768, 32
    %v6806 = vpop.permute.xlu0 %6805
    %6807 = vrot.lane.b32.xlu0 %v6771, 32
    %v6808 = vpop.permute.xlu0 %6807
    %6809 = vrot.lane.b32.xlu0 %v6774, 32
    %v6810 = vpop.permute.xlu0 %6809
    %6811 = vrot.lane.b32.xlu0 %v6777, 32
    %v6812 = vpop.permute.xlu0 %6811
    %6813 = vrot.lane.b32.xlu0 %v6780, 32
    %v6814 = vpop.permute.xlu0 %6813
    %6815 = vrot.lane.b32.xlu0 %v6783, 32
    %v6816 = vpop.permute.xlu0 %6815
    %6817 = vrot.lane.b32.xlu0 %v6786, 32
    %v6818 = vpop.permute.xlu0 %6817
    %v6851 = vlaneseq
    %v6852 = vshrl.u32 %v6851, 7
    %v6853 = vsub.s32 0, %v6852
    %v6854 = vrot.slane %v6133, %v6853
    %v6855 = vlaneseq
    %v6856 = vshrl.u32 %v6855, 7
    %v6857 = vsub.s32 0, %v6856
    %v6858 = vrot.slane %v6139, %v6857
    %v6859 = vlaneseq
    %v6860 = vshrl.u32 %v6859, 7
    %v6861 = vsub.s32 0, %v6860
    %v6862 = vrot.slane %v6145, %v6861
    %v6863 = vlaneseq
    %v6864 = vshrl.u32 %v6863, 7
    %v6865 = vsub.s32 0, %v6864
    %v6866 = vrot.slane %v6151, %v6865
    %v6867 = vlaneseq
    %v6868 = vshrl.u32 %v6867, 7
    %v6869 = vsub.s32 0, %v6868
    %v6870 = vrot.slane %v6169, %v6869
    %v6871 = vlaneseq
    %v6872 = vshrl.u32 %v6871, 7
    %v6873 = vsub.s32 0, %v6872
    %v6874 = vrot.slane %v6175, %v6873
    %v6875 = vlaneseq
    %v6876 = vshrl.u32 %v6875, 7
    %v6877 = vsub.s32 0, %v6876
    %v6878 = vrot.slane %v6181, %v6877
    %v6879 = vlaneseq
    %v6880 = vshrl.u32 %v6879, 7
    %v6881 = vsub.s32 0, %v6880
    %v6882 = vrot.slane %v6187, %v6881
    %v6883 = vlaneseq
    %v6884 = vshrl.u32 %v6883, 7
    %v6885 = vsub.s32 0, %v6884
    %v6886 = vrot.slane %v6205, %v6885
    %v6887 = vlaneseq
    %v6888 = vshrl.u32 %v6887, 7
    %v6889 = vsub.s32 0, %v6888
    %v6890 = vrot.slane %v6211, %v6889
    %v6891 = vlaneseq
    %v6892 = vshrl.u32 %v6891, 7
    %v6893 = vsub.s32 0, %v6892
    %v6894 = vrot.slane %v6217, %v6893
    %v6895 = vlaneseq
    %v6896 = vshrl.u32 %v6895, 7
    %v6897 = vsub.s32 0, %v6896
    %v6898 = vrot.slane %v6223, %v6897
    %v6899 = vlaneseq
    %v6900 = vshrl.u32 %v6899, 7
    %v6901 = vsub.s32 0, %v6900
    %v6902 = vrot.slane %v6241, %v6901
    %v6903 = vlaneseq
    %v6904 = vshrl.u32 %v6903, 7
    %v6905 = vsub.s32 0, %v6904
    %v6906 = vrot.slane %v6247, %v6905
    %v6907 = vlaneseq
    %v6908 = vshrl.u32 %v6907, 7
    %v6909 = vsub.s32 0, %v6908
    %v6910 = vrot.slane %v6253, %v6909
    %v6911 = vlaneseq
    %v6912 = vshrl.u32 %v6911, 7
    %v6913 = vsub.s32 0, %v6912
    %v6914 = vrot.slane %v6259, %v6913
    %v6915 = vsel %vm6592, %v6351, %v6347
    %v6916 = vsel %vm6594, %v6678, %v6915
    %v6917 = vsel %vm6596, %v6854, %v6916
    %v6918 = vsel %vm6592, %v6367, %v6363
    %v6919 = vsel %vm6594, %v6682, %v6918
    %v6920 = vsel %vm6596, %v6858, %v6919
    %v6921 = vsel %vm6592, %v6383, %v6379
    %v6922 = vsel %vm6594, %v6686, %v6921
    %v6923 = vsel %vm6596, %v6862, %v6922
    %v6924 = vsel %vm6592, %v6399, %v6395
    %v6925 = vsel %vm6594, %v6690, %v6924
    %v6926 = vsel %vm6596, %v6866, %v6925
    %v6927 = vsel %vm6592, %v6415, %v6411
    %v6928 = vsel %vm6594, %v6694, %v6927
    %v6929 = vsel %vm6596, %v6870, %v6928
    %v6930 = vsel %vm6592, %v6431, %v6427
    %v6931 = vsel %vm6594, %v6698, %v6930
    %v6932 = vsel %vm6596, %v6874, %v6931
    %v6933 = vsel %vm6592, %v6447, %v6443
    %v6934 = vsel %vm6594, %v6702, %v6933
    %v6935 = vsel %vm6596, %v6878, %v6934
    %v6936 = vsel %vm6592, %v6463, %v6459
    %v6937 = vsel %vm6594, %v6706, %v6936
    %v6938 = vsel %vm6596, %v6882, %v6937
    %v6939 = vsel %vm6592, %v6479, %v6475
    %v6940 = vsel %vm6594, %v6710, %v6939
    %v6941 = vsel %vm6596, %v6886, %v6940
    %v6942 = vsel %vm6592, %v6495, %v6491
    %v6943 = vsel %vm6594, %v6714, %v6942
    %v6944 = vsel %vm6596, %v6890, %v6943
    %v6945 = vsel %vm6592, %v6511, %v6507
    %v6946 = vsel %vm6594, %v6718, %v6945
    %v6947 = vsel %vm6596, %v6894, %v6946
    %v6948 = vsel %vm6592, %v6527, %v6523
    %v6949 = vsel %vm6594, %v6722, %v6948
    %v6950 = vsel %vm6596, %v6898, %v6949
    %v6951 = vsel %vm6592, %v6543, %v6539
    %v6952 = vsel %vm6594, %v6726, %v6951
    %v6953 = vsel %vm6596, %v6902, %v6952
    %v6954 = vsel %vm6592, %v6559, %v6555
    %v6955 = vsel %vm6594, %v6730, %v6954
    %v6956 = vsel %vm6596, %v6906, %v6955
    %v6957 = vsel %vm6592, %v6575, %v6571
    %v6958 = vsel %vm6594, %v6734, %v6957
    %v6959 = vsel %vm6596, %v6910, %v6958
    %v6960 = vsel %vm6592, %v6591, %v6587
    %v6961 = vsel %vm6594, %v6738, %v6960
    %v6962 = vsel %vm6596, %v6914, %v6961
    %6963 = vrot.lane.b32.xlu0 %v6917, 64
    %v6964 = vpop.permute.xlu0 %6963
    %6965 = vrot.lane.b32.xlu0 %v6920, 64
    %v6966 = vpop.permute.xlu0 %6965
    %6967 = vrot.lane.b32.xlu0 %v6923, 64
    %v6968 = vpop.permute.xlu0 %6967
    %6969 = vrot.lane.b32.xlu0 %v6926, 64
    %v6970 = vpop.permute.xlu0 %6969
    %6971 = vrot.lane.b32.xlu0 %v6929, 64
    %v6972 = vpop.permute.xlu0 %6971
    %6973 = vrot.lane.b32.xlu0 %v6932, 64
    %v6974 = vpop.permute.xlu0 %6973
    %6975 = vrot.lane.b32.xlu0 %v6935, 64
    %v6976 = vpop.permute.xlu0 %6975
    %6977 = vrot.lane.b32.xlu0 %v6938, 64
    %v6978 = vpop.permute.xlu0 %6977
    %6979 = vrot.lane.b32.xlu0 %v6941, 64
    %v6980 = vpop.permute.xlu0 %6979
    %6981 = vrot.lane.b32.xlu0 %v6944, 64
    %v6982 = vpop.permute.xlu0 %6981
    %6983 = vrot.lane.b32.xlu0 %v6947, 64
    %v6984 = vpop.permute.xlu0 %6983
    %6985 = vrot.lane.b32.xlu0 %v6950, 64
    %v6986 = vpop.permute.xlu0 %6985
    %6987 = vrot.lane.b32.xlu0 %v6953, 64
    %v6988 = vpop.permute.xlu0 %6987
    %6989 = vrot.lane.b32.xlu0 %v6956, 64
    %v6990 = vpop.permute.xlu0 %6989
    %6991 = vrot.lane.b32.xlu0 %v6959, 64
    %v6992 = vpop.permute.xlu0 %6991
    %6993 = vrot.lane.b32.xlu0 %v6962, 64
    %v6994 = vpop.permute.xlu0 %6993
    %v7027 = vlaneseq
    %v7028 = vshrl.u32 %v7027, 7
    %v7029 = vsub.s32 0, %v7028
    %v7030 = vrot.slane %v6152, %v7029
    %v7031 = vlaneseq
    %v7032 = vshrl.u32 %v7031, 7
    %v7033 = vsub.s32 0, %v7032
    %v7034 = vrot.slane %v6153, %v7033
    %v7035 = vlaneseq
    %v7036 = vshrl.u32 %v7035, 7
    %v7037 = vsub.s32 0, %v7036
    %v7038 = vrot.slane %v6154, %v7037
    %v7039 = vlaneseq
    %v7040 = vshrl.u32 %v7039, 7
    %v7041 = vsub.s32 0, %v7040
    %v7042 = vrot.slane %v6155, %v7041
    %v7043 = vlaneseq
    %v7044 = vshrl.u32 %v7043, 7
    %v7045 = vsub.s32 0, %v7044
    %v7046 = vrot.slane %v6188, %v7045
    %v7047 = vlaneseq
    %v7048 = vshrl.u32 %v7047, 7
    %v7049 = vsub.s32 0, %v7048
    %v7050 = vrot.slane %v6189, %v7049
    %v7051 = vlaneseq
    %v7052 = vshrl.u32 %v7051, 7
    %v7053 = vsub.s32 0, %v7052
    %v7054 = vrot.slane %v6190, %v7053
    %v7055 = vlaneseq
    %v7056 = vshrl.u32 %v7055, 7
    %v7057 = vsub.s32 0, %v7056
    %v7058 = vrot.slane %v6191, %v7057
    %v7059 = vlaneseq
    %v7060 = vshrl.u32 %v7059, 7
    %v7061 = vsub.s32 0, %v7060
    %v7062 = vrot.slane %v6224, %v7061
    %v7063 = vlaneseq
    %v7064 = vshrl.u32 %v7063, 7
    %v7065 = vsub.s32 0, %v7064
    %v7066 = vrot.slane %v6225, %v7065
    %v7067 = vlaneseq
    %v7068 = vshrl.u32 %v7067, 7
    %v7069 = vsub.s32 0, %v7068
    %v7070 = vrot.slane %v6226, %v7069
    %v7071 = vlaneseq
    %v7072 = vshrl.u32 %v7071, 7
    %v7073 = vsub.s32 0, %v7072
    %v7074 = vrot.slane %v6227, %v7073
    %v7075 = vlaneseq
    %v7076 = vshrl.u32 %v7075, 7
    %v7077 = vsub.s32 0, %v7076
    %v7078 = vrot.slane %v6260, %v7077
    %v7079 = vlaneseq
    %v7080 = vshrl.u32 %v7079, 7
    %v7081 = vsub.s32 0, %v7080
    %v7082 = vrot.slane %v6261, %v7081
    %v7083 = vlaneseq
    %v7084 = vshrl.u32 %v7083, 7
    %v7085 = vsub.s32 0, %v7084
    %v7086 = vrot.slane %v6262, %v7085
    %v7087 = vlaneseq
    %v7088 = vshrl.u32 %v7087, 7
    %v7089 = vsub.s32 0, %v7088
    %v7090 = vrot.slane %v6263, %v7089
    %v7091 = vsel %vm6592, %v7034, %v7030
    %v7092 = vsel %vm6594, %v7038, %v7091
    %v7093 = vsel %vm6596, %v7042, %v7092
    %v7094 = vsel %vm6592, %v7050, %v7046
    %v7095 = vsel %vm6594, %v7054, %v7094
    %v7096 = vsel %vm6596, %v7058, %v7095
    %v7097 = vsel %vm6592, %v7066, %v7062
    %v7098 = vsel %vm6594, %v7070, %v7097
    %v7099 = vsel %vm6596, %v7074, %v7098
    %v7100 = vsel %vm6592, %v7082, %v7078
    %v7101 = vsel %vm6594, %v7086, %v7100
    %v7102 = vsel %vm6596, %v7090, %v7101
    %7103 = vrot.lane.b32.xlu0 %v6600, 96
    %v7104 = vpop.permute.xlu0 %7103
    %7105 = vrot.lane.b32.xlu0 %v6603, 96
    %v7106 = vpop.permute.xlu0 %7105
    %7107 = vrot.lane.b32.xlu0 %v6606, 96
    %v7108 = vpop.permute.xlu0 %7107
    %7109 = vrot.lane.b32.xlu0 %v7093, 96
    %v7110 = vpop.permute.xlu0 %7109
    %7111 = vrot.lane.b32.xlu0 %v6612, 96
    %v7112 = vpop.permute.xlu0 %7111
    %7113 = vrot.lane.b32.xlu0 %v6615, 96
    %v7114 = vpop.permute.xlu0 %7113
    %7115 = vrot.lane.b32.xlu0 %v6618, 96
    %v7116 = vpop.permute.xlu0 %7115
    %7117 = vrot.lane.b32.xlu0 %v7096, 96
    %v7118 = vpop.permute.xlu0 %7117
    %7119 = vrot.lane.b32.xlu0 %v6624, 96
    %v7120 = vpop.permute.xlu0 %7119
    %7121 = vrot.lane.b32.xlu0 %v6627, 96
    %v7122 = vpop.permute.xlu0 %7121
    %7123 = vrot.lane.b32.xlu0 %v6630, 96
    %v7124 = vpop.permute.xlu0 %7123
    %7125 = vrot.lane.b32.xlu0 %v7099, 96
    %v7126 = vpop.permute.xlu0 %7125
    %7127 = vrot.lane.b32.xlu0 %v6636, 96
    %v7128 = vpop.permute.xlu0 %7127
    %7129 = vrot.lane.b32.xlu0 %v6639, 96
    %v7130 = vpop.permute.xlu0 %7129
    %7131 = vrot.lane.b32.xlu0 %v6642, 96
    %v7132 = vpop.permute.xlu0 %7131
    %7133 = vrot.lane.b32.xlu0 %v7102, 96
    %v7134 = vpop.permute.xlu0 %7133
    %v7155 = vlaneseq
    %v7156 = vshrl.u32 %v7155, 7
    %v7157 = vsub.s32 0, %v7156
    %v7158 = vrot.slane %v6156, %v7157
    %v7159 = vlaneseq
    %v7160 = vshrl.u32 %v7159, 7
    %v7161 = vsub.s32 0, %v7160
    %v7162 = vrot.slane %v6192, %v7161
    %v7163 = vlaneseq
    %v7164 = vshrl.u32 %v7163, 7
    %v7165 = vsub.s32 0, %v7164
    %v7166 = vrot.slane %v6228, %v7165
    %v7167 = vlaneseq
    %v7168 = vshrl.u32 %v7167, 7
    %v7169 = vsub.s32 0, %v7168
    %v7170 = vrot.slane %v6264, %v7169
    %v7171 = vsel %vm6592, %v7038, %v7034
    %v7172 = vsel %vm6594, %v7042, %v7171
    %v7173 = vsel %vm6596, %v7158, %v7172
    %v7174 = vsel %vm6592, %v7054, %v7050
    %v7175 = vsel %vm6594, %v7058, %v7174
    %v7176 = vsel %vm6596, %v7162, %v7175
    %v7177 = vsel %vm6592, %v7070, %v7066
    %v7178 = vsel %vm6594, %v7074, %v7177
    %v7179 = vsel %vm6596, %v7166, %v7178
    %v7180 = vsel %vm6592, %v7086, %v7082
    %v7181 = vsel %vm6594, %v7090, %v7180
    %v7182 = vsel %vm6596, %v7170, %v7181
    %v7203 = vlaneseq
    %v7204 = vshrl.u32 %v7203, 7
    %v7205 = vsub.s32 0, %v7204
    %v7206 = vrot.slane %v6157, %v7205
    %v7207 = vlaneseq
    %v7208 = vshrl.u32 %v7207, 7
    %v7209 = vsub.s32 0, %v7208
    %v7210 = vrot.slane %v6193, %v7209
    %v7211 = vlaneseq
    %v7212 = vshrl.u32 %v7211, 7
    %v7213 = vsub.s32 0, %v7212
    %v7214 = vrot.slane %v6229, %v7213
    %v7215 = vlaneseq
    %v7216 = vshrl.u32 %v7215, 7
    %v7217 = vsub.s32 0, %v7216
    %v7218 = vrot.slane %v6265, %v7217
    %v7219 = vsel %vm6592, %v7042, %v7038
    %v7220 = vsel %vm6594, %v7158, %v7219
    %v7221 = vsel %vm6596, %v7206, %v7220
    %v7222 = vsel %vm6592, %v7058, %v7054
    %v7223 = vsel %vm6594, %v7162, %v7222
    %v7224 = vsel %vm6596, %v7210, %v7223
    %v7225 = vsel %vm6592, %v7074, %v7070
    %v7226 = vsel %vm6594, %v7166, %v7225
    %v7227 = vsel %vm6596, %v7214, %v7226
    %v7228 = vsel %vm6592, %v7090, %v7086
    %v7229 = vsel %vm6594, %v7170, %v7228
    %v7230 = vsel %vm6596, %v7218, %v7229
    %7231 = vrot.lane.b32.xlu0 %v6920, 32
    %v7232 = vpop.permute.xlu0 %7231
    %7233 = vrot.lane.b32.xlu0 %v6923, 32
    %v7234 = vpop.permute.xlu0 %7233
    %7235 = vrot.lane.b32.xlu0 %v6926, 32
    %v7236 = vpop.permute.xlu0 %7235
    %7237 = vrot.lane.b32.xlu0 %v7221, 32
    %v7238 = vpop.permute.xlu0 %7237
    %7239 = vrot.lane.b32.xlu0 %v6932, 32
    %v7240 = vpop.permute.xlu0 %7239
    %7241 = vrot.lane.b32.xlu0 %v6935, 32
    %v7242 = vpop.permute.xlu0 %7241
    %7243 = vrot.lane.b32.xlu0 %v6938, 32
    %v7244 = vpop.permute.xlu0 %7243
    %7245 = vrot.lane.b32.xlu0 %v7224, 32
    %v7246 = vpop.permute.xlu0 %7245
    %7247 = vrot.lane.b32.xlu0 %v6944, 32
    %v7248 = vpop.permute.xlu0 %7247
    %7249 = vrot.lane.b32.xlu0 %v6947, 32
    %v7250 = vpop.permute.xlu0 %7249
    %7251 = vrot.lane.b32.xlu0 %v6950, 32
    %v7252 = vpop.permute.xlu0 %7251
    %7253 = vrot.lane.b32.xlu0 %v7227, 32
    %v7254 = vpop.permute.xlu0 %7253
    %7255 = vrot.lane.b32.xlu0 %v6956, 32
    %v7256 = vpop.permute.xlu0 %7255
    %7257 = vrot.lane.b32.xlu0 %v6959, 32
    %v7258 = vpop.permute.xlu0 %7257
    %7259 = vrot.lane.b32.xlu0 %v6962, 32
    %v7260 = vpop.permute.xlu0 %7259
    %7261 = vrot.lane.b32.xlu0 %v7230, 32
    %v7262 = vpop.permute.xlu0 %7261
    %v7295 = vlaneseq
    %v7296 = vshrl.u32 %v7295, 7
    %v7297 = vsub.s32 0, %v7296
    %v7298 = vrot.slane %v6158, %v7297
    %v7299 = vlaneseq
    %v7300 = vshrl.u32 %v7299, 7
    %v7301 = vsub.s32 0, %v7300
    %v7302 = vrot.slane %v6159, %v7301
    %v7303 = vlaneseq
    %v7304 = vshrl.u32 %v7303, 7
    %v7305 = vsub.s32 0, %v7304
    %v7306 = vrot.slane %v6160, %v7305
    %v7307 = vlaneseq
    %v7308 = vshrl.u32 %v7307, 7
    %v7309 = vsub.s32 0, %v7308
    %v7310 = vrot.slane %v6161, %v7309
    %v7311 = vlaneseq
    %v7312 = vshrl.u32 %v7311, 7
    %v7313 = vsub.s32 0, %v7312
    %v7314 = vrot.slane %v6194, %v7313
    %v7315 = vlaneseq
    %v7316 = vshrl.u32 %v7315, 7
    %v7317 = vsub.s32 0, %v7316
    %v7318 = vrot.slane %v6195, %v7317
    %v7319 = vlaneseq
    %v7320 = vshrl.u32 %v7319, 7
    %v7321 = vsub.s32 0, %v7320
    %v7322 = vrot.slane %v6196, %v7321
    %v7323 = vlaneseq
    %v7324 = vshrl.u32 %v7323, 7
    %v7325 = vsub.s32 0, %v7324
    %v7326 = vrot.slane %v6197, %v7325
    %v7327 = vlaneseq
    %v7328 = vshrl.u32 %v7327, 7
    %v7329 = vsub.s32 0, %v7328
    %v7330 = vrot.slane %v6230, %v7329
    %v7331 = vlaneseq
    %v7332 = vshrl.u32 %v7331, 7
    %v7333 = vsub.s32 0, %v7332
    %v7334 = vrot.slane %v6231, %v7333
    %v7335 = vlaneseq
    %v7336 = vshrl.u32 %v7335, 7
    %v7337 = vsub.s32 0, %v7336
    %v7338 = vrot.slane %v6232, %v7337
    %v7339 = vlaneseq
    %v7340 = vshrl.u32 %v7339, 7
    %v7341 = vsub.s32 0, %v7340
    %v7342 = vrot.slane %v6233, %v7341
    %v7343 = vlaneseq
    %v7344 = vshrl.u32 %v7343, 7
    %v7345 = vsub.s32 0, %v7344
    %v7346 = vrot.slane %v6266, %v7345
    %v7347 = vlaneseq
    %v7348 = vshrl.u32 %v7347, 7
    %v7349 = vsub.s32 0, %v7348
    %v7350 = vrot.slane %v6267, %v7349
    %v7351 = vlaneseq
    %v7352 = vshrl.u32 %v7351, 7
    %v7353 = vsub.s32 0, %v7352
    %v7354 = vrot.slane %v6268, %v7353
    %v7355 = vlaneseq
    %v7356 = vshrl.u32 %v7355, 7
    %v7357 = vsub.s32 0, %v7356
    %v7358 = vrot.slane %v6269, %v7357
    %v7359 = vsel %vm6592, %v7302, %v7298
    %v7360 = vsel %vm6594, %v7306, %v7359
    %v7361 = vsel %vm6596, %v7310, %v7360
    %v7362 = vsel %vm6592, %v7318, %v7314
    %v7363 = vsel %vm6594, %v7322, %v7362
    %v7364 = vsel %vm6596, %v7326, %v7363
    %v7365 = vsel %vm6592, %v7334, %v7330
    %v7366 = vsel %vm6594, %v7338, %v7365
    %v7367 = vsel %vm6596, %v7342, %v7366
    %v7368 = vsel %vm6592, %v7350, %v7346
    %v7369 = vsel %vm6594, %v7354, %v7368
    %v7370 = vsel %vm6596, %v7358, %v7369
    %7371 = vrot.lane.b32.xlu0 %v6603, 64
    %v7372 = vpop.permute.xlu0 %7371
    %7373 = vrot.lane.b32.xlu0 %v6606, 64
    %v7374 = vpop.permute.xlu0 %7373
    %7375 = vrot.lane.b32.xlu0 %v7093, 64
    %v7376 = vpop.permute.xlu0 %7375
    %7377 = vrot.lane.b32.xlu0 %v7361, 64
    %v7378 = vpop.permute.xlu0 %7377
    %7379 = vrot.lane.b32.xlu0 %v6615, 64
    %v7380 = vpop.permute.xlu0 %7379
    %7381 = vrot.lane.b32.xlu0 %v6618, 64
    %v7382 = vpop.permute.xlu0 %7381
    %7383 = vrot.lane.b32.xlu0 %v7096, 64
    %v7384 = vpop.permute.xlu0 %7383
    %7385 = vrot.lane.b32.xlu0 %v7364, 64
    %v7386 = vpop.permute.xlu0 %7385
    %7387 = vrot.lane.b32.xlu0 %v6627, 64
    %v7388 = vpop.permute.xlu0 %7387
    %7389 = vrot.lane.b32.xlu0 %v6630, 64
    %v7390 = vpop.permute.xlu0 %7389
    %7391 = vrot.lane.b32.xlu0 %v7099, 64
    %v7392 = vpop.permute.xlu0 %7391
    %7393 = vrot.lane.b32.xlu0 %v7367, 64
    %v7394 = vpop.permute.xlu0 %7393
    %7395 = vrot.lane.b32.xlu0 %v6639, 64
    %v7396 = vpop.permute.xlu0 %7395
    %7397 = vrot.lane.b32.xlu0 %v6642, 64
    %v7398 = vpop.permute.xlu0 %7397
    %7399 = vrot.lane.b32.xlu0 %v7102, 64
    %v7400 = vpop.permute.xlu0 %7399
    %7401 = vrot.lane.b32.xlu0 %v7370, 64
    %v7402 = vpop.permute.xlu0 %7401
    %v7423 = vlaneseq
    %v7424 = vshrl.u32 %v7423, 7
    %v7425 = vsub.s32 0, %v7424
    %v7426 = vrot.slane %v6162, %v7425
    %v7427 = vlaneseq
    %v7428 = vshrl.u32 %v7427, 7
    %v7429 = vsub.s32 0, %v7428
    %v7430 = vrot.slane %v6198, %v7429
    %v7431 = vlaneseq
    %v7432 = vshrl.u32 %v7431, 7
    %v7433 = vsub.s32 0, %v7432
    %v7434 = vrot.slane %v6234, %v7433
    %v7435 = vlaneseq
    %v7436 = vshrl.u32 %v7435, 7
    %v7437 = vsub.s32 0, %v7436
    %v7438 = vrot.slane %v6270, %v7437
    %v7439 = vsel %vm6592, %v7306, %v7302
    %v7440 = vsel %vm6594, %v7310, %v7439
    %v7441 = vsel %vm6596, %v7426, %v7440
    %v7442 = vsel %vm6592, %v7322, %v7318
    %v7443 = vsel %vm6594, %v7326, %v7442
    %v7444 = vsel %vm6596, %v7430, %v7443
    %v7445 = vsel %vm6592, %v7338, %v7334
    %v7446 = vsel %vm6594, %v7342, %v7445
    %v7447 = vsel %vm6596, %v7434, %v7446
    %v7448 = vsel %vm6592, %v7354, %v7350
    %v7449 = vsel %vm6594, %v7358, %v7448
    %v7450 = vsel %vm6596, %v7438, %v7449
    %7451 = vrot.lane.b32.xlu0 %v6747, 96
    %v7452 = vpop.permute.xlu0 %7451
    %7453 = vrot.lane.b32.xlu0 %v6750, 96
    %v7454 = vpop.permute.xlu0 %7453
    %7455 = vrot.lane.b32.xlu0 %v7173, 96
    %v7456 = vpop.permute.xlu0 %7455
    %7457 = vrot.lane.b32.xlu0 %v7441, 96
    %v7458 = vpop.permute.xlu0 %7457
    %7459 = vrot.lane.b32.xlu0 %v6759, 96
    %v7460 = vpop.permute.xlu0 %7459
    %7461 = vrot.lane.b32.xlu0 %v6762, 96
    %v7462 = vpop.permute.xlu0 %7461
    %7463 = vrot.lane.b32.xlu0 %v7176, 96
    %v7464 = vpop.permute.xlu0 %7463
    %7465 = vrot.lane.b32.xlu0 %v7444, 96
    %v7466 = vpop.permute.xlu0 %7465
    %7467 = vrot.lane.b32.xlu0 %v6771, 96
    %v7468 = vpop.permute.xlu0 %7467
    %7469 = vrot.lane.b32.xlu0 %v6774, 96
    %v7470 = vpop.permute.xlu0 %7469
    %7471 = vrot.lane.b32.xlu0 %v7179, 96
    %v7472 = vpop.permute.xlu0 %7471
    %7473 = vrot.lane.b32.xlu0 %v7447, 96
    %v7474 = vpop.permute.xlu0 %7473
    %7475 = vrot.lane.b32.xlu0 %v6783, 96
    %v7476 = vpop.permute.xlu0 %7475
    %7477 = vrot.lane.b32.xlu0 %v6786, 96
    %v7478 = vpop.permute.xlu0 %7477
    %7479 = vrot.lane.b32.xlu0 %v7182, 96
    %v7480 = vpop.permute.xlu0 %7479
    %7481 = vrot.lane.b32.xlu0 %v7450, 96
    %v7482 = vpop.permute.xlu0 %7481
    %v7503 = vlaneseq
    %v7504 = vshrl.u32 %v7503, 7
    %v7505 = vsub.s32 0, %v7504
    %v7506 = vrot.slane %v6163, %v7505
    %v7507 = vlaneseq
    %v7508 = vshrl.u32 %v7507, 7
    %v7509 = vsub.s32 0, %v7508
    %v7510 = vrot.slane %v6199, %v7509
    %v7511 = vlaneseq
    %v7512 = vshrl.u32 %v7511, 7
    %v7513 = vsub.s32 0, %v7512
    %v7514 = vrot.slane %v6235, %v7513
    %v7515 = vlaneseq
    %v7516 = vshrl.u32 %v7515, 7
    %v7517 = vsub.s32 0, %v7516
    %v7518 = vrot.slane %v6271, %v7517
    %v7519 = vsel %vm6592, %v7310, %v7306
    %v7520 = vsel %vm6594, %v7426, %v7519
    %v7521 = vsel %vm6596, %v7506, %v7520
    %v7522 = vsel %vm6592, %v7326, %v7322
    %v7523 = vsel %vm6594, %v7430, %v7522
    %v7524 = vsel %vm6596, %v7510, %v7523
    %v7525 = vsel %vm6592, %v7342, %v7338
    %v7526 = vsel %vm6594, %v7434, %v7525
    %v7527 = vsel %vm6596, %v7514, %v7526
    %v7528 = vsel %vm6592, %v7358, %v7354
    %v7529 = vsel %vm6594, %v7438, %v7528
    %v7530 = vsel %vm6596, %v7518, %v7529
    %vm7531 = vcmask 261120
    %v7532 = vsel %vm7531, %v6597, %v6788
    %v7533 = vsel %vm7531, %v6600, %v6790
    %v7534 = vsel %vm7531, %v6603, %v6792
    %v7535 = vsel %vm7531, %v6606, %v6794
    %v7536 = vsel %vm7531, %v6609, %v6796
    %v7537 = vsel %vm7531, %v6612, %v6798
    %v7538 = vsel %vm7531, %v6615, %v6800
    %v7539 = vsel %vm7531, %v6618, %v6802
    %v7540 = vsel %vm7531, %v6621, %v6804
    %v7541 = vsel %vm7531, %v6624, %v6806
    %v7542 = vsel %vm7531, %v6627, %v6808
    %v7543 = vsel %vm7531, %v6630, %v6810
    %v7544 = vsel %vm7531, %v6633, %v6812
    %v7545 = vsel %vm7531, %v6636, %v6814
    %v7546 = vsel %vm7531, %v6639, %v6816
    %v7547 = vsel %vm7531, %v6642, %v6818
    %vm7548 = vcmask 523264
    %v7549 = vsel %vm7548, %v7532, %v6964
    %v7550 = vsel %vm7548, %v7533, %v6966
    %v7551 = vsel %vm7548, %v7534, %v6968
    %v7552 = vsel %vm7548, %v7535, %v6970
    %v7553 = vsel %vm7548, %v7536, %v6972
    %v7554 = vsel %vm7548, %v7537, %v6974
    %v7555 = vsel %vm7548, %v7538, %v6976
    %v7556 = vsel %vm7548, %v7539, %v6978
    %v7557 = vsel %vm7548, %v7540, %v6980
    %v7558 = vsel %vm7548, %v7541, %v6982
    %v7559 = vsel %vm7548, %v7542, %v6984
    %v7560 = vsel %vm7548, %v7543, %v6986
    %v7561 = vsel %vm7548, %v7544, %v6988
    %v7562 = vsel %vm7548, %v7545, %v6990
    %v7563 = vsel %vm7548, %v7546, %v6992
    %v7564 = vsel %vm7548, %v7547, %v6994
    %vm7565 = vcmask 785408
    %v7566 = vsel %vm7565, %v7549, %v7104
    %v7567 = vsel %vm7565, %v7550, %v7106
    %v7568 = vsel %vm7565, %v7551, %v7108
    %v7569 = vsel %vm7565, %v7552, %v7110
    %v7570 = vsel %vm7565, %v7553, %v7112
    %v7571 = vsel %vm7565, %v7554, %v7114
    %v7572 = vsel %vm7565, %v7555, %v7116
    %v7573 = vsel %vm7565, %v7556, %v7118
    %v7574 = vsel %vm7565, %v7557, %v7120
    %v7575 = vsel %vm7565, %v7558, %v7122
    %v7576 = vsel %vm7565, %v7559, %v7124
    %v7577 = vsel %vm7565, %v7560, %v7126
    %v7578 = vsel %vm7565, %v7561, %v7128
    %v7579 = vsel %vm7565, %v7562, %v7130
    %v7580 = vsel %vm7565, %v7563, %v7132
    %v7581 = vsel %vm7565, %v7564, %v7134
    %v7582 = vsel %vm7531, %v6744, %v7232
    %v7583 = vsel %vm7531, %v6747, %v7234
    %v7584 = vsel %vm7531, %v6750, %v7236
    %v7585 = vsel %vm7531, %v7173, %v7238
    %v7586 = vsel %vm7531, %v6756, %v7240
    %v7587 = vsel %vm7531, %v6759, %v7242
    %v7588 = vsel %vm7531, %v6762, %v7244
    %v7589 = vsel %vm7531, %v7176, %v7246
    %v7590 = vsel %vm7531, %v6768, %v7248
    %v7591 = vsel %vm7531, %v6771, %v7250
    %v7592 = vsel %vm7531, %v6774, %v7252
    %v7593 = vsel %vm7531, %v7179, %v7254
    %v7594 = vsel %vm7531, %v6780, %v7256
    %v7595 = vsel %vm7531, %v6783, %v7258
    %v7596 = vsel %vm7531, %v6786, %v7260
    %v7597 = vsel %vm7531, %v7182, %v7262
    %v7598 = vsel %vm7548, %v7582, %v7372
    %v7599 = vsel %vm7548, %v7583, %v7374
    %v7600 = vsel %vm7548, %v7584, %v7376
    %v7601 = vsel %vm7548, %v7585, %v7378
    %v7602 = vsel %vm7548, %v7586, %v7380
    %v7603 = vsel %vm7548, %v7587, %v7382
    %v7604 = vsel %vm7548, %v7588, %v7384
    %v7605 = vsel %vm7548, %v7589, %v7386
    %v7606 = vsel %vm7548, %v7590, %v7388
    %v7607 = vsel %vm7548, %v7591, %v7390
    %v7608 = vsel %vm7548, %v7592, %v7392
    %v7609 = vsel %vm7548, %v7593, %v7394
    %v7610 = vsel %vm7548, %v7594, %v7396
    %v7611 = vsel %vm7548, %v7595, %v7398
    %v7612 = vsel %vm7548, %v7596, %v7400
    %v7613 = vsel %vm7548, %v7597, %v7402
    %v7614 = vsel %vm7565, %v7598, %v7452
    %v7615 = vsel %vm7565, %v7599, %v7454
    %v7616 = vsel %vm7565, %v7600, %v7456
    %v7617 = vsel %vm7565, %v7601, %v7458
    %v7618 = vsel %vm7565, %v7602, %v7460
    %v7619 = vsel %vm7565, %v7603, %v7462
    %v7620 = vsel %vm7565, %v7604, %v7464
    %v7621 = vsel %vm7565, %v7605, %v7466
    %v7622 = vsel %vm7565, %v7606, %v7468
    %v7623 = vsel %vm7565, %v7607, %v7470
    %v7624 = vsel %vm7565, %v7608, %v7472
    %v7625 = vsel %vm7565, %v7609, %v7474
    %v7626 = vsel %vm7565, %v7610, %v7476
    %v7627 = vsel %vm7565, %v7611, %v7478
    %v7628 = vsel %vm7565, %v7612, %v7480
    %v7629 = vsel %vm7565, %v7613, %v7482
    %v7662 = vcombine.low %v7566, %v7614
    %v7663 = vcombine.low %v7567, %v7615
    %v7664 = vcombine.low %v7568, %v7616
    %v7665 = vcombine.low %v7569, %v7617
    %v7666 = vcombine.low %v7570, %v7618
    %v7667 = vcombine.low %v7571, %v7619
    %v7668 = vcombine.low %v7572, %v7620
    %v7669 = vcombine.low %v7573, %v7621
    %v7670 = vcombine.low %v7574, %v7622
    %v7671 = vcombine.low %v7575, %v7623
    %v7672 = vcombine.low %v7576, %v7624
    %v7673 = vcombine.low %v7577, %v7625
    %v7674 = vcombine.low %v7578, %v7626
    %v7675 = vcombine.low %v7579, %v7627
    %v7676 = vcombine.low %v7580, %v7628
    %v7677 = vcombine.low %v7581, %v7629
    %v7678 = vld [vmem:[%s5] sm:$0xff]
    %v7679 = vld [vmem:[%s5 + $0x8] sm:$0xff]
    %v7680 = vld [vmem:[%s5 + $0x10] sm:$0xff]
    %v7681 = vld [vmem:[%s5 + $0x18] sm:$0xff]
    %v7682 = vld [vmem:[%s5 + $0x20] sm:$0xff]
    %v7683 = vld [vmem:[%s5 + $0x28] sm:$0xff]
    %v7684 = vld [vmem:[%s5 + $0x30] sm:$0xff]
    %v7685 = vld [vmem:[%s5 + $0x38] sm:$0xff]
    %v7686 = vld [vmem:[%s5 + $0x40] sm:$0xff]
    %v7687 = vld [vmem:[%s5 + $0x48] sm:$0xff]
    %v7688 = vld [vmem:[%s5 + $0x50] sm:$0xff]
    %v7689 = vld [vmem:[%s5 + $0x58] sm:$0xff]
    %v7690 = vld [vmem:[%s5 + $0x60] sm:$0xff]
    %v7691 = vld [vmem:[%s5 + $0x68] sm:$0xff]
    %v7692 = vld [vmem:[%s5 + $0x70] sm:$0xff]
    %v7693 = vld [vmem:[%s5 + $0x78] sm:$0xff]
    %v7694 = vld [vmem:[%s5 + $0x80] sm:$0xff]
    %v7695 = vld [vmem:[%s5 + $0x88] sm:$0xff]
    %v7696 = vld [vmem:[%s5 + $0x90] sm:$0xff]
    %v7697 = vld [vmem:[%s5 + $0x98] sm:$0xff]
    %v7698 = vld [vmem:[%s5 + $0xa0] sm:$0xff]
    %v7699 = vld [vmem:[%s5 + $0xa8] sm:$0xff]
    %v7700 = vld [vmem:[%s5 + $0xb0] sm:$0xff]
    %v7701 = vld [vmem:[%s5 + $0xb8] sm:$0xff]
    %v7702 = vld [vmem:[%s5 + $0xc0] sm:$0xff]
    %v7703 = vld [vmem:[%s5 + $0xc8] sm:$0xff]
    %v7704 = vld [vmem:[%s5 + $0xd0] sm:$0xff]
    %v7705 = vld [vmem:[%s5 + $0xd8] sm:$0xff]
    %v7706 = vld [vmem:[%s5 + $0xe0] sm:$0xff]
    %v7707 = vld [vmem:[%s5 + $0xe8] sm:$0xff]
    %v7708 = vld [vmem:[%s5 + $0xf0] sm:$0xff]
    %v7709 = vld [vmem:[%s5 + $0xf8] sm:$0xff]
    %v7710 = vld [vmem:[%s5 + $0x100] sm:$0xff]
    %v7711 = vld [vmem:[%s5 + $0x108] sm:$0xff]
    %v7712 = vld [vmem:[%s5 + $0x110] sm:$0xff]
    %v7713 = vld [vmem:[%s5 + $0x118] sm:$0xff]
    %v7714 = vld [vmem:[%s6] sm:$0x1]
    %v7716 = vlaneseq
    %v7717 = vshrl.u32 %v7716, 7
    %v7718 = vsub.s32 0, %v7717
    %v7719 = vrot.slane %v7714, %v7718
    %v7721 = vcombine.low %v7662, %v7663
    %v7722 = vcombine.high %v7662, %v7663
    %v7723 = vcombine.low %v6923, %v6926
    %v7724 = vcombine.low %v7664, %v7665
    %v7725 = vcombine.high %v7664, %v7665
    %v7726 = vcombine.low %v7221, %v7521
    %v7727 = vcombine.low %v7666, %v7667
    %v7728 = vcombine.high %v7666, %v7667
    %v7729 = vcombine.low %v6935, %v6938
    %v7730 = vcombine.low %v7668, %v7669
    %v7731 = vcombine.high %v7668, %v7669
    %v7732 = vcombine.low %v7224, %v7524
    %v7733 = vcombine.low %v7670, %v7671
    %v7734 = vcombine.high %v7670, %v7671
    %v7735 = vcombine.low %v6947, %v6950
    %v7736 = vcombine.low %v7672, %v7673
    %v7737 = vcombine.high %v7672, %v7673
    %v7738 = vcombine.low %v7227, %v7527
    %v7739 = vcombine.low %v7674, %v7675
    %v7740 = vcombine.high %v7674, %v7675
    %v7741 = vcombine.low %v6959, %v6962
    %v7742 = vcombine.low %v7676, %v7677
    %v7743 = vcombine.high %v7676, %v7677
    %v7744 = vcombine.low %v7230, %v7530
    %v7761 = vsel %vm7531, %v7723, 0
    %v7763 = vsel %vm7531, %v7726, 0
    %v7765 = vsel %vm7531, %v7729, 0
    %v7767 = vsel %vm7531, %v7732, 0
    %v7769 = vsel %vm7531, %v7735, 0
    %v7771 = vsel %vm7531, %v7738, 0
    %v7773 = vsel %vm7531, %v7741, 0
    %v7775 = vsel %vm7531, %v7744, 0
    %7777 = vmatprep.subr.mxu0 0.0
    %7778 = vmatpush1.msra.mxu0 %v7693
    %7779 = vmatprep.subr.mxu0 0.0
    %7780 = vmatpush1.msra.mxu0 %v7692
    %7781 = vmatprep.subr.mxu0 0.0
    %7782 = vmatpush1.msra.mxu0 %v7691
    %7783 = vmatprep.subr.mxu0 0.0
    %7784 = vmatpush1.msra.mxu0 %v7690
    %7785 = vmatprep.subr.mxu0 0.0
    %7786 = vmatpush1.msra.mxu0 %v7689
    %7787 = vmatprep.subr.mxu0 0.0
    %7788 = vmatpush1.msra.mxu0 %v7688
    %7789 = vmatprep.subr.mxu0 0.0
    %7790 = vmatpush1.msra.mxu0 %v7687
    %7791 = vmatprep.subr.mxu0 0.0
    %7792 = vmatpush1.msra.mxu0 %v7686
    %7793 = vmatprep.subr.mxu0 0.0
    %7794 = vmatpush1.msra.mxu0 %v7685
    %7795 = vmatprep.subr.mxu0 0.0
    %7796 = vmatpush1.msra.mxu0 %v7684
    %7797 = vmatprep.subr.mxu0 0.0
    %7798 = vmatpush1.msra.mxu0 %v7683
    %7799 = vmatprep.subr.mxu0 0.0
    %7800 = vmatpush1.msra.mxu0 %v7682
    %7801 = vmatprep.subr.mxu0 0.0
    %7802 = vmatpush1.msra.mxu0 %v7681
    %7803 = vmatprep.subr.mxu0 0.0
    %7804 = vmatpush1.msra.mxu0 %v7680
    %7805 = vmatprep.subr.mxu0 0.0
    %7806 = vmatpush1.msra.mxu0 %v7679
    %7807 = vmatprep.subr.mxu0 0.0
    %7808 = vmatpush1.msra.mxu0 %v7678
    %7809 = vmatprep.subr.mxu0 0.0
    %7810 = vmatpush2.msra.mxu0 %v7709
    %7811 = vmatprep.subr.mxu0 0.0
    %7812 = vmatpush2.msra.mxu0 %v7708
    %7813 = vmatprep.subr.mxu0 0.0
    %7814 = vmatpush2.msra.mxu0 %v7707
    %7815 = vmatprep.subr.mxu0 0.0
    %7816 = vmatpush2.msra.mxu0 %v7706
    %7817 = vmatprep.subr.mxu0 0.0
    %7818 = vmatpush2.msra.mxu0 %v7705
    %7819 = vmatprep.subr.mxu0 0.0
    %7820 = vmatpush2.msra.mxu0 %v7704
    %7821 = vmatprep.subr.mxu0 0.0
    %7822 = vmatpush2.msra.mxu0 %v7703
    %7823 = vmatprep.subr.mxu0 0.0
    %7824 = vmatpush2.msra.mxu0 %v7702
    %7825 = vmatprep.subr.mxu0 0.0
    %7826 = vmatpush2.msra.mxu0 %v7701
    %7827 = vmatprep.subr.mxu0 0.0
    %7828 = vmatpush2.msra.mxu0 %v7700
    %7829 = vmatprep.subr.mxu0 0.0
    %7830 = vmatpush2.msra.mxu0 %v7699
    %7831 = vmatprep.subr.mxu0 0.0
    %7832 = vmatpush2.msra.mxu0 %v7698
    %7833 = vmatprep.subr.mxu0 0.0
    %7834 = vmatpush2.msra.mxu0 %v7697
    %7835 = vmatprep.subr.mxu0 0.0
    %7836 = vmatpush2.msra.mxu0 %v7696
    %7837 = vmatprep.subr.mxu0 0.0
    %7838 = vmatpush2.msra.mxu0 %v7695
    %7839 = vmatprep.subr.mxu0 0.0
    %7840 = vmatpush2.msra.mxu0 %v7694
    %7841 = vmatprep.mubr.f32.mxu0 %v7722
    %7842 = vmatmul.mubr.f32.gmra.mxu0 %v7721
    %v7843 = vpop.f32.mrf.mxu0
    %v7844 = vadd.f32 %v7719, %v7843
    %v7845 = vpop.f32.mrf.mxu0
    %7846 = vmatprep.mubr.f32.mxu0 %v7725
    %7847 = vmatmul.mubr.f32.gmra.mxu0 %v7724
    %v7848 = vpop.f32.mrf.mxu0
    %v7849 = vadd.f32 %v7719, %v7848
    %v7850 = vpop.f32.mrf.mxu0
    %7851 = vmatprep.mubr.f32.mxu0 %v7728
    %7852 = vmatmul.mubr.f32.gmra.mxu0 %v7727
    %v7853 = vpop.f32.mrf.mxu0
    %v7854 = vadd.f32 %v7719, %v7853
    %v7855 = vpop.f32.mrf.mxu0
    %7856 = vmatprep.mubr.f32.mxu0 %v7731
    %7857 = vmatmul.mubr.f32.gmra.mxu0 %v7730
    %v7858 = vpop.f32.mrf.mxu0
    %v7859 = vadd.f32 %v7719, %v7858
    %v7860 = vpop.f32.mrf.mxu0
    %7861 = vmatprep.mubr.f32.mxu0 %v7734
    %7862 = vmatmul.mubr.f32.gmra.mxu0 %v7733
    %v7863 = vpop.f32.mrf.mxu0
    %v7864 = vadd.f32 %v7719, %v7863
    %v7865 = vpop.f32.mrf.mxu0
    %7866 = vmatprep.mubr.f32.mxu0 %v7737
    %7867 = vmatmul.mubr.f32.gmra.mxu0 %v7736
    %v7868 = vpop.f32.mrf.mxu0
    %v7869 = vadd.f32 %v7719, %v7868
    %v7870 = vpop.f32.mrf.mxu0
    %7871 = vmatprep.mubr.f32.mxu0 %v7740
    %7872 = vmatmul.mubr.f32.gmra.mxu0 %v7739
    %v7873 = vpop.f32.mrf.mxu0
    %v7874 = vadd.f32 %v7719, %v7873
    %v7875 = vpop.f32.mrf.mxu0
    %7876 = vmatprep.mubr.f32.mxu0 %v7743
    %7877 = vmatmul.mubr.f32.gmra.mxu0 %v7742
    %v7878 = vpop.f32.mrf.mxu0
    %v7879 = vadd.f32 %v7719, %v7878
    %v7880 = vpop.f32.mrf.mxu0
    %7881 = vdwg.mxu0
    %7882 = vmatprep.subr.mxu0 0.0
    %7883 = vmatpush1.msra.mxu0 0.0
    %7884 = vmatprep.subr.mxu0 0.0
    %7885 = vmatpush1.msra.mxu0 0.0
    %7886 = vmatprep.subr.mxu0 0.0
    %7887 = vmatpush1.msra.mxu0 0.0
    %7888 = vmatprep.subr.mxu0 0.0
    %7889 = vmatpush1.msra.mxu0 0.0
    %7890 = vmatprep.subr.mxu0 0.0
    %7891 = vmatpush1.msra.mxu0 0.0
    %7892 = vmatprep.subr.mxu0 0.0
    %7893 = vmatpush1.msra.mxu0 0.0
    %7894 = vmatprep.subr.mxu0 0.0
    %7895 = vmatpush1.msra.mxu0 0.0
    %7896 = vmatprep.subr.mxu0 0.0
    %7897 = vmatpush1.msra.mxu0 0.0
    %7898 = vmatprep.subr.mxu0 0.0
    %7899 = vmatpush1.msra.mxu0 0.0
    %7900 = vmatprep.subr.mxu0 0.0
    %7901 = vmatpush1.msra.mxu0 0.0
    %7902 = vmatprep.subr.mxu0 0.0
    %7903 = vmatpush1.msra.mxu0 0.0
    %7904 = vmatprep.subr.mxu0 0.0
    %7905 = vmatpush1.msra.mxu0 0.0
    %7906 = vmatprep.subr.mxu0 0.0
    %7907 = vmatpush1.msra.mxu0 %v7713
    %7908 = vmatprep.subr.mxu0 0.0
    %7909 = vmatpush1.msra.mxu0 %v7712
    %7910 = vmatprep.subr.mxu0 0.0
    %7911 = vmatpush1.msra.mxu0 %v7711
    %7912 = vmatprep.subr.mxu0 0.0
    %7913 = vmatpush1.msra.mxu0 %v7710
    %7914 = vmatprep.subr.mxu0 0.0
    %7915 = vmatpush2.msra.mxu0 0.0
    %7916 = vmatprep.subr.mxu0 0.0
    %7917 = vmatpush2.msra.mxu0 0.0
    %7918 = vmatprep.subr.mxu0 0.0
    %7919 = vmatpush2.msra.mxu0 0.0
    %7920 = vmatprep.subr.mxu0 0.0
    %7921 = vmatpush2.msra.mxu0 0.0
    %7922 = vmatprep.subr.mxu0 0.0
    %7923 = vmatpush2.msra.mxu0 0.0
    %7924 = vmatprep.subr.mxu0 0.0
    %7925 = vmatpush2.msra.mxu0 0.0
    %7926 = vmatprep.subr.mxu0 0.0
    %7927 = vmatpush2.msra.mxu0 0.0
    %7928 = vmatprep.subr.mxu0 0.0
    %7929 = vmatpush2.msra.mxu0 0.0
    %7930 = vmatprep.subr.mxu0 0.0
    %7931 = vmatpush2.msra.mxu0 0.0
    %7932 = vmatprep.subr.mxu0 0.0
    %7933 = vmatpush2.msra.mxu0 0.0
    %7934 = vmatprep.subr.mxu0 0.0
    %7935 = vmatpush2.msra.mxu0 0.0
    %7936 = vmatprep.subr.mxu0 0.0
    %7937 = vmatpush2.msra.mxu0 0.0
    %7938 = vmatprep.subr.mxu0 0.0
    %7939 = vmatpush2.msra.mxu0 0.0
    %7940 = vmatprep.subr.mxu0 0.0
    %7941 = vmatpush2.msra.mxu0 0.0
    %7942 = vmatprep.subr.mxu0 0.0
    %7943 = vmatpush2.msra.mxu0 0.0
    %7944 = vmatprep.subr.mxu0 0.0
    %7945 = vmatpush2.msra.mxu0 0.0
    %7946 = vmatprep.mubr.f32.mxu0 0.0
    %7947 = vmatmul.mubr.f32.gmra.mxu0 %v7761
    %v7948 = vpop.f32.mrf.mxu0
    %v7949 = vadd.f32 %v7844, %v7948
    %v7950 = vpop.f32.mrf.mxu0
    %7951 = vmatprep.mubr.f32.mxu0 0.0
    %7952 = vmatmul.mubr.f32.gmra.mxu0 %v7763
    %v7953 = vpop.f32.mrf.mxu0
    %v7954 = vadd.f32 %v7849, %v7953
    %v7955 = vpop.f32.mrf.mxu0
    %7956 = vmatprep.mubr.f32.mxu0 0.0
    %7957 = vmatmul.mubr.f32.gmra.mxu0 %v7765
    %v7958 = vpop.f32.mrf.mxu0
    %v7959 = vadd.f32 %v7854, %v7958
    %v7960 = vpop.f32.mrf.mxu0
    %7961 = vmatprep.mubr.f32.mxu0 0.0
    %7962 = vmatmul.mubr.f32.gmra.mxu0 %v7767
    %v7963 = vpop.f32.mrf.mxu0
    %v7964 = vadd.f32 %v7859, %v7963
    %v7965 = vpop.f32.mrf.mxu0
    %7966 = vmatprep.mubr.f32.mxu0 0.0
    %7967 = vmatmul.mubr.f32.gmra.mxu0 %v7769
    %v7968 = vpop.f32.mrf.mxu0
    %v7969 = vadd.f32 %v7864, %v7968
    %v7970 = vpop.f32.mrf.mxu0
    %7971 = vmatprep.mubr.f32.mxu0 0.0
    %7972 = vmatmul.mubr.f32.gmra.mxu0 %v7771
    %v7973 = vpop.f32.mrf.mxu0
    %v7974 = vadd.f32 %v7869, %v7973
    %v7975 = vpop.f32.mrf.mxu0
    %7976 = vmatprep.mubr.f32.mxu0 0.0
    %7977 = vmatmul.mubr.f32.gmra.mxu0 %v7773
    %v7978 = vpop.f32.mrf.mxu0
    %v7979 = vadd.f32 %v7874, %v7978
    %v7980 = vpop.f32.mrf.mxu0
    %7981 = vmatprep.mubr.f32.mxu0 0.0
    %7982 = vmatmul.mubr.f32.gmra.mxu0 %v7775
    %v7983 = vpop.f32.mrf.mxu0
    %v7984 = vadd.f32 %v7879, %v7983
    %v7985 = vpop.f32.mrf.mxu0
    %7986 = vdwg.mxu0
    %v7987 = vmax.f32 %v7949, 0.0
    %v7988 = vmax.f32 %v7954, 0.0
    %v7989 = vmax.f32 %v7959, 0.0
    %v7990 = vmax.f32 %v7964, 0.0
    %v7991 = vmax.f32 %v7969, 0.0
    %v7992 = vmax.f32 %v7974, 0.0
    %v7993 = vmax.f32 %v7979, 0.0
    %v7994 = vmax.f32 %v7984, 0.0
    %v7995 = vld [vmem:[%s7] sm:$0x1]
    %v7997 = vlaneseq
    %v7998 = vshrl.u32 %v7997, 7
    %v7999 = vsub.s32 0, %v7998
    %v8000 = vrot.slane %v7995, %v7999
    %v8002 = vmul.f32 %v7987, %v8000
    %v8003 = vmul.f32 %v7988, %v8000
    %v8004 = vmul.f32 %v7989, %v8000
    %v8005 = vmul.f32 %v7990, %v8000
    %v8006 = vmul.f32 %v7991, %v8000
    %v8007 = vmul.f32 %v7992, %v8000
    %v8008 = vmul.f32 %v7993, %v8000
    %v8009 = vmul.f32 %v7994, %v8000
    %v8010 = vld [vmem:[%s8] sm:$0x1]
    %v8012 = vlaneseq
    %v8013 = vshrl.u32 %v8012, 7
    %v8014 = vsub.s32 0, %v8013
    %v8015 = vrot.slane %v8010, %v8014
    %v8017 = vadd.f32 %v8002, %v8015
    %v8018 = vadd.f32 %v8003, %v8015
    %v8019 = vadd.f32 %v8004, %v8015
    %v8020 = vadd.f32 %v8005, %v8015
    %v8021 = vadd.f32 %v8006, %v8015
    %v8022 = vadd.f32 %v8007, %v8015
    %v8023 = vadd.f32 %v8008, %v8015
    %v8024 = vadd.f32 %v8009, %v8015
    %v8033 = vcombine.high %v8017, %v8017
    %v8034 = vcombine.high %v8018, %v8018
    %v8035 = vcombine.high %v8019, %v8019
    %v8036 = vcombine.high %v8020, %v8020
    %v8037 = vcombine.high %v8021, %v8021
    %v8038 = vcombine.high %v8022, %v8022
    %v8039 = vcombine.high %v8023, %v8023
    %v8040 = vcombine.high %v8024, %v8024
    %v8049 = vmax.f32 %v8017, %v8033
    %v8050 = vmax.f32 %v8018, %v8034
    %v8051 = vmax.f32 %v8019, %v8035
    %v8052 = vmax.f32 %v8020, %v8036
    %v8053 = vmax.f32 %v8021, %v8037
    %v8054 = vmax.f32 %v8022, %v8038
    %v8055 = vmax.f32 %v8023, %v8039
    %v8056 = vmax.f32 %v8024, %v8040
    %v8066 = vunpack.c.l.s4 1983009808
    %v8067 = vunpack.c.0.s8 %v8066
    %v8068 = vlaneseq
    %v8069 = vshrl.u32 %v8068, 7
    %v8070 = vsub.s32 %v8067, %v8069
    %v8071 = vrot.slane %v8049, %v8070
    %v8072 = vcombine.high %v8071, %v8071
    %v8074 = vunpack.c.l.s4 1983009808
    %v8075 = vunpack.c.0.s8 %v8074
    %v8076 = vlaneseq
    %v8077 = vshrl.u32 %v8076, 7
    %v8078 = vsub.s32 %v8075, %v8077
    %v8079 = vrot.slane %v8050, %v8078
    %v8080 = vcombine.high %v8079, %v8079
    %v8082 = vunpack.c.l.s4 1983009808
    %v8083 = vunpack.c.0.s8 %v8082
    %v8084 = vlaneseq
    %v8085 = vshrl.u32 %v8084, 7
    %v8086 = vsub.s32 %v8083, %v8085
    %v8087 = vrot.slane %v8051, %v8086
    %v8088 = vcombine.high %v8087, %v8087
    %v8090 = vunpack.c.l.s4 1983009808
    %v8091 = vunpack.c.0.s8 %v8090
    %v8092 = vlaneseq
    %v8093 = vshrl.u32 %v8092, 7
    %v8094 = vsub.s32 %v8091, %v8093
    %v8095 = vrot.slane %v8052, %v8094
    %v8096 = vcombine.high %v8095, %v8095
    %v8098 = vunpack.c.l.s4 1983009808
    %v8099 = vunpack.c.0.s8 %v8098
    %v8100 = vlaneseq
    %v8101 = vshrl.u32 %v8100, 7
    %v8102 = vsub.s32 %v8099, %v8101
    %v8103 = vrot.slane %v8053, %v8102
    %v8104 = vcombine.high %v8103, %v8103
    %v8106 = vunpack.c.l.s4 1983009808
    %v8107 = vunpack.c.0.s8 %v8106
    %v8108 = vlaneseq
    %v8109 = vshrl.u32 %v8108, 7
    %v8110 = vsub.s32 %v8107, %v8109
    %v8111 = vrot.slane %v8054, %v8110
    %v8112 = vcombine.high %v8111, %v8111
    %v8114 = vunpack.c.l.s4 1983009808
    %v8115 = vunpack.c.0.s8 %v8114
    %v8116 = vlaneseq
    %v8117 = vshrl.u32 %v8116, 7
    %v8118 = vsub.s32 %v8115, %v8117
    %v8119 = vrot.slane %v8055, %v8118
    %v8120 = vcombine.high %v8119, %v8119
    %v8122 = vunpack.c.l.s4 1983009808
    %v8123 = vunpack.c.0.s8 %v8122
    %v8124 = vlaneseq
    %v8125 = vshrl.u32 %v8124, 7
    %v8126 = vsub.s32 %v8123, %v8125
    %v8127 = vrot.slane %v8056, %v8126
    %v8128 = vcombine.high %v8127, %v8127
    %v8145 = vrot.slane %v8071, 7
    %v8146 = vrot.slane %v8145, 2
    %v8147 = vrot.slane %v8072, 7
    %v8148 = vrot.slane %v8147, 2
    %v8149 = vrot.slane %v8079, 7
    %v8150 = vrot.slane %v8149, 2
    %v8151 = vrot.slane %v8080, 7
    %v8152 = vrot.slane %v8151, 2
    %v8153 = vrot.slane %v8087, 7
    %v8154 = vrot.slane %v8153, 2
    %v8155 = vrot.slane %v8088, 7
    %v8156 = vrot.slane %v8155, 2
    %v8157 = vrot.slane %v8095, 7
    %v8158 = vrot.slane %v8157, 2
    %v8159 = vrot.slane %v8096, 7
    %v8160 = vrot.slane %v8159, 2
    %v8161 = vrot.slane %v8103, 7
    %v8162 = vrot.slane %v8161, 2
    %v8163 = vrot.slane %v8104, 7
    %v8164 = vrot.slane %v8163, 2
    %v8165 = vrot.slane %v8111, 7
    %v8166 = vrot.slane %v8165, 2
    %v8167 = vrot.slane %v8112, 7
    %v8168 = vrot.slane %v8167, 2
    %v8169 = vrot.slane %v8119, 7
    %v8170 = vrot.slane %v8169, 2
    %v8171 = vrot.slane %v8120, 7
    %v8172 = vrot.slane %v8171, 2
    %v8173 = vrot.slane %v8127, 7
    %v8174 = vrot.slane %v8173, 2
    %v8175 = vrot.slane %v8128, 7
    %v8176 = vrot.slane %v8175, 2
    %v8193 = vmax.f32 %v8071, %v8146
    %v8194 = vmax.f32 %v8072, %v8148
    %v8195 = vmax.f32 %v8079, %v8150
    %v8196 = vmax.f32 %v8080, %v8152
    %v8197 = vmax.f32 %v8087, %v8154
    %v8198 = vmax.f32 %v8088, %v8156
    %v8199 = vmax.f32 %v8095, %v8158
    %v8200 = vmax.f32 %v8096, %v8160
    %v8201 = vmax.f32 %v8103, %v8162
    %v8202 = vmax.f32 %v8104, %v8164
    %v8203 = vmax.f32 %v8111, %v8166
    %v8204 = vmax.f32 %v8112, %v8168
    %v8205 = vmax.f32 %v8119, %v8170
    %v8206 = vmax.f32 %v8120, %v8172
    %v8207 = vmax.f32 %v8127, %v8174
    %v8208 = vmax.f32 %v8128, %v8176
    %v8213 = vlaneseq
    %v8214 = vshrl.u32 %v8213, 7
    %v8215 = vsub.s32 0, %v8214
    %v8216 = vrot.slane %v8193, %v8215
    %v8217 = vlaneseq
    %v8218 = vshrl.u32 %v8217, 7
    %v8219 = vsub.s32 0, %v8218
    %v8220 = vrot.slane %v8197, %v8219
    %v8221 = vlaneseq
    %v8222 = vshrl.u32 %v8221, 7
    %v8223 = vsub.s32 0, %v8222
    %v8224 = vrot.slane %v8201, %v8223
    %v8225 = vlaneseq
    %v8226 = vshrl.u32 %v8225, 7
    %v8227 = vsub.s32 0, %v8226
    %v8228 = vrot.slane %v8205, %v8227
    %v8229 = vsel %vm6592, %v8220, %v8216
    %v8230 = vsel %vm6594, %v8224, %v8229
    %v8231 = vsel %vm6596, %v8228, %v8230
    %v8237 = vlaneseq
    %v8238 = vshrl.u32 %v8237, 7
    %v8239 = vsub.s32 0, %v8238
    %v8240 = vrot.slane %v8194, %v8239
    %v8241 = vlaneseq
    %v8242 = vshrl.u32 %v8241, 7
    %v8243 = vsub.s32 0, %v8242
    %v8244 = vrot.slane %v8198, %v8243
    %v8245 = vlaneseq
    %v8246 = vshrl.u32 %v8245, 7
    %v8247 = vsub.s32 0, %v8246
    %v8248 = vrot.slane %v8202, %v8247
    %v8249 = vlaneseq
    %v8250 = vshrl.u32 %v8249, 7
    %v8251 = vsub.s32 0, %v8250
    %v8252 = vrot.slane %v8206, %v8251
    %v8253 = vsel %vm6592, %v8244, %v8240
    %v8254 = vsel %vm6594, %v8248, %v8253
    %v8255 = vsel %vm6596, %v8252, %v8254
    %8256 = vrot.lane.b32.xlu0 %v8255, 64
    %v8257 = vpop.permute.xlu0 %8256
    %v8263 = vlaneseq
    %v8264 = vshrl.u32 %v8263, 7
    %v8265 = vsub.s32 0, %v8264
    %v8266 = vrot.slane %v8195, %v8265
    %v8267 = vlaneseq
    %v8268 = vshrl.u32 %v8267, 7
    %v8269 = vsub.s32 0, %v8268
    %v8270 = vrot.slane %v8199, %v8269
    %v8271 = vlaneseq
    %v8272 = vshrl.u32 %v8271, 7
    %v8273 = vsub.s32 0, %v8272
    %v8274 = vrot.slane %v8203, %v8273
    %v8275 = vlaneseq
    %v8276 = vshrl.u32 %v8275, 7
    %v8277 = vsub.s32 0, %v8276
    %v8278 = vrot.slane %v8207, %v8277
    %v8279 = vsel %vm6592, %v8270, %v8266
    %v8280 = vsel %vm6594, %v8274, %v8279
    %v8281 = vsel %vm6596, %v8278, %v8280
    %v8287 = vlaneseq
    %v8288 = vshrl.u32 %v8287, 7
    %v8289 = vsub.s32 0, %v8288
    %v8290 = vrot.slane %v8196, %v8289
    %v8291 = vlaneseq
    %v8292 = vshrl.u32 %v8291, 7
    %v8293 = vsub.s32 0, %v8292
    %v8294 = vrot.slane %v8200, %v8293
    %v8295 = vlaneseq
    %v8296 = vshrl.u32 %v8295, 7
    %v8297 = vsub.s32 0, %v8296
    %v8298 = vrot.slane %v8204, %v8297
    %v8299 = vlaneseq
    %v8300 = vshrl.u32 %v8299, 7
    %v8301 = vsub.s32 0, %v8300
    %v8302 = vrot.slane %v8208, %v8301
    %v8303 = vsel %vm6592, %v8294, %v8290
    %v8304 = vsel %vm6594, %v8298, %v8303
    %v8305 = vsel %vm6596, %v8302, %v8304
    %8306 = vrot.lane.b32.xlu0 %v8305, 64
    %v8307 = vpop.permute.xlu0 %8306
    %v8309 = vsel %vm7548, %v8231, %v8257
    %v8310 = vsel %vm7548, %v8281, %v8307
    %v8311 = vld [vmem:[%s9] sm:$0xff]
    %v8312 = vld [vmem:[%s9 + $0x8] sm:$0xff]
    %v8313 = vld [vmem:[%s9 + $0x10] sm:$0xff]
    %v8314 = vld [vmem:[%s9 + $0x18] sm:$0xff]
    %v8315 = vld [vmem:[%s9 + $0x20] sm:$0xff]
    %v8316 = vld [vmem:[%s9 + $0x28] sm:$0xff]
    %v8317 = vld [vmem:[%s9 + $0x30] sm:$0xff]
    %v8318 = vld [vmem:[%s9 + $0x38] sm:$0xff]
    %v8319 = vld [vmem:[%s9 + $0x40] sm:$0xff]
    %v8320 = vld [vmem:[%s9 + $0x48] sm:$0xff]
    %v8321 = vld [vmem:[%s9 + $0x50] sm:$0xff]
    %v8322 = vld [vmem:[%s9 + $0x58] sm:$0xff]
    %v8323 = vld [vmem:[%s9 + $0x60] sm:$0xff]
    %v8324 = vld [vmem:[%s9 + $0x68] sm:$0xff]
    %v8325 = vld [vmem:[%s9 + $0x70] sm:$0xff]
    %v8326 = vld [vmem:[%s9 + $0x78] sm:$0xff]
    %v8327 = vld [vmem:[%s9 + $0x80] sm:$0xff]
    %v8328 = vld [vmem:[%s9 + $0x88] sm:$0xff]
    %v8329 = vld [vmem:[%s9 + $0x90] sm:$0xff]
    %v8330 = vld [vmem:[%s9 + $0x98] sm:$0xff]
    %v8331 = vld [vmem:[%s9 + $0xa0] sm:$0xff]
    %v8332 = vld [vmem:[%s9 + $0xa8] sm:$0xff]
    %v8333 = vld [vmem:[%s9 + $0xb0] sm:$0xff]
    %v8334 = vld [vmem:[%s9 + $0xb8] sm:$0xff]
    %v8335 = vld [vmem:[%s9 + $0xc0] sm:$0xff]
    %v8336 = vld [vmem:[%s9 + $0xc8] sm:$0xff]
    %v8337 = vld [vmem:[%s9 + $0xd0] sm:$0xff]
    %v8338 = vld [vmem:[%s9 + $0xd8] sm:$0xff]
    %v8339 = vld [vmem:[%s9 + $0xe0] sm:$0xff]
    %v8340 = vld [vmem:[%s9 + $0xe8] sm:$0xff]
    %v8341 = vld [vmem:[%s9 + $0xf0] sm:$0xff]
    %v8342 = vld [vmem:[%s9 + $0xf8] sm:$0xff]
    %v8343 = vld [vmem:[%s10] sm:$0x1]
    %v8345 = vlaneseq
    %v8346 = vshrl.u32 %v8345, 7
    %v8347 = vsub.s32 0, %v8346
    %v8348 = vrot.slane %v8343, %v8347
    %8350 = vmatprep.subr.mxu0 0.0
    %8351 = vmatpush1.msra.mxu0 %v8326
    %8352 = vmatprep.subr.mxu0 0.0
    %8353 = vmatpush1.msra.mxu0 %v8325
    %8354 = vmatprep.subr.mxu0 0.0
    %8355 = vmatpush1.msra.mxu0 %v8324
    %8356 = vmatprep.subr.mxu0 0.0
    %8357 = vmatpush1.msra.mxu0 %v8323
    %8358 = vmatprep.subr.mxu0 0.0
    %8359 = vmatpush1.msra.mxu0 %v8322
    %8360 = vmatprep.subr.mxu0 0.0
    %8361 = vmatpush1.msra.mxu0 %v8321
    %8362 = vmatprep.subr.mxu0 0.0
    %8363 = vmatpush1.msra.mxu0 %v8320
    %8364 = vmatprep.subr.mxu0 0.0
    %8365 = vmatpush1.msra.mxu0 %v8319
    %8366 = vmatprep.subr.mxu0 0.0
    %8367 = vmatpush1.msra.mxu0 %v8318
    %8368 = vmatprep.subr.mxu0 0.0
    %8369 = vmatpush1.msra.mxu0 %v8317
    %8370 = vmatprep.subr.mxu0 0.0
    %8371 = vmatpush1.msra.mxu0 %v8316
    %8372 = vmatprep.subr.mxu0 0.0
    %8373 = vmatpush1.msra.mxu0 %v8315
    %8374 = vmatprep.subr.mxu0 0.0
    %8375 = vmatpush1.msra.mxu0 %v8314
    %8376 = vmatprep.subr.mxu0 0.0
    %8377 = vmatpush1.msra.mxu0 %v8313
    %8378 = vmatprep.subr.mxu0 0.0
    %8379 = vmatpush1.msra.mxu0 %v8312
    %8380 = vmatprep.subr.mxu0 0.0
    %8381 = vmatpush1.msra.mxu0 %v8311
    %8382 = vmatprep.subr.mxu0 0.0
    %8383 = vmatpush2.msra.mxu0 %v8342
    %8384 = vmatprep.subr.mxu0 0.0
    %8385 = vmatpush2.msra.mxu0 %v8341
    %8386 = vmatprep.subr.mxu0 0.0
    %8387 = vmatpush2.msra.mxu0 %v8340
    %8388 = vmatprep.subr.mxu0 0.0
    %8389 = vmatpush2.msra.mxu0 %v8339
    %8390 = vmatprep.subr.mxu0 0.0
    %8391 = vmatpush2.msra.mxu0 %v8338
    %8392 = vmatprep.subr.mxu0 0.0
    %8393 = vmatpush2.msra.mxu0 %v8337
    %8394 = vmatprep.subr.mxu0 0.0
    %8395 = vmatpush2.msra.mxu0 %v8336
    %8396 = vmatprep.subr.mxu0 0.0
    %8397 = vmatpush2.msra.mxu0 %v8335
    %8398 = vmatprep.subr.mxu0 0.0
    %8399 = vmatpush2.msra.mxu0 %v8334
    %8400 = vmatprep.subr.mxu0 0.0
    %8401 = vmatpush2.msra.mxu0 %v8333
    %8402 = vmatprep.subr.mxu0 0.0
    %8403 = vmatpush2.msra.mxu0 %v8332
    %8404 = vmatprep.subr.mxu0 0.0
    %8405 = vmatpush2.msra.mxu0 %v8331
    %8406 = vmatprep.subr.mxu0 0.0
    %8407 = vmatpush2.msra.mxu0 %v8330
    %8408 = vmatprep.subr.mxu0 0.0
    %8409 = vmatpush2.msra.mxu0 %v8329
    %8410 = vmatprep.subr.mxu0 0.0
    %8411 = vmatpush2.msra.mxu0 %v8328
    %8412 = vmatprep.subr.mxu0 0.0
    %8413 = vmatpush2.msra.mxu0 %v8327
    %8414 = vmatprep.mubr.f32.mxu0 %v8310
    %8415 = vmatmul.mubr.f32.gmra.mxu0 %v8309
    %v8416 = vpop.f32.mrf.mxu0
    %v8417 = vadd.f32 %v8348, %v8416
    %v8418 = vpop.f32.mrf.mxu0
    %8419 = vdwg.mxu0
    %v8420 = vmax.f32 %v8417, 0.0
    %v8421 = vld [vmem:[%s11] sm:$0xff]
    %v8422 = vld [vmem:[%s11 + $0x8] sm:$0xff]
    %v8423 = vld [vmem:[%s11 + $0x10] sm:$0xff]
    %v8424 = vld [vmem:[%s11 + $0x18] sm:$0xff]
    %v8425 = vld [vmem:[%s11 + $0x20] sm:$0xff]
    %v8426 = vld [vmem:[%s11 + $0x28] sm:$0xff]
    %v8427 = vld [vmem:[%s11 + $0x30] sm:$0xff]
    %v8428 = vld [vmem:[%s11 + $0x38] sm:$0xff]
    %v8429 = vld [vmem:[%s11 + $0x40] sm:$0xff]
    %v8430 = vld [vmem:[%s11 + $0x48] sm:$0xff]
    %v8431 = vld [vmem:[%s11 + $0x50] sm:$0xff]
    %v8432 = vld [vmem:[%s11 + $0x58] sm:$0xff]
    %v8433 = vld [vmem:[%s11 + $0x60] sm:$0xff]
    %v8434 = vld [vmem:[%s11 + $0x68] sm:$0xff]
    %v8435 = vld [vmem:[%s11 + $0x70] sm:$0xff]
    %v8436 = vld [vmem:[%s11 + $0x78] sm:$0xff]
    %v8437 = vld [vmem:[%s12] sm:$0x1]
    %v8439 = vlaneseq
    %v8440 = vshrl.u32 %v8439, 7
    %v8441 = vsub.s32 0, %v8440
    %v8442 = vrot.slane %v8437, %v8441
    %8444 = vmatprep.subr.mxu0 0.0
    %8445 = vmatpush1.msra.mxu0 %v8436
    %8446 = vmatprep.subr.mxu0 0.0
    %8447 = vmatpush1.msra.mxu0 %v8435
    %8448 = vmatprep.subr.mxu0 0.0
    %8449 = vmatpush1.msra.mxu0 %v8434
    %8450 = vmatprep.subr.mxu0 0.0
    %8451 = vmatpush1.msra.mxu0 %v8433
    %8452 = vmatprep.subr.mxu0 0.0
    %8453 = vmatpush1.msra.mxu0 %v8432
    %8454 = vmatprep.subr.mxu0 0.0
    %8455 = vmatpush1.msra.mxu0 %v8431
    %8456 = vmatprep.subr.mxu0 0.0
    %8457 = vmatpush1.msra.mxu0 %v8430
    %8458 = vmatprep.subr.mxu0 0.0
    %8459 = vmatpush1.msra.mxu0 %v8429
    %8460 = vmatprep.subr.mxu0 0.0
    %8461 = vmatpush1.msra.mxu0 %v8428
    %8462 = vmatprep.subr.mxu0 0.0
    %8463 = vmatpush1.msra.mxu0 %v8427
    %8464 = vmatprep.subr.mxu0 0.0
    %8465 = vmatpush1.msra.mxu0 %v8426
    %8466 = vmatprep.subr.mxu0 0.0
    %8467 = vmatpush1.msra.mxu0 %v8425
    %8468 = vmatprep.subr.mxu0 0.0
    %8469 = vmatpush1.msra.mxu0 %v8424
    %8470 = vmatprep.subr.mxu0 0.0
    %8471 = vmatpush1.msra.mxu0 %v8423
    %8472 = vmatprep.subr.mxu0 0.0
    %8473 = vmatpush1.msra.mxu0 %v8422
    %8474 = vmatprep.subr.mxu0 0.0
    %8475 = vmatpush1.msra.mxu0 %v8421
    %8476 = vmatprep.subr.mxu0 0.0
    %8477 = vmatpush2.msra.mxu0 0.0
    %8478 = vmatprep.subr.mxu0 0.0
    %8479 = vmatpush2.msra.mxu0 0.0
    %8480 = vmatprep.subr.mxu0 0.0
    %8481 = vmatpush2.msra.mxu0 0.0
    %8482 = vmatprep.subr.mxu0 0.0
    %8483 = vmatpush2.msra.mxu0 0.0
    %8484 = vmatprep.subr.mxu0 0.0
    %8485 = vmatpush2.msra.mxu0 0.0
    %8486 = vmatprep.subr.mxu0 0.0
    %8487 = vmatpush2.msra.mxu0 0.0
    %8488 = vmatprep.subr.mxu0 0.0
    %8489 = vmatpush2.msra.mxu0 0.0
    %8490 = vmatprep.subr.mxu0 0.0
    %8491 = vmatpush2.msra.mxu0 0.0
    %8492 = vmatprep.subr.mxu0 0.0
    %8493 = vmatpush2.msra.mxu0 0.0
    %8494 = vmatprep.subr.mxu0 0.0
    %8495 = vmatpush2.msra.mxu0 0.0
    %8496 = vmatprep.subr.mxu0 0.0
    %8497 = vmatpush2.msra.mxu0 0.0
    %8498 = vmatprep.subr.mxu0 0.0
    %8499 = vmatpush2.msra.mxu0 0.0
    %8500 = vmatprep.subr.mxu0 0.0
    %8501 = vmatpush2.msra.mxu0 0.0
    %8502 = vmatprep.subr.mxu0 0.0
    %8503 = vmatpush2.msra.mxu0 0.0
    %8504 = vmatprep.subr.mxu0 0.0
    %8505 = vmatpush2.msra.mxu0 0.0
    %8506 = vmatprep.subr.mxu0 0.0
    %8507 = vmatpush2.msra.mxu0 0.0
    %8508 = vmatprep.mubr.f32.mxu0 0.0
    %8509 = vmatmul.mubr.f32.gmra.mxu0 %v8420
    %v8510 = vpop.f32.mrf.mxu0
    %v8511 = vadd.f32 %v8442, %v8510
    %v8512 = vpop.f32.mrf.mxu0
    %8513 = vdwg.mxu0
    %vm8514 = vcmask 76800
    %v8515 = vsel %vm8514, %v8511, -inf
    %8516 = vmax.xlane.f32.xlu0 %v8515
    %v8517 = vpop.xlane.xlu0 %8516
    %v8518 = vsub.f32 %v8511, %v8517
    %v8519 = vmul.f32 %v8518, 1.442695
    %v8520 = vpow.pop %v8519
    %v8521 = vsel %vm8514, %v8520, 0.0
    %8522 = vadd.xlane.f32.xlu0 %v8521
    %v8523 = vpop.xlane.xlu0 %8522
    %v8524 = vrcp.pop %v8523
    %v8525 = vmul.f32 %v8520, %v8524
    %vm8526 = vcmask 74752
    %8527 = vst.msk [vmem:[#allocation2] sm:$0x3] %vm8526, %v8525
    %vm8528 = vcmask 76802
    %8529 = vst.msk [vmem:[#allocation4 - $0x2] sm:$0xc] %vm8528, %v8525
    %v8530 = vld [vmem:[%s13] sm:$0xff]
    %v8531 = vld [vmem:[%s13 + $0x8] sm:$0x3]
    %v8532 = vld [vmem:[%s14] sm:$0xff]
    %v8533 = vld [vmem:[%s14 + $0x8] sm:$0x3]
    %v8535 = vrot.slane %v8525, 2
    %vm8536 = vcmask 80896
    %v8537 = vsel %vm8536, %v8535, 0
    %vm8539 = vcmask 1041408
    %v8541 = vsel %vm8539, %v8533, 0
    %8543 = vmatprep.subr.mxu0 0.0
    %8544 = vmatpush1.msra.mxu0 0.0
    %8545 = vmatprep.subr.mxu0 0.0
    %8546 = vmatpush1.msra.mxu0 0.0
    %8547 = vmatprep.subr.mxu0 0.0
    %8548 = vmatpush1.msra.mxu0 0.0
    %8549 = vmatprep.subr.mxu0 0.0
    %8550 = vmatpush1.msra.mxu0 0.0
    %8551 = vmatprep.subr.mxu0 0.0
    %8552 = vmatpush1.msra.mxu0 0.0
    %8553 = vmatprep.subr.mxu0 0.0
    %8554 = vmatpush1.msra.mxu0 0.0
    %8555 = vmatprep.subr.mxu0 0.0
    %8556 = vmatpush1.msra.mxu0 0.0
    %8557 = vmatprep.subr.mxu0 0.0
    %8558 = vmatpush1.msra.mxu0 0.0
    %8559 = vmatprep.subr.mxu0 0.0
    %8560 = vmatpush1.msra.mxu0 0.0
    %8561 = vmatprep.subr.mxu0 0.0
    %8562 = vmatpush1.msra.mxu0 0.0
    %8563 = vmatprep.subr.mxu0 0.0
    %8564 = vmatpush1.msra.mxu0 0.0
    %8565 = vmatprep.subr.mxu0 0.0
    %8566 = vmatpush1.msra.mxu0 0.0
    %8567 = vmatprep.subr.mxu0 0.0
    %8568 = vmatpush1.msra.mxu0 0.0
    %8569 = vmatprep.subr.mxu0 0.0
    %8570 = vmatpush1.msra.mxu0 0.0
    %8571 = vmatprep.subr.mxu0 0.0
    %8572 = vmatpush1.msra.mxu0 %v8541
    %8573 = vmatprep.subr.mxu0 0.0
    %8574 = vmatpush1.msra.mxu0 %v8532
    %8575 = vmatprep.subr.mxu0 0.0
    %8576 = vmatpush2.msra.mxu0 0.0
    %8577 = vmatprep.subr.mxu0 0.0
    %8578 = vmatpush2.msra.mxu0 0.0
    %8579 = vmatprep.subr.mxu0 0.0
    %8580 = vmatpush2.msra.mxu0 0.0
    %8581 = vmatprep.subr.mxu0 0.0
    %8582 = vmatpush2.msra.mxu0 0.0
    %8583 = vmatprep.subr.mxu0 0.0
    %8584 = vmatpush2.msra.mxu0 0.0
    %8585 = vmatprep.subr.mxu0 0.0
    %8586 = vmatpush2.msra.mxu0 0.0
    %8587 = vmatprep.subr.mxu0 0.0
    %8588 = vmatpush2.msra.mxu0 0.0
    %8589 = vmatprep.subr.mxu0 0.0
    %8590 = vmatpush2.msra.mxu0 0.0
    %8591 = vmatprep.subr.mxu0 0.0
    %8592 = vmatpush2.msra.mxu0 0.0
    %8593 = vmatprep.subr.mxu0 0.0
    %8594 = vmatpush2.msra.mxu0 0.0
    %8595 = vmatprep.subr.mxu0 0.0
    %8596 = vmatpush2.msra.mxu0 0.0
    %8597 = vmatprep.subr.mxu0 0.0
    %8598 = vmatpush2.msra.mxu0 0.0
    %8599 = vmatprep.subr.mxu0 0.0
    %8600 = vmatpush2.msra.mxu0 0.0
    %8601 = vmatprep.subr.mxu0 0.0
    %8602 = vmatpush2.msra.mxu0 0.0
    %8603 = vmatprep.subr.mxu0 0.0
    %8604 = vmatpush2.msra.mxu0 0.0
    %8605 = vmatprep.subr.mxu0 0.0
    %8606 = vmatpush2.msra.mxu0 0.0
    %8607 = vmatprep.mubr.f32.mxu0 0.0
    %8608 = vmatmul.mubr.f32.gmra.mxu0 %v8537
    %v8609 = vpop.f32.mrf.mxu0
    %v8610 = vadd.f32 0.0, %v8609
    %v8611 = vpop.f32.mrf.mxu0
    %8612 = vdwg.mxu0
    %v8613 = vsel %vm8536, %v8525, 0
    %v8616 = vsel %vm8539, %v8531, 0
    %8618 = vmatprep.subr.mxu0 0.0
    %8619 = vmatpush1.msra.mxu0 0.0
    %8620 = vmatprep.subr.mxu0 0.0
    %8621 = vmatpush1.msra.mxu0 0.0
    %8622 = vmatprep.subr.mxu0 0.0
    %8623 = vmatpush1.msra.mxu0 0.0
    %8624 = vmatprep.subr.mxu0 0.0
    %8625 = vmatpush1.msra.mxu0 0.0
    %8626 = vmatprep.subr.mxu0 0.0
    %8627 = vmatpush1.msra.mxu0 0.0
    %8628 = vmatprep.subr.mxu0 0.0
    %8629 = vmatpush1.msra.mxu0 0.0
    %8630 = vmatprep.subr.mxu0 0.0
    %8631 = vmatpush1.msra.mxu0 0.0
    %8632 = vmatprep.subr.mxu0 0.0
    %8633 = vmatpush1.msra.mxu0 0.0
    %8634 = vmatprep.subr.mxu0 0.0
    %8635 = vmatpush1.msra.mxu0 0.0
    %8636 = vmatprep.subr.mxu0 0.0
    %8637 = vmatpush1.msra.mxu0 0.0
    %8638 = vmatprep.subr.mxu0 0.0
    %8639 = vmatpush1.msra.mxu0 0.0
    %8640 = vmatprep.subr.mxu0 0.0
    %8641 = vmatpush1.msra.mxu0 0.0
    %8642 = vmatprep.subr.mxu0 0.0
    %8643 = vmatpush1.msra.mxu0 0.0
    %8644 = vmatprep.subr.mxu0 0.0
    %8645 = vmatpush1.msra.mxu0 0.0
    %8646 = vmatprep.subr.mxu0 0.0
    %8647 = vmatpush1.msra.mxu0 %v8616
    %8648 = vmatprep.subr.mxu0 0.0
    %8649 = vmatpush1.msra.mxu0 %v8530
    %8650 = vmatprep.subr.mxu0 0.0
    %8651 = vmatpush2.msra.mxu0 0.0
    %8652 = vmatprep.subr.mxu0 0.0
    %8653 = vmatpush2.msra.mxu0 0.0
    %8654 = vmatprep.subr.mxu0 0.0
    %8655 = vmatpush2.msra.mxu0 0.0
    %8656 = vmatprep.subr.mxu0 0.0
    %8657 = vmatpush2.msra.mxu0 0.0
    %8658 = vmatprep.subr.mxu0 0.0
    %8659 = vmatpush2.msra.mxu0 0.0
    %8660 = vmatprep.subr.mxu0 0.0
    %8661 = vmatpush2.msra.mxu0 0.0
    %8662 = vmatprep.subr.mxu0 0.0
    %8663 = vmatpush2.msra.mxu0 0.0
    %8664 = vmatprep.subr.mxu0 0.0
    %8665 = vmatpush2.msra.mxu0 0.0
    %8666 = vmatprep.subr.mxu0 0.0
    %8667 = vmatpush2.msra.mxu0 0.0
    %8668 = vmatprep.subr.mxu0 0.0
    %8669 = vmatpush2.msra.mxu0 0.0
    %8670 = vmatprep.subr.mxu0 0.0
    %8671 = vmatpush2.msra.mxu0 0.0
    %8672 = vmatprep.subr.mxu0 0.0
    %8673 = vmatpush2.msra.mxu0 0.0
    %8674 = vmatprep.subr.mxu0 0.0
    %8675 = vmatpush2.msra.mxu0 0.0
    %8676 = vmatprep.subr.mxu0 0.0
    %8677 = vmatpush2.msra.mxu0 0.0
    %8678 = vmatprep.subr.mxu0 0.0
    %8679 = vmatpush2.msra.mxu0 0.0
    %8680 = vmatprep.subr.mxu0 0.0
    %8681 = vmatpush2.msra.mxu0 0.0
    %8682 = vmatprep.mubr.f32.mxu0 0.0
    %8683 = vmatmul.mubr.f32.gmra.mxu0 %v8613
    %v8684 = vpop.f32.mrf.mxu0
    %v8685 = vadd.f32 %v8610, %v8684
    %v8686 = vpop.f32.mrf.mxu0
    %8687 = vdwg.mxu0
    %v8688 = vld [vmem:[%s15] sm:$0x1]
    %v8690 = vlaneseq
    %v8691 = vshrl.u32 %v8690, 7
    %v8692 = vsub.s32 0, %v8691
    %v8693 = vrot.slane %v8688, %v8692
    %v8695 = vadd.f32 %v8685, %v8693
    %vm8696 = vcmask 9216
    %v8697 = vsel %vm8696, %v8695, -inf
    %8698 = vmax.xlane.f32.xlu0 %v8697
    %v8699 = vpop.xlane.xlu0 %8698
    %v8700 = vsub.f32 %v8695, %v8699
    %v8701 = vmul.f32 %v8700, 1.442695
    %v8702 = vpow.pop %v8701
    %v8703 = vsel %vm8696, %v8702, 0.0
    %8704 = vadd.xlane.f32.xlu0 %v8703
    %v8705 = vpop.xlane.xlu0 %8704
    %v8706 = vrcp.pop %v8705
    %v8707 = vmul.f32 %v8702, %v8706
    %8708 = vst.msk [vmem:[#allocation6] sm:$0x3] %vm8696, %v8707
    // Predicated region
    $region66: #{siamese_forward.1} parent=1 // pred_check
      _
    $region67: #{siamese_forward.1} parent=1 // pred_check_branch
      %8710 = sbr.rel (0) target = $region69
    $region68: #{siamese_forward.1} parent=1 // pred_region
      %s8712 = ssub.s32 32, 32
      %8713 = vsyncadd [#allocation3], %s8712
      %s8715 = sshll.u32 [#allocation2], 4
      %s8716 = int_to_ptr.vmem [resolvable:$true] %s8715
      %8718 = dma.vmem_to_hbm [thread:$0]  %s8716, 32, %s16, [#allocation3]
    $region69: #{siamese_forward.1} parent=1 // pred_fallthru
      _
    // Predicated region
    $region70: #{siamese_forward.1} parent=1 // pred_check
      _
    $region71: #{siamese_forward.1} parent=1 // pred_check_branch
      %8720 = sbr.rel (0) target = $region73
    $region72: #{siamese_forward.1} parent=1 // pred_region
      %s8722 = ssub.s32 32, 32
      %8723 = vsyncadd [#allocation5], %s8722
      %s8725 = sshll.u32 [#allocation4], 4
      %s8726 = int_to_ptr.vmem [resolvable:$true] %s8725
      %8728 = dma.vmem_to_hbm [thread:$0]  %s8726, 32, %s17, [#allocation5]
    $region73: #{siamese_forward.1} parent=1 // pred_fallthru
      _
    // Predicated region
    $region74: #{siamese_forward.1} parent=1 // pred_check
      _
    $region75: #{siamese_forward.1} parent=1 // pred_check_branch
      %8730 = sbr.rel (0) target = $region77
    $region76: #{siamese_forward.1} parent=1 // pred_region
      %s8732 = ssub.s32 32, 32
      %8733 = vsyncadd [#allocation5], %s8732
      %s8735 = sshll.u32 [#allocation6], 4
      %s8736 = int_to_ptr.vmem [resolvable:$true] %s8735
      %8738 = dma.vmem_to_hbm [thread:$0]  %s8736, 32, %s18, [#allocation5]
    $region77: #{siamese_forward.1} parent=1 // pred_fallthru
      _
    // Predicated region
    $region78: #{siamese_forward.1} parent=1 // pred_check
      _
    $region79: #{siamese_forward.1} parent=1 // pred_check_branch
      %8740 = sbr.rel (0) target = $region81
    $region80: #{siamese_forward.1} parent=1 // pred_region
      %8741 = dma.done [#allocation3], 32
    $region81: #{siamese_forward.1} parent=1 // pred_fallthru
      _
    // Predicated region
    $region82: #{siamese_forward.1} parent=1 // pred_check
      _
    $region83: #{siamese_forward.1} parent=1 // pred_check_branch
      %8743 = sbr.rel (0) target = $region85
    $region84: #{siamese_forward.1} parent=1 // pred_region
      %8744 = dma.done [#allocation5], 32
    $region85: #{siamese_forward.1} parent=1 // pred_fallthru
      _
    // Predicated region
    $region86: #{siamese_forward.1} parent=1 // pred_check
      _
    $region87: #{siamese_forward.1} parent=1 // pred_check_branch
      %8746 = sbr.rel (0) target = $region89
    $region88: #{siamese_forward.1} parent=1 // pred_region
      %8747 = dma.done [#allocation5], 32
    $region89: #{siamese_forward.1} parent=1 // pred_fallthru
      _
    %8748 = vsyncpa [#allocation3], 1
    %8749 = vsyncpa [#allocation5], 1

</llo_original>
